<compile_context>
chip_gen: v5e
topology: v5e:2x2
jax: 0.10.0
libtpu: 0.0.40
codegen_flags: <defaults>
</compile_context>

<pallas_src>
import functools

import jax
import jax.numpy as jnp
from jax.experimental import pallas as pl
from jax.experimental.pallas import tpu as pltpu


FEATURE_DIM = 1280
STEM_CH = 32
K_IM2COL = 3 * 3 * 3        # 27 im2col taps
K_PAD = 32                  # padded to a clean sub-lane width
ATT_HID = 512               # attention/classifier first-layer width (merged -> 1024)
TM_MAX = 1024               # M-tile cap (fits v7x 64 MiB VMEM comfortably)


def _round_up(x, m):
    return ((x + m - 1) // m) * m


def _epilogue_dtype():
    """bf16 elementwise epilogue on v6e/v7x (bf16 VPU paths); f32 elsewhere."""
    try:
        kind = jax.devices()[0].device_kind.lower()
    except Exception:
        return jnp.float32
    if ("v6" in kind) or ("v7" in kind):
        return jnp.bfloat16
    return jnp.float32


def _silu(x):
    """SiLU; sigmoid built from exp + EUP approximate reciprocal (own VLIW slot)."""
    xf = x.astype(jnp.float32)
    sig = pl.reciprocal(1.0 + jnp.exp(-xf), approx=True)
    return x * sig.astype(x.dtype)


def fold_bn(w, b, gamma, beta, mean, var, *, eps):
    """Fold eval-mode BatchNorm into the preceding conv/linear weights."""
    scale = gamma * jax.lax.rsqrt(var + eps)            # [1, N]
    w_f = w * scale
    if b is None:
        b_f = beta - mean * scale
    else:
        b_f = (b - mean) * scale + beta
    return w_f, b_f


# -----------------------------------------------------------------------------
# Fused kernel: stem matmul+SiLU -> 1x1 head conv+SiLU -> avg pool ->
#               attention/classifier heads -> gated output.
# Grid = (batch, M tiles); per-batch accumulator lives in VMEM scratch.
# -----------------------------------------------------------------------------
def fused_forward_kernel(patches_ref, sw_ref, sb_ref, hw_ref, hb_ref,
                         w1_ref, b1_ref, w2_ref, b2_ref, w3_ref, b3_ref,
                         w5_ref, b5_ref, o_ref, acc_ref,
                         *, tm, sub, n_pad_rows, inv_hw, epi_dtype):
    m = pl.program_id(1)

    @pl.when(m == 0)
    def _():
        acc_ref[...] = jnp.zeros_like(acc_ref)

    # --- stem conv (im2col matmul, BN folded) + SiLU --------------------------
    p = patches_ref[0]                                               # [tm,32] bf16
    stem = jnp.dot(p, sw_ref[...], preferred_element_type=jnp.float32) + sb_ref[...]
    stem = _silu(stem)                                               # [tm,32] f32

    # --- 1x1 head conv to 1280 ch (BN folded) + SiLU (bf16 on v6e/v7x) --------
    feat = jnp.dot(stem.astype(jnp.bfloat16), hw_ref[...],
                   preferred_element_type=jnp.float32) + hb_ref[...]
    feat = _silu(feat.astype(epi_dtype))                             # [tm,1280]

    # --- partial global-average-pool: keep `sub` sublanes live ----------------
    # (VALU-only adds per tile; the cross-sublane reduce is deferred to finalize)
    part = jnp.sum(feat.reshape(tm // sub, sub, FEATURE_DIM).astype(jnp.float32),
                   axis=0)                                           # [sub,1280] f32
    acc_ref[...] += part

    # --- finalize: sublane reduce, pad correction, pooled avg, fused heads ----
    @pl.when(m == pl.num_programs(1) - 1)
    def _():
        pooled = jnp.sum(acc_ref[...], axis=0, keepdims=True)        # [1,1280] f32
        if n_pad_rows:
            # contribution of one all-zero (padded) patch row; mirrors the
            # hot-loop dtype path exactly so the subtraction cancels it
            z = _silu(sb_ref[...])                                   # [1,32] f32
            fz = jnp.dot(z.astype(jnp.bfloat16), hw_ref[...],
                         preferred_element_type=jnp.float32) + hb_ref[...]
            fz = _silu(fz.astype(epi_dtype)).astype(jnp.float32)     # [1,1280]
            pooled = pooled - float(n_pad_rows) * fz
        pooled = pooled * inv_hw                                     # avg pool

        # heads (BN folded, Dropout identity).  The two 1280x512 projections
        # are merged into one 1280x1024 matmul.
        f = pooled.astype(jnp.bfloat16)                              # [1,1280]
        y1 = jnp.dot(f, w1_ref[...], preferred_element_type=jnp.float32) + b1_ref[...]
        y1 = _silu(y1)                                               # [1,1024] f32
        a1 = y1[:, :ATT_HID]                                         # attention branch
        c1 = y1[:, ATT_HID:]                                         # classifier branch

        a2 = jnp.dot(a1.astype(jnp.bfloat16), w2_ref[...],
                     preferred_element_type=jnp.float32) + b2_ref[...]
        a2 = _silu(a2)                                               # [1,256]

        # final attention projection has N=1: VPU/XLU reduction, no 1-lane matmul
        att = jax.nn.sigmoid(
            jnp.sum(a2 * w3_ref[...], axis=-1, keepdims=True) + b3_ref[...])   # [1,1]

        out = jnp.dot(c1.astype(jnp.bfloat16), w5_ref[...],
                      preferred_element_type=jnp.float32) + b5_ref[...]        # [1,nc_pad]
        o_ref[0] = out * att


def fused_forward(patches, sw, sb, hconv_w, hconv_b,
                  w1m, b1m, w2, b2, w3r, b3, w5p, b5p,
                  *, hw_valid, tm, epi_dtype):
    B = patches.shape[0]
    num_m = patches.shape[1] // tm
    n_pad_rows = patches.shape[1] - hw_valid
    nc_pad = w5p.shape[1]
    sub = 8 if epi_dtype == jnp.float32 else 16       # native sublane tile of epi dtype

    kern = functools.partial(
        fused_forward_kernel, tm=tm, sub=sub, n_pad_rows=n_pad_rows,
        inv_hw=1.0 / float(hw_valid), epi_dtype=epi_dtype)

    out = pl.pallas_call(
        kern,
        out_shape=jax.ShapeDtypeStruct((B, 1, nc_pad), jnp.float32),
        grid=(B, num_m),
        in_specs=[
            pl.BlockSpec((1, tm, K_PAD), lambda b, m: (b, m, 0)),        # patches
            pl.BlockSpec((K_PAD, STEM_CH), lambda b, m: (0, 0)),         # stem w
            pl.BlockSpec((1, STEM_CH), lambda b, m: (0, 0)),             # stem b
            pl.BlockSpec((STEM_CH, FEATURE_DIM), lambda b, m: (0, 0)),   # head-conv w
            pl.BlockSpec((1, FEATURE_DIM), lambda b, m: (0, 0)),         # head-conv b
            pl.BlockSpec((FEATURE_DIM, 2 * ATT_HID), lambda b, m: (0, 0)),  # merged w1
            pl.BlockSpec((1, 2 * ATT_HID), lambda b, m: (0, 0)),         # merged b1
            pl.BlockSpec((ATT_HID, 256), lambda b, m: (0, 0)),           # att w2
            pl.BlockSpec((1, 256), lambda b, m: (0, 0)),                 # att b2
            pl.BlockSpec((1, 256), lambda b, m: (0, 0)),                 # att w3 (row)
            pl.BlockSpec((1, 1), lambda b, m: (0, 0)),                   # att b3
            pl.BlockSpec((ATT_HID, nc_pad), lambda b, m: (0, 0)),        # cls w2 (pad)
            pl.BlockSpec((1, nc_pad), lambda b, m: (0, 0)),              # cls b2 (pad)
        ],
        out_specs=pl.BlockSpec((1, 1, nc_pad), lambda b, m: (b, 0, 0)),
        scratch_shapes=[pltpu.VMEM((sub, FEATURE_DIM), jnp.float32)],
        compiler_params=pltpu.CompilerParams(
            dimension_semantics=("parallel", "arbitrary"),
            vmem_limit_bytes=48 * 1024 * 1024),
    )(patches, sw, sb, hconv_w, hconv_b, w1m, b1m, w2, b2, w3r, b3, w5p, b5p)
    return out.reshape(B, nc_pad)


# -----------------------------------------------------------------------------
# Parameters (deterministic synthetic init — no checkpoint loading)
# -----------------------------------------------------------------------------
def init_params(key, num_classes=1):
    keys = jax.random.split(key, 8)

    def randw(k, shape, scale=0.02):
        return jax.random.normal(k, shape, jnp.float32) * scale

    def bn_stats(n):
        # (gamma, beta, running_mean, running_var)
        return (jnp.ones((1, n), jnp.float32), jnp.zeros((1, n), jnp.float32),
                jnp.zeros((1, n), jnp.float32), jnp.ones((1, n), jnp.float32))

    p = {}
    # synthetic backbone: stem 3x3/s2 conv (3->32) as im2col weights, then
    # 1x1 head conv (32 -> 1280)
    p["stem_w"] = randw(keys[0], (K_IM2COL, STEM_CH))
    p["stem_bn"] = bn_stats(STEM_CH)
    p["headconv_w"] = randw(keys[1], (STEM_CH, FEATURE_DIM))
    p["headconv_bn"] = bn_stats(FEATURE_DIM)
    # attention head
    p["att_w1"] = randw(keys[2], (FEATURE_DIM, 512)); p["att_b1"] = jnp.zeros((1, 512), jnp.float32)
    p["att_bn1"] = bn_stats(512)
    p["att_w2"] = randw(keys[3], (512, 256)); p["att_b2"] = jnp.zeros((1, 256), jnp.float32)
    p["att_bn2"] = bn_stats(256)
    p["att_w3"] = randw(keys[4], (256, 1)); p["att_b3"] = jnp.zeros((1, 1), jnp.float32)
    # classifier head
    p["cls_w1"] = randw(keys[5], (FEATURE_DIM, 512)); p["cls_b1"] = jnp.zeros((1, 512), jnp.float32)
    p["cls_bn1"] = bn_stats(512)
    p["cls_w2"] = randw(keys[6], (512, num_classes))
    p["cls_b2"] = jnp.zeros((1, num_classes), jnp.float32)
    return p


# -----------------------------------------------------------------------------
# Full forward (layout plumbing / BN folding in plain JAX, hot path in Pallas)
# -----------------------------------------------------------------------------
def efficientnetv2_pad_forward(x_nchw, params):
    B, _, H, W = x_nchw.shape
    # NCHW -> NHWC; cast once to bf16 so the im2col slab materializes in bf16
    x = jnp.transpose(x_nchw, (0, 2, 3, 1)).astype(jnp.bfloat16)
    Ho, Wo = H // 2, W // 2
    HW = Ho * Wo

    # im2col for the stem conv: k=3, stride=2, TF 'SAME' padding (pad (0,1)).
    # Assumes even H, W (TF SAME would differ for odd inputs).
    # TODO(synk): in-kernel im2col (strided pl.ds loads of the NHWC input) would
    # remove this HBM slab entirely; kept in the wrapper (bf16) for simplicity.
    xp = jnp.pad(x, ((0, 0), (0, 1), (0, 1), (0, 0)))
    cols = []
    for dh in range(3):
        for dw in range(3):
            cols.append(xp[:, dh:dh + 2 * Ho:2, dw:dw + 2 * Wo:2, :])
    patches = jnp.concatenate(cols, axis=-1).reshape(B, HW, K_IM2COL)
    patches = jnp.pad(patches, ((0, 0), (0, 0), (0, K_PAD - K_IM2COL)))  # 27 -> 32

    # fold backbone BN (timm BN eps = 1e-3) into the matmul weights
    sw, sb = fold_bn(params["stem_w"], None, *params["stem_bn"], eps=1e-3)
    sw = jnp.pad(sw, ((0, K_PAD - K_IM2COL), (0, 0)))                    # K 27 -> 32
    hconv_w, hconv_b = fold_bn(params["headconv_w"], None,
                               *params["headconv_bn"], eps=1e-3)

    # divisor-aware M tile: multiple of 16 sublanes, capped at TM_MAX,
    # minimal padding waste
    num_m = max(1, pl.cdiv(HW, TM_MAX))
    tm = _round_up(pl.cdiv(HW, num_m), 16)
    num_m = pl.cdiv(HW, tm)
    hw_pad = num_m * tm
    if hw_pad != HW:
        patches = jnp.pad(patches, ((0, 0), (0, hw_pad - HW), (0, 0)))

    # TODO(synk): the pretrained (Fused)MBConv block stack of tf_efficientnetv2_b0
    # is not reimplemented; the synthetic backbone goes stem -> 1x1 head conv.

    # heads: fold BN (nn.BatchNorm1d eps = 1e-5), merge the two 1280x512
    # projections, pad the narrow classifier output to full lanes.
    w1a, b1a = fold_bn(params["att_w1"], params["att_b1"], *params["att_bn1"], eps=1e-5)
    w1c, b1c = fold_bn(params["cls_w1"], params["cls_b1"], *params["cls_bn1"], eps=1e-5)
    w1m = jnp.concatenate([w1a, w1c], axis=1)        # [1280, 1024]
    b1m = jnp.concatenate([b1a, b1c], axis=1)        # [1, 1024]
    w2, b2 = fold_bn(params["att_w2"], params["att_b2"], *params["att_bn2"], eps=1e-5)
    w3r = jnp.transpose(params["att_w3"])            # [1, 256]
    b3 = params["att_b3"]                            # [1, 1]

    nc = params["cls_w2"].shape[1]
    nc_pad = _round_up(max(nc, 1), 128)
    w5p = jnp.pad(params["cls_w2"], ((0, 0), (0, nc_pad - nc)))
    b5p = jnp.pad(params["cls_b2"], ((0, 0), (0, nc_pad - nc)))

    gated = fused_forward(
        patches,
        sw.astype(jnp.bfloat16), sb,
        hconv_w.astype(jnp.bfloat16), hconv_b,
        w1m.astype(jnp.bfloat16), b1m,
        w2.astype(jnp.bfloat16), b2,
        w3r, b3,
        w5p.astype(jnp.bfloat16), b5p,
        hw_valid=HW, tm=tm, epi_dtype=_epilogue_dtype())   # [B, nc_pad]
    return gated[:, :nc]                                   # == out * attention


if __name__ == "__main__":
    key = jax.random.PRNGKey(0)
    kx, kp = jax.random.split(key)
    x = jax.random.normal(kx, (2, 3, 16, 16), jnp.float32)  # NCHW like PyTorch
    params = init_params(kp, num_classes=1)

    fwd = jax.jit(efficientnetv2_pad_forward)
    out = jax.block_until_ready(fwd(x, params))

    assert out.shape == (2, 1), out.shape
    assert bool(jnp.all(jnp.isfinite(out)))
    print("KERNEL_OK")
</pallas_src>

<mosaic_0001>
module attributes {stable_mosaic.version = 11 : i64} {
  func.func @fused_forward_kernel(%arg0: i32, %arg1: i32, %arg2: memref<1x64x32xbf16, #tpu.memory_space<vmem>>, %arg3: memref<32x32xbf16, #tpu.memory_space<vmem>>, %arg4: memref<1x32xf32, #tpu.memory_space<vmem>>, %arg5: memref<32x1280xbf16, #tpu.memory_space<vmem>>, %arg6: memref<1x1280xf32, #tpu.memory_space<vmem>>, %arg7: memref<1280x1024xbf16, #tpu.memory_space<vmem>>, %arg8: memref<1x1024xf32, #tpu.memory_space<vmem>>, %arg9: memref<512x256xbf16, #tpu.memory_space<vmem>>, %arg10: memref<1x256xf32, #tpu.memory_space<vmem>>, %arg11: memref<1x256xf32, #tpu.memory_space<vmem>>, %arg12: memref<1x1xf32, #tpu.memory_space<vmem>>, %arg13: memref<512x128xbf16, #tpu.memory_space<vmem>>, %arg14: memref<1x128xf32, #tpu.memory_space<vmem>>, %arg15: memref<1x1x128xf32, #tpu.memory_space<vmem>>, %arg16: memref<8x1280xf32, #tpu.memory_space<vmem>>) attributes {dimension_semantics = [#tpu.dimension_semantics<parallel>, #tpu.dimension_semantics<arbitrary>], iteration_bounds = array<i64: 2, 1>, scalar_prefetch = 0 : i64, scratch_operands = 1 : i64, tpu.core_type = #tpu.core_type<tc>, window_params = [{transform_indices = @transform_0, window_bounds = array<i64: 1, 64, 32>}, {pipeline_mode = #tpu.pipeline_mode<synchronous>, transform_indices = @transform_1, window_bounds = array<i64: 32, 32>}, {pipeline_mode = #tpu.pipeline_mode<synchronous>, transform_indices = @transform_2, window_bounds = array<i64: 1, 32>}, {pipeline_mode = #tpu.pipeline_mode<synchronous>, transform_indices = @transform_3, window_bounds = array<i64: 32, 1280>}, {pipeline_mode = #tpu.pipeline_mode<synchronous>, transform_indices = @transform_4, window_bounds = array<i64: 1, 1280>}, {pipeline_mode = #tpu.pipeline_mode<synchronous>, transform_indices = @transform_5, window_bounds = array<i64: 1280, 1024>}, {pipeline_mode = #tpu.pipeline_mode<synchronous>, transform_indices = @transform_6, window_bounds = array<i64: 1, 1024>}, {pipeline_mode = #tpu.pipeline_mode<synchronous>, transform_indices = @transform_7, window_bounds = array<i64: 512, 256>}, {pipeline_mode = #tpu.pipeline_mode<synchronous>, transform_indices = @transform_8, window_bounds = array<i64: 1, 256>}, {pipeline_mode = #tpu.pipeline_mode<synchronous>, transform_indices = @transform_9, window_bounds = array<i64: 1, 256>}, {pipeline_mode = #tpu.pipeline_mode<synchronous>, transform_indices = @transform_10, window_bounds = array<i64: 1, 1>}, {pipeline_mode = #tpu.pipeline_mode<synchronous>, transform_indices = @transform_11, window_bounds = array<i64: 512, 128>}, {pipeline_mode = #tpu.pipeline_mode<synchronous>, transform_indices = @transform_12, window_bounds = array<i64: 1, 128>}, {transform_indices = @transform_13, window_bounds = array<i64: 1, 1, 128>}]} {
    %c0_i32 = arith.constant 0 : i32
    %0 = arith.cmpi eq, %arg1, %c0_i32 : i32
    %1 = arith.extui %0 : i1 to i32
    %c0_i32_0 = arith.constant 0 : i32
    %2 = arith.cmpi ne, %1, %c0_i32_0 : i32
    scf.if %2 {
      %cst_23 = arith.constant 0.000000e+00 : f32
      %38 = vector.broadcast %cst_23 : f32 to vector<8x1280xf32>
      %c0_24 = arith.constant 0 : index
      %c0_25 = arith.constant 0 : index
      %39 = vector.load %arg16[%c0_24, %c0_25] : memref<8x1280xf32, #tpu.memory_space<vmem>>, vector<8x1280xf32>
      tpu.vector_store %arg16[%c0_24, %c0_25], %38 {strides = array<i32>} : memref<8x1280xf32, #tpu.memory_space<vmem>>, vector<8x1280xf32>,
    } else {
    }
    %c0 = arith.constant 0 : index
    %c0_1 = arith.constant 0 : index
    %c0_2 = arith.constant 0 : index
    %3 = vector.load %arg2[%c0, %c0_1, %c0_2] : memref<1x64x32xbf16, #tpu.memory_space<vmem>>, vector<1x64x32xbf16>
    %4 = vector.shape_cast %3 : vector<1x64x32xbf16> to vector<64x32xbf16>
    %c0_3 = arith.constant 0 : index
    %c0_4 = arith.constant 0 : index
    %5 = vector.load %arg3[%c0_3, %c0_4] : memref<32x32xbf16, #tpu.memory_space<vmem>>, vector<32x32xbf16>
    %cst = arith.constant dense<0.000000e+00> : vector<64x32xf32>
    %6 = tpu.matmul %4, %5, %cst {dimension_numbers = #tpu.dot_dimension_numbers<[1], [0], [0], [1], [0, 0, 1, 1], [], []>} : vector<64x32xbf16>, vector<32x32xbf16>, vector<64x32xf32> -> vector<64x32xf32>
    %c0_5 = arith.constant 0 : index
    %c0_6 = arith.constant 0 : index
    %7 = vector.load %arg4[%c0_5, %c0_6] : memref<1x32xf32, #tpu.memory_space<vmem>>, vector<1x32xf32>
    %8 = vector.broadcast %7 : vector<1x32xf32> to vector<64x32xf32>
    %9 = arith.addf %6, %8 : vector<64x32xf32>
    %cst_7 = arith.constant 0.000000e+00 : f32
    %10 = vector.broadcast %cst_7 : f32 to vector<64x32xf32>
    %11 = arith.subf %10, %9 : vector<64x32xf32>
    %12 = math.exp %11 : vector<64x32xf32>
    %cst_8 = arith.constant 1.000000e+00 : f32
    %13 = vector.broadcast %cst_8 : f32 to vector<64x32xf32>
    %14 = arith.addf %13, %12 : vector<64x32xf32>
    %15 = tpu.reciprocal %14 {approx = true} : vector<64x32xf32> -> vector<64x32xf32>
    %16 = arith.mulf %9, %15 : vector<64x32xf32>
    %17 = arith.truncf %16 : vector<64x32xf32> to vector<64x32xbf16>
    %c0_9 = arith.constant 0 : index
    %c0_10 = arith.constant 0 : index
    %18 = vector.load %arg5[%c0_9, %c0_10] : memref<32x1280xbf16, #tpu.memory_space<vmem>>, vector<32x1280xbf16>
    %cst_11 = arith.constant dense<0.000000e+00> : vector<64x1280xf32>
    %19 = tpu.matmul %17, %18, %cst_11 {dimension_numbers = #tpu.dot_dimension_numbers<[1], [0], [0], [1], [0, 0, 1, 1], [], []>} : vector<64x32xbf16>, vector<32x1280xbf16>, vector<64x1280xf32> -> vector<64x1280xf32>
    %c0_12 = arith.constant 0 : index
    %c0_13 = arith.constant 0 : index
    %20 = vector.load %arg6[%c0_12, %c0_13] : memref<1x1280xf32, #tpu.memory_space<vmem>>, vector<1x1280xf32>
    %21 = vector.broadcast %20 : vector<1x1280xf32> to vector<64x1280xf32>
    %22 = arith.addf %19, %21 : vector<64x1280xf32>
    %cst_14 = arith.constant 0.000000e+00 : f32
    %23 = vector.broadcast %cst_14 : f32 to vector<64x1280xf32>
    %24 = arith.subf %23, %22 : vector<64x1280xf32>
    %25 = math.exp %24 : vector<64x1280xf32>
    %cst_15 = arith.constant 1.000000e+00 : f32
    %26 = vector.broadcast %cst_15 : f32 to vector<64x1280xf32>
    %27 = arith.addf %26, %25 : vector<64x1280xf32>
    %28 = tpu.reciprocal %27 {approx = true} : vector<64x1280xf32> -> vector<64x1280xf32>
    %29 = arith.mulf %22, %28 : vector<64x1280xf32>
    %30 = vector.shape_cast %29 : vector<64x1280xf32> to vector<8x8x1280xf32>
    %cst_16 = arith.constant dense<0.000000e+00> : vector<8x1280xf32>
    %31 = vector.multi_reduction <add>, %30, %cst_16 [0] : vector<8x8x1280xf32> to vector<8x1280xf32>
    %c0_17 = arith.constant 0 : index
    %c0_18 = arith.constant 0 : index
    %32 = vector.load %arg16[%c0_17, %c0_18] : memref<8x1280xf32, #tpu.memory_space<vmem>>, vector<8x1280xf32>
    %33 = arith.addf %32, %31 : vector<8x1280xf32>
    %c0_19 = arith.constant 0 : index
    %c0_20 = arith.constant 0 : index
    %34 = vector.load %arg16[%c0_19, %c0_20] : memref<8x1280xf32, #tpu.memory_space<vmem>>, vector<8x1280xf32>
    tpu.vector_store %arg16[%c0_19, %c0_20], %33 {strides = array<i32>} : memref<8x1280xf32, #tpu.memory_space<vmem>>, vector<8x1280xf32>,
    %c0_i32_21 = arith.constant 0 : i32
    %35 = arith.cmpi eq, %arg1, %c0_i32_21 : i32
    %36 = arith.extui %35 : i1 to i32
    %c0_i32_22 = arith.constant 0 : i32
    %37 = arith.cmpi ne, %36, %c0_i32_22 : i32
    scf.if %37 {
      %c0_23 = arith.constant 0 : index
      %c0_24 = arith.constant 0 : index
      %38 = vector.load %arg16[%c0_23, %c0_24] : memref<8x1280xf32, #tpu.memory_space<vmem>>, vector<8x1280xf32>
      %cst_25 = arith.constant dense<0.000000e+00> : vector<1280xf32>
      %39 = vector.multi_reduction <add>, %38, %cst_25 [0] : vector<8x1280xf32> to vector<1280xf32>
      %40 = vector.shape_cast %39 : vector<1280xf32> to vector<1x1280xf32>
      %cst_26 = arith.constant 1.562500e-02 : f32
      %41 = vector.broadcast %cst_26 : f32 to vector<1x1280xf32>
      %42 = arith.mulf %40, %41 : vector<1x1280xf32>
      %43 = arith.truncf %42 : vector<1x1280xf32> to vector<1x1280xbf16>
      %c0_27 = arith.constant 0 : index
      %c0_28 = arith.constant 0 : index
      %44 = vector.load %arg7[%c0_27, %c0_28] : memref<1280x1024xbf16, #tpu.memory_space<vmem>>, vector<1280x1024xbf16>
      %cst_29 = arith.constant dense<0.000000e+00> : vector<1x1024xf32>
      %45 = tpu.matmul %43, %44, %cst_29 {dimension_numbers = #tpu.dot_dimension_numbers<[1], [0], [0], [1], [0, 0, 1, 1], [], []>} : vector<1x1280xbf16>, vector<1280x1024xbf16>, vector<1x1024xf32> -> vector<1x1024xf32>
      %c0_30 = arith.constant 0 : index
      %c0_31 = arith.constant 0 : index
      %46 = vector.load %arg8[%c0_30, %c0_31] : memref<1x1024xf32, #tpu.memory_space<vmem>>, vector<1x1024xf32>
      %47 = arith.addf %45, %46 : vector<1x1024xf32>
      %cst_32 = arith.constant 0.000000e+00 : f32
      %48 = vector.broadcast %cst_32 : f32 to vector<1x1024xf32>
      %49 = arith.subf %48, %47 : vector<1x1024xf32>
      %50 = math.exp %49 : vector<1x1024xf32>
      %cst_33 = arith.constant 1.000000e+00 : f32
      %51 = vector.broadcast %cst_33 : f32 to vector<1x1024xf32>
      %52 = arith.addf %51, %50 : vector<1x1024xf32>
      %53 = tpu.reciprocal %52 {approx = true} : vector<1x1024xf32> -> vector<1x1024xf32>
      %54 = arith.mulf %47, %53 : vector<1x1024xf32>
      %55 = vector.extract_strided_slice %54 {offsets = [0, 0], sizes = [1, 512], strides = [1, 1]} : vector<1x1024xf32> to vector<1x512xf32>
      %56 = vector.extract_strided_slice %54 {offsets = [0, 512], sizes = [1, 512], strides = [1, 1]} : vector<1x1024xf32> to vector<1x512xf32>
      %57 = arith.truncf %55 : vector<1x512xf32> to vector<1x512xbf16>
      %c0_34 = arith.constant 0 : index
      %c0_35 = arith.constant 0 : index
      %58 = vector.load %arg9[%c0_34, %c0_35] : memref<512x256xbf16, #tpu.memory_space<vmem>>, vector<512x256xbf16>
      %cst_36 = arith.constant dense<0.000000e+00> : vector<1x256xf32>
      %59 = tpu.matmul %57, %58, %cst_36 {dimension_numbers = #tpu.dot_dimension_numbers<[1], [0], [0], [1], [0, 0, 1, 1], [], []>} : vector<1x512xbf16>, vector<512x256xbf16>, vector<1x256xf32> -> vector<1x256xf32>
      %c0_37 = arith.constant 0 : index
      %c0_38 = arith.constant 0 : index
      %60 = vector.load %arg10[%c0_37, %c0_38] : memref<1x256xf32, #tpu.memory_space<vmem>>, vector<1x256xf32>
      %61 = arith.addf %59, %60 : vector<1x256xf32>
      %cst_39 = arith.constant 0.000000e+00 : f32
      %62 = vector.broadcast %cst_39 : f32 to vector<1x256xf32>
      %63 = arith.subf %62, %61 : vector<1x256xf32>
      %64 = math.exp %63 : vector<1x256xf32>
      %cst_40 = arith.constant 1.000000e+00 : f32
      %65 = vector.broadcast %cst_40 : f32 to vector<1x256xf32>
      %66 = arith.addf %65, %64 : vector<1x256xf32>
      %67 = tpu.reciprocal %66 {approx = true} : vector<1x256xf32> -> vector<1x256xf32>
      %68 = arith.mulf %61, %67 : vector<1x256xf32>
      %c0_41 = arith.constant 0 : index
      %c0_42 = arith.constant 0 : index
      %69 = vector.load %arg11[%c0_41, %c0_42] : memref<1x256xf32, #tpu.memory_space<vmem>>, vector<1x256xf32>
      %70 = arith.mulf %68, %69 : vector<1x256xf32>
      %cst_43 = arith.constant dense<0.000000e+00> : vector<1xf32>
      %71 = vector.multi_reduction <add>, %70, %cst_43 [1] : vector<1x256xf32> to vector<1xf32>
      %72 = vector.shape_cast %71 : vector<1xf32> to vector<1x1xf32>
      %c0_44 = arith.constant 0 : index
      %c0_45 = arith.constant 0 : index
      %73 = vector.load %arg12[%c0_44, %c0_45] : memref<1x1xf32, #tpu.memory_space<vmem>>, vector<1x1xf32>
      %74 = arith.addf %72, %73 : vector<1x1xf32>
      %75 = arith.negf %74 : vector<1x1xf32>
      %76 = math.exp %75 : vector<1x1xf32>
      %cst_46 = arith.constant 1.000000e+00 : f32
      %77 = vector.broadcast %cst_46 : f32 to vector<1x1xf32>
      %78 = arith.addf %77, %76 : vector<1x1xf32>
      %79 = arith.divf %77, %78 : vector<1x1xf32>
      %80 = arith.truncf %56 : vector<1x512xf32> to vector<1x512xbf16>
      %c0_47 = arith.constant 0 : index
      %c0_48 = arith.constant 0 : index
      %81 = vector.load %arg13[%c0_47, %c0_48] : memref<512x128xbf16, #tpu.memory_space<vmem>>, vector<512x128xbf16>
      %cst_49 = arith.constant dense<0.000000e+00> : vector<1x128xf32>
      %82 = tpu.matmul %80, %81, %cst_49 {dimension_numbers = #tpu.dot_dimension_numbers<[1], [0], [0], [1], [0, 0, 1, 1], [], []>} : vector<1x512xbf16>, vector<512x128xbf16>, vector<1x128xf32> -> vector<1x128xf32>
      %c0_50 = arith.constant 0 : index
      %c0_51 = arith.constant 0 : index
      %83 = vector.load %arg14[%c0_50, %c0_51] : memref<1x128xf32, #tpu.memory_space<vmem>>, vector<1x128xf32>
      %84 = arith.addf %82, %83 : vector<1x128xf32>
      %85 = vector.broadcast %79 : vector<1x1xf32> to vector<1x128xf32>
      %86 = arith.mulf %84, %85 : vector<1x128xf32>
      %c0_52 = arith.constant 0 : index
      %c0_53 = arith.constant 0 : index
      %c0_54 = arith.constant 0 : index
      %87 = vector.load %arg15[%c0_52, %c0_53, %c0_54] : memref<1x1x128xf32, #tpu.memory_space<vmem>>, vector<1x1x128xf32>
      %88 = vector.shape_cast %87 : vector<1x1x128xf32> to vector<1x128xf32>
      %89 = vector.shape_cast %86 : vector<1x128xf32> to vector<1x1x128xf32>
      tpu.vector_store %arg15[%c0_52, %c0_53, %c0_54], %89 {strides = array<i32>} : memref<1x1x128xf32, #tpu.memory_space<vmem>>, vector<1x1x128xf32>,
    } else {
    }
    return
  }
  func.func @transform_0(%arg0: i32, %arg1: i32) -> (i32, i32, i32) {
    %c0_i32 = arith.constant 0 : i32
    %c0_i32_0 = arith.constant 0 : i32
    return %arg0, %arg1, %c0_i32 : i32, i32, i32
  }
  func.func @transform_1(%arg0: i32, %arg1: i32) -> (i32, i32) {
    %c0_i32 = arith.constant 0 : i32
    %c0_i32_0 = arith.constant 0 : i32
    %c0_i32_1 = arith.constant 0 : i32
    return %c0_i32, %c0_i32_0 : i32, i32
  }
  func.func @transform_2(%arg0: i32, %arg1: i32) -> (i32, i32) {
    %c0_i32 = arith.constant 0 : i32
    %c0_i32_0 = arith.constant 0 : i32
    %c0_i32_1 = arith.constant 0 : i32
    return %c0_i32, %c0_i32_0 : i32, i32
  }
  func.func @transform_3(%arg0: i32, %arg1: i32) -> (i32, i32) {
    %c0_i32 = arith.constant 0 : i32
    %c0_i32_0 = arith.constant 0 : i32
    %c0_i32_1 = arith.constant 0 : i32
    return %c0_i32, %c0_i32_0 : i32, i32
  }
  func.func @transform_4(%arg0: i32, %arg1: i32) -> (i32, i32) {
    %c0_i32 = arith.constant 0 : i32
    %c0_i32_0 = arith.constant 0 : i32
    %c0_i32_1 = arith.constant 0 : i32
    return %c0_i32, %c0_i32_0 : i32, i32
  }
  func.func @transform_5(%arg0: i32, %arg1: i32) -> (i32, i32) {
    %c0_i32 = arith.constant 0 : i32
    %c0_i32_0 = arith.constant 0 : i32
    %c0_i32_1 = arith.constant 0 : i32
    return %c0_i32, %c0_i32_0 : i32, i32
  }
  func.func @transform_6(%arg0: i32, %arg1: i32) -> (i32, i32) {
    %c0_i32 = arith.constant 0 : i32
    %c0_i32_0 = arith.constant 0 : i32
    %c0_i32_1 = arith.constant 0 : i32
    return %c0_i32, %c0_i32_0 : i32, i32
  }
  func.func @transform_7(%arg0: i32, %arg1: i32) -> (i32, i32) {
    %c0_i32 = arith.constant 0 : i32
    %c0_i32_0 = arith.constant 0 : i32
    %c0_i32_1 = arith.constant 0 : i32
    return %c0_i32, %c0_i32_0 : i32, i32
  }
  func.func @transform_8(%arg0: i32, %arg1: i32) -> (i32, i32) {
    %c0_i32 = arith.constant 0 : i32
    %c0_i32_0 = arith.constant 0 : i32
    %c0_i32_1 = arith.constant 0 : i32
    return %c0_i32, %c0_i32_0 : i32, i32
  }
  func.func @transform_9(%arg0: i32, %arg1: i32) -> (i32, i32) {
    %c0_i32 = arith.constant 0 : i32
    %c0_i32_0 = arith.constant 0 : i32
    %c0_i32_1 = arith.constant 0 : i32
    return %c0_i32, %c0_i32_0 : i32, i32
  }
  func.func @transform_10(%arg0: i32, %arg1: i32) -> (i32, i32) {
    %c0_i32 = arith.constant 0 : i32
    %c0_i32_0 = arith.constant 0 : i32
    %c0_i32_1 = arith.constant 0 : i32
    return %c0_i32, %c0_i32_0 : i32, i32
  }
  func.func @transform_11(%arg0: i32, %arg1: i32) -> (i32, i32) {
    %c0_i32 = arith.constant 0 : i32
    %c0_i32_0 = arith.constant 0 : i32
    %c0_i32_1 = arith.constant 0 : i32
    return %c0_i32, %c0_i32_0 : i32, i32
  }
  func.func @transform_12(%arg0: i32, %arg1: i32) -> (i32, i32) {
    %c0_i32 = arith.constant 0 : i32
    %c0_i32_0 = arith.constant 0 : i32
    %c0_i32_1 = arith.constant 0 : i32
    return %c0_i32, %c0_i32_0 : i32, i32
  }
  func.func @transform_13(%arg0: i32, %arg1: i32) -> (i32, i32, i32) {
    %c0_i32 = arith.constant 0 : i32
    %c0_i32_0 = arith.constant 0 : i32
    %c0_i32_1 = arith.constant 0 : i32
    return %arg0, %c0_i32, %c0_i32_0 : i32, i32, i32
  }
}

</mosaic_0001>

<llo_original>
// kernel: efficientnetv2_pad_forward.1
$region0: #{efficientnetv2_pad_forward.1}
  #allocation0 [shape = 'u32[]', space=smem, size = 0x4, offset = 0x4, fixed_abs, tag = 'smem constant byte address 0x4 - core index']
  #allocation1 [shape = 'u32[72,128]{1,0:T(1,128)}', space=vmem, size = 0x9000, scoped, tag = 'internal scratch']
  #allocation2 [shape = 'f32[8,1280]{1,0:T(8,128)}', space=vmem, size = 0xa000, scoped, tag = 'scratch operand']
  #allocation3 [shape = 'f32[1,1]{1,0:T(1,128)S(1)}', space=vmem, size = 0x200, scoped, tag = 'scoped memory for efficientnetv2_pad_forward.1']
  %s0 = inlined_call_operand.vmem [shape: bf16[2,64,32], index: 0, kind: input, shape index: {}]
  %s1 = inlined_call_operand.vmem [shape: bf16[32,32], index: 1, kind: input, shape index: {}]
  %s2 = inlined_call_operand.vmem [shape: f32[1,32], index: 2, kind: input, shape index: {}]
  %s3 = inlined_call_operand.vmem [shape: bf16[32,1280], index: 3, kind: input, shape index: {}]
  %s4 = inlined_call_operand.vmem [shape: f32[1,1280], index: 4, kind: input, shape index: {}]
  %s5 = inlined_call_operand.vmem [shape: bf16[1280,1024], index: 5, kind: input, shape index: {}]
  %s6 = inlined_call_operand.vmem [shape: f32[1,1024], index: 6, kind: input, shape index: {}]
  %s7 = inlined_call_operand.vmem [shape: bf16[512,256], index: 7, kind: input, shape index: {}]
  %s8 = inlined_call_operand.vmem [shape: f32[1,256], index: 8, kind: input, shape index: {}]
  %s9 = inlined_call_operand.vmem [shape: f32[1,256], index: 9, kind: input, shape index: {}]
  %s10 = inlined_call_operand.<no memory space> [shape: f32[1,1], index: 10, kind: input, shape index: {}]
  %s11 = inlined_call_operand.vmem [shape: bf16[512,128], index: 11, kind: input, shape index: {}]
  %s12 = inlined_call_operand.vmem [shape: f32[1,128], index: 12, kind: input, shape index: {}]
  %s13 = inlined_call_operand.vmem [shape: f32[2,1,128], index: 13, kind: output, shape index: {}]
  %s14 = sld [smem:[#allocation0]]
  $region93: #{efficientnetv2_pad_forward.1} parent=0
    _
  %s16 = ssub.s32 1, %s14
  %s17 = scalar_select 0, %s16, %s14
  %v18 = vstv %s10
  %19 = vst [vmem:[#allocation3] sm:$0x1] %v18
  loop: start=0, step=1, limit=4
  $region2: #{efficientnetv2_pad_forward.1} parent=0 // loop_pre_header
    _
  $region3: #{efficientnetv2_pad_forward.1} parent=0 // loop_header
    %s21 = sphi 0, %s25
    %p22 = scmp.ge.s32.totalorder %s21, 4
    %s28 = sphi 0, %s40
    %s29 = sphi 0, %s36
    %s30 = sphi 0, %s28
    %s31 = sphi 0, %s29
    %s32 = sphi 0, %s30
    %s33 = sphi 0, %s31
    %s45 = sphi 0, %s47
    %s48 = sphi 0, %s45
    %s49 = sphi 0, %s48
    %s65 = sphi 0, %s49
    %s69 = sphi 0, %s69
    %s71 = sphi 0, %s69
    %s72 = sphi 0, %s71
    %s86 = sphi 0, %s72
    %s90 = sphi 0, %s90
    %s92 = sphi 0, %s90
    %s93 = sphi 0, %s92
    %s107 = sphi 0, %s93
    %s111 = sphi 0, %s111
    %s113 = sphi 0, %s111
    %s114 = sphi 0, %s113
    %s128 = sphi 0, %s114
    %s132 = sphi 0, %s132
    %s134 = sphi 0, %s132
    %s135 = sphi 0, %s134
    %s149 = sphi 0, %s135
    %s153 = sphi 0, %s153
    %s155 = sphi 0, %s153
    %s156 = sphi 0, %s155
    %s170 = sphi 0, %s156
    %s174 = sphi 0, %s174
    %s176 = sphi 0, %s174
    %s177 = sphi 0, %s176
    %s191 = sphi 0, %s177
    %s195 = sphi 0, %s195
    %s197 = sphi 0, %s195
    %s198 = sphi 0, %s197
    %s212 = sphi 0, %s198
    %s216 = sphi 0, %s216
    %s218 = sphi 0, %s216
    %s219 = sphi 0, %s218
    %s233 = sphi 0, %s219
    %s237 = sphi 0, %s237
    %s239 = sphi 0, %s237
    %s240 = sphi 0, %s239
    %s254 = sphi 0, %s240
    %s258 = sphi 0, %s258
    %s260 = sphi 0, %s258
    %s261 = sphi 0, %s260
    %s275 = sphi 0, %s261
    %s279 = sphi 0, %s279
    %s281 = sphi 0, %s279
    %s282 = sphi 0, %s281
    %s296 = sphi 0, %s282
    %s300 = sphi 0, %s300
    %s302 = sphi 0, %s300
    %s303 = sphi 0, %s302
    %s317 = sphi 0, %s303
    %s323 = sphi 0, %s325
    %s326 = sphi 0, %s323
    %s327 = sphi 0, %s326
    %s343 = sphi 0, %s327
  $region4: #{efficientnetv2_pad_forward.1} parent=0 // loop_header_branch
    %24 = sbr.rel (%p22) target = $region8
  $region5: #{efficientnetv2_pad_forward.1} parent=0 // loop_body
    %s26 = ssub.s32 %s21, 1
    %s27 = ssub.s32 %s21, 2
    %s34 = sadd.s32 1, %s29
    %p35 = scmp.ge.s32.totalorder %s34, 1
    %s36 = scalar_select %p35, 0, %s34
    %s37 = sadd.s32 1, %s28
    %s38 = scalar_select %p35, %s37, %s28
    %p39 = scmp.ge.s32.totalorder %s38, 2
    %s40 = scalar_select %p39, 0, %s38
    %s41 = ssub.s32 %s28, %s40
    %s42 = ssub.s32 %s29, %s36
    %s43 = sor.u32 %s41, %s42
    %p44 = scmp.eq.s32.totalorder %s43, 0
    %s46 = sadd.s32 %s45, 1
    %s47 = scalar_select %p44, %s45, %s46
    %p50 = pneg %p44
    %p51 = scmp.eq.s32.totalorder %s21, 1
    %p52 = por %p50, %p51
    %p53 = scmp.ne.s32.totalorder %s45, %s48
    %p54 = scmp.eq.s32.totalorder %s21, 0
    %p55 = por %p53, %p54
    %p56 = scmp.ne.s32.totalorder %s45, %s48
    %p57 = scmp.eq.s32.totalorder %s26, 1
    %p58 = por %p56, %p57
    %p59 = scmp.ne.s32.totalorder %s48, %s49
    %p60 = scmp.eq.s32.totalorder %s26, 0
    %p61 = por %p59, %p60
    %p62 = scmp.ne.s32.totalorder %s48, %s49
    %p63 = scmp.eq.s32.totalorder %s27, 1
    %p64 = por %p62, %p63
    %p66 = scmp.ne.s32.totalorder %s49, %s65
    %p67 = scmp.eq.s32.totalorder %s27, 0
    %p68 = por %p66, %p67
    %s70 = sadd.s32 %s69, 1
    %p73 = scmp.eq.s32.totalorder %s21, 1
    %p74 = scmp.ne.s32.totalorder %s69, %s71
    %p75 = scmp.eq.s32.totalorder %s21, 0
    %p76 = por %p74, %p75
    %p77 = scmp.ne.s32.totalorder %s69, %s71
    %p78 = scmp.eq.s32.totalorder %s26, 1
    %p79 = por %p77, %p78
    %p80 = scmp.ne.s32.totalorder %s71, %s72
    %p81 = scmp.eq.s32.totalorder %s26, 0
    %p82 = por %p80, %p81
    %p83 = scmp.ne.s32.totalorder %s71, %s72
    %p84 = scmp.eq.s32.totalorder %s27, 1
    %p85 = por %p83, %p84
    %p87 = scmp.ne.s32.totalorder %s72, %s86
    %p88 = scmp.eq.s32.totalorder %s27, 0
    %p89 = por %p87, %p88
    %s91 = sadd.s32 %s90, 1
    %p94 = scmp.eq.s32.totalorder %s21, 1
    %p95 = scmp.ne.s32.totalorder %s90, %s92
    %p96 = scmp.eq.s32.totalorder %s21, 0
    %p97 = por %p95, %p96
    %p98 = scmp.ne.s32.totalorder %s90, %s92
    %p99 = scmp.eq.s32.totalorder %s26, 1
    %p100 = por %p98, %p99
    %p101 = scmp.ne.s32.totalorder %s92, %s93
    %p102 = scmp.eq.s32.totalorder %s26, 0
    %p103 = por %p101, %p102
    %p104 = scmp.ne.s32.totalorder %s92, %s93
    %p105 = scmp.eq.s32.totalorder %s27, 1
    %p106 = por %p104, %p105
    %p108 = scmp.ne.s32.totalorder %s93, %s107
    %p109 = scmp.eq.s32.totalorder %s27, 0
    %p110 = por %p108, %p109
    %s112 = sadd.s32 %s111, 1
    %p115 = scmp.eq.s32.totalorder %s21, 1
    %p116 = scmp.ne.s32.totalorder %s111, %s113
    %p117 = scmp.eq.s32.totalorder %s21, 0
    %p118 = por %p116, %p117
    %p119 = scmp.ne.s32.totalorder %s111, %s113
    %p120 = scmp.eq.s32.totalorder %s26, 1
    %p121 = por %p119, %p120
    %p122 = scmp.ne.s32.totalorder %s113, %s114
    %p123 = scmp.eq.s32.totalorder %s26, 0
    %p124 = por %p122, %p123
    %p125 = scmp.ne.s32.totalorder %s113, %s114
    %p126 = scmp.eq.s32.totalorder %s27, 1
    %p127 = por %p125, %p126
    %p129 = scmp.ne.s32.totalorder %s114, %s128
    %p130 = scmp.eq.s32.totalorder %s27, 0
    %p131 = por %p129, %p130
    %s133 = sadd.s32 %s132, 1
    %p136 = scmp.eq.s32.totalorder %s21, 1
    %p137 = scmp.ne.s32.totalorder %s132, %s134
    %p138 = scmp.eq.s32.totalorder %s21, 0
    %p139 = por %p137, %p138
    %p140 = scmp.ne.s32.totalorder %s132, %s134
    %p141 = scmp.eq.s32.totalorder %s26, 1
    %p142 = por %p140, %p141
    %p143 = scmp.ne.s32.totalorder %s134, %s135
    %p144 = scmp.eq.s32.totalorder %s26, 0
    %p145 = por %p143, %p144
    %p146 = scmp.ne.s32.totalorder %s134, %s135
    %p147 = scmp.eq.s32.totalorder %s27, 1
    %p148 = por %p146, %p147
    %p150 = scmp.ne.s32.totalorder %s135, %s149
    %p151 = scmp.eq.s32.totalorder %s27, 0
    %p152 = por %p150, %p151
    %s154 = sadd.s32 %s153, 1
    %p157 = scmp.eq.s32.totalorder %s21, 1
    %p158 = scmp.ne.s32.totalorder %s153, %s155
    %p159 = scmp.eq.s32.totalorder %s21, 0
    %p160 = por %p158, %p159
    %p161 = scmp.ne.s32.totalorder %s153, %s155
    %p162 = scmp.eq.s32.totalorder %s26, 1
    %p163 = por %p161, %p162
    %p164 = scmp.ne.s32.totalorder %s155, %s156
    %p165 = scmp.eq.s32.totalorder %s26, 0
    %p166 = por %p164, %p165
    %p167 = scmp.ne.s32.totalorder %s155, %s156
    %p168 = scmp.eq.s32.totalorder %s27, 1
    %p169 = por %p167, %p168
    %p171 = scmp.ne.s32.totalorder %s156, %s170
    %p172 = scmp.eq.s32.totalorder %s27, 0
    %p173 = por %p171, %p172
    %s175 = sadd.s32 %s174, 1
    %p178 = scmp.eq.s32.totalorder %s21, 1
    %p179 = scmp.ne.s32.totalorder %s174, %s176
    %p180 = scmp.eq.s32.totalorder %s21, 0
    %p181 = por %p179, %p180
    %p182 = scmp.ne.s32.totalorder %s174, %s176
    %p183 = scmp.eq.s32.totalorder %s26, 1
    %p184 = por %p182, %p183
    %p185 = scmp.ne.s32.totalorder %s176, %s177
    %p186 = scmp.eq.s32.totalorder %s26, 0
    %p187 = por %p185, %p186
    %p188 = scmp.ne.s32.totalorder %s176, %s177
    %p189 = scmp.eq.s32.totalorder %s27, 1
    %p190 = por %p188, %p189
    %p192 = scmp.ne.s32.totalorder %s177, %s191
    %p193 = scmp.eq.s32.totalorder %s27, 0
    %p194 = por %p192, %p193
    %s196 = sadd.s32 %s195, 1
    %p199 = scmp.eq.s32.totalorder %s21, 1
    %p200 = scmp.ne.s32.totalorder %s195, %s197
    %p201 = scmp.eq.s32.totalorder %s21, 0
    %p202 = por %p200, %p201
    %p203 = scmp.ne.s32.totalorder %s195, %s197
    %p204 = scmp.eq.s32.totalorder %s26, 1
    %p205 = por %p203, %p204
    %p206 = scmp.ne.s32.totalorder %s197, %s198
    %p207 = scmp.eq.s32.totalorder %s26, 0
    %p208 = por %p206, %p207
    %p209 = scmp.ne.s32.totalorder %s197, %s198
    %p210 = scmp.eq.s32.totalorder %s27, 1
    %p211 = por %p209, %p210
    %p213 = scmp.ne.s32.totalorder %s198, %s212
    %p214 = scmp.eq.s32.totalorder %s27, 0
    %p215 = por %p213, %p214
    %s217 = sadd.s32 %s216, 1
    %p220 = scmp.eq.s32.totalorder %s21, 1
    %p221 = scmp.ne.s32.totalorder %s216, %s218
    %p222 = scmp.eq.s32.totalorder %s21, 0
    %p223 = por %p221, %p222
    %p224 = scmp.ne.s32.totalorder %s216, %s218
    %p225 = scmp.eq.s32.totalorder %s26, 1
    %p226 = por %p224, %p225
    %p227 = scmp.ne.s32.totalorder %s218, %s219
    %p228 = scmp.eq.s32.totalorder %s26, 0
    %p229 = por %p227, %p228
    %p230 = scmp.ne.s32.totalorder %s218, %s219
    %p231 = scmp.eq.s32.totalorder %s27, 1
    %p232 = por %p230, %p231
    %p234 = scmp.ne.s32.totalorder %s219, %s233
    %p235 = scmp.eq.s32.totalorder %s27, 0
    %p236 = por %p234, %p235
    %s238 = sadd.s32 %s237, 1
    %p241 = scmp.eq.s32.totalorder %s21, 1
    %p242 = scmp.ne.s32.totalorder %s237, %s239
    %p243 = scmp.eq.s32.totalorder %s21, 0
    %p244 = por %p242, %p243
    %p245 = scmp.ne.s32.totalorder %s237, %s239
    %p246 = scmp.eq.s32.totalorder %s26, 1
    %p247 = por %p245, %p246
    %p248 = scmp.ne.s32.totalorder %s239, %s240
    %p249 = scmp.eq.s32.totalorder %s26, 0
    %p250 = por %p248, %p249
    %p251 = scmp.ne.s32.totalorder %s239, %s240
    %p252 = scmp.eq.s32.totalorder %s27, 1
    %p253 = por %p251, %p252
    %p255 = scmp.ne.s32.totalorder %s240, %s254
    %p256 = scmp.eq.s32.totalorder %s27, 0
    %p257 = por %p255, %p256
    %s259 = sadd.s32 %s258, 1
    %p262 = scmp.eq.s32.totalorder %s21, 1
    %p263 = scmp.ne.s32.totalorder %s258, %s260
    %p264 = scmp.eq.s32.totalorder %s21, 0
    %p265 = por %p263, %p264
    %p266 = scmp.ne.s32.totalorder %s258, %s260
    %p267 = scmp.eq.s32.totalorder %s26, 1
    %p268 = por %p266, %p267
    %p269 = scmp.ne.s32.totalorder %s260, %s261
    %p270 = scmp.eq.s32.totalorder %s26, 0
    %p271 = por %p269, %p270
    %p272 = scmp.ne.s32.totalorder %s260, %s261
    %p273 = scmp.eq.s32.totalorder %s27, 1
    %p274 = por %p272, %p273
    %p276 = scmp.ne.s32.totalorder %s261, %s275
    %p277 = scmp.eq.s32.totalorder %s27, 0
    %p278 = por %p276, %p277
    %s280 = sadd.s32 %s279, 1
    %p283 = scmp.eq.s32.totalorder %s21, 1
    %p284 = scmp.ne.s32.totalorder %s279, %s281
    %p285 = scmp.eq.s32.totalorder %s21, 0
    %p286 = por %p284, %p285
    %p287 = scmp.ne.s32.totalorder %s279, %s281
    %p288 = scmp.eq.s32.totalorder %s26, 1
    %p289 = por %p287, %p288
    %p290 = scmp.ne.s32.totalorder %s281, %s282
    %p291 = scmp.eq.s32.totalorder %s26, 0
    %p292 = por %p290, %p291
    %p293 = scmp.ne.s32.totalorder %s281, %s282
    %p294 = scmp.eq.s32.totalorder %s27, 1
    %p295 = por %p293, %p294
    %p297 = scmp.ne.s32.totalorder %s282, %s296
    %p298 = scmp.eq.s32.totalorder %s27, 0
    %p299 = por %p297, %p298
    %s301 = sadd.s32 %s300, 1
    %p304 = scmp.eq.s32.totalorder %s21, 1
    %p305 = scmp.ne.s32.totalorder %s300, %s302
    %p306 = scmp.eq.s32.totalorder %s21, 0
    %p307 = por %p305, %p306
    %p308 = scmp.ne.s32.totalorder %s300, %s302
    %p309 = scmp.eq.s32.totalorder %s26, 1
    %p310 = por %p308, %p309
    %p311 = scmp.ne.s32.totalorder %s302, %s303
    %p312 = scmp.eq.s32.totalorder %s26, 0
    %p313 = por %p311, %p312
    %p314 = scmp.ne.s32.totalorder %s302, %s303
    %p315 = scmp.eq.s32.totalorder %s27, 1
    %p316 = por %p314, %p315
    %p318 = scmp.ne.s32.totalorder %s303, %s317
    %p319 = scmp.eq.s32.totalorder %s27, 0
    %p320 = por %p318, %p319
    %s321 = ssub.s32 %s28, %s40
    %p322 = scmp.eq.s32.totalorder %s321, 0
    %s324 = sadd.s32 %s323, 1
    %s325 = scalar_select %p322, %s323, %s324
    %p328 = pneg %p322
    %p329 = scmp.eq.s32.totalorder %s21, 1
    %p330 = por %p328, %p329
    %p331 = scmp.ne.s32.totalorder %s323, %s326
    %p332 = scmp.eq.s32.totalorder %s21, 0
    %p333 = por %p331, %p332
    %p334 = scmp.ne.s32.totalorder %s323, %s326
    %p335 = scmp.eq.s32.totalorder %s26, 1
    %p336 = por %p334, %p335
    %p337 = scmp.ne.s32.totalorder %s326, %s327
    %p338 = scmp.eq.s32.totalorder %s26, 0
    %p339 = por %p337, %p338
    %p340 = scmp.ne.s32.totalorder %s326, %s327
    %p341 = scmp.eq.s32.totalorder %s27, 1
    %p342 = por %p340, %p341
    %p344 = scmp.ne.s32.totalorder %s327, %s343
    %p345 = scmp.eq.s32.totalorder %s27, 0
    %p346 = por %p344, %p345
    %p347 = scmp.le.s32.totalorder 1, %s21
    %p348 = scmp.lt.s32.totalorder %s21, 3
    %p349 = pnand %p347, %p348
    %p350 = pneg %p349
    // Predicated region
    $region9: #{efficientnetv2_pad_forward.1} parent=5 // pred_check
      _
    $region10: #{efficientnetv2_pad_forward.1} parent=5 // pred_check_branch
      %352 = sbr.rel (%p349) target = $region12
    $region11: #{efficientnetv2_pad_forward.1} parent=5 // pred_region
      %s353 = ssub.s32 %s21, 1
      // Predicated region
      $region13: #{efficientnetv2_pad_forward.1} parent=11 // pred_check
        %p354 = pneg %p82
      $region14: #{efficientnetv2_pad_forward.1} parent=11 // pred_check_branch
        %356 = sbr.rel (%p354) target = $region16
      $region15: #{efficientnetv2_pad_forward.1} parent=11 // pred_region
        _
      $region16: #{efficientnetv2_pad_forward.1} parent=11 // pred_fallthru
        _
      // Predicated region
      $region17: #{efficientnetv2_pad_forward.1} parent=11 // pred_check
        %p357 = pneg %p103
      $region18: #{efficientnetv2_pad_forward.1} parent=11 // pred_check_branch
        %359 = sbr.rel (%p357) target = $region20
      $region19: #{efficientnetv2_pad_forward.1} parent=11 // pred_region
        _
      $region20: #{efficientnetv2_pad_forward.1} parent=11 // pred_fallthru
        _
      // Predicated region
      $region21: #{efficientnetv2_pad_forward.1} parent=11 // pred_check
        %p360 = pneg %p124
      $region22: #{efficientnetv2_pad_forward.1} parent=11 // pred_check_branch
        %362 = sbr.rel (%p360) target = $region24
      $region23: #{efficientnetv2_pad_forward.1} parent=11 // pred_region
        _
      $region24: #{efficientnetv2_pad_forward.1} parent=11 // pred_fallthru
        _
      // Predicated region
      $region25: #{efficientnetv2_pad_forward.1} parent=11 // pred_check
        %p363 = pneg %p145
      $region26: #{efficientnetv2_pad_forward.1} parent=11 // pred_check_branch
        %365 = sbr.rel (%p363) target = $region28
      $region27: #{efficientnetv2_pad_forward.1} parent=11 // pred_region
        _
      $region28: #{efficientnetv2_pad_forward.1} parent=11 // pred_fallthru
        _
      // Predicated region
      $region29: #{efficientnetv2_pad_forward.1} parent=11 // pred_check
        %p366 = pneg %p166
      $region30: #{efficientnetv2_pad_forward.1} parent=11 // pred_check_branch
        %368 = sbr.rel (%p366) target = $region32
      $region31: #{efficientnetv2_pad_forward.1} parent=11 // pred_region
        _
      $region32: #{efficientnetv2_pad_forward.1} parent=11 // pred_fallthru
        _
      // Predicated region
      $region33: #{efficientnetv2_pad_forward.1} parent=11 // pred_check
        %p369 = pneg %p187
      $region34: #{efficientnetv2_pad_forward.1} parent=11 // pred_check_branch
        %371 = sbr.rel (%p369) target = $region36
      $region35: #{efficientnetv2_pad_forward.1} parent=11 // pred_region
        _
      $region36: #{efficientnetv2_pad_forward.1} parent=11 // pred_fallthru
        _
      // Predicated region
      $region37: #{efficientnetv2_pad_forward.1} parent=11 // pred_check
        %p372 = pneg %p208
      $region38: #{efficientnetv2_pad_forward.1} parent=11 // pred_check_branch
        %374 = sbr.rel (%p372) target = $region40
      $region39: #{efficientnetv2_pad_forward.1} parent=11 // pred_region
        _
      $region40: #{efficientnetv2_pad_forward.1} parent=11 // pred_fallthru
        _
      // Predicated region
      $region41: #{efficientnetv2_pad_forward.1} parent=11 // pred_check
        %p375 = pneg %p229
      $region42: #{efficientnetv2_pad_forward.1} parent=11 // pred_check_branch
        %377 = sbr.rel (%p375) target = $region44
      $region43: #{efficientnetv2_pad_forward.1} parent=11 // pred_region
        _
      $region44: #{efficientnetv2_pad_forward.1} parent=11 // pred_fallthru
        _
      // Predicated region
      $region45: #{efficientnetv2_pad_forward.1} parent=11 // pred_check
        %p378 = pneg %p250
      $region46: #{efficientnetv2_pad_forward.1} parent=11 // pred_check_branch
        %380 = sbr.rel (%p378) target = $region48
      $region47: #{efficientnetv2_pad_forward.1} parent=11 // pred_region
        _
      $region48: #{efficientnetv2_pad_forward.1} parent=11 // pred_fallthru
        _
      // Predicated region
      $region49: #{efficientnetv2_pad_forward.1} parent=11 // pred_check
        %p381 = pneg %p271
      $region50: #{efficientnetv2_pad_forward.1} parent=11 // pred_check_branch
        %383 = sbr.rel (%p381) target = $region52
      $region51: #{efficientnetv2_pad_forward.1} parent=11 // pred_region
        _
      $region52: #{efficientnetv2_pad_forward.1} parent=11 // pred_fallthru
        _
      // Predicated region
      $region53: #{efficientnetv2_pad_forward.1} parent=11 // pred_check
        %p384 = pneg %p292
      $region54: #{efficientnetv2_pad_forward.1} parent=11 // pred_check_branch
        %386 = sbr.rel (%p384) target = $region56
      $region55: #{efficientnetv2_pad_forward.1} parent=11 // pred_region
        _
      $region56: #{efficientnetv2_pad_forward.1} parent=11 // pred_fallthru
        _
      // Predicated region
      $region57: #{efficientnetv2_pad_forward.1} parent=11 // pred_check
        %p387 = pneg %p313
      $region58: #{efficientnetv2_pad_forward.1} parent=11 // pred_check_branch
        %389 = sbr.rel (%p387) target = $region60
      $region59: #{efficientnetv2_pad_forward.1} parent=11 // pred_region
        _
      $region60: #{efficientnetv2_pad_forward.1} parent=11 // pred_fallthru
        _
    $region12: #{efficientnetv2_pad_forward.1} parent=5 // pred_fallthru
      _
    %p390 = scmp.lt.s32.totalorder %s21, 2
    // Predicated region
    $region61: #{efficientnetv2_pad_forward.1} parent=5 // pred_check
      %p391 = pneg %p390
    $region62: #{efficientnetv2_pad_forward.1} parent=5 // pred_check_branch
      %393 = sbr.rel (%p391) target = $region64
    $region63: #{efficientnetv2_pad_forward.1} parent=5 // pred_region
      // Predicated region
      $region65: #{efficientnetv2_pad_forward.1} parent=63 // pred_check
        %p394 = pneg %p55
      $region66: #{efficientnetv2_pad_forward.1} parent=63 // pred_check_branch
        %396 = sbr.rel (%p394) target = $region68
      $region67: #{efficientnetv2_pad_forward.1} parent=63 // pred_region
        %s397 = smul.u32 8, %s29
        %p398 = scmp.lt.s32.totalorder %s28, 1
        %s399 = scalar_select %p398, %s28, 1
        %p400 = scmp.lt.s32.totalorder %s397, 7
        %s401 = scalar_select %p400, %s397, 7
        %s402 = smul.addr %s399, 8
        %s403 = sadd.s32 %s401, %s402
        %s404 = smul.addr %s403, 4
        %s405 = scalar_lea.vmem %s0, %s404
        %s406 = smul.u32 8, %s29
      $region68: #{efficientnetv2_pad_forward.1} parent=63 // pred_fallthru
        _
    $region64: #{efficientnetv2_pad_forward.1} parent=5 // pred_fallthru
      _
    %p407 = scmp.le.s32.totalorder 1, %s21
    %p408 = scmp.lt.s32.totalorder %s21, 3
    %p409 = pnand %p407, %p408
    %p410 = pneg %p409
    // Predicated region
    $region69: #{efficientnetv2_pad_forward.1} parent=5 // pred_check
      _
    $region70: #{efficientnetv2_pad_forward.1} parent=5 // pred_check_branch
      %412 = sbr.rel (%p409) target = $region72
    $region71: #{efficientnetv2_pad_forward.1} parent=5 // pred_region
      %s413 = ssub.s32 %s21, 1
      %s414 = smul.u32 8, %s31
      %p415 = scmp.lt.s32.totalorder %s30, 1
      %s416 = scalar_select %p415, %s30, 1
      %p417 = scmp.lt.s32.totalorder %s414, 7
      %s418 = scalar_select %p417, %s414, 7
      %s419 = smul.addr %s416, 8
      %s420 = sadd.s32 %s418, %s419
      %s421 = smul.addr %s420, 4
      %s422 = scalar_lea.vmem %s0, %s421
      %p423 = pneg %p61
      %p424 = pneg %p58
      %p425 = pneg %p82
      %p426 = pneg %p79
      %p427 = pneg %p103
      %p428 = pneg %p100
      %p429 = pneg %p124
      %p430 = pneg %p121
      %p431 = pneg %p145
      %p432 = pneg %p142
      %p433 = pneg %p166
      %p434 = pneg %p163
      %p435 = pneg %p187
      %p436 = pneg %p184
      %p437 = pneg %p208
      %p438 = pneg %p205
      %p439 = pneg %p229
      %p440 = pneg %p226
      %p441 = pneg %p250
      %p442 = pneg %p247
      %p443 = pneg %p271
      %p444 = pneg %p268
      %p445 = pneg %p292
      %p446 = pneg %p289
      %p447 = pneg %p313
      %p448 = pneg %p310
      %p449 = pneg %p339
      %p450 = pneg %p336
      %p451 = scmp.lt.s32.totalorder %s30, 1
      %s452 = scalar_select %p451, %s30, 1
      %s453 = scalar_lea.vmem %s13, %s452
      %s454 = smul.u32 8, %s31
      %p455 = scmp.lt.s32.totalorder %s30, 1
      %s456 = scalar_select %p455, %s30, 1
      %p457 = scmp.lt.s32.totalorder %s454, 7
      %s458 = scalar_select %p457, %s454, 7
      %s459 = smul.addr %s456, 8
      %s460 = sadd.s32 %s458, %s459
      %s461 = smul.addr %s460, 4
      %s462 = scalar_lea.vmem %s0, %s461
      %s463 = smul.u32 8, %s31
      %p464 = scmp.lt.s32.totalorder %s30, 1
      %s465 = scalar_select %p464, %s30, 1
      %s466 = scalar_lea.vmem %s13, %s465
      %p468 = scmp.eq.s32.totalorder %s31, 0
      // Predicated region
      $region73: #{efficientnetv2_pad_forward.1} parent=71 // pred_check
        %p469 = pneg %p468
      $region74: #{efficientnetv2_pad_forward.1} parent=71 // pred_check_branch
        %471 = sbr.rel (%p469) target = $region76
      $region75: #{efficientnetv2_pad_forward.1} parent=71 // pred_region
        %472 = vst [vmem:[#allocation2] sm:$0xff] 0.0
        %473 = vst [vmem:[#allocation2 + $0x8] sm:$0xff] 0.0
        %474 = vst [vmem:[#allocation2 + $0x10] sm:$0xff] 0.0
        %475 = vst [vmem:[#allocation2 + $0x18] sm:$0xff] 0.0
        %476 = vst [vmem:[#allocation2 + $0x20] sm:$0xff] 0.0
        %477 = vst [vmem:[#allocation2 + $0x28] sm:$0xff] 0.0
        %478 = vst [vmem:[#allocation2 + $0x30] sm:$0xff] 0.0
        %479 = vst [vmem:[#allocation2 + $0x38] sm:$0xff] 0.0
        %480 = vst [vmem:[#allocation2 + $0x40] sm:$0xff] 0.0
        %481 = vst [vmem:[#allocation2 + $0x48] sm:$0xff] 0.0
      $region76: #{efficientnetv2_pad_forward.1} parent=71 // pred_fallthru
        _
      %v482 = vld [vmem:[%s462] sm:$0xf]
      %v483 = vld [vmem:[%s462 + $0x4] sm:$0xf]
      %v484 = vld [vmem:[%s462 + $0x8] sm:$0xf]
      %v485 = vld [vmem:[%s462 + $0xc] sm:$0xf]
      %v486 = vld [vmem:[%s462 + $0x10] sm:$0xf]
      %v487 = vld [vmem:[%s462 + $0x14] sm:$0xf]
      %v488 = vld [vmem:[%s462 + $0x18] sm:$0xf]
      %v489 = vld [vmem:[%s462 + $0x1c] sm:$0xf]
      %v490 = vld [vmem:[%s1] sm:$0xf]
      %v491 = vld [vmem:[%s1 + $0x4] sm:$0xf]
      %v492 = vld [vmem:[%s1 + $0x8] sm:$0xf]
      %v493 = vld [vmem:[%s1 + $0xc] sm:$0xf]
      %v494 = vld [vmem:[%s2] sm:$0x1]
      %v496 = vperm.slane %v494, 0
      %v506 = vunpack.c.l.b16 %v482
      %v507 = vunpack.c.l.b16 %v483
      %v508 = vunpack.c.l.b16 %v484
      %v509 = vunpack.c.l.b16 %v485
      %v510 = vunpack.c.l.b16 %v486
      %v511 = vunpack.c.l.b16 %v487
      %v512 = vunpack.c.l.b16 %v488
      %v513 = vunpack.c.l.b16 %v489
      %v514 = vpack.c.b16 %v507, %v506
      %v515 = vpack.c.b16 %v509, %v508
      %v516 = vpack.c.b16 %v511, %v510
      %v517 = vpack.c.b16 %v513, %v512
      %v522 = vunpack.c.l.b16 %v490
      %v523 = vunpack.c.l.b16 %v491
      %v524 = vunpack.c.l.b16 %v492
      %v525 = vunpack.c.l.b16 %v493
      %v526 = vpack.c.b16 %v523, %v522
      %v527 = vpack.c.b16 %v525, %v524
      %vm530 = vcmask 261120
      %v532 = vsel %vm530, %v514, 0
      %v535 = vsel %vm530, %v515, 0
      %v538 = vsel %vm530, %v516, 0
      %v541 = vsel %vm530, %v517, 0
      %543 = vmatpush.bf16.msra.mxu0 0
      %544 = vmatpush.bf16.msra.mxu0 0
      %545 = vmatpush.bf16.msra.mxu0 0
      %546 = vmatpush.bf16.msra.mxu0 0
      %547 = vmatpush.bf16.msra.mxu0 0
      %548 = vmatpush.bf16.msra.mxu0 0
      %549 = vmatpush.bf16.msra.mxu0 %v527
      %550 = vmatpush.bf16.msra.mxu0 %v526
      %551 = vmatmul.bf16.gmra.mxu0 %v532
      %v552 = vpop.f32.mrf.mxu0
      %v553 = vadd.f32 %v496, %v552
      %v554 = vpop.f32.mrf.mxu0
      %v555 = vadd.f32 %v496, %v554
      %556 = vmatmul.bf16.gmra.mxu0 %v535
      %v557 = vpop.f32.mrf.mxu0
      %v558 = vadd.f32 %v496, %v557
      %v559 = vpop.f32.mrf.mxu0
      %v560 = vadd.f32 %v496, %v559
      %561 = vmatmul.bf16.gmra.mxu0 %v538
      %v562 = vpop.f32.mrf.mxu0
      %v563 = vadd.f32 %v496, %v562
      %v564 = vpop.f32.mrf.mxu0
      %v565 = vadd.f32 %v496, %v564
      %566 = vmatmul.bf16.gmra.mxu0 %v541
      %v567 = vpop.f32.mrf.mxu0
      %v568 = vadd.f32 %v496, %v567
      %v569 = vpop.f32.mrf.mxu0
      %v570 = vadd.f32 %v496, %v569
      %571 = vdwg.mxu0
      %v572 = vsub.f32 0.0, %v553
      %v573 = vsub.f32 0.0, %v555
      %v574 = vsub.f32 0.0, %v558
      %v575 = vsub.f32 0.0, %v560
      %v576 = vsub.f32 0.0, %v563
      %v577 = vsub.f32 0.0, %v565
      %v578 = vsub.f32 0.0, %v568
      %v579 = vsub.f32 0.0, %v570
      %v580 = vmul.f32 %v572, 1.442695
      %v581 = vpow.pop %v580
      %v582 = vmul.f32 %v573, 1.442695
      %v583 = vpow.pop %v582
      %v584 = vmul.f32 %v574, 1.442695
      %v585 = vpow.pop %v584
      %v586 = vmul.f32 %v575, 1.442695
      %v587 = vpow.pop %v586
      %v588 = vmul.f32 %v576, 1.442695
      %v589 = vpow.pop %v588
      %v590 = vmul.f32 %v577, 1.442695
      %v591 = vpow.pop %v590
      %v592 = vmul.f32 %v578, 1.442695
      %v593 = vpow.pop %v592
      %v594 = vmul.f32 %v579, 1.442695
      %v595 = vpow.pop %v594
      %v596 = vadd.f32 %v581, 1.0
      %v597 = vadd.f32 %v583, 1.0
      %v598 = vadd.f32 %v585, 1.0
      %v599 = vadd.f32 %v587, 1.0
      %v600 = vadd.f32 %v589, 1.0
      %v601 = vadd.f32 %v591, 1.0
      %v602 = vadd.f32 %v593, 1.0
      %v603 = vadd.f32 %v595, 1.0
      %v604 = vrcp.pop %v596
      %v605 = vrcp.pop %v597
      %v606 = vrcp.pop %v598
      %v607 = vrcp.pop %v599
      %v608 = vrcp.pop %v600
      %v609 = vrcp.pop %v601
      %v610 = vrcp.pop %v602
      %v611 = vrcp.pop %v603
      %v612 = vmul.f32 %v553, %v604
      %v613 = vmul.f32 %v555, %v605
      %v614 = vmul.f32 %v558, %v606
      %v615 = vmul.f32 %v560, %v607
      %v616 = vmul.f32 %v563, %v608
      %v617 = vmul.f32 %v565, %v609
      %v618 = vmul.f32 %v568, %v610
      %v619 = vmul.f32 %v570, %v611
      %v620 = vpack.c.bf16 %v613, %v612
      %v621 = vpack.c.bf16 %v615, %v614
      %v622 = vpack.c.bf16 %v617, %v616
      %v623 = vpack.c.bf16 %v619, %v618
      %v624 = vld [vmem:[%s3] sm:$0xff]
      %v625 = vld [vmem:[%s3 + $0x8] sm:$0xff]
      %v626 = vld [vmem:[%s3 + $0x10] sm:$0xff]
      %v627 = vld [vmem:[%s3 + $0x18] sm:$0xff]
      %v628 = vld [vmem:[%s3 + $0x20] sm:$0xff]
      %v629 = vld [vmem:[%s3 + $0x28] sm:$0xff]
      %v630 = vld [vmem:[%s3 + $0x30] sm:$0xff]
      %v631 = vld [vmem:[%s3 + $0x38] sm:$0xff]
      %v632 = vld [vmem:[%s3 + $0x40] sm:$0xff]
      %v633 = vld [vmem:[%s3 + $0x48] sm:$0xff]
      %v634 = vld [vmem:[%s3 + $0x50] sm:$0xff]
      %v635 = vld [vmem:[%s3 + $0x58] sm:$0xff]
      %v636 = vld [vmem:[%s3 + $0x60] sm:$0xff]
      %v637 = vld [vmem:[%s3 + $0x68] sm:$0xff]
      %v638 = vld [vmem:[%s3 + $0x70] sm:$0xff]
      %v639 = vld [vmem:[%s3 + $0x78] sm:$0xff]
      %v640 = vld [vmem:[%s3 + $0x80] sm:$0xff]
      %v641 = vld [vmem:[%s3 + $0x88] sm:$0xff]
      %v642 = vld [vmem:[%s3 + $0x90] sm:$0xff]
      %v643 = vld [vmem:[%s3 + $0x98] sm:$0xff]
      %v644 = vld [vmem:[%s4] sm:$0xff]
      %v645 = vld [vmem:[%s4 + $0x8] sm:$0x3]
      %v648 = vperm.slane %v644, 0
      %v649 = vperm.slane %v644, 1
      %v650 = vperm.slane %v644, 2
      %v651 = vperm.slane %v644, 3
      %v652 = vperm.slane %v644, 4
      %v653 = vperm.slane %v644, 5
      %v654 = vperm.slane %v644, 6
      %v655 = vperm.slane %v644, 7
      %v656 = vperm.slane %v645, 0
      %v657 = vperm.slane %v645, 1
      %v688 = vunpack.c.l.b16 %v624
      %v689 = vunpack.c.h.b16 %v624
      %v690 = vunpack.c.l.b16 %v625
      %v691 = vunpack.c.h.b16 %v625
      %v692 = vunpack.c.l.b16 %v626
      %v693 = vunpack.c.h.b16 %v626
      %v694 = vunpack.c.l.b16 %v627
      %v695 = vunpack.c.h.b16 %v627
      %v696 = vunpack.c.l.b16 %v628
      %v697 = vunpack.c.h.b16 %v628
      %v698 = vunpack.c.l.b16 %v629
      %v699 = vunpack.c.h.b16 %v629
      %v700 = vunpack.c.l.b16 %v630
      %v701 = vunpack.c.h.b16 %v630
      %v702 = vunpack.c.l.b16 %v631
      %v703 = vunpack.c.h.b16 %v631
      %v704 = vunpack.c.l.b16 %v632
      %v705 = vunpack.c.h.b16 %v632
      %v706 = vunpack.c.l.b16 %v633
      %v707 = vunpack.c.h.b16 %v633
      %v708 = vunpack.c.l.b16 %v634
      %v709 = vunpack.c.h.b16 %v634
      %v710 = vunpack.c.l.b16 %v635
      %v711 = vunpack.c.h.b16 %v635
      %v712 = vunpack.c.l.b16 %v636
      %v713 = vunpack.c.h.b16 %v636
      %v714 = vunpack.c.l.b16 %v637
      %v715 = vunpack.c.h.b16 %v637
      %v716 = vunpack.c.l.b16 %v638
      %v717 = vunpack.c.h.b16 %v638
      %v718 = vunpack.c.l.b16 %v639
      %v719 = vunpack.c.h.b16 %v639
      %v720 = vunpack.c.l.b16 %v640
      %v721 = vunpack.c.h.b16 %v640
      %v722 = vunpack.c.l.b16 %v641
      %v723 = vunpack.c.h.b16 %v641
      %v724 = vunpack.c.l.b16 %v642
      %v725 = vunpack.c.h.b16 %v642
      %v726 = vunpack.c.l.b16 %v643
      %v727 = vunpack.c.h.b16 %v643
      %v728 = vpack.c.b16 %v698, %v688
      %v729 = vpack.c.b16 %v699, %v689
      %v730 = vpack.c.b16 %v700, %v690
      %v731 = vpack.c.b16 %v701, %v691
      %v732 = vpack.c.b16 %v702, %v692
      %v733 = vpack.c.b16 %v703, %v693
      %v734 = vpack.c.b16 %v704, %v694
      %v735 = vpack.c.b16 %v705, %v695
      %v736 = vpack.c.b16 %v706, %v696
      %v737 = vpack.c.b16 %v707, %v697
      %v738 = vpack.c.b16 %v718, %v708
      %v739 = vpack.c.b16 %v719, %v709
      %v740 = vpack.c.b16 %v720, %v710
      %v741 = vpack.c.b16 %v721, %v711
      %v742 = vpack.c.b16 %v722, %v712
      %v743 = vpack.c.b16 %v723, %v713
      %v744 = vpack.c.b16 %v724, %v714
      %v745 = vpack.c.b16 %v725, %v715
      %v746 = vpack.c.b16 %v726, %v716
      %v747 = vpack.c.b16 %v727, %v717
      %v769 = vsel %vm530, %v620, 0
      %v772 = vsel %vm530, %v621, 0
      %v775 = vsel %vm530, %v622, 0
      %v778 = vsel %vm530, %v623, 0
      %780 = vmatpush.bf16.msra.mxu0 0
      %781 = vmatpush.bf16.msra.mxu0 0
      %782 = vmatpush.bf16.msra.mxu0 0
      %783 = vmatpush.bf16.msra.mxu0 0
      %784 = vmatpush.bf16.msra.mxu0 0
      %785 = vmatpush.bf16.msra.mxu0 0
      %786 = vmatpush.bf16.msra.mxu0 %v738
      %787 = vmatpush.bf16.msra.mxu0 %v728
      %788 = vmatmul.bf16.gmra.mxu0 %v769
      %v789 = vpop.f32.mrf.mxu0
      %v790 = vadd.f32 %v648, %v789
      %v791 = vpop.f32.mrf.mxu0
      %v792 = vadd.f32 %v648, %v791
      %793 = vmatmul.bf16.gmra.mxu0 %v772
      %v794 = vpop.f32.mrf.mxu0
      %v795 = vadd.f32 %v648, %v794
      %v796 = vpop.f32.mrf.mxu0
      %v797 = vadd.f32 %v648, %v796
      %798 = vmatmul.bf16.gmra.mxu0 %v775
      %v799 = vpop.f32.mrf.mxu0
      %v800 = vadd.f32 %v648, %v799
      %v801 = vpop.f32.mrf.mxu0
      %v802 = vadd.f32 %v648, %v801
      %803 = vmatmul.bf16.gmra.mxu0 %v778
      %v804 = vpop.f32.mrf.mxu0
      %v805 = vadd.f32 %v648, %v804
      %v806 = vpop.f32.mrf.mxu0
      %v807 = vadd.f32 %v648, %v806
      %808 = vdwg.mxu0
      %809 = vmatpush.bf16.msra.mxu0 0
      %810 = vmatpush.bf16.msra.mxu0 0
      %811 = vmatpush.bf16.msra.mxu0 0
      %812 = vmatpush.bf16.msra.mxu0 0
      %813 = vmatpush.bf16.msra.mxu0 0
      %814 = vmatpush.bf16.msra.mxu0 0
      %815 = vmatpush.bf16.msra.mxu0 %v739
      %816 = vmatpush.bf16.msra.mxu0 %v729
      %817 = vmatmul.bf16.gmra.mxu0 %v769
      %v818 = vpop.f32.mrf.mxu0
      %v819 = vadd.f32 %v649, %v818
      %v820 = vpop.f32.mrf.mxu0
      %v821 = vadd.f32 %v649, %v820
      %822 = vmatmul.bf16.gmra.mxu0 %v772
      %v823 = vpop.f32.mrf.mxu0
      %v824 = vadd.f32 %v649, %v823
      %v825 = vpop.f32.mrf.mxu0
      %v826 = vadd.f32 %v649, %v825
      %827 = vmatmul.bf16.gmra.mxu0 %v775
      %v828 = vpop.f32.mrf.mxu0
      %v829 = vadd.f32 %v649, %v828
      %v830 = vpop.f32.mrf.mxu0
      %v831 = vadd.f32 %v649, %v830
      %832 = vmatmul.bf16.gmra.mxu0 %v778
      %v833 = vpop.f32.mrf.mxu0
      %v834 = vadd.f32 %v649, %v833
      %v835 = vpop.f32.mrf.mxu0
      %v836 = vadd.f32 %v649, %v835
      %837 = vdwg.mxu0
      %838 = vmatpush.bf16.msra.mxu0 0
      %839 = vmatpush.bf16.msra.mxu0 0
      %840 = vmatpush.bf16.msra.mxu0 0
      %841 = vmatpush.bf16.msra.mxu0 0
      %842 = vmatpush.bf16.msra.mxu0 0
      %843 = vmatpush.bf16.msra.mxu0 0
      %844 = vmatpush.bf16.msra.mxu0 %v740
      %845 = vmatpush.bf16.msra.mxu0 %v730
      %846 = vmatmul.bf16.gmra.mxu0 %v769
      %v847 = vpop.f32.mrf.mxu0
      %v848 = vadd.f32 %v650, %v847
      %v849 = vpop.f32.mrf.mxu0
      %v850 = vadd.f32 %v650, %v849
      %851 = vmatmul.bf16.gmra.mxu0 %v772
      %v852 = vpop.f32.mrf.mxu0
      %v853 = vadd.f32 %v650, %v852
      %v854 = vpop.f32.mrf.mxu0
      %v855 = vadd.f32 %v650, %v854
      %856 = vmatmul.bf16.gmra.mxu0 %v775
      %v857 = vpop.f32.mrf.mxu0
      %v858 = vadd.f32 %v650, %v857
      %v859 = vpop.f32.mrf.mxu0
      %v860 = vadd.f32 %v650, %v859
      %861 = vmatmul.bf16.gmra.mxu0 %v778
      %v862 = vpop.f32.mrf.mxu0
      %v863 = vadd.f32 %v650, %v862
      %v864 = vpop.f32.mrf.mxu0
      %v865 = vadd.f32 %v650, %v864
      %866 = vdwg.mxu0
      %867 = vmatpush.bf16.msra.mxu0 0
      %868 = vmatpush.bf16.msra.mxu0 0
      %869 = vmatpush.bf16.msra.mxu0 0
      %870 = vmatpush.bf16.msra.mxu0 0
      %871 = vmatpush.bf16.msra.mxu0 0
      %872 = vmatpush.bf16.msra.mxu0 0
      %873 = vmatpush.bf16.msra.mxu0 %v741
      %874 = vmatpush.bf16.msra.mxu0 %v731
      %875 = vmatmul.bf16.gmra.mxu0 %v769
      %v876 = vpop.f32.mrf.mxu0
      %v877 = vadd.f32 %v651, %v876
      %v878 = vpop.f32.mrf.mxu0
      %v879 = vadd.f32 %v651, %v878
      %880 = vmatmul.bf16.gmra.mxu0 %v772
      %v881 = vpop.f32.mrf.mxu0
      %v882 = vadd.f32 %v651, %v881
      %v883 = vpop.f32.mrf.mxu0
      %v884 = vadd.f32 %v651, %v883
      %885 = vmatmul.bf16.gmra.mxu0 %v775
      %v886 = vpop.f32.mrf.mxu0
      %v887 = vadd.f32 %v651, %v886
      %v888 = vpop.f32.mrf.mxu0
      %v889 = vadd.f32 %v651, %v888
      %890 = vmatmul.bf16.gmra.mxu0 %v778
      %v891 = vpop.f32.mrf.mxu0
      %v892 = vadd.f32 %v651, %v891
      %v893 = vpop.f32.mrf.mxu0
      %v894 = vadd.f32 %v651, %v893
      %895 = vdwg.mxu0
      %896 = vmatpush.bf16.msra.mxu0 0
      %897 = vmatpush.bf16.msra.mxu0 0
      %898 = vmatpush.bf16.msra.mxu0 0
      %899 = vmatpush.bf16.msra.mxu0 0
      %900 = vmatpush.bf16.msra.mxu0 0
      %901 = vmatpush.bf16.msra.mxu0 0
      %902 = vmatpush.bf16.msra.mxu0 %v742
      %903 = vmatpush.bf16.msra.mxu0 %v732
      %904 = vmatmul.bf16.gmra.mxu0 %v769
      %v905 = vpop.f32.mrf.mxu0
      %v906 = vadd.f32 %v652, %v905
      %v907 = vpop.f32.mrf.mxu0
      %v908 = vadd.f32 %v652, %v907
      %909 = vmatmul.bf16.gmra.mxu0 %v772
      %v910 = vpop.f32.mrf.mxu0
      %v911 = vadd.f32 %v652, %v910
      %v912 = vpop.f32.mrf.mxu0
      %v913 = vadd.f32 %v652, %v912
      %914 = vmatmul.bf16.gmra.mxu0 %v775
      %v915 = vpop.f32.mrf.mxu0
      %v916 = vadd.f32 %v652, %v915
      %v917 = vpop.f32.mrf.mxu0
      %v918 = vadd.f32 %v652, %v917
      %919 = vmatmul.bf16.gmra.mxu0 %v778
      %v920 = vpop.f32.mrf.mxu0
      %v921 = vadd.f32 %v652, %v920
      %v922 = vpop.f32.mrf.mxu0
      %v923 = vadd.f32 %v652, %v922
      %924 = vdwg.mxu0
      %925 = vmatpush.bf16.msra.mxu0 0
      %926 = vmatpush.bf16.msra.mxu0 0
      %927 = vmatpush.bf16.msra.mxu0 0
      %928 = vmatpush.bf16.msra.mxu0 0
      %929 = vmatpush.bf16.msra.mxu0 0
      %930 = vmatpush.bf16.msra.mxu0 0
      %931 = vmatpush.bf16.msra.mxu0 %v743
      %932 = vmatpush.bf16.msra.mxu0 %v733
      %933 = vmatmul.bf16.gmra.mxu0 %v769
      %v934 = vpop.f32.mrf.mxu0
      %v935 = vadd.f32 %v653, %v934
      %v936 = vpop.f32.mrf.mxu0
      %v937 = vadd.f32 %v653, %v936
      %938 = vmatmul.bf16.gmra.mxu0 %v772
      %v939 = vpop.f32.mrf.mxu0
      %v940 = vadd.f32 %v653, %v939
      %v941 = vpop.f32.mrf.mxu0
      %v942 = vadd.f32 %v653, %v941
      %943 = vmatmul.bf16.gmra.mxu0 %v775
      %v944 = vpop.f32.mrf.mxu0
      %v945 = vadd.f32 %v653, %v944
      %v946 = vpop.f32.mrf.mxu0
      %v947 = vadd.f32 %v653, %v946
      %948 = vmatmul.bf16.gmra.mxu0 %v778
      %v949 = vpop.f32.mrf.mxu0
      %v950 = vadd.f32 %v653, %v949
      %v951 = vpop.f32.mrf.mxu0
      %v952 = vadd.f32 %v653, %v951
      %953 = vdwg.mxu0
      %954 = vmatpush.bf16.msra.mxu0 0
      %955 = vmatpush.bf16.msra.mxu0 0
      %956 = vmatpush.bf16.msra.mxu0 0
      %957 = vmatpush.bf16.msra.mxu0 0
      %958 = vmatpush.bf16.msra.mxu0 0
      %959 = vmatpush.bf16.msra.mxu0 0
      %960 = vmatpush.bf16.msra.mxu0 %v744
      %961 = vmatpush.bf16.msra.mxu0 %v734
      %962 = vmatmul.bf16.gmra.mxu0 %v769
      %v963 = vpop.f32.mrf.mxu0
      %v964 = vadd.f32 %v654, %v963
      %v965 = vpop.f32.mrf.mxu0
      %v966 = vadd.f32 %v654, %v965
      %967 = vmatmul.bf16.gmra.mxu0 %v772
      %v968 = vpop.f32.mrf.mxu0
      %v969 = vadd.f32 %v654, %v968
      %v970 = vpop.f32.mrf.mxu0
      %v971 = vadd.f32 %v654, %v970
      %972 = vmatmul.bf16.gmra.mxu0 %v775
      %v973 = vpop.f32.mrf.mxu0
      %v974 = vadd.f32 %v654, %v973
      %v975 = vpop.f32.mrf.mxu0
      %v976 = vadd.f32 %v654, %v975
      %977 = vmatmul.bf16.gmra.mxu0 %v778
      %v978 = vpop.f32.mrf.mxu0
      %v979 = vadd.f32 %v654, %v978
      %v980 = vpop.f32.mrf.mxu0
      %v981 = vadd.f32 %v654, %v980
      %982 = vdwg.mxu0
      %983 = vmatpush.bf16.msra.mxu0 0
      %984 = vmatpush.bf16.msra.mxu0 0
      %985 = vmatpush.bf16.msra.mxu0 0
      %986 = vmatpush.bf16.msra.mxu0 0
      %987 = vmatpush.bf16.msra.mxu0 0
      %988 = vmatpush.bf16.msra.mxu0 0
      %989 = vmatpush.bf16.msra.mxu0 %v745
      %990 = vmatpush.bf16.msra.mxu0 %v735
      %991 = vmatmul.bf16.gmra.mxu0 %v769
      %v992 = vpop.f32.mrf.mxu0
      %v993 = vadd.f32 %v655, %v992
      %v994 = vpop.f32.mrf.mxu0
      %v995 = vadd.f32 %v655, %v994
      %996 = vmatmul.bf16.gmra.mxu0 %v772
      %v997 = vpop.f32.mrf.mxu0
      %v998 = vadd.f32 %v655, %v997
      %v999 = vpop.f32.mrf.mxu0
      %v1000 = vadd.f32 %v655, %v999
      %1001 = vmatmul.bf16.gmra.mxu0 %v775
      %v1002 = vpop.f32.mrf.mxu0
      %v1003 = vadd.f32 %v655, %v1002
      %v1004 = vpop.f32.mrf.mxu0
      %v1005 = vadd.f32 %v655, %v1004
      %1006 = vmatmul.bf16.gmra.mxu0 %v778
      %v1007 = vpop.f32.mrf.mxu0
      %v1008 = vadd.f32 %v655, %v1007
      %v1009 = vpop.f32.mrf.mxu0
      %v1010 = vadd.f32 %v655, %v1009
      %1011 = vdwg.mxu0
      %1012 = vmatpush.bf16.msra.mxu0 0
      %1013 = vmatpush.bf16.msra.mxu0 0
      %1014 = vmatpush.bf16.msra.mxu0 0
      %1015 = vmatpush.bf16.msra.mxu0 0
      %1016 = vmatpush.bf16.msra.mxu0 0
      %1017 = vmatpush.bf16.msra.mxu0 0
      %1018 = vmatpush.bf16.msra.mxu0 %v746
      %1019 = vmatpush.bf16.msra.mxu0 %v736
      %1020 = vmatmul.bf16.gmra.mxu0 %v769
      %v1021 = vpop.f32.mrf.mxu0
      %v1022 = vadd.f32 %v656, %v1021
      %v1023 = vpop.f32.mrf.mxu0
      %v1024 = vadd.f32 %v656, %v1023
      %1025 = vmatmul.bf16.gmra.mxu0 %v772
      %v1026 = vpop.f32.mrf.mxu0
      %v1027 = vadd.f32 %v656, %v1026
      %v1028 = vpop.f32.mrf.mxu0
      %v1029 = vadd.f32 %v656, %v1028
      %1030 = vmatmul.bf16.gmra.mxu0 %v775
      %v1031 = vpop.f32.mrf.mxu0
      %v1032 = vadd.f32 %v656, %v1031
      %v1033 = vpop.f32.mrf.mxu0
      %v1034 = vadd.f32 %v656, %v1033
      %1035 = vmatmul.bf16.gmra.mxu0 %v778
      %v1036 = vpop.f32.mrf.mxu0
      %v1037 = vadd.f32 %v656, %v1036
      %v1038 = vpop.f32.mrf.mxu0
      %v1039 = vadd.f32 %v656, %v1038
      %1040 = vdwg.mxu0
      %1041 = vmatpush.bf16.msra.mxu0 0
      %1042 = vmatpush.bf16.msra.mxu0 0
      %1043 = vmatpush.bf16.msra.mxu0 0
      %1044 = vmatpush.bf16.msra.mxu0 0
      %1045 = vmatpush.bf16.msra.mxu0 0
      %1046 = vmatpush.bf16.msra.mxu0 0
      %1047 = vmatpush.bf16.msra.mxu0 %v747
      %1048 = vmatpush.bf16.msra.mxu0 %v737
      %1049 = vmatmul.bf16.gmra.mxu0 %v769
      %v1050 = vpop.f32.mrf.mxu0
      %v1051 = vadd.f32 %v657, %v1050
      %v1052 = vpop.f32.mrf.mxu0
      %v1053 = vadd.f32 %v657, %v1052
      %1054 = vmatmul.bf16.gmra.mxu0 %v772
      %v1055 = vpop.f32.mrf.mxu0
      %v1056 = vadd.f32 %v657, %v1055
      %v1057 = vpop.f32.mrf.mxu0
      %v1058 = vadd.f32 %v657, %v1057
      %1059 = vmatmul.bf16.gmra.mxu0 %v775
      %v1060 = vpop.f32.mrf.mxu0
      %v1061 = vadd.f32 %v657, %v1060
      %v1062 = vpop.f32.mrf.mxu0
      %v1063 = vadd.f32 %v657, %v1062
      %1064 = vmatmul.bf16.gmra.mxu0 %v778
      %v1065 = vpop.f32.mrf.mxu0
      %v1066 = vadd.f32 %v657, %v1065
      %v1067 = vpop.f32.mrf.mxu0
      %v1068 = vadd.f32 %v657, %v1067
      %1069 = vdwg.mxu0
      %v1070 = vsub.f32 0.0, %v790
      %v1071 = vsub.f32 0.0, %v819
      %v1072 = vsub.f32 0.0, %v848
      %v1073 = vsub.f32 0.0, %v877
      %v1074 = vsub.f32 0.0, %v906
      %v1075 = vsub.f32 0.0, %v935
      %v1076 = vsub.f32 0.0, %v964
      %v1077 = vsub.f32 0.0, %v993
      %v1078 = vsub.f32 0.0, %v1022
      %v1079 = vsub.f32 0.0, %v1051
      %v1080 = vsub.f32 0.0, %v792
      %v1081 = vsub.f32 0.0, %v821
      %v1082 = vsub.f32 0.0, %v850
      %v1083 = vsub.f32 0.0, %v879
      %v1084 = vsub.f32 0.0, %v908
      %v1085 = vsub.f32 0.0, %v937
      %v1086 = vsub.f32 0.0, %v966
      %v1087 = vsub.f32 0.0, %v995
      %v1088 = vsub.f32 0.0, %v1024
      %v1089 = vsub.f32 0.0, %v1053
      %v1090 = vsub.f32 0.0, %v795
      %v1091 = vsub.f32 0.0, %v824
      %v1092 = vsub.f32 0.0, %v853
      %v1093 = vsub.f32 0.0, %v882
      %v1094 = vsub.f32 0.0, %v911
      %v1095 = vsub.f32 0.0, %v940
      %v1096 = vsub.f32 0.0, %v969
      %v1097 = vsub.f32 0.0, %v998
      %v1098 = vsub.f32 0.0, %v1027
      %v1099 = vsub.f32 0.0, %v1056
      %v1100 = vsub.f32 0.0, %v797
      %v1101 = vsub.f32 0.0, %v826
      %v1102 = vsub.f32 0.0, %v855
      %v1103 = vsub.f32 0.0, %v884
      %v1104 = vsub.f32 0.0, %v913
      %v1105 = vsub.f32 0.0, %v942
      %v1106 = vsub.f32 0.0, %v971
      %v1107 = vsub.f32 0.0, %v1000
      %v1108 = vsub.f32 0.0, %v1029
      %v1109 = vsub.f32 0.0, %v1058
      %v1110 = vsub.f32 0.0, %v800
      %v1111 = vsub.f32 0.0, %v829
      %v1112 = vsub.f32 0.0, %v858
      %v1113 = vsub.f32 0.0, %v887
      %v1114 = vsub.f32 0.0, %v916
      %v1115 = vsub.f32 0.0, %v945
      %v1116 = vsub.f32 0.0, %v974
      %v1117 = vsub.f32 0.0, %v1003
      %v1118 = vsub.f32 0.0, %v1032
      %v1119 = vsub.f32 0.0, %v1061
      %v1120 = vsub.f32 0.0, %v802
      %v1121 = vsub.f32 0.0, %v831
      %v1122 = vsub.f32 0.0, %v860
      %v1123 = vsub.f32 0.0, %v889
      %v1124 = vsub.f32 0.0, %v918
      %v1125 = vsub.f32 0.0, %v947
      %v1126 = vsub.f32 0.0, %v976
      %v1127 = vsub.f32 0.0, %v1005
      %v1128 = vsub.f32 0.0, %v1034
      %v1129 = vsub.f32 0.0, %v1063
      %v1130 = vsub.f32 0.0, %v805
      %v1131 = vsub.f32 0.0, %v834
      %v1132 = vsub.f32 0.0, %v863
      %v1133 = vsub.f32 0.0, %v892
      %v1134 = vsub.f32 0.0, %v921
      %v1135 = vsub.f32 0.0, %v950
      %v1136 = vsub.f32 0.0, %v979
      %v1137 = vsub.f32 0.0, %v1008
      %v1138 = vsub.f32 0.0, %v1037
      %v1139 = vsub.f32 0.0, %v1066
      %v1140 = vsub.f32 0.0, %v807
      %v1141 = vsub.f32 0.0, %v836
      %v1142 = vsub.f32 0.0, %v865
      %v1143 = vsub.f32 0.0, %v894
      %v1144 = vsub.f32 0.0, %v923
      %v1145 = vsub.f32 0.0, %v952
      %v1146 = vsub.f32 0.0, %v981
      %v1147 = vsub.f32 0.0, %v1010
      %v1148 = vsub.f32 0.0, %v1039
      %v1149 = vsub.f32 0.0, %v1068
      %v1150 = vmul.f32 %v1070, 1.442695
      %v1151 = vpow.pop %v1150
      %v1152 = vmul.f32 %v1071, 1.442695
      %v1153 = vpow.pop %v1152
      %v1154 = vmul.f32 %v1072, 1.442695
      %v1155 = vpow.pop %v1154
      %v1156 = vmul.f32 %v1073, 1.442695
      %v1157 = vpow.pop %v1156
      %v1158 = vmul.f32 %v1074, 1.442695
      %v1159 = vpow.pop %v1158
      %v1160 = vmul.f32 %v1075, 1.442695
      %v1161 = vpow.pop %v1160
      %v1162 = vmul.f32 %v1076, 1.442695
      %v1163 = vpow.pop %v1162
      %v1164 = vmul.f32 %v1077, 1.442695
      %v1165 = vpow.pop %v1164
      %v1166 = vmul.f32 %v1078, 1.442695
      %v1167 = vpow.pop %v1166
      %v1168 = vmul.f32 %v1079, 1.442695
      %v1169 = vpow.pop %v1168
      %v1170 = vmul.f32 %v1080, 1.442695
      %v1171 = vpow.pop %v1170
      %v1172 = vmul.f32 %v1081, 1.442695
      %v1173 = vpow.pop %v1172
      %v1174 = vmul.f32 %v1082, 1.442695
      %v1175 = vpow.pop %v1174
      %v1176 = vmul.f32 %v1083, 1.442695
      %v1177 = vpow.pop %v1176
      %v1178 = vmul.f32 %v1084, 1.442695
      %v1179 = vpow.pop %v1178
      %v1180 = vmul.f32 %v1085, 1.442695
      %v1181 = vpow.pop %v1180
      %v1182 = vmul.f32 %v1086, 1.442695
      %v1183 = vpow.pop %v1182
      %v1184 = vmul.f32 %v1087, 1.442695
      %v1185 = vpow.pop %v1184
      %v1186 = vmul.f32 %v1088, 1.442695
      %v1187 = vpow.pop %v1186
      %v1188 = vmul.f32 %v1089, 1.442695
      %v1189 = vpow.pop %v1188
      %v1190 = vmul.f32 %v1090, 1.442695
      %v1191 = vpow.pop %v1190
      %v1192 = vmul.f32 %v1091, 1.442695
      %v1193 = vpow.pop %v1192
      %v1194 = vmul.f32 %v1092, 1.442695
      %v1195 = vpow.pop %v1194
      %v1196 = vmul.f32 %v1093, 1.442695
      %v1197 = vpow.pop %v1196
      %v1198 = vmul.f32 %v1094, 1.442695
      %v1199 = vpow.pop %v1198
      %v1200 = vmul.f32 %v1095, 1.442695
      %v1201 = vpow.pop %v1200
      %v1202 = vmul.f32 %v1096, 1.442695
      %v1203 = vpow.pop %v1202
      %v1204 = vmul.f32 %v1097, 1.442695
      %v1205 = vpow.pop %v1204
      %v1206 = vmul.f32 %v1098, 1.442695
      %v1207 = vpow.pop %v1206
      %v1208 = vmul.f32 %v1099, 1.442695
      %v1209 = vpow.pop %v1208
      %v1210 = vmul.f32 %v1100, 1.442695
      %v1211 = vpow.pop %v1210
      %v1212 = vmul.f32 %v1101, 1.442695
      %v1213 = vpow.pop %v1212
      %v1214 = vmul.f32 %v1102, 1.442695
      %v1215 = vpow.pop %v1214
      %v1216 = vmul.f32 %v1103, 1.442695
      %v1217 = vpow.pop %v1216
      %v1218 = vmul.f32 %v1104, 1.442695
      %v1219 = vpow.pop %v1218
      %v1220 = vmul.f32 %v1105, 1.442695
      %v1221 = vpow.pop %v1220
      %v1222 = vmul.f32 %v1106, 1.442695
      %v1223 = vpow.pop %v1222
      %v1224 = vmul.f32 %v1107, 1.442695
      %v1225 = vpow.pop %v1224
      %v1226 = vmul.f32 %v1108, 1.442695
      %v1227 = vpow.pop %v1226
      %v1228 = vmul.f32 %v1109, 1.442695
      %v1229 = vpow.pop %v1228
      %v1230 = vmul.f32 %v1110, 1.442695
      %v1231 = vpow.pop %v1230
      %v1232 = vmul.f32 %v1111, 1.442695
      %v1233 = vpow.pop %v1232
      %v1234 = vmul.f32 %v1112, 1.442695
      %v1235 = vpow.pop %v1234
      %v1236 = vmul.f32 %v1113, 1.442695
      %v1237 = vpow.pop %v1236
      %v1238 = vmul.f32 %v1114, 1.442695
      %v1239 = vpow.pop %v1238
      %v1240 = vmul.f32 %v1115, 1.442695
      %v1241 = vpow.pop %v1240
      %v1242 = vmul.f32 %v1116, 1.442695
      %v1243 = vpow.pop %v1242
      %v1244 = vmul.f32 %v1117, 1.442695
      %v1245 = vpow.pop %v1244
      %v1246 = vmul.f32 %v1118, 1.442695
      %v1247 = vpow.pop %v1246
      %v1248 = vmul.f32 %v1119, 1.442695
      %v1249 = vpow.pop %v1248
      %v1250 = vmul.f32 %v1120, 1.442695
      %v1251 = vpow.pop %v1250
      %v1252 = vmul.f32 %v1121, 1.442695
      %v1253 = vpow.pop %v1252
      %v1254 = vmul.f32 %v1122, 1.442695
      %v1255 = vpow.pop %v1254
      %v1256 = vmul.f32 %v1123, 1.442695
      %v1257 = vpow.pop %v1256
      %v1258 = vmul.f32 %v1124, 1.442695
      %v1259 = vpow.pop %v1258
      %v1260 = vmul.f32 %v1125, 1.442695
      %v1261 = vpow.pop %v1260
      %v1262 = vmul.f32 %v1126, 1.442695
      %v1263 = vpow.pop %v1262
      %v1264 = vmul.f32 %v1127, 1.442695
      %v1265 = vpow.pop %v1264
      %v1266 = vmul.f32 %v1128, 1.442695
      %v1267 = vpow.pop %v1266
      %v1268 = vmul.f32 %v1129, 1.442695
      %v1269 = vpow.pop %v1268
      %v1270 = vmul.f32 %v1130, 1.442695
      %v1271 = vpow.pop %v1270
      %v1272 = vmul.f32 %v1131, 1.442695
      %v1273 = vpow.pop %v1272
      %v1274 = vmul.f32 %v1132, 1.442695
      %v1275 = vpow.pop %v1274
      %v1276 = vmul.f32 %v1133, 1.442695
      %v1277 = vpow.pop %v1276
      %v1278 = vmul.f32 %v1134, 1.442695
      %v1279 = vpow.pop %v1278
      %v1280 = vmul.f32 %v1135, 1.442695
      %v1281 = vpow.pop %v1280
      %v1282 = vmul.f32 %v1136, 1.442695
      %v1283 = vpow.pop %v1282
      %v1284 = vmul.f32 %v1137, 1.442695
      %v1285 = vpow.pop %v1284
      %v1286 = vmul.f32 %v1138, 1.442695
      %v1287 = vpow.pop %v1286
      %v1288 = vmul.f32 %v1139, 1.442695
      %v1289 = vpow.pop %v1288
      %v1290 = vmul.f32 %v1140, 1.442695
      %v1291 = vpow.pop %v1290
      %v1292 = vmul.f32 %v1141, 1.442695
      %v1293 = vpow.pop %v1292
      %v1294 = vmul.f32 %v1142, 1.442695
      %v1295 = vpow.pop %v1294
      %v1296 = vmul.f32 %v1143, 1.442695
      %v1297 = vpow.pop %v1296
      %v1298 = vmul.f32 %v1144, 1.442695
      %v1299 = vpow.pop %v1298
      %v1300 = vmul.f32 %v1145, 1.442695
      %v1301 = vpow.pop %v1300
      %v1302 = vmul.f32 %v1146, 1.442695
      %v1303 = vpow.pop %v1302
      %v1304 = vmul.f32 %v1147, 1.442695
      %v1305 = vpow.pop %v1304
      %v1306 = vmul.f32 %v1148, 1.442695
      %v1307 = vpow.pop %v1306
      %v1308 = vmul.f32 %v1149, 1.442695
      %v1309 = vpow.pop %v1308
      %v1310 = vadd.f32 %v1151, 1.0
      %v1311 = vadd.f32 %v1153, 1.0
      %v1312 = vadd.f32 %v1155, 1.0
      %v1313 = vadd.f32 %v1157, 1.0
      %v1314 = vadd.f32 %v1159, 1.0
      %v1315 = vadd.f32 %v1161, 1.0
      %v1316 = vadd.f32 %v1163, 1.0
      %v1317 = vadd.f32 %v1165, 1.0
      %v1318 = vadd.f32 %v1167, 1.0
      %v1319 = vadd.f32 %v1169, 1.0
      %v1320 = vadd.f32 %v1171, 1.0
      %v1321 = vadd.f32 %v1173, 1.0
      %v1322 = vadd.f32 %v1175, 1.0
      %v1323 = vadd.f32 %v1177, 1.0
      %v1324 = vadd.f32 %v1179, 1.0
      %v1325 = vadd.f32 %v1181, 1.0
      %v1326 = vadd.f32 %v1183, 1.0
      %v1327 = vadd.f32 %v1185, 1.0
      %v1328 = vadd.f32 %v1187, 1.0
      %v1329 = vadd.f32 %v1189, 1.0
      %v1330 = vadd.f32 %v1191, 1.0
      %v1331 = vadd.f32 %v1193, 1.0
      %v1332 = vadd.f32 %v1195, 1.0
      %v1333 = vadd.f32 %v1197, 1.0
      %v1334 = vadd.f32 %v1199, 1.0
      %v1335 = vadd.f32 %v1201, 1.0
      %v1336 = vadd.f32 %v1203, 1.0
      %v1337 = vadd.f32 %v1205, 1.0
      %v1338 = vadd.f32 %v1207, 1.0
      %v1339 = vadd.f32 %v1209, 1.0
      %v1340 = vadd.f32 %v1211, 1.0
      %v1341 = vadd.f32 %v1213, 1.0
      %v1342 = vadd.f32 %v1215, 1.0
      %v1343 = vadd.f32 %v1217, 1.0
      %v1344 = vadd.f32 %v1219, 1.0
      %v1345 = vadd.f32 %v1221, 1.0
      %v1346 = vadd.f32 %v1223, 1.0
      %v1347 = vadd.f32 %v1225, 1.0
      %v1348 = vadd.f32 %v1227, 1.0
      %v1349 = vadd.f32 %v1229, 1.0
      %v1350 = vadd.f32 %v1231, 1.0
      %v1351 = vadd.f32 %v1233, 1.0
      %v1352 = vadd.f32 %v1235, 1.0
      %v1353 = vadd.f32 %v1237, 1.0
      %v1354 = vadd.f32 %v1239, 1.0
      %v1355 = vadd.f32 %v1241, 1.0
      %v1356 = vadd.f32 %v1243, 1.0
      %v1357 = vadd.f32 %v1245, 1.0
      %v1358 = vadd.f32 %v1247, 1.0
      %v1359 = vadd.f32 %v1249, 1.0
      %v1360 = vadd.f32 %v1251, 1.0
      %v1361 = vadd.f32 %v1253, 1.0
      %v1362 = vadd.f32 %v1255, 1.0
      %v1363 = vadd.f32 %v1257, 1.0
      %v1364 = vadd.f32 %v1259, 1.0
      %v1365 = vadd.f32 %v1261, 1.0
      %v1366 = vadd.f32 %v1263, 1.0
      %v1367 = vadd.f32 %v1265, 1.0
      %v1368 = vadd.f32 %v1267, 1.0
      %v1369 = vadd.f32 %v1269, 1.0
      %v1370 = vadd.f32 %v1271, 1.0
      %v1371 = vadd.f32 %v1273, 1.0
      %v1372 = vadd.f32 %v1275, 1.0
      %v1373 = vadd.f32 %v1277, 1.0
      %v1374 = vadd.f32 %v1279, 1.0
      %v1375 = vadd.f32 %v1281, 1.0
      %v1376 = vadd.f32 %v1283, 1.0
      %v1377 = vadd.f32 %v1285, 1.0
      %v1378 = vadd.f32 %v1287, 1.0
      %v1379 = vadd.f32 %v1289, 1.0
      %v1380 = vadd.f32 %v1291, 1.0
      %v1381 = vadd.f32 %v1293, 1.0
      %v1382 = vadd.f32 %v1295, 1.0
      %v1383 = vadd.f32 %v1297, 1.0
      %v1384 = vadd.f32 %v1299, 1.0
      %v1385 = vadd.f32 %v1301, 1.0
      %v1386 = vadd.f32 %v1303, 1.0
      %v1387 = vadd.f32 %v1305, 1.0
      %v1388 = vadd.f32 %v1307, 1.0
      %v1389 = vadd.f32 %v1309, 1.0
      %v1390 = vrcp.pop %v1310
      %v1391 = vrcp.pop %v1311
      %v1392 = vrcp.pop %v1312
      %v1393 = vrcp.pop %v1313
      %v1394 = vrcp.pop %v1314
      %v1395 = vrcp.pop %v1315
      %v1396 = vrcp.pop %v1316
      %v1397 = vrcp.pop %v1317
      %v1398 = vrcp.pop %v1318
      %v1399 = vrcp.pop %v1319
      %v1400 = vrcp.pop %v1320
      %v1401 = vrcp.pop %v1321
      %v1402 = vrcp.pop %v1322
      %v1403 = vrcp.pop %v1323
      %v1404 = vrcp.pop %v1324
      %v1405 = vrcp.pop %v1325
      %v1406 = vrcp.pop %v1326
      %v1407 = vrcp.pop %v1327
      %v1408 = vrcp.pop %v1328
      %v1409 = vrcp.pop %v1329
      %v1410 = vrcp.pop %v1330
      %v1411 = vrcp.pop %v1331
      %v1412 = vrcp.pop %v1332
      %v1413 = vrcp.pop %v1333
      %v1414 = vrcp.pop %v1334
      %v1415 = vrcp.pop %v1335
      %v1416 = vrcp.pop %v1336
      %v1417 = vrcp.pop %v1337
      %v1418 = vrcp.pop %v1338
      %v1419 = vrcp.pop %v1339
      %v1420 = vrcp.pop %v1340
      %v1421 = vrcp.pop %v1341
      %v1422 = vrcp.pop %v1342
      %v1423 = vrcp.pop %v1343
      %v1424 = vrcp.pop %v1344
      %v1425 = vrcp.pop %v1345
      %v1426 = vrcp.pop %v1346
      %v1427 = vrcp.pop %v1347
      %v1428 = vrcp.pop %v1348
      %v1429 = vrcp.pop %v1349
      %v1430 = vrcp.pop %v1350
      %v1431 = vrcp.pop %v1351
      %v1432 = vrcp.pop %v1352
      %v1433 = vrcp.pop %v1353
      %v1434 = vrcp.pop %v1354
      %v1435 = vrcp.pop %v1355
      %v1436 = vrcp.pop %v1356
      %v1437 = vrcp.pop %v1357
      %v1438 = vrcp.pop %v1358
      %v1439 = vrcp.pop %v1359
      %v1440 = vrcp.pop %v1360
      %v1441 = vrcp.pop %v1361
      %v1442 = vrcp.pop %v1362
      %v1443 = vrcp.pop %v1363
      %v1444 = vrcp.pop %v1364
      %v1445 = vrcp.pop %v1365
      %v1446 = vrcp.pop %v1366
      %v1447 = vrcp.pop %v1367
      %v1448 = vrcp.pop %v1368
      %v1449 = vrcp.pop %v1369
      %v1450 = vrcp.pop %v1370
      %v1451 = vrcp.pop %v1371
      %v1452 = vrcp.pop %v1372
      %v1453 = vrcp.pop %v1373
      %v1454 = vrcp.pop %v1374
      %v1455 = vrcp.pop %v1375
      %v1456 = vrcp.pop %v1376
      %v1457 = vrcp.pop %v1377
      %v1458 = vrcp.pop %v1378
      %v1459 = vrcp.pop %v1379
      %v1460 = vrcp.pop %v1380
      %v1461 = vrcp.pop %v1381
      %v1462 = vrcp.pop %v1382
      %v1463 = vrcp.pop %v1383
      %v1464 = vrcp.pop %v1384
      %v1465 = vrcp.pop %v1385
      %v1466 = vrcp.pop %v1386
      %v1467 = vrcp.pop %v1387
      %v1468 = vrcp.pop %v1388
      %v1469 = vrcp.pop %v1389
      %v1470 = vmul.f32 %v790, %v1390
      %v1471 = vmul.f32 %v819, %v1391
      %v1472 = vmul.f32 %v848, %v1392
      %v1473 = vmul.f32 %v877, %v1393
      %v1474 = vmul.f32 %v906, %v1394
      %v1475 = vmul.f32 %v935, %v1395
      %v1476 = vmul.f32 %v964, %v1396
      %v1477 = vmul.f32 %v993, %v1397
      %v1478 = vmul.f32 %v1022, %v1398
      %v1479 = vmul.f32 %v1051, %v1399
      %v1480 = vmul.f32 %v792, %v1400
      %v1481 = vmul.f32 %v821, %v1401
      %v1482 = vmul.f32 %v850, %v1402
      %v1483 = vmul.f32 %v879, %v1403
      %v1484 = vmul.f32 %v908, %v1404
      %v1485 = vmul.f32 %v937, %v1405
      %v1486 = vmul.f32 %v966, %v1406
      %v1487 = vmul.f32 %v995, %v1407
      %v1488 = vmul.f32 %v1024, %v1408
      %v1489 = vmul.f32 %v1053, %v1409
      %v1490 = vmul.f32 %v795, %v1410
      %v1491 = vmul.f32 %v824, %v1411
      %v1492 = vmul.f32 %v853, %v1412
      %v1493 = vmul.f32 %v882, %v1413
      %v1494 = vmul.f32 %v911, %v1414
      %v1495 = vmul.f32 %v940, %v1415
      %v1496 = vmul.f32 %v969, %v1416
      %v1497 = vmul.f32 %v998, %v1417
      %v1498 = vmul.f32 %v1027, %v1418
      %v1499 = vmul.f32 %v1056, %v1419
      %v1500 = vmul.f32 %v797, %v1420
      %v1501 = vmul.f32 %v826, %v1421
      %v1502 = vmul.f32 %v855, %v1422
      %v1503 = vmul.f32 %v884, %v1423
      %v1504 = vmul.f32 %v913, %v1424
      %v1505 = vmul.f32 %v942, %v1425
      %v1506 = vmul.f32 %v971, %v1426
      %v1507 = vmul.f32 %v1000, %v1427
      %v1508 = vmul.f32 %v1029, %v1428
      %v1509 = vmul.f32 %v1058, %v1429
      %v1510 = vmul.f32 %v800, %v1430
      %v1511 = vmul.f32 %v829, %v1431
      %v1512 = vmul.f32 %v858, %v1432
      %v1513 = vmul.f32 %v887, %v1433
      %v1514 = vmul.f32 %v916, %v1434
      %v1515 = vmul.f32 %v945, %v1435
      %v1516 = vmul.f32 %v974, %v1436
      %v1517 = vmul.f32 %v1003, %v1437
      %v1518 = vmul.f32 %v1032, %v1438
      %v1519 = vmul.f32 %v1061, %v1439
      %v1520 = vmul.f32 %v802, %v1440
      %v1521 = vmul.f32 %v831, %v1441
      %v1522 = vmul.f32 %v860, %v1442
      %v1523 = vmul.f32 %v889, %v1443
      %v1524 = vmul.f32 %v918, %v1444
      %v1525 = vmul.f32 %v947, %v1445
      %v1526 = vmul.f32 %v976, %v1446
      %v1527 = vmul.f32 %v1005, %v1447
      %v1528 = vmul.f32 %v1034, %v1448
      %v1529 = vmul.f32 %v1063, %v1449
      %v1530 = vmul.f32 %v805, %v1450
      %v1531 = vmul.f32 %v834, %v1451
      %v1532 = vmul.f32 %v863, %v1452
      %v1533 = vmul.f32 %v892, %v1453
      %v1534 = vmul.f32 %v921, %v1454
      %v1535 = vmul.f32 %v950, %v1455
      %v1536 = vmul.f32 %v979, %v1456
      %v1537 = vmul.f32 %v1008, %v1457
      %v1538 = vmul.f32 %v1037, %v1458
      %v1539 = vmul.f32 %v1066, %v1459
      %v1540 = vmul.f32 %v807, %v1460
      %v1541 = vmul.f32 %v836, %v1461
      %v1542 = vmul.f32 %v865, %v1462
      %v1543 = vmul.f32 %v894, %v1463
      %v1544 = vmul.f32 %v923, %v1464
      %v1545 = vmul.f32 %v952, %v1465
      %v1546 = vmul.f32 %v981, %v1466
      %v1547 = vmul.f32 %v1010, %v1467
      %v1548 = vmul.f32 %v1039, %v1468
      %v1549 = vmul.f32 %v1068, %v1469
      %v1550 = vadd.f32 %v1470, %v1480
      %v1551 = vadd.f32 %v1550, %v1490
      %v1552 = vadd.f32 %v1551, %v1500
      %v1553 = vadd.f32 %v1552, %v1510
      %v1554 = vadd.f32 %v1553, %v1520
      %v1555 = vadd.f32 %v1554, %v1530
      %v1556 = vadd.f32 %v1555, %v1540
      %v1557 = vadd.f32 %v1471, %v1481
      %v1558 = vadd.f32 %v1557, %v1491
      %v1559 = vadd.f32 %v1558, %v1501
      %v1560 = vadd.f32 %v1559, %v1511
      %v1561 = vadd.f32 %v1560, %v1521
      %v1562 = vadd.f32 %v1561, %v1531
      %v1563 = vadd.f32 %v1562, %v1541
      %v1564 = vadd.f32 %v1472, %v1482
      %v1565 = vadd.f32 %v1564, %v1492
      %v1566 = vadd.f32 %v1565, %v1502
      %v1567 = vadd.f32 %v1566, %v1512
      %v1568 = vadd.f32 %v1567, %v1522
      %v1569 = vadd.f32 %v1568, %v1532
      %v1570 = vadd.f32 %v1569, %v1542
      %v1571 = vadd.f32 %v1473, %v1483
      %v1572 = vadd.f32 %v1571, %v1493
      %v1573 = vadd.f32 %v1572, %v1503
      %v1574 = vadd.f32 %v1573, %v1513
      %v1575 = vadd.f32 %v1574, %v1523
      %v1576 = vadd.f32 %v1575, %v1533
      %v1577 = vadd.f32 %v1576, %v1543
      %v1578 = vadd.f32 %v1474, %v1484
      %v1579 = vadd.f32 %v1578, %v1494
      %v1580 = vadd.f32 %v1579, %v1504
      %v1581 = vadd.f32 %v1580, %v1514
      %v1582 = vadd.f32 %v1581, %v1524
      %v1583 = vadd.f32 %v1582, %v1534
      %v1584 = vadd.f32 %v1583, %v1544
      %v1585 = vadd.f32 %v1475, %v1485
      %v1586 = vadd.f32 %v1585, %v1495
      %v1587 = vadd.f32 %v1586, %v1505
      %v1588 = vadd.f32 %v1587, %v1515
      %v1589 = vadd.f32 %v1588, %v1525
      %v1590 = vadd.f32 %v1589, %v1535
      %v1591 = vadd.f32 %v1590, %v1545
      %v1592 = vadd.f32 %v1476, %v1486
      %v1593 = vadd.f32 %v1592, %v1496
      %v1594 = vadd.f32 %v1593, %v1506
      %v1595 = vadd.f32 %v1594, %v1516
      %v1596 = vadd.f32 %v1595, %v1526
      %v1597 = vadd.f32 %v1596, %v1536
      %v1598 = vadd.f32 %v1597, %v1546
      %v1599 = vadd.f32 %v1477, %v1487
      %v1600 = vadd.f32 %v1599, %v1497
      %v1601 = vadd.f32 %v1600, %v1507
      %v1602 = vadd.f32 %v1601, %v1517
      %v1603 = vadd.f32 %v1602, %v1527
      %v1604 = vadd.f32 %v1603, %v1537
      %v1605 = vadd.f32 %v1604, %v1547
      %v1606 = vadd.f32 %v1478, %v1488
      %v1607 = vadd.f32 %v1606, %v1498
      %v1608 = vadd.f32 %v1607, %v1508
      %v1609 = vadd.f32 %v1608, %v1518
      %v1610 = vadd.f32 %v1609, %v1528
      %v1611 = vadd.f32 %v1610, %v1538
      %v1612 = vadd.f32 %v1611, %v1548
      %v1613 = vadd.f32 %v1479, %v1489
      %v1614 = vadd.f32 %v1613, %v1499
      %v1615 = vadd.f32 %v1614, %v1509
      %v1616 = vadd.f32 %v1615, %v1519
      %v1617 = vadd.f32 %v1616, %v1529
      %v1618 = vadd.f32 %v1617, %v1539
      %v1619 = vadd.f32 %v1618, %v1549
      %v1620 = vld [vmem:[#allocation2] sm:$0xff]
      %v1621 = vld [vmem:[#allocation2 + $0x8] sm:$0xff]
      %v1622 = vld [vmem:[#allocation2 + $0x10] sm:$0xff]
      %v1623 = vld [vmem:[#allocation2 + $0x18] sm:$0xff]
      %v1624 = vld [vmem:[#allocation2 + $0x20] sm:$0xff]
      %v1625 = vld [vmem:[#allocation2 + $0x28] sm:$0xff]
      %v1626 = vld [vmem:[#allocation2 + $0x30] sm:$0xff]
      %v1627 = vld [vmem:[#allocation2 + $0x38] sm:$0xff]
      %v1628 = vld [vmem:[#allocation2 + $0x40] sm:$0xff]
      %v1629 = vld [vmem:[#allocation2 + $0x48] sm:$0xff]
      %v1630 = vadd.f32 %v1620, %v1556
      %v1631 = vadd.f32 %v1621, %v1563
      %v1632 = vadd.f32 %v1622, %v1570
      %v1633 = vadd.f32 %v1623, %v1577
      %v1634 = vadd.f32 %v1624, %v1584
      %v1635 = vadd.f32 %v1625, %v1591
      %v1636 = vadd.f32 %v1626, %v1598
      %v1637 = vadd.f32 %v1627, %v1605
      %v1638 = vadd.f32 %v1628, %v1612
      %v1639 = vadd.f32 %v1629, %v1619
      %1640 = vst [vmem:[#allocation2] sm:$0xff] %v1630
      %1641 = vst [vmem:[#allocation2 + $0x8] sm:$0xff] %v1631
      %1642 = vst [vmem:[#allocation2 + $0x10] sm:$0xff] %v1632
      %1643 = vst [vmem:[#allocation2 + $0x18] sm:$0xff] %v1633
      %1644 = vst [vmem:[#allocation2 + $0x20] sm:$0xff] %v1634
      %1645 = vst [vmem:[#allocation2 + $0x28] sm:$0xff] %v1635
      %1646 = vst [vmem:[#allocation2 + $0x30] sm:$0xff] %v1636
      %1647 = vst [vmem:[#allocation2 + $0x38] sm:$0xff] %v1637
      %1648 = vst [vmem:[#allocation2 + $0x40] sm:$0xff] %v1638
      %1649 = vst [vmem:[#allocation2 + $0x48] sm:$0xff] %v1639
      // Predicated region
      $region77: #{efficientnetv2_pad_forward.1} parent=71 // pred_check
        %p1650 = pneg %p468
      $region78: #{efficientnetv2_pad_forward.1} parent=71 // pred_check_branch
        %1652 = sbr.rel (%p1650) target = $region80
      $region79: #{efficientnetv2_pad_forward.1} parent=71 // pred_region
        %v1653 = vld [vmem:[#allocation2] sm:$0xff]
        %v1654 = vld [vmem:[#allocation2 + $0x8] sm:$0xff]
        %v1655 = vld [vmem:[#allocation2 + $0x10] sm:$0xff]
        %v1656 = vld [vmem:[#allocation2 + $0x18] sm:$0xff]
        %v1657 = vld [vmem:[#allocation2 + $0x20] sm:$0xff]
        %v1658 = vld [vmem:[#allocation2 + $0x28] sm:$0xff]
        %v1659 = vld [vmem:[#allocation2 + $0x30] sm:$0xff]
        %v1660 = vld [vmem:[#allocation2 + $0x38] sm:$0xff]
        %v1661 = vld [vmem:[#allocation2 + $0x40] sm:$0xff]
        %v1662 = vld [vmem:[#allocation2 + $0x48] sm:$0xff]
        %v1663 = vrot.slane %v1653, 4
        %v1664 = vadd.f32 %v1653, %v1663
        %v1665 = vrot.slane %v1664, 2
        %v1666 = vadd.f32 %v1664, %v1665
        %v1667 = vrot.slane %v1666, 1
        %v1668 = vadd.f32 %v1666, %v1667
        %v1669 = vrot.slane %v1654, 4
        %v1670 = vadd.f32 %v1654, %v1669
        %v1671 = vrot.slane %v1670, 2
        %v1672 = vadd.f32 %v1670, %v1671
        %v1673 = vrot.slane %v1672, 1
        %v1674 = vadd.f32 %v1672, %v1673
        %v1675 = vrot.slane %v1655, 4
        %v1676 = vadd.f32 %v1655, %v1675
        %v1677 = vrot.slane %v1676, 2
        %v1678 = vadd.f32 %v1676, %v1677
        %v1679 = vrot.slane %v1678, 1
        %v1680 = vadd.f32 %v1678, %v1679
        %v1681 = vrot.slane %v1656, 4
        %v1682 = vadd.f32 %v1656, %v1681
        %v1683 = vrot.slane %v1682, 2
        %v1684 = vadd.f32 %v1682, %v1683
        %v1685 = vrot.slane %v1684, 1
        %v1686 = vadd.f32 %v1684, %v1685
        %v1687 = vrot.slane %v1657, 4
        %v1688 = vadd.f32 %v1657, %v1687
        %v1689 = vrot.slane %v1688, 2
        %v1690 = vadd.f32 %v1688, %v1689
        %v1691 = vrot.slane %v1690, 1
        %v1692 = vadd.f32 %v1690, %v1691
        %v1693 = vrot.slane %v1658, 4
        %v1694 = vadd.f32 %v1658, %v1693
        %v1695 = vrot.slane %v1694, 2
        %v1696 = vadd.f32 %v1694, %v1695
        %v1697 = vrot.slane %v1696, 1
        %v1698 = vadd.f32 %v1696, %v1697
        %v1699 = vrot.slane %v1659, 4
        %v1700 = vadd.f32 %v1659, %v1699
        %v1701 = vrot.slane %v1700, 2
        %v1702 = vadd.f32 %v1700, %v1701
        %v1703 = vrot.slane %v1702, 1
        %v1704 = vadd.f32 %v1702, %v1703
        %v1705 = vrot.slane %v1660, 4
        %v1706 = vadd.f32 %v1660, %v1705
        %v1707 = vrot.slane %v1706, 2
        %v1708 = vadd.f32 %v1706, %v1707
        %v1709 = vrot.slane %v1708, 1
        %v1710 = vadd.f32 %v1708, %v1709
        %v1711 = vrot.slane %v1661, 4
        %v1712 = vadd.f32 %v1661, %v1711
        %v1713 = vrot.slane %v1712, 2
        %v1714 = vadd.f32 %v1712, %v1713
        %v1715 = vrot.slane %v1714, 1
        %v1716 = vadd.f32 %v1714, %v1715
        %v1717 = vrot.slane %v1662, 4
        %v1718 = vadd.f32 %v1662, %v1717
        %v1719 = vrot.slane %v1718, 2
        %v1720 = vadd.f32 %v1718, %v1719
        %v1721 = vrot.slane %v1720, 1
        %v1722 = vadd.f32 %v1720, %v1721
        %v1723 = vmul.f32 %v1668, 0.015625
        %v1724 = vmul.f32 %v1674, 0.015625
        %v1725 = vmul.f32 %v1680, 0.015625
        %v1726 = vmul.f32 %v1686, 0.015625
        %v1727 = vmul.f32 %v1692, 0.015625
        %v1728 = vmul.f32 %v1698, 0.015625
        %v1729 = vmul.f32 %v1704, 0.015625
        %v1730 = vmul.f32 %v1710, 0.015625
        %v1731 = vmul.f32 %v1716, 0.015625
        %v1732 = vmul.f32 %v1722, 0.015625
        %v1733 = vpack.c.bf16 %v1723, %v1723
        %v1734 = vpack.c.bf16 %v1724, %v1724
        %v1735 = vpack.c.bf16 %v1725, %v1725
        %v1736 = vpack.c.bf16 %v1726, %v1726
        %v1737 = vpack.c.bf16 %v1727, %v1727
        %v1738 = vpack.c.bf16 %v1728, %v1728
        %v1739 = vpack.c.bf16 %v1729, %v1729
        %v1740 = vpack.c.bf16 %v1730, %v1730
        %v1741 = vpack.c.bf16 %v1731, %v1731
        %v1742 = vpack.c.bf16 %v1732, %v1732
        %v1743 = vld [vmem:[%s5] sm:$0xff]
        %v1744 = vld [vmem:[%s5 + $0x8] sm:$0xff]
        %v1745 = vld [vmem:[%s5 + $0x10] sm:$0xff]
        %v1746 = vld [vmem:[%s5 + $0x18] sm:$0xff]
        %v1747 = vld [vmem:[%s5 + $0x20] sm:$0xff]
        %v1748 = vld [vmem:[%s5 + $0x28] sm:$0xff]
        %v1749 = vld [vmem:[%s5 + $0x30] sm:$0xff]
        %v1750 = vld [vmem:[%s5 + $0x38] sm:$0xff]
        %v1751 = vld [vmem:[%s5 + $0x40] sm:$0xff]
        %v1752 = vld [vmem:[%s5 + $0x48] sm:$0xff]
        %v1753 = vld [vmem:[%s5 + $0x50] sm:$0xff]
        %v1754 = vld [vmem:[%s5 + $0x58] sm:$0xff]
        %v1755 = vld [vmem:[%s5 + $0x60] sm:$0xff]
        %v1756 = vld [vmem:[%s5 + $0x68] sm:$0xff]
        %v1757 = vld [vmem:[%s5 + $0x70] sm:$0xff]
        %v1758 = vld [vmem:[%s5 + $0x78] sm:$0xff]
        %v1759 = vld [vmem:[%s5 + $0x80] sm:$0xff]
        %v1760 = vld [vmem:[%s5 + $0x88] sm:$0xff]
        %v1761 = vld [vmem:[%s5 + $0x90] sm:$0xff]
        %v1762 = vld [vmem:[%s5 + $0x98] sm:$0xff]
        %v1763 = vld [vmem:[%s5 + $0xa0] sm:$0xff]
        %v1764 = vld [vmem:[%s5 + $0xa8] sm:$0xff]
        %v1765 = vld [vmem:[%s5 + $0xb0] sm:$0xff]
        %v1766 = vld [vmem:[%s5 + $0xb8] sm:$0xff]
        %v1767 = vld [vmem:[%s5 + $0xc0] sm:$0xff]
        %v1768 = vld [vmem:[%s5 + $0xc8] sm:$0xff]
        %v1769 = vld [vmem:[%s5 + $0xd0] sm:$0xff]
        %v1770 = vld [vmem:[%s5 + $0xd8] sm:$0xff]
        %v1771 = vld [vmem:[%s5 + $0xe0] sm:$0xff]
        %v1772 = vld [vmem:[%s5 + $0xe8] sm:$0xff]
        %v1773 = vld [vmem:[%s5 + $0xf0] sm:$0xff]
        %v1774 = vld [vmem:[%s5 + $0xf8] sm:$0xff]
        %v1775 = vld [vmem:[%s5 + $0x100] sm:$0xff]
        %v1776 = vld [vmem:[%s5 + $0x108] sm:$0xff]
        %v1777 = vld [vmem:[%s5 + $0x110] sm:$0xff]
        %v1778 = vld [vmem:[%s5 + $0x118] sm:$0xff]
        %v1779 = vld [vmem:[%s5 + $0x120] sm:$0xff]
        %v1780 = vld [vmem:[%s5 + $0x128] sm:$0xff]
        %v1781 = vld [vmem:[%s5 + $0x130] sm:$0xff]
        %v1782 = vld [vmem:[%s5 + $0x138] sm:$0xff]
        %v1783 = vld [vmem:[%s5 + $0x140] sm:$0xff]
        %v1784 = vld [vmem:[%s5 + $0x148] sm:$0xff]
        %v1785 = vld [vmem:[%s5 + $0x150] sm:$0xff]
        %v1786 = vld [vmem:[%s5 + $0x158] sm:$0xff]
        %v1787 = vld [vmem:[%s5 + $0x160] sm:$0xff]
        %v1788 = vld [vmem:[%s5 + $0x168] sm:$0xff]
        %v1789 = vld [vmem:[%s5 + $0x170] sm:$0xff]
        %v1790 = vld [vmem:[%s5 + $0x178] sm:$0xff]
        %v1791 = vld [vmem:[%s5 + $0x180] sm:$0xff]
        %v1792 = vld [vmem:[%s5 + $0x188] sm:$0xff]
        %v1793 = vld [vmem:[%s5 + $0x190] sm:$0xff]
        %v1794 = vld [vmem:[%s5 + $0x198] sm:$0xff]
        %v1795 = vld [vmem:[%s5 + $0x1a0] sm:$0xff]
        %v1796 = vld [vmem:[%s5 + $0x1a8] sm:$0xff]
        %v1797 = vld [vmem:[%s5 + $0x1b0] sm:$0xff]
        %v1798 = vld [vmem:[%s5 + $0x1b8] sm:$0xff]
        %v1799 = vld [vmem:[%s5 + $0x1c0] sm:$0xff]
        %v1800 = vld [vmem:[%s5 + $0x1c8] sm:$0xff]
        %v1801 = vld [vmem:[%s5 + $0x1d0] sm:$0xff]
        %v1802 = vld [vmem:[%s5 + $0x1d8] sm:$0xff]
        %v1803 = vld [vmem:[%s5 + $0x1e0] sm:$0xff]
        %v1804 = vld [vmem:[%s5 + $0x1e8] sm:$0xff]
        %v1805 = vld [vmem:[%s5 + $0x1f0] sm:$0xff]
        %v1806 = vld [vmem:[%s5 + $0x1f8] sm:$0xff]
        %v1807 = vld [vmem:[%s5 + $0x200] sm:$0xff]
        %v1808 = vld [vmem:[%s5 + $0x208] sm:$0xff]
        %v1809 = vld [vmem:[%s5 + $0x210] sm:$0xff]
        %v1810 = vld [vmem:[%s5 + $0x218] sm:$0xff]
        %v1811 = vld [vmem:[%s5 + $0x220] sm:$0xff]
        %v1812 = vld [vmem:[%s5 + $0x228] sm:$0xff]
        %v1813 = vld [vmem:[%s5 + $0x230] sm:$0xff]
        %v1814 = vld [vmem:[%s5 + $0x238] sm:$0xff]
        %v1815 = vld [vmem:[%s5 + $0x240] sm:$0xff]
        %v1816 = vld [vmem:[%s5 + $0x248] sm:$0xff]
        %v1817 = vld [vmem:[%s5 + $0x250] sm:$0xff]
        %v1818 = vld [vmem:[%s5 + $0x258] sm:$0xff]
        %v1819 = vld [vmem:[%s5 + $0x260] sm:$0xff]
        %v1820 = vld [vmem:[%s5 + $0x268] sm:$0xff]
        %v1821 = vld [vmem:[%s5 + $0x270] sm:$0xff]
        %v1822 = vld [vmem:[%s5 + $0x278] sm:$0xff]
        %v1823 = vld [vmem:[%s5 + $0x280] sm:$0xff]
        %v1824 = vld [vmem:[%s5 + $0x288] sm:$0xff]
        %v1825 = vld [vmem:[%s5 + $0x290] sm:$0xff]
        %v1826 = vld [vmem:[%s5 + $0x298] sm:$0xff]
        %v1827 = vld [vmem:[%s5 + $0x2a0] sm:$0xff]
        %v1828 = vld [vmem:[%s5 + $0x2a8] sm:$0xff]
        %v1829 = vld [vmem:[%s5 + $0x2b0] sm:$0xff]
        %v1830 = vld [vmem:[%s5 + $0x2b8] sm:$0xff]
        %v1831 = vld [vmem:[%s5 + $0x2c0] sm:$0xff]
        %v1832 = vld [vmem:[%s5 + $0x2c8] sm:$0xff]
        %v1833 = vld [vmem:[%s5 + $0x2d0] sm:$0xff]
        %v1834 = vld [vmem:[%s5 + $0x2d8] sm:$0xff]
        %v1835 = vld [vmem:[%s5 + $0x2e0] sm:$0xff]
        %v1836 = vld [vmem:[%s5 + $0x2e8] sm:$0xff]
        %v1837 = vld [vmem:[%s5 + $0x2f0] sm:$0xff]
        %v1838 = vld [vmem:[%s5 + $0x2f8] sm:$0xff]
        %v1839 = vld [vmem:[%s5 + $0x300] sm:$0xff]
        %v1840 = vld [vmem:[%s5 + $0x308] sm:$0xff]
        %v1841 = vld [vmem:[%s5 + $0x310] sm:$0xff]
        %v1842 = vld [vmem:[%s5 + $0x318] sm:$0xff]
        %v1843 = vld [vmem:[%s5 + $0x320] sm:$0xff]
        %v1844 = vld [vmem:[%s5 + $0x328] sm:$0xff]
        %v1845 = vld [vmem:[%s5 + $0x330] sm:$0xff]
        %v1846 = vld [vmem:[%s5 + $0x338] sm:$0xff]
        %v1847 = vld [vmem:[%s5 + $0x340] sm:$0xff]
        %v1848 = vld [vmem:[%s5 + $0x348] sm:$0xff]
        %v1849 = vld [vmem:[%s5 + $0x350] sm:$0xff]
        %v1850 = vld [vmem:[%s5 + $0x358] sm:$0xff]
        %v1851 = vld [vmem:[%s5 + $0x360] sm:$0xff]
        %v1852 = vld [vmem:[%s5 + $0x368] sm:$0xff]
        %v1853 = vld [vmem:[%s5 + $0x370] sm:$0xff]
        %v1854 = vld [vmem:[%s5 + $0x378] sm:$0xff]
        %v1855 = vld [vmem:[%s5 + $0x380] sm:$0xff]
        %v1856 = vld [vmem:[%s5 + $0x388] sm:$0xff]
        %v1857 = vld [vmem:[%s5 + $0x390] sm:$0xff]
        %v1858 = vld [vmem:[%s5 + $0x398] sm:$0xff]
        %v1859 = vld [vmem:[%s5 + $0x3a0] sm:$0xff]
        %v1860 = vld [vmem:[%s5 + $0x3a8] sm:$0xff]
        %v1861 = vld [vmem:[%s5 + $0x3b0] sm:$0xff]
        %v1862 = vld [vmem:[%s5 + $0x3b8] sm:$0xff]
        %v1863 = vld [vmem:[%s5 + $0x3c0] sm:$0xff]
        %v1864 = vld [vmem:[%s5 + $0x3c8] sm:$0xff]
        %v1865 = vld [vmem:[%s5 + $0x3d0] sm:$0xff]
        %v1866 = vld [vmem:[%s5 + $0x3d8] sm:$0xff]
        %v1867 = vld [vmem:[%s5 + $0x3e0] sm:$0xff]
        %v1868 = vld [vmem:[%s5 + $0x3e8] sm:$0xff]
        %v1869 = vld [vmem:[%s5 + $0x3f0] sm:$0xff]
        %v1870 = vld [vmem:[%s5 + $0x3f8] sm:$0xff]
        %v1871 = vld [vmem:[%s5 + $0x400] sm:$0xff]
        %v1872 = vld [vmem:[%s5 + $0x408] sm:$0xff]
        %v1873 = vld [vmem:[%s5 + $0x410] sm:$0xff]
        %v1874 = vld [vmem:[%s5 + $0x418] sm:$0xff]
        %v1875 = vld [vmem:[%s5 + $0x420] sm:$0xff]
        %v1876 = vld [vmem:[%s5 + $0x428] sm:$0xff]
        %v1877 = vld [vmem:[%s5 + $0x430] sm:$0xff]
        %v1878 = vld [vmem:[%s5 + $0x438] sm:$0xff]
        %v1879 = vld [vmem:[%s5 + $0x440] sm:$0xff]
        %v1880 = vld [vmem:[%s5 + $0x448] sm:$0xff]
        %v1881 = vld [vmem:[%s5 + $0x450] sm:$0xff]
        %v1882 = vld [vmem:[%s5 + $0x458] sm:$0xff]
        %v1883 = vld [vmem:[%s5 + $0x460] sm:$0xff]
        %v1884 = vld [vmem:[%s5 + $0x468] sm:$0xff]
        %v1885 = vld [vmem:[%s5 + $0x470] sm:$0xff]
        %v1886 = vld [vmem:[%s5 + $0x478] sm:$0xff]
        %v1887 = vld [vmem:[%s5 + $0x480] sm:$0xff]
        %v1888 = vld [vmem:[%s5 + $0x488] sm:$0xff]
        %v1889 = vld [vmem:[%s5 + $0x490] sm:$0xff]
        %v1890 = vld [vmem:[%s5 + $0x498] sm:$0xff]
        %v1891 = vld [vmem:[%s5 + $0x4a0] sm:$0xff]
        %v1892 = vld [vmem:[%s5 + $0x4a8] sm:$0xff]
        %v1893 = vld [vmem:[%s5 + $0x4b0] sm:$0xff]
        %v1894 = vld [vmem:[%s5 + $0x4b8] sm:$0xff]
        %v1895 = vld [vmem:[%s5 + $0x4c0] sm:$0xff]
        %v1896 = vld [vmem:[%s5 + $0x4c8] sm:$0xff]
        %v1897 = vld [vmem:[%s5 + $0x4d0] sm:$0xff]
        %v1898 = vld [vmem:[%s5 + $0x4d8] sm:$0xff]
        %v1899 = vld [vmem:[%s5 + $0x4e0] sm:$0xff]
        %v1900 = vld [vmem:[%s5 + $0x4e8] sm:$0xff]
        %v1901 = vld [vmem:[%s5 + $0x4f0] sm:$0xff]
        %v1902 = vld [vmem:[%s5 + $0x4f8] sm:$0xff]
        %v1903 = vld [vmem:[%s5 + $0x500] sm:$0xff]
        %v1904 = vld [vmem:[%s5 + $0x508] sm:$0xff]
        %v1905 = vld [vmem:[%s5 + $0x510] sm:$0xff]
        %v1906 = vld [vmem:[%s5 + $0x518] sm:$0xff]
        %v1907 = vld [vmem:[%s5 + $0x520] sm:$0xff]
        %v1908 = vld [vmem:[%s5 + $0x528] sm:$0xff]
        %v1909 = vld [vmem:[%s5 + $0x530] sm:$0xff]
        %v1910 = vld [vmem:[%s5 + $0x538] sm:$0xff]
        %v1911 = vld [vmem:[%s5 + $0x540] sm:$0xff]
        %v1912 = vld [vmem:[%s5 + $0x548] sm:$0xff]
        %v1913 = vld [vmem:[%s5 + $0x550] sm:$0xff]
        %v1914 = vld [vmem:[%s5 + $0x558] sm:$0xff]
        %v1915 = vld [vmem:[%s5 + $0x560] sm:$0xff]
        %v1916 = vld [vmem:[%s5 + $0x568] sm:$0xff]
        %v1917 = vld [vmem:[%s5 + $0x570] sm:$0xff]
        %v1918 = vld [vmem:[%s5 + $0x578] sm:$0xff]
        %v1919 = vld [vmem:[%s5 + $0x580] sm:$0xff]
        %v1920 = vld [vmem:[%s5 + $0x588] sm:$0xff]
        %v1921 = vld [vmem:[%s5 + $0x590] sm:$0xff]
        %v1922 = vld [vmem:[%s5 + $0x598] sm:$0xff]
        %v1923 = vld [vmem:[%s5 + $0x5a0] sm:$0xff]
        %v1924 = vld [vmem:[%s5 + $0x5a8] sm:$0xff]
        %v1925 = vld [vmem:[%s5 + $0x5b0] sm:$0xff]
        %v1926 = vld [vmem:[%s5 + $0x5b8] sm:$0xff]
        %v1927 = vld [vmem:[%s5 + $0x5c0] sm:$0xff]
        %v1928 = vld [vmem:[%s5 + $0x5c8] sm:$0xff]
        %v1929 = vld [vmem:[%s5 + $0x5d0] sm:$0xff]
        %v1930 = vld [vmem:[%s5 + $0x5d8] sm:$0xff]
        %v1931 = vld [vmem:[%s5 + $0x5e0] sm:$0xff]
        %v1932 = vld [vmem:[%s5 + $0x5e8] sm:$0xff]
        %v1933 = vld [vmem:[%s5 + $0x5f0] sm:$0xff]
        %v1934 = vld [vmem:[%s5 + $0x5f8] sm:$0xff]
        %v1935 = vld [vmem:[%s5 + $0x600] sm:$0xff]
        %v1936 = vld [vmem:[%s5 + $0x608] sm:$0xff]
        %v1937 = vld [vmem:[%s5 + $0x610] sm:$0xff]
        %v1938 = vld [vmem:[%s5 + $0x618] sm:$0xff]
        %v1939 = vld [vmem:[%s5 + $0x620] sm:$0xff]
        %v1940 = vld [vmem:[%s5 + $0x628] sm:$0xff]
        %v1941 = vld [vmem:[%s5 + $0x630] sm:$0xff]
        %v1942 = vld [vmem:[%s5 + $0x638] sm:$0xff]
        %v1943 = vld [vmem:[%s5 + $0x640] sm:$0xff]
        %v1944 = vld [vmem:[%s5 + $0x648] sm:$0xff]
        %v1945 = vld [vmem:[%s5 + $0x650] sm:$0xff]
        %v1946 = vld [vmem:[%s5 + $0x658] sm:$0xff]
        %v1947 = vld [vmem:[%s5 + $0x660] sm:$0xff]
        %v1948 = vld [vmem:[%s5 + $0x668] sm:$0xff]
        %v1949 = vld [vmem:[%s5 + $0x670] sm:$0xff]
        %v1950 = vld [vmem:[%s5 + $0x678] sm:$0xff]
        %v1951 = vld [vmem:[%s5 + $0x680] sm:$0xff]
        %v1952 = vld [vmem:[%s5 + $0x688] sm:$0xff]
        %v1953 = vld [vmem:[%s5 + $0x690] sm:$0xff]
        %v1954 = vld [vmem:[%s5 + $0x698] sm:$0xff]
        %v1955 = vld [vmem:[%s5 + $0x6a0] sm:$0xff]
        %v1956 = vld [vmem:[%s5 + $0x6a8] sm:$0xff]
        %v1957 = vld [vmem:[%s5 + $0x6b0] sm:$0xff]
        %v1958 = vld [vmem:[%s5 + $0x6b8] sm:$0xff]
        %v1959 = vld [vmem:[%s5 + $0x6c0] sm:$0xff]
        %v1960 = vld [vmem:[%s5 + $0x6c8] sm:$0xff]
        %v1961 = vld [vmem:[%s5 + $0x6d0] sm:$0xff]
        %v1962 = vld [vmem:[%s5 + $0x6d8] sm:$0xff]
        %v1963 = vld [vmem:[%s5 + $0x6e0] sm:$0xff]
        %v1964 = vld [vmem:[%s5 + $0x6e8] sm:$0xff]
        %v1965 = vld [vmem:[%s5 + $0x6f0] sm:$0xff]
        %v1966 = vld [vmem:[%s5 + $0x6f8] sm:$0xff]
        %v1967 = vld [vmem:[%s5 + $0x700] sm:$0xff]
        %v1968 = vld [vmem:[%s5 + $0x708] sm:$0xff]
        %v1969 = vld [vmem:[%s5 + $0x710] sm:$0xff]
        %v1970 = vld [vmem:[%s5 + $0x718] sm:$0xff]
        %v1971 = vld [vmem:[%s5 + $0x720] sm:$0xff]
        %v1972 = vld [vmem:[%s5 + $0x728] sm:$0xff]
        %v1973 = vld [vmem:[%s5 + $0x730] sm:$0xff]
        %v1974 = vld [vmem:[%s5 + $0x738] sm:$0xff]
        %v1975 = vld [vmem:[%s5 + $0x740] sm:$0xff]
        %v1976 = vld [vmem:[%s5 + $0x748] sm:$0xff]
        %v1977 = vld [vmem:[%s5 + $0x750] sm:$0xff]
        %v1978 = vld [vmem:[%s5 + $0x758] sm:$0xff]
        %v1979 = vld [vmem:[%s5 + $0x760] sm:$0xff]
        %v1980 = vld [vmem:[%s5 + $0x768] sm:$0xff]
        %v1981 = vld [vmem:[%s5 + $0x770] sm:$0xff]
        %v1982 = vld [vmem:[%s5 + $0x778] sm:$0xff]
        %v1983 = vld [vmem:[%s5 + $0x780] sm:$0xff]
        %v1984 = vld [vmem:[%s5 + $0x788] sm:$0xff]
        %v1985 = vld [vmem:[%s5 + $0x790] sm:$0xff]
        %v1986 = vld [vmem:[%s5 + $0x798] sm:$0xff]
        %v1987 = vld [vmem:[%s5 + $0x7a0] sm:$0xff]
        %v1988 = vld [vmem:[%s5 + $0x7a8] sm:$0xff]
        %v1989 = vld [vmem:[%s5 + $0x7b0] sm:$0xff]
        %v1990 = vld [vmem:[%s5 + $0x7b8] sm:$0xff]
        %v1991 = vld [vmem:[%s5 + $0x7c0] sm:$0xff]
        %v1992 = vld [vmem:[%s5 + $0x7c8] sm:$0xff]
        %v1993 = vld [vmem:[%s5 + $0x7d0] sm:$0xff]
        %v1994 = vld [vmem:[%s5 + $0x7d8] sm:$0xff]
        %v1995 = vld [vmem:[%s5 + $0x7e0] sm:$0xff]
        %v1996 = vld [vmem:[%s5 + $0x7e8] sm:$0xff]
        %v1997 = vld [vmem:[%s5 + $0x7f0] sm:$0xff]
        %v1998 = vld [vmem:[%s5 + $0x7f8] sm:$0xff]
        %v1999 = vld [vmem:[%s5 + $0x800] sm:$0xff]
        %v2000 = vld [vmem:[%s5 + $0x808] sm:$0xff]
        %v2001 = vld [vmem:[%s5 + $0x810] sm:$0xff]
        %v2002 = vld [vmem:[%s5 + $0x818] sm:$0xff]
        %v2003 = vld [vmem:[%s5 + $0x820] sm:$0xff]
        %v2004 = vld [vmem:[%s5 + $0x828] sm:$0xff]
        %v2005 = vld [vmem:[%s5 + $0x830] sm:$0xff]
        %v2006 = vld [vmem:[%s5 + $0x838] sm:$0xff]
        %v2007 = vld [vmem:[%s5 + $0x840] sm:$0xff]
        %v2008 = vld [vmem:[%s5 + $0x848] sm:$0xff]
        %v2009 = vld [vmem:[%s5 + $0x850] sm:$0xff]
        %v2010 = vld [vmem:[%s5 + $0x858] sm:$0xff]
        %v2011 = vld [vmem:[%s5 + $0x860] sm:$0xff]
        %v2012 = vld [vmem:[%s5 + $0x868] sm:$0xff]
        %v2013 = vld [vmem:[%s5 + $0x870] sm:$0xff]
        %v2014 = vld [vmem:[%s5 + $0x878] sm:$0xff]
        %v2015 = vld [vmem:[%s5 + $0x880] sm:$0xff]
        %v2016 = vld [vmem:[%s5 + $0x888] sm:$0xff]
        %v2017 = vld [vmem:[%s5 + $0x890] sm:$0xff]
        %v2018 = vld [vmem:[%s5 + $0x898] sm:$0xff]
        %v2019 = vld [vmem:[%s5 + $0x8a0] sm:$0xff]
        %v2020 = vld [vmem:[%s5 + $0x8a8] sm:$0xff]
        %v2021 = vld [vmem:[%s5 + $0x8b0] sm:$0xff]
        %v2022 = vld [vmem:[%s5 + $0x8b8] sm:$0xff]
        %v2023 = vld [vmem:[%s5 + $0x8c0] sm:$0xff]
        %v2024 = vld [vmem:[%s5 + $0x8c8] sm:$0xff]
        %v2025 = vld [vmem:[%s5 + $0x8d0] sm:$0xff]
        %v2026 = vld [vmem:[%s5 + $0x8d8] sm:$0xff]
        %v2027 = vld [vmem:[%s5 + $0x8e0] sm:$0xff]
        %v2028 = vld [vmem:[%s5 + $0x8e8] sm:$0xff]
        %v2029 = vld [vmem:[%s5 + $0x8f0] sm:$0xff]
        %v2030 = vld [vmem:[%s5 + $0x8f8] sm:$0xff]
        %v2031 = vld [vmem:[%s5 + $0x900] sm:$0xff]
        %v2032 = vld [vmem:[%s5 + $0x908] sm:$0xff]
        %v2033 = vld [vmem:[%s5 + $0x910] sm:$0xff]
        %v2034 = vld [vmem:[%s5 + $0x918] sm:$0xff]
        %v2035 = vld [vmem:[%s5 + $0x920] sm:$0xff]
        %v2036 = vld [vmem:[%s5 + $0x928] sm:$0xff]
        %v2037 = vld [vmem:[%s5 + $0x930] sm:$0xff]
        %v2038 = vld [vmem:[%s5 + $0x938] sm:$0xff]
        %v2039 = vld [vmem:[%s5 + $0x940] sm:$0xff]
        %v2040 = vld [vmem:[%s5 + $0x948] sm:$0xff]
        %v2041 = vld [vmem:[%s5 + $0x950] sm:$0xff]
        %v2042 = vld [vmem:[%s5 + $0x958] sm:$0xff]
        %v2043 = vld [vmem:[%s5 + $0x960] sm:$0xff]
        %v2044 = vld [vmem:[%s5 + $0x968] sm:$0xff]
        %v2045 = vld [vmem:[%s5 + $0x970] sm:$0xff]
        %v2046 = vld [vmem:[%s5 + $0x978] sm:$0xff]
        %v2047 = vld [vmem:[%s5 + $0x980] sm:$0xff]
        %v2048 = vld [vmem:[%s5 + $0x988] sm:$0xff]
        %v2049 = vld [vmem:[%s5 + $0x990] sm:$0xff]
        %v2050 = vld [vmem:[%s5 + $0x998] sm:$0xff]
        %v2051 = vld [vmem:[%s5 + $0x9a0] sm:$0xff]
        %v2052 = vld [vmem:[%s5 + $0x9a8] sm:$0xff]
        %v2053 = vld [vmem:[%s5 + $0x9b0] sm:$0xff]
        %v2054 = vld [vmem:[%s5 + $0x9b8] sm:$0xff]
        %v2055 = vld [vmem:[%s5 + $0x9c0] sm:$0xff]
        %v2056 = vld [vmem:[%s5 + $0x9c8] sm:$0xff]
        %v2057 = vld [vmem:[%s5 + $0x9d0] sm:$0xff]
        %v2058 = vld [vmem:[%s5 + $0x9d8] sm:$0xff]
        %v2059 = vld [vmem:[%s5 + $0x9e0] sm:$0xff]
        %v2060 = vld [vmem:[%s5 + $0x9e8] sm:$0xff]
        %v2061 = vld [vmem:[%s5 + $0x9f0] sm:$0xff]
        %v2062 = vld [vmem:[%s5 + $0x9f8] sm:$0xff]
        %v2063 = vld [vmem:[%s5 + $0xa00] sm:$0xff]
        %v2064 = vld [vmem:[%s5 + $0xa08] sm:$0xff]
        %v2065 = vld [vmem:[%s5 + $0xa10] sm:$0xff]
        %v2066 = vld [vmem:[%s5 + $0xa18] sm:$0xff]
        %v2067 = vld [vmem:[%s5 + $0xa20] sm:$0xff]
        %v2068 = vld [vmem:[%s5 + $0xa28] sm:$0xff]
        %v2069 = vld [vmem:[%s5 + $0xa30] sm:$0xff]
        %v2070 = vld [vmem:[%s5 + $0xa38] sm:$0xff]
        %v2071 = vld [vmem:[%s5 + $0xa40] sm:$0xff]
        %v2072 = vld [vmem:[%s5 + $0xa48] sm:$0xff]
        %v2073 = vld [vmem:[%s5 + $0xa50] sm:$0xff]
        %v2074 = vld [vmem:[%s5 + $0xa58] sm:$0xff]
        %v2075 = vld [vmem:[%s5 + $0xa60] sm:$0xff]
        %v2076 = vld [vmem:[%s5 + $0xa68] sm:$0xff]
        %v2077 = vld [vmem:[%s5 + $0xa70] sm:$0xff]
        %v2078 = vld [vmem:[%s5 + $0xa78] sm:$0xff]
        %v2079 = vld [vmem:[%s5 + $0xa80] sm:$0xff]
        %v2080 = vld [vmem:[%s5 + $0xa88] sm:$0xff]
        %v2081 = vld [vmem:[%s5 + $0xa90] sm:$0xff]
        %v2082 = vld [vmem:[%s5 + $0xa98] sm:$0xff]
        %v2083 = vld [vmem:[%s5 + $0xaa0] sm:$0xff]
        %v2084 = vld [vmem:[%s5 + $0xaa8] sm:$0xff]
        %v2085 = vld [vmem:[%s5 + $0xab0] sm:$0xff]
        %v2086 = vld [vmem:[%s5 + $0xab8] sm:$0xff]
        %v2087 = vld [vmem:[%s5 + $0xac0] sm:$0xff]
        %v2088 = vld [vmem:[%s5 + $0xac8] sm:$0xff]
        %v2089 = vld [vmem:[%s5 + $0xad0] sm:$0xff]
        %v2090 = vld [vmem:[%s5 + $0xad8] sm:$0xff]
        %v2091 = vld [vmem:[%s5 + $0xae0] sm:$0xff]
        %v2092 = vld [vmem:[%s5 + $0xae8] sm:$0xff]
        %v2093 = vld [vmem:[%s5 + $0xaf0] sm:$0xff]
        %v2094 = vld [vmem:[%s5 + $0xaf8] sm:$0xff]
        %v2095 = vld [vmem:[%s5 + $0xb00] sm:$0xff]
        %v2096 = vld [vmem:[%s5 + $0xb08] sm:$0xff]
        %v2097 = vld [vmem:[%s5 + $0xb10] sm:$0xff]
        %v2098 = vld [vmem:[%s5 + $0xb18] sm:$0xff]
        %v2099 = vld [vmem:[%s5 + $0xb20] sm:$0xff]
        %v2100 = vld [vmem:[%s5 + $0xb28] sm:$0xff]
        %v2101 = vld [vmem:[%s5 + $0xb30] sm:$0xff]
        %v2102 = vld [vmem:[%s5 + $0xb38] sm:$0xff]
        %v2103 = vld [vmem:[%s5 + $0xb40] sm:$0xff]
        %v2104 = vld [vmem:[%s5 + $0xb48] sm:$0xff]
        %v2105 = vld [vmem:[%s5 + $0xb50] sm:$0xff]
        %v2106 = vld [vmem:[%s5 + $0xb58] sm:$0xff]
        %v2107 = vld [vmem:[%s5 + $0xb60] sm:$0xff]
        %v2108 = vld [vmem:[%s5 + $0xb68] sm:$0xff]
        %v2109 = vld [vmem:[%s5 + $0xb70] sm:$0xff]
        %v2110 = vld [vmem:[%s5 + $0xb78] sm:$0xff]
        %v2111 = vld [vmem:[%s5 + $0xb80] sm:$0xff]
        %v2112 = vld [vmem:[%s5 + $0xb88] sm:$0xff]
        %v2113 = vld [vmem:[%s5 + $0xb90] sm:$0xff]
        %v2114 = vld [vmem:[%s5 + $0xb98] sm:$0xff]
        %v2115 = vld [vmem:[%s5 + $0xba0] sm:$0xff]
        %v2116 = vld [vmem:[%s5 + $0xba8] sm:$0xff]
        %v2117 = vld [vmem:[%s5 + $0xbb0] sm:$0xff]
        %v2118 = vld [vmem:[%s5 + $0xbb8] sm:$0xff]
        %v2119 = vld [vmem:[%s5 + $0xbc0] sm:$0xff]
        %v2120 = vld [vmem:[%s5 + $0xbc8] sm:$0xff]
        %v2121 = vld [vmem:[%s5 + $0xbd0] sm:$0xff]
        %v2122 = vld [vmem:[%s5 + $0xbd8] sm:$0xff]
        %v2123 = vld [vmem:[%s5 + $0xbe0] sm:$0xff]
        %v2124 = vld [vmem:[%s5 + $0xbe8] sm:$0xff]
        %v2125 = vld [vmem:[%s5 + $0xbf0] sm:$0xff]
        %v2126 = vld [vmem:[%s5 + $0xbf8] sm:$0xff]
        %v2127 = vld [vmem:[%s5 + $0xc00] sm:$0xff]
        %v2128 = vld [vmem:[%s5 + $0xc08] sm:$0xff]
        %v2129 = vld [vmem:[%s5 + $0xc10] sm:$0xff]
        %v2130 = vld [vmem:[%s5 + $0xc18] sm:$0xff]
        %v2131 = vld [vmem:[%s5 + $0xc20] sm:$0xff]
        %v2132 = vld [vmem:[%s5 + $0xc28] sm:$0xff]
        %v2133 = vld [vmem:[%s5 + $0xc30] sm:$0xff]
        %v2134 = vld [vmem:[%s5 + $0xc38] sm:$0xff]
        %v2135 = vld [vmem:[%s5 + $0xc40] sm:$0xff]
        %v2136 = vld [vmem:[%s5 + $0xc48] sm:$0xff]
        %v2137 = vld [vmem:[%s5 + $0xc50] sm:$0xff]
        %v2138 = vld [vmem:[%s5 + $0xc58] sm:$0xff]
        %v2139 = vld [vmem:[%s5 + $0xc60] sm:$0xff]
        %v2140 = vld [vmem:[%s5 + $0xc68] sm:$0xff]
        %v2141 = vld [vmem:[%s5 + $0xc70] sm:$0xff]
        %v2142 = vld [vmem:[%s5 + $0xc78] sm:$0xff]
        %v2143 = vld [vmem:[%s5 + $0xc80] sm:$0xff]
        %v2144 = vld [vmem:[%s5 + $0xc88] sm:$0xff]
        %v2145 = vld [vmem:[%s5 + $0xc90] sm:$0xff]
        %v2146 = vld [vmem:[%s5 + $0xc98] sm:$0xff]
        %v2147 = vld [vmem:[%s5 + $0xca0] sm:$0xff]
        %v2148 = vld [vmem:[%s5 + $0xca8] sm:$0xff]
        %v2149 = vld [vmem:[%s5 + $0xcb0] sm:$0xff]
        %v2150 = vld [vmem:[%s5 + $0xcb8] sm:$0xff]
        %v2151 = vld [vmem:[%s5 + $0xcc0] sm:$0xff]
        %v2152 = vld [vmem:[%s5 + $0xcc8] sm:$0xff]
        %v2153 = vld [vmem:[%s5 + $0xcd0] sm:$0xff]
        %v2154 = vld [vmem:[%s5 + $0xcd8] sm:$0xff]
        %v2155 = vld [vmem:[%s5 + $0xce0] sm:$0xff]
        %v2156 = vld [vmem:[%s5 + $0xce8] sm:$0xff]
        %v2157 = vld [vmem:[%s5 + $0xcf0] sm:$0xff]
        %v2158 = vld [vmem:[%s5 + $0xcf8] sm:$0xff]
        %v2159 = vld [vmem:[%s5 + $0xd00] sm:$0xff]
        %v2160 = vld [vmem:[%s5 + $0xd08] sm:$0xff]
        %v2161 = vld [vmem:[%s5 + $0xd10] sm:$0xff]
        %v2162 = vld [vmem:[%s5 + $0xd18] sm:$0xff]
        %v2163 = vld [vmem:[%s5 + $0xd20] sm:$0xff]
        %v2164 = vld [vmem:[%s5 + $0xd28] sm:$0xff]
        %v2165 = vld [vmem:[%s5 + $0xd30] sm:$0xff]
        %v2166 = vld [vmem:[%s5 + $0xd38] sm:$0xff]
        %v2167 = vld [vmem:[%s5 + $0xd40] sm:$0xff]
        %v2168 = vld [vmem:[%s5 + $0xd48] sm:$0xff]
        %v2169 = vld [vmem:[%s5 + $0xd50] sm:$0xff]
        %v2170 = vld [vmem:[%s5 + $0xd58] sm:$0xff]
        %v2171 = vld [vmem:[%s5 + $0xd60] sm:$0xff]
        %v2172 = vld [vmem:[%s5 + $0xd68] sm:$0xff]
        %v2173 = vld [vmem:[%s5 + $0xd70] sm:$0xff]
        %v2174 = vld [vmem:[%s5 + $0xd78] sm:$0xff]
        %v2175 = vld [vmem:[%s5 + $0xd80] sm:$0xff]
        %v2176 = vld [vmem:[%s5 + $0xd88] sm:$0xff]
        %v2177 = vld [vmem:[%s5 + $0xd90] sm:$0xff]
        %v2178 = vld [vmem:[%s5 + $0xd98] sm:$0xff]
        %v2179 = vld [vmem:[%s5 + $0xda0] sm:$0xff]
        %v2180 = vld [vmem:[%s5 + $0xda8] sm:$0xff]
        %v2181 = vld [vmem:[%s5 + $0xdb0] sm:$0xff]
        %v2182 = vld [vmem:[%s5 + $0xdb8] sm:$0xff]
        %v2183 = vld [vmem:[%s5 + $0xdc0] sm:$0xff]
        %v2184 = vld [vmem:[%s5 + $0xdc8] sm:$0xff]
        %v2185 = vld [vmem:[%s5 + $0xdd0] sm:$0xff]
        %v2186 = vld [vmem:[%s5 + $0xdd8] sm:$0xff]
        %v2187 = vld [vmem:[%s5 + $0xde0] sm:$0xff]
        %v2188 = vld [vmem:[%s5 + $0xde8] sm:$0xff]
        %v2189 = vld [vmem:[%s5 + $0xdf0] sm:$0xff]
        %v2190 = vld [vmem:[%s5 + $0xdf8] sm:$0xff]
        %v2191 = vld [vmem:[%s5 + $0xe00] sm:$0xff]
        %v2192 = vld [vmem:[%s5 + $0xe08] sm:$0xff]
        %v2193 = vld [vmem:[%s5 + $0xe10] sm:$0xff]
        %v2194 = vld [vmem:[%s5 + $0xe18] sm:$0xff]
        %v2195 = vld [vmem:[%s5 + $0xe20] sm:$0xff]
        %v2196 = vld [vmem:[%s5 + $0xe28] sm:$0xff]
        %v2197 = vld [vmem:[%s5 + $0xe30] sm:$0xff]
        %v2198 = vld [vmem:[%s5 + $0xe38] sm:$0xff]
        %v2199 = vld [vmem:[%s5 + $0xe40] sm:$0xff]
        %v2200 = vld [vmem:[%s5 + $0xe48] sm:$0xff]
        %v2201 = vld [vmem:[%s5 + $0xe50] sm:$0xff]
        %v2202 = vld [vmem:[%s5 + $0xe58] sm:$0xff]
        %v2203 = vld [vmem:[%s5 + $0xe60] sm:$0xff]
        %v2204 = vld [vmem:[%s5 + $0xe68] sm:$0xff]
        %v2205 = vld [vmem:[%s5 + $0xe70] sm:$0xff]
        %v2206 = vld [vmem:[%s5 + $0xe78] sm:$0xff]
        %v2207 = vld [vmem:[%s5 + $0xe80] sm:$0xff]
        %v2208 = vld [vmem:[%s5 + $0xe88] sm:$0xff]
        %v2209 = vld [vmem:[%s5 + $0xe90] sm:$0xff]
        %v2210 = vld [vmem:[%s5 + $0xe98] sm:$0xff]
        %v2211 = vld [vmem:[%s5 + $0xea0] sm:$0xff]
        %v2212 = vld [vmem:[%s5 + $0xea8] sm:$0xff]
        %v2213 = vld [vmem:[%s5 + $0xeb0] sm:$0xff]
        %v2214 = vld [vmem:[%s5 + $0xeb8] sm:$0xff]
        %v2215 = vld [vmem:[%s5 + $0xec0] sm:$0xff]
        %v2216 = vld [vmem:[%s5 + $0xec8] sm:$0xff]
        %v2217 = vld [vmem:[%s5 + $0xed0] sm:$0xff]
        %v2218 = vld [vmem:[%s5 + $0xed8] sm:$0xff]
        %v2219 = vld [vmem:[%s5 + $0xee0] sm:$0xff]
        %v2220 = vld [vmem:[%s5 + $0xee8] sm:$0xff]
        %v2221 = vld [vmem:[%s5 + $0xef0] sm:$0xff]
        %v2222 = vld [vmem:[%s5 + $0xef8] sm:$0xff]
        %v2223 = vld [vmem:[%s5 + $0xf00] sm:$0xff]
        %v2224 = vld [vmem:[%s5 + $0xf08] sm:$0xff]
        %v2225 = vld [vmem:[%s5 + $0xf10] sm:$0xff]
        %v2226 = vld [vmem:[%s5 + $0xf18] sm:$0xff]
        %v2227 = vld [vmem:[%s5 + $0xf20] sm:$0xff]
        %v2228 = vld [vmem:[%s5 + $0xf28] sm:$0xff]
        %v2229 = vld [vmem:[%s5 + $0xf30] sm:$0xff]
        %v2230 = vld [vmem:[%s5 + $0xf38] sm:$0xff]
        %v2231 = vld [vmem:[%s5 + $0xf40] sm:$0xff]
        %v2232 = vld [vmem:[%s5 + $0xf48] sm:$0xff]
        %v2233 = vld [vmem:[%s5 + $0xf50] sm:$0xff]
        %v2234 = vld [vmem:[%s5 + $0xf58] sm:$0xff]
        %v2235 = vld [vmem:[%s5 + $0xf60] sm:$0xff]
        %v2236 = vld [vmem:[%s5 + $0xf68] sm:$0xff]
        %v2237 = vld [vmem:[%s5 + $0xf70] sm:$0xff]
        %v2238 = vld [vmem:[%s5 + $0xf78] sm:$0xff]
        %v2239 = vld [vmem:[%s5 + $0xf80] sm:$0xff]
        %v2240 = vld [vmem:[%s5 + $0xf88] sm:$0xff]
        %v2241 = vld [vmem:[%s5 + $0xf90] sm:$0xff]
        %v2242 = vld [vmem:[%s5 + $0xf98] sm:$0xff]
        %v2243 = vld [vmem:[%s5 + $0xfa0] sm:$0xff]
        %v2244 = vld [vmem:[%s5 + $0xfa8] sm:$0xff]
        %v2245 = vld [vmem:[%s5 + $0xfb0] sm:$0xff]
        %v2246 = vld [vmem:[%s5 + $0xfb8] sm:$0xff]
        %v2247 = vld [vmem:[%s5 + $0xfc0] sm:$0xff]
        %v2248 = vld [vmem:[%s5 + $0xfc8] sm:$0xff]
        %v2249 = vld [vmem:[%s5 + $0xfd0] sm:$0xff]
        %v2250 = vld [vmem:[%s5 + $0xfd8] sm:$0xff]
        %v2251 = vld [vmem:[%s5 + $0xfe0] sm:$0xff]
        %v2252 = vld [vmem:[%s5 + $0xfe8] sm:$0xff]
        %v2253 = vld [vmem:[%s5 + $0xff0] sm:$0xff]
        %v2254 = vld [vmem:[%s5 + $0xff8] sm:$0xff]
        %v2255 = vld [vmem:[%s5 + $0x1000] sm:$0xff]
        %v2256 = vld [vmem:[%s5 + $0x1008] sm:$0xff]
        %v2257 = vld [vmem:[%s5 + $0x1010] sm:$0xff]
        %v2258 = vld [vmem:[%s5 + $0x1018] sm:$0xff]
        %v2259 = vld [vmem:[%s5 + $0x1020] sm:$0xff]
        %v2260 = vld [vmem:[%s5 + $0x1028] sm:$0xff]
        %v2261 = vld [vmem:[%s5 + $0x1030] sm:$0xff]
        %v2262 = vld [vmem:[%s5 + $0x1038] sm:$0xff]
        %v2263 = vld [vmem:[%s5 + $0x1040] sm:$0xff]
        %v2264 = vld [vmem:[%s5 + $0x1048] sm:$0xff]
        %v2265 = vld [vmem:[%s5 + $0x1050] sm:$0xff]
        %v2266 = vld [vmem:[%s5 + $0x1058] sm:$0xff]
        %v2267 = vld [vmem:[%s5 + $0x1060] sm:$0xff]
        %v2268 = vld [vmem:[%s5 + $0x1068] sm:$0xff]
        %v2269 = vld [vmem:[%s5 + $0x1070] sm:$0xff]
        %v2270 = vld [vmem:[%s5 + $0x1078] sm:$0xff]
        %v2271 = vld [vmem:[%s5 + $0x1080] sm:$0xff]
        %v2272 = vld [vmem:[%s5 + $0x1088] sm:$0xff]
        %v2273 = vld [vmem:[%s5 + $0x1090] sm:$0xff]
        %v2274 = vld [vmem:[%s5 + $0x1098] sm:$0xff]
        %v2275 = vld [vmem:[%s5 + $0x10a0] sm:$0xff]
        %v2276 = vld [vmem:[%s5 + $0x10a8] sm:$0xff]
        %v2277 = vld [vmem:[%s5 + $0x10b0] sm:$0xff]
        %v2278 = vld [vmem:[%s5 + $0x10b8] sm:$0xff]
        %v2279 = vld [vmem:[%s5 + $0x10c0] sm:$0xff]
        %v2280 = vld [vmem:[%s5 + $0x10c8] sm:$0xff]
        %v2281 = vld [vmem:[%s5 + $0x10d0] sm:$0xff]
        %v2282 = vld [vmem:[%s5 + $0x10d8] sm:$0xff]
        %v2283 = vld [vmem:[%s5 + $0x10e0] sm:$0xff]
        %v2284 = vld [vmem:[%s5 + $0x10e8] sm:$0xff]
        %v2285 = vld [vmem:[%s5 + $0x10f0] sm:$0xff]
        %v2286 = vld [vmem:[%s5 + $0x10f8] sm:$0xff]
        %v2287 = vld [vmem:[%s5 + $0x1100] sm:$0xff]
        %v2288 = vld [vmem:[%s5 + $0x1108] sm:$0xff]
        %v2289 = vld [vmem:[%s5 + $0x1110] sm:$0xff]
        %v2290 = vld [vmem:[%s5 + $0x1118] sm:$0xff]
        %v2291 = vld [vmem:[%s5 + $0x1120] sm:$0xff]
        %v2292 = vld [vmem:[%s5 + $0x1128] sm:$0xff]
        %v2293 = vld [vmem:[%s5 + $0x1130] sm:$0xff]
        %v2294 = vld [vmem:[%s5 + $0x1138] sm:$0xff]
        %v2295 = vld [vmem:[%s5 + $0x1140] sm:$0xff]
        %v2296 = vld [vmem:[%s5 + $0x1148] sm:$0xff]
        %v2297 = vld [vmem:[%s5 + $0x1150] sm:$0xff]
        %v2298 = vld [vmem:[%s5 + $0x1158] sm:$0xff]
        %v2299 = vld [vmem:[%s5 + $0x1160] sm:$0xff]
        %v2300 = vld [vmem:[%s5 + $0x1168] sm:$0xff]
        %v2301 = vld [vmem:[%s5 + $0x1170] sm:$0xff]
        %v2302 = vld [vmem:[%s5 + $0x1178] sm:$0xff]
        %v2303 = vld [vmem:[%s5 + $0x1180] sm:$0xff]
        %v2304 = vld [vmem:[%s5 + $0x1188] sm:$0xff]
        %v2305 = vld [vmem:[%s5 + $0x1190] sm:$0xff]
        %v2306 = vld [vmem:[%s5 + $0x1198] sm:$0xff]
        %v2307 = vld [vmem:[%s5 + $0x11a0] sm:$0xff]
        %v2308 = vld [vmem:[%s5 + $0x11a8] sm:$0xff]
        %v2309 = vld [vmem:[%s5 + $0x11b0] sm:$0xff]
        %v2310 = vld [vmem:[%s5 + $0x11b8] sm:$0xff]
        %v2311 = vld [vmem:[%s5 + $0x11c0] sm:$0xff]
        %v2312 = vld [vmem:[%s5 + $0x11c8] sm:$0xff]
        %v2313 = vld [vmem:[%s5 + $0x11d0] sm:$0xff]
        %v2314 = vld [vmem:[%s5 + $0x11d8] sm:$0xff]
        %v2315 = vld [vmem:[%s5 + $0x11e0] sm:$0xff]
        %v2316 = vld [vmem:[%s5 + $0x11e8] sm:$0xff]
        %v2317 = vld [vmem:[%s5 + $0x11f0] sm:$0xff]
        %v2318 = vld [vmem:[%s5 + $0x11f8] sm:$0xff]
        %v2319 = vld [vmem:[%s5 + $0x1200] sm:$0xff]
        %v2320 = vld [vmem:[%s5 + $0x1208] sm:$0xff]
        %v2321 = vld [vmem:[%s5 + $0x1210] sm:$0xff]
        %v2322 = vld [vmem:[%s5 + $0x1218] sm:$0xff]
        %v2323 = vld [vmem:[%s5 + $0x1220] sm:$0xff]
        %v2324 = vld [vmem:[%s5 + $0x1228] sm:$0xff]
        %v2325 = vld [vmem:[%s5 + $0x1230] sm:$0xff]
        %v2326 = vld [vmem:[%s5 + $0x1238] sm:$0xff]
        %v2327 = vld [vmem:[%s5 + $0x1240] sm:$0xff]
        %v2328 = vld [vmem:[%s5 + $0x1248] sm:$0xff]
        %v2329 = vld [vmem:[%s5 + $0x1250] sm:$0xff]
        %v2330 = vld [vmem:[%s5 + $0x1258] sm:$0xff]
        %v2331 = vld [vmem:[%s5 + $0x1260] sm:$0xff]
        %v2332 = vld [vmem:[%s5 + $0x1268] sm:$0xff]
        %v2333 = vld [vmem:[%s5 + $0x1270] sm:$0xff]
        %v2334 = vld [vmem:[%s5 + $0x1278] sm:$0xff]
        %v2335 = vld [vmem:[%s5 + $0x1280] sm:$0xff]
        %v2336 = vld [vmem:[%s5 + $0x1288] sm:$0xff]
        %v2337 = vld [vmem:[%s5 + $0x1290] sm:$0xff]
        %v2338 = vld [vmem:[%s5 + $0x1298] sm:$0xff]
        %v2339 = vld [vmem:[%s5 + $0x12a0] sm:$0xff]
        %v2340 = vld [vmem:[%s5 + $0x12a8] sm:$0xff]
        %v2341 = vld [vmem:[%s5 + $0x12b0] sm:$0xff]
        %v2342 = vld [vmem:[%s5 + $0x12b8] sm:$0xff]
        %v2343 = vld [vmem:[%s5 + $0x12c0] sm:$0xff]
        %v2344 = vld [vmem:[%s5 + $0x12c8] sm:$0xff]
        %v2345 = vld [vmem:[%s5 + $0x12d0] sm:$0xff]
        %v2346 = vld [vmem:[%s5 + $0x12d8] sm:$0xff]
        %v2347 = vld [vmem:[%s5 + $0x12e0] sm:$0xff]
        %v2348 = vld [vmem:[%s5 + $0x12e8] sm:$0xff]
        %v2349 = vld [vmem:[%s5 + $0x12f0] sm:$0xff]
        %v2350 = vld [vmem:[%s5 + $0x12f8] sm:$0xff]
        %v2351 = vld [vmem:[%s5 + $0x1300] sm:$0xff]
        %v2352 = vld [vmem:[%s5 + $0x1308] sm:$0xff]
        %v2353 = vld [vmem:[%s5 + $0x1310] sm:$0xff]
        %v2354 = vld [vmem:[%s5 + $0x1318] sm:$0xff]
        %v2355 = vld [vmem:[%s5 + $0x1320] sm:$0xff]
        %v2356 = vld [vmem:[%s5 + $0x1328] sm:$0xff]
        %v2357 = vld [vmem:[%s5 + $0x1330] sm:$0xff]
        %v2358 = vld [vmem:[%s5 + $0x1338] sm:$0xff]
        %v2359 = vld [vmem:[%s5 + $0x1340] sm:$0xff]
        %v2360 = vld [vmem:[%s5 + $0x1348] sm:$0xff]
        %v2361 = vld [vmem:[%s5 + $0x1350] sm:$0xff]
        %v2362 = vld [vmem:[%s5 + $0x1358] sm:$0xff]
        %v2363 = vld [vmem:[%s5 + $0x1360] sm:$0xff]
        %v2364 = vld [vmem:[%s5 + $0x1368] sm:$0xff]
        %v2365 = vld [vmem:[%s5 + $0x1370] sm:$0xff]
        %v2366 = vld [vmem:[%s5 + $0x1378] sm:$0xff]
        %v2367 = vld [vmem:[%s5 + $0x1380] sm:$0xff]
        %v2368 = vld [vmem:[%s5 + $0x1388] sm:$0xff]
        %v2369 = vld [vmem:[%s5 + $0x1390] sm:$0xff]
        %v2370 = vld [vmem:[%s5 + $0x1398] sm:$0xff]
        %v2371 = vld [vmem:[%s5 + $0x13a0] sm:$0xff]
        %v2372 = vld [vmem:[%s5 + $0x13a8] sm:$0xff]
        %v2373 = vld [vmem:[%s5 + $0x13b0] sm:$0xff]
        %v2374 = vld [vmem:[%s5 + $0x13b8] sm:$0xff]
        %v2375 = vld [vmem:[%s5 + $0x13c0] sm:$0xff]
        %v2376 = vld [vmem:[%s5 + $0x13c8] sm:$0xff]
        %v2377 = vld [vmem:[%s5 + $0x13d0] sm:$0xff]
        %v2378 = vld [vmem:[%s5 + $0x13d8] sm:$0xff]
        %v2379 = vld [vmem:[%s5 + $0x13e0] sm:$0xff]
        %v2380 = vld [vmem:[%s5 + $0x13e8] sm:$0xff]
        %v2381 = vld [vmem:[%s5 + $0x13f0] sm:$0xff]
        %v2382 = vld [vmem:[%s5 + $0x13f8] sm:$0xff]
        %v2383 = vld [vmem:[%s6] sm:$0xff]
        %v3024 = vunpack.c.l.b16 %v1743
        %v3025 = vunpack.c.h.b16 %v1743
        %v3026 = vunpack.c.l.b16 %v1744
        %v3027 = vunpack.c.h.b16 %v1744
        %v3028 = vunpack.c.l.b16 %v1745
        %v3029 = vunpack.c.h.b16 %v1745
        %v3030 = vunpack.c.l.b16 %v1746
        %v3031 = vunpack.c.h.b16 %v1746
        %v3032 = vunpack.c.l.b16 %v1747
        %v3033 = vunpack.c.h.b16 %v1747
        %v3034 = vunpack.c.l.b16 %v1748
        %v3035 = vunpack.c.h.b16 %v1748
        %v3036 = vunpack.c.l.b16 %v1749
        %v3037 = vunpack.c.h.b16 %v1749
        %v3038 = vunpack.c.l.b16 %v1750
        %v3039 = vunpack.c.h.b16 %v1750
        %v3040 = vunpack.c.l.b16 %v1751
        %v3041 = vunpack.c.h.b16 %v1751
        %v3042 = vunpack.c.l.b16 %v1752
        %v3043 = vunpack.c.h.b16 %v1752
        %v3044 = vunpack.c.l.b16 %v1753
        %v3045 = vunpack.c.h.b16 %v1753
        %v3046 = vunpack.c.l.b16 %v1754
        %v3047 = vunpack.c.h.b16 %v1754
        %v3048 = vunpack.c.l.b16 %v1755
        %v3049 = vunpack.c.h.b16 %v1755
        %v3050 = vunpack.c.l.b16 %v1756
        %v3051 = vunpack.c.h.b16 %v1756
        %v3052 = vunpack.c.l.b16 %v1757
        %v3053 = vunpack.c.h.b16 %v1757
        %v3054 = vunpack.c.l.b16 %v1758
        %v3055 = vunpack.c.h.b16 %v1758
        %v3056 = vunpack.c.l.b16 %v1759
        %v3057 = vunpack.c.h.b16 %v1759
        %v3058 = vunpack.c.l.b16 %v1760
        %v3059 = vunpack.c.h.b16 %v1760
        %v3060 = vunpack.c.l.b16 %v1761
        %v3061 = vunpack.c.h.b16 %v1761
        %v3062 = vunpack.c.l.b16 %v1762
        %v3063 = vunpack.c.h.b16 %v1762
        %v3064 = vunpack.c.l.b16 %v1763
        %v3065 = vunpack.c.h.b16 %v1763
        %v3066 = vunpack.c.l.b16 %v1764
        %v3067 = vunpack.c.h.b16 %v1764
        %v3068 = vunpack.c.l.b16 %v1765
        %v3069 = vunpack.c.h.b16 %v1765
        %v3070 = vunpack.c.l.b16 %v1766
        %v3071 = vunpack.c.h.b16 %v1766
        %v3072 = vunpack.c.l.b16 %v1767
        %v3073 = vunpack.c.h.b16 %v1767
        %v3074 = vunpack.c.l.b16 %v1768
        %v3075 = vunpack.c.h.b16 %v1768
        %v3076 = vunpack.c.l.b16 %v1769
        %v3077 = vunpack.c.h.b16 %v1769
        %v3078 = vunpack.c.l.b16 %v1770
        %v3079 = vunpack.c.h.b16 %v1770
        %v3080 = vunpack.c.l.b16 %v1771
        %v3081 = vunpack.c.h.b16 %v1771
        %v3082 = vunpack.c.l.b16 %v1772
        %v3083 = vunpack.c.h.b16 %v1772
        %v3084 = vunpack.c.l.b16 %v1773
        %v3085 = vunpack.c.h.b16 %v1773
        %v3086 = vunpack.c.l.b16 %v1774
        %v3087 = vunpack.c.h.b16 %v1774
        %v3088 = vunpack.c.l.b16 %v1775
        %v3089 = vunpack.c.h.b16 %v1775
        %v3090 = vunpack.c.l.b16 %v1776
        %v3091 = vunpack.c.h.b16 %v1776
        %v3092 = vunpack.c.l.b16 %v1777
        %v3093 = vunpack.c.h.b16 %v1777
        %v3094 = vunpack.c.l.b16 %v1778
        %v3095 = vunpack.c.h.b16 %v1778
        %v3096 = vunpack.c.l.b16 %v1779
        %v3097 = vunpack.c.h.b16 %v1779
        %v3098 = vunpack.c.l.b16 %v1780
        %v3099 = vunpack.c.h.b16 %v1780
        %v3100 = vunpack.c.l.b16 %v1781
        %v3101 = vunpack.c.h.b16 %v1781
        %v3102 = vunpack.c.l.b16 %v1782
        %v3103 = vunpack.c.h.b16 %v1782
        %v3104 = vunpack.c.l.b16 %v1783
        %v3105 = vunpack.c.h.b16 %v1783
        %v3106 = vunpack.c.l.b16 %v1784
        %v3107 = vunpack.c.h.b16 %v1784
        %v3108 = vunpack.c.l.b16 %v1785
        %v3109 = vunpack.c.h.b16 %v1785
        %v3110 = vunpack.c.l.b16 %v1786
        %v3111 = vunpack.c.h.b16 %v1786
        %v3112 = vunpack.c.l.b16 %v1787
        %v3113 = vunpack.c.h.b16 %v1787
        %v3114 = vunpack.c.l.b16 %v1788
        %v3115 = vunpack.c.h.b16 %v1788
        %v3116 = vunpack.c.l.b16 %v1789
        %v3117 = vunpack.c.h.b16 %v1789
        %v3118 = vunpack.c.l.b16 %v1790
        %v3119 = vunpack.c.h.b16 %v1790
        %v3120 = vunpack.c.l.b16 %v1791
        %v3121 = vunpack.c.h.b16 %v1791
        %v3122 = vunpack.c.l.b16 %v1792
        %v3123 = vunpack.c.h.b16 %v1792
        %v3124 = vunpack.c.l.b16 %v1793
        %v3125 = vunpack.c.h.b16 %v1793
        %v3126 = vunpack.c.l.b16 %v1794
        %v3127 = vunpack.c.h.b16 %v1794
        %v3128 = vunpack.c.l.b16 %v1795
        %v3129 = vunpack.c.h.b16 %v1795
        %v3130 = vunpack.c.l.b16 %v1796
        %v3131 = vunpack.c.h.b16 %v1796
        %v3132 = vunpack.c.l.b16 %v1797
        %v3133 = vunpack.c.h.b16 %v1797
        %v3134 = vunpack.c.l.b16 %v1798
        %v3135 = vunpack.c.h.b16 %v1798
        %v3136 = vunpack.c.l.b16 %v1799
        %v3137 = vunpack.c.h.b16 %v1799
        %v3138 = vunpack.c.l.b16 %v1800
        %v3139 = vunpack.c.h.b16 %v1800
        %v3140 = vunpack.c.l.b16 %v1801
        %v3141 = vunpack.c.h.b16 %v1801
        %v3142 = vunpack.c.l.b16 %v1802
        %v3143 = vunpack.c.h.b16 %v1802
        %v3144 = vunpack.c.l.b16 %v1803
        %v3145 = vunpack.c.h.b16 %v1803
        %v3146 = vunpack.c.l.b16 %v1804
        %v3147 = vunpack.c.h.b16 %v1804
        %v3148 = vunpack.c.l.b16 %v1805
        %v3149 = vunpack.c.h.b16 %v1805
        %v3150 = vunpack.c.l.b16 %v1806
        %v3151 = vunpack.c.h.b16 %v1806
        %v3152 = vunpack.c.l.b16 %v1807
        %v3153 = vunpack.c.h.b16 %v1807
        %v3154 = vunpack.c.l.b16 %v1808
        %v3155 = vunpack.c.h.b16 %v1808
        %v3156 = vunpack.c.l.b16 %v1809
        %v3157 = vunpack.c.h.b16 %v1809
        %v3158 = vunpack.c.l.b16 %v1810
        %v3159 = vunpack.c.h.b16 %v1810
        %v3160 = vunpack.c.l.b16 %v1811
        %v3161 = vunpack.c.h.b16 %v1811
        %v3162 = vunpack.c.l.b16 %v1812
        %v3163 = vunpack.c.h.b16 %v1812
        %v3164 = vunpack.c.l.b16 %v1813
        %v3165 = vunpack.c.h.b16 %v1813
        %v3166 = vunpack.c.l.b16 %v1814
        %v3167 = vunpack.c.h.b16 %v1814
        %v3168 = vunpack.c.l.b16 %v1815
        %v3169 = vunpack.c.h.b16 %v1815
        %v3170 = vunpack.c.l.b16 %v1816
        %v3171 = vunpack.c.h.b16 %v1816
        %v3172 = vunpack.c.l.b16 %v1817
        %v3173 = vunpack.c.h.b16 %v1817
        %v3174 = vunpack.c.l.b16 %v1818
        %v3175 = vunpack.c.h.b16 %v1818
        %v3176 = vunpack.c.l.b16 %v1819
        %v3177 = vunpack.c.h.b16 %v1819
        %v3178 = vunpack.c.l.b16 %v1820
        %v3179 = vunpack.c.h.b16 %v1820
        %v3180 = vunpack.c.l.b16 %v1821
        %v3181 = vunpack.c.h.b16 %v1821
        %v3182 = vunpack.c.l.b16 %v1822
        %v3183 = vunpack.c.h.b16 %v1822
        %v3184 = vunpack.c.l.b16 %v1823
        %v3185 = vunpack.c.h.b16 %v1823
        %v3186 = vunpack.c.l.b16 %v1824
        %v3187 = vunpack.c.h.b16 %v1824
        %v3188 = vunpack.c.l.b16 %v1825
        %v3189 = vunpack.c.h.b16 %v1825
        %v3190 = vunpack.c.l.b16 %v1826
        %v3191 = vunpack.c.h.b16 %v1826
        %v3192 = vunpack.c.l.b16 %v1827
        %v3193 = vunpack.c.h.b16 %v1827
        %v3194 = vunpack.c.l.b16 %v1828
        %v3195 = vunpack.c.h.b16 %v1828
        %v3196 = vunpack.c.l.b16 %v1829
        %v3197 = vunpack.c.h.b16 %v1829
        %v3198 = vunpack.c.l.b16 %v1830
        %v3199 = vunpack.c.h.b16 %v1830
        %v3200 = vunpack.c.l.b16 %v1831
        %v3201 = vunpack.c.h.b16 %v1831
        %v3202 = vunpack.c.l.b16 %v1832
        %v3203 = vunpack.c.h.b16 %v1832
        %v3204 = vunpack.c.l.b16 %v1833
        %v3205 = vunpack.c.h.b16 %v1833
        %v3206 = vunpack.c.l.b16 %v1834
        %v3207 = vunpack.c.h.b16 %v1834
        %v3208 = vunpack.c.l.b16 %v1835
        %v3209 = vunpack.c.h.b16 %v1835
        %v3210 = vunpack.c.l.b16 %v1836
        %v3211 = vunpack.c.h.b16 %v1836
        %v3212 = vunpack.c.l.b16 %v1837
        %v3213 = vunpack.c.h.b16 %v1837
        %v3214 = vunpack.c.l.b16 %v1838
        %v3215 = vunpack.c.h.b16 %v1838
        %v3216 = vunpack.c.l.b16 %v1839
        %v3217 = vunpack.c.h.b16 %v1839
        %v3218 = vunpack.c.l.b16 %v1840
        %v3219 = vunpack.c.h.b16 %v1840
        %v3220 = vunpack.c.l.b16 %v1841
        %v3221 = vunpack.c.h.b16 %v1841
        %v3222 = vunpack.c.l.b16 %v1842
        %v3223 = vunpack.c.h.b16 %v1842
        %v3224 = vunpack.c.l.b16 %v1843
        %v3225 = vunpack.c.h.b16 %v1843
        %v3226 = vunpack.c.l.b16 %v1844
        %v3227 = vunpack.c.h.b16 %v1844
        %v3228 = vunpack.c.l.b16 %v1845
        %v3229 = vunpack.c.h.b16 %v1845
        %v3230 = vunpack.c.l.b16 %v1846
        %v3231 = vunpack.c.h.b16 %v1846
        %v3232 = vunpack.c.l.b16 %v1847
        %v3233 = vunpack.c.h.b16 %v1847
        %v3234 = vunpack.c.l.b16 %v1848
        %v3235 = vunpack.c.h.b16 %v1848
        %v3236 = vunpack.c.l.b16 %v1849
        %v3237 = vunpack.c.h.b16 %v1849
        %v3238 = vunpack.c.l.b16 %v1850
        %v3239 = vunpack.c.h.b16 %v1850
        %v3240 = vunpack.c.l.b16 %v1851
        %v3241 = vunpack.c.h.b16 %v1851
        %v3242 = vunpack.c.l.b16 %v1852
        %v3243 = vunpack.c.h.b16 %v1852
        %v3244 = vunpack.c.l.b16 %v1853
        %v3245 = vunpack.c.h.b16 %v1853
        %v3246 = vunpack.c.l.b16 %v1854
        %v3247 = vunpack.c.h.b16 %v1854
        %v3248 = vunpack.c.l.b16 %v1855
        %v3249 = vunpack.c.h.b16 %v1855
        %v3250 = vunpack.c.l.b16 %v1856
        %v3251 = vunpack.c.h.b16 %v1856
        %v3252 = vunpack.c.l.b16 %v1857
        %v3253 = vunpack.c.h.b16 %v1857
        %v3254 = vunpack.c.l.b16 %v1858
        %v3255 = vunpack.c.h.b16 %v1858
        %v3256 = vunpack.c.l.b16 %v1859
        %v3257 = vunpack.c.h.b16 %v1859
        %v3258 = vunpack.c.l.b16 %v1860
        %v3259 = vunpack.c.h.b16 %v1860
        %v3260 = vunpack.c.l.b16 %v1861
        %v3261 = vunpack.c.h.b16 %v1861
        %v3262 = vunpack.c.l.b16 %v1862
        %v3263 = vunpack.c.h.b16 %v1862
        %v3264 = vunpack.c.l.b16 %v1863
        %v3265 = vunpack.c.h.b16 %v1863
        %v3266 = vunpack.c.l.b16 %v1864
        %v3267 = vunpack.c.h.b16 %v1864
        %v3268 = vunpack.c.l.b16 %v1865
        %v3269 = vunpack.c.h.b16 %v1865
        %v3270 = vunpack.c.l.b16 %v1866
        %v3271 = vunpack.c.h.b16 %v1866
        %v3272 = vunpack.c.l.b16 %v1867
        %v3273 = vunpack.c.h.b16 %v1867
        %v3274 = vunpack.c.l.b16 %v1868
        %v3275 = vunpack.c.h.b16 %v1868
        %v3276 = vunpack.c.l.b16 %v1869
        %v3277 = vunpack.c.h.b16 %v1869
        %v3278 = vunpack.c.l.b16 %v1870
        %v3279 = vunpack.c.h.b16 %v1870
        %v3280 = vunpack.c.l.b16 %v1871
        %v3281 = vunpack.c.h.b16 %v1871
        %v3282 = vunpack.c.l.b16 %v1872
        %v3283 = vunpack.c.h.b16 %v1872
        %v3284 = vunpack.c.l.b16 %v1873
        %v3285 = vunpack.c.h.b16 %v1873
        %v3286 = vunpack.c.l.b16 %v1874
        %v3287 = vunpack.c.h.b16 %v1874
        %v3288 = vunpack.c.l.b16 %v1875
        %v3289 = vunpack.c.h.b16 %v1875
        %v3290 = vunpack.c.l.b16 %v1876
        %v3291 = vunpack.c.h.b16 %v1876
        %v3292 = vunpack.c.l.b16 %v1877
        %v3293 = vunpack.c.h.b16 %v1877
        %v3294 = vunpack.c.l.b16 %v1878
        %v3295 = vunpack.c.h.b16 %v1878
        %v3296 = vunpack.c.l.b16 %v1879
        %v3297 = vunpack.c.h.b16 %v1879
        %v3298 = vunpack.c.l.b16 %v1880
        %v3299 = vunpack.c.h.b16 %v1880
        %v3300 = vunpack.c.l.b16 %v1881
        %v3301 = vunpack.c.h.b16 %v1881
        %v3302 = vunpack.c.l.b16 %v1882
        %v3303 = vunpack.c.h.b16 %v1882
        %v3304 = vunpack.c.l.b16 %v1883
        %v3305 = vunpack.c.h.b16 %v1883
        %v3306 = vunpack.c.l.b16 %v1884
        %v3307 = vunpack.c.h.b16 %v1884
        %v3308 = vunpack.c.l.b16 %v1885
        %v3309 = vunpack.c.h.b16 %v1885
        %v3310 = vunpack.c.l.b16 %v1886
        %v3311 = vunpack.c.h.b16 %v1886
        %v3312 = vunpack.c.l.b16 %v1887
        %v3313 = vunpack.c.h.b16 %v1887
        %v3314 = vunpack.c.l.b16 %v1888
        %v3315 = vunpack.c.h.b16 %v1888
        %v3316 = vunpack.c.l.b16 %v1889
        %v3317 = vunpack.c.h.b16 %v1889
        %v3318 = vunpack.c.l.b16 %v1890
        %v3319 = vunpack.c.h.b16 %v1890
        %v3320 = vunpack.c.l.b16 %v1891
        %v3321 = vunpack.c.h.b16 %v1891
        %v3322 = vunpack.c.l.b16 %v1892
        %v3323 = vunpack.c.h.b16 %v1892
        %v3324 = vunpack.c.l.b16 %v1893
        %v3325 = vunpack.c.h.b16 %v1893
        %v3326 = vunpack.c.l.b16 %v1894
        %v3327 = vunpack.c.h.b16 %v1894
        %v3328 = vunpack.c.l.b16 %v1895
        %v3329 = vunpack.c.h.b16 %v1895
        %v3330 = vunpack.c.l.b16 %v1896
        %v3331 = vunpack.c.h.b16 %v1896
        %v3332 = vunpack.c.l.b16 %v1897
        %v3333 = vunpack.c.h.b16 %v1897
        %v3334 = vunpack.c.l.b16 %v1898
        %v3335 = vunpack.c.h.b16 %v1898
        %v3336 = vunpack.c.l.b16 %v1899
        %v3337 = vunpack.c.h.b16 %v1899
        %v3338 = vunpack.c.l.b16 %v1900
        %v3339 = vunpack.c.h.b16 %v1900
        %v3340 = vunpack.c.l.b16 %v1901
        %v3341 = vunpack.c.h.b16 %v1901
        %v3342 = vunpack.c.l.b16 %v1902
        %v3343 = vunpack.c.h.b16 %v1902
        %v3344 = vunpack.c.l.b16 %v1903
        %v3345 = vunpack.c.h.b16 %v1903
        %v3346 = vunpack.c.l.b16 %v1904
        %v3347 = vunpack.c.h.b16 %v1904
        %v3348 = vunpack.c.l.b16 %v1905
        %v3349 = vunpack.c.h.b16 %v1905
        %v3350 = vunpack.c.l.b16 %v1906
        %v3351 = vunpack.c.h.b16 %v1906
        %v3352 = vunpack.c.l.b16 %v1907
        %v3353 = vunpack.c.h.b16 %v1907
        %v3354 = vunpack.c.l.b16 %v1908
        %v3355 = vunpack.c.h.b16 %v1908
        %v3356 = vunpack.c.l.b16 %v1909
        %v3357 = vunpack.c.h.b16 %v1909
        %v3358 = vunpack.c.l.b16 %v1910
        %v3359 = vunpack.c.h.b16 %v1910
        %v3360 = vunpack.c.l.b16 %v1911
        %v3361 = vunpack.c.h.b16 %v1911
        %v3362 = vunpack.c.l.b16 %v1912
        %v3363 = vunpack.c.h.b16 %v1912
        %v3364 = vunpack.c.l.b16 %v1913
        %v3365 = vunpack.c.h.b16 %v1913
        %v3366 = vunpack.c.l.b16 %v1914
        %v3367 = vunpack.c.h.b16 %v1914
        %v3368 = vunpack.c.l.b16 %v1915
        %v3369 = vunpack.c.h.b16 %v1915
        %v3370 = vunpack.c.l.b16 %v1916
        %v3371 = vunpack.c.h.b16 %v1916
        %v3372 = vunpack.c.l.b16 %v1917
        %v3373 = vunpack.c.h.b16 %v1917
        %v3374 = vunpack.c.l.b16 %v1918
        %v3375 = vunpack.c.h.b16 %v1918
        %v3376 = vunpack.c.l.b16 %v1919
        %v3377 = vunpack.c.h.b16 %v1919
        %v3378 = vunpack.c.l.b16 %v1920
        %v3379 = vunpack.c.h.b16 %v1920
        %v3380 = vunpack.c.l.b16 %v1921
        %v3381 = vunpack.c.h.b16 %v1921
        %v3382 = vunpack.c.l.b16 %v1922
        %v3383 = vunpack.c.h.b16 %v1922
        %v3384 = vunpack.c.l.b16 %v1923
        %v3385 = vunpack.c.h.b16 %v1923
        %v3386 = vunpack.c.l.b16 %v1924
        %v3387 = vunpack.c.h.b16 %v1924
        %v3388 = vunpack.c.l.b16 %v1925
        %v3389 = vunpack.c.h.b16 %v1925
        %v3390 = vunpack.c.l.b16 %v1926
        %v3391 = vunpack.c.h.b16 %v1926
        %v3392 = vunpack.c.l.b16 %v1927
        %v3393 = vunpack.c.h.b16 %v1927
        %v3394 = vunpack.c.l.b16 %v1928
        %v3395 = vunpack.c.h.b16 %v1928
        %v3396 = vunpack.c.l.b16 %v1929
        %v3397 = vunpack.c.h.b16 %v1929
        %v3398 = vunpack.c.l.b16 %v1930
        %v3399 = vunpack.c.h.b16 %v1930
        %v3400 = vunpack.c.l.b16 %v1931
        %v3401 = vunpack.c.h.b16 %v1931
        %v3402 = vunpack.c.l.b16 %v1932
        %v3403 = vunpack.c.h.b16 %v1932
        %v3404 = vunpack.c.l.b16 %v1933
        %v3405 = vunpack.c.h.b16 %v1933
        %v3406 = vunpack.c.l.b16 %v1934
        %v3407 = vunpack.c.h.b16 %v1934
        %v3408 = vunpack.c.l.b16 %v1935
        %v3409 = vunpack.c.h.b16 %v1935
        %v3410 = vunpack.c.l.b16 %v1936
        %v3411 = vunpack.c.h.b16 %v1936
        %v3412 = vunpack.c.l.b16 %v1937
        %v3413 = vunpack.c.h.b16 %v1937
        %v3414 = vunpack.c.l.b16 %v1938
        %v3415 = vunpack.c.h.b16 %v1938
        %v3416 = vunpack.c.l.b16 %v1939
        %v3417 = vunpack.c.h.b16 %v1939
        %v3418 = vunpack.c.l.b16 %v1940
        %v3419 = vunpack.c.h.b16 %v1940
        %v3420 = vunpack.c.l.b16 %v1941
        %v3421 = vunpack.c.h.b16 %v1941
        %v3422 = vunpack.c.l.b16 %v1942
        %v3423 = vunpack.c.h.b16 %v1942
        %v3424 = vunpack.c.l.b16 %v1943
        %v3425 = vunpack.c.h.b16 %v1943
        %v3426 = vunpack.c.l.b16 %v1944
        %v3427 = vunpack.c.h.b16 %v1944
        %v3428 = vunpack.c.l.b16 %v1945
        %v3429 = vunpack.c.h.b16 %v1945
        %v3430 = vunpack.c.l.b16 %v1946
        %v3431 = vunpack.c.h.b16 %v1946
        %v3432 = vunpack.c.l.b16 %v1947
        %v3433 = vunpack.c.h.b16 %v1947
        %v3434 = vunpack.c.l.b16 %v1948
        %v3435 = vunpack.c.h.b16 %v1948
        %v3436 = vunpack.c.l.b16 %v1949
        %v3437 = vunpack.c.h.b16 %v1949
        %v3438 = vunpack.c.l.b16 %v1950
        %v3439 = vunpack.c.h.b16 %v1950
        %v3440 = vunpack.c.l.b16 %v1951
        %v3441 = vunpack.c.h.b16 %v1951
        %v3442 = vunpack.c.l.b16 %v1952
        %v3443 = vunpack.c.h.b16 %v1952
        %v3444 = vunpack.c.l.b16 %v1953
        %v3445 = vunpack.c.h.b16 %v1953
        %v3446 = vunpack.c.l.b16 %v1954
        %v3447 = vunpack.c.h.b16 %v1954
        %v3448 = vunpack.c.l.b16 %v1955
        %v3449 = vunpack.c.h.b16 %v1955
        %v3450 = vunpack.c.l.b16 %v1956
        %v3451 = vunpack.c.h.b16 %v1956
        %v3452 = vunpack.c.l.b16 %v1957
        %v3453 = vunpack.c.h.b16 %v1957
        %v3454 = vunpack.c.l.b16 %v1958
        %v3455 = vunpack.c.h.b16 %v1958
        %v3456 = vunpack.c.l.b16 %v1959
        %v3457 = vunpack.c.h.b16 %v1959
        %v3458 = vunpack.c.l.b16 %v1960
        %v3459 = vunpack.c.h.b16 %v1960
        %v3460 = vunpack.c.l.b16 %v1961
        %v3461 = vunpack.c.h.b16 %v1961
        %v3462 = vunpack.c.l.b16 %v1962
        %v3463 = vunpack.c.h.b16 %v1962
        %v3464 = vunpack.c.l.b16 %v1963
        %v3465 = vunpack.c.h.b16 %v1963
        %v3466 = vunpack.c.l.b16 %v1964
        %v3467 = vunpack.c.h.b16 %v1964
        %v3468 = vunpack.c.l.b16 %v1965
        %v3469 = vunpack.c.h.b16 %v1965
        %v3470 = vunpack.c.l.b16 %v1966
        %v3471 = vunpack.c.h.b16 %v1966
        %v3472 = vunpack.c.l.b16 %v1967
        %v3473 = vunpack.c.h.b16 %v1967
        %v3474 = vunpack.c.l.b16 %v1968
        %v3475 = vunpack.c.h.b16 %v1968
        %v3476 = vunpack.c.l.b16 %v1969
        %v3477 = vunpack.c.h.b16 %v1969
        %v3478 = vunpack.c.l.b16 %v1970
        %v3479 = vunpack.c.h.b16 %v1970
        %v3480 = vunpack.c.l.b16 %v1971
        %v3481 = vunpack.c.h.b16 %v1971
        %v3482 = vunpack.c.l.b16 %v1972
        %v3483 = vunpack.c.h.b16 %v1972
        %v3484 = vunpack.c.l.b16 %v1973
        %v3485 = vunpack.c.h.b16 %v1973
        %v3486 = vunpack.c.l.b16 %v1974
        %v3487 = vunpack.c.h.b16 %v1974
        %v3488 = vunpack.c.l.b16 %v1975
        %v3489 = vunpack.c.h.b16 %v1975
        %v3490 = vunpack.c.l.b16 %v1976
        %v3491 = vunpack.c.h.b16 %v1976
        %v3492 = vunpack.c.l.b16 %v1977
        %v3493 = vunpack.c.h.b16 %v1977
        %v3494 = vunpack.c.l.b16 %v1978
        %v3495 = vunpack.c.h.b16 %v1978
        %v3496 = vunpack.c.l.b16 %v1979
        %v3497 = vunpack.c.h.b16 %v1979
        %v3498 = vunpack.c.l.b16 %v1980
        %v3499 = vunpack.c.h.b16 %v1980
        %v3500 = vunpack.c.l.b16 %v1981
        %v3501 = vunpack.c.h.b16 %v1981
        %v3502 = vunpack.c.l.b16 %v1982
        %v3503 = vunpack.c.h.b16 %v1982
        %v3504 = vunpack.c.l.b16 %v1983
        %v3505 = vunpack.c.h.b16 %v1983
        %v3506 = vunpack.c.l.b16 %v1984
        %v3507 = vunpack.c.h.b16 %v1984
        %v3508 = vunpack.c.l.b16 %v1985
        %v3509 = vunpack.c.h.b16 %v1985
        %v3510 = vunpack.c.l.b16 %v1986
        %v3511 = vunpack.c.h.b16 %v1986
        %v3512 = vunpack.c.l.b16 %v1987
        %v3513 = vunpack.c.h.b16 %v1987
        %v3514 = vunpack.c.l.b16 %v1988
        %v3515 = vunpack.c.h.b16 %v1988
        %v3516 = vunpack.c.l.b16 %v1989
        %v3517 = vunpack.c.h.b16 %v1989
        %v3518 = vunpack.c.l.b16 %v1990
        %v3519 = vunpack.c.h.b16 %v1990
        %v3520 = vunpack.c.l.b16 %v1991
        %v3521 = vunpack.c.h.b16 %v1991
        %v3522 = vunpack.c.l.b16 %v1992
        %v3523 = vunpack.c.h.b16 %v1992
        %v3524 = vunpack.c.l.b16 %v1993
        %v3525 = vunpack.c.h.b16 %v1993
        %v3526 = vunpack.c.l.b16 %v1994
        %v3527 = vunpack.c.h.b16 %v1994
        %v3528 = vunpack.c.l.b16 %v1995
        %v3529 = vunpack.c.h.b16 %v1995
        %v3530 = vunpack.c.l.b16 %v1996
        %v3531 = vunpack.c.h.b16 %v1996
        %v3532 = vunpack.c.l.b16 %v1997
        %v3533 = vunpack.c.h.b16 %v1997
        %v3534 = vunpack.c.l.b16 %v1998
        %v3535 = vunpack.c.h.b16 %v1998
        %v3536 = vunpack.c.l.b16 %v1999
        %v3537 = vunpack.c.h.b16 %v1999
        %v3538 = vunpack.c.l.b16 %v2000
        %v3539 = vunpack.c.h.b16 %v2000
        %v3540 = vunpack.c.l.b16 %v2001
        %v3541 = vunpack.c.h.b16 %v2001
        %v3542 = vunpack.c.l.b16 %v2002
        %v3543 = vunpack.c.h.b16 %v2002
        %v3544 = vunpack.c.l.b16 %v2003
        %v3545 = vunpack.c.h.b16 %v2003
        %v3546 = vunpack.c.l.b16 %v2004
        %v3547 = vunpack.c.h.b16 %v2004
        %v3548 = vunpack.c.l.b16 %v2005
        %v3549 = vunpack.c.h.b16 %v2005
        %v3550 = vunpack.c.l.b16 %v2006
        %v3551 = vunpack.c.h.b16 %v2006
        %v3552 = vunpack.c.l.b16 %v2007
        %v3553 = vunpack.c.h.b16 %v2007
        %v3554 = vunpack.c.l.b16 %v2008
        %v3555 = vunpack.c.h.b16 %v2008
        %v3556 = vunpack.c.l.b16 %v2009
        %v3557 = vunpack.c.h.b16 %v2009
        %v3558 = vunpack.c.l.b16 %v2010
        %v3559 = vunpack.c.h.b16 %v2010
        %v3560 = vunpack.c.l.b16 %v2011
        %v3561 = vunpack.c.h.b16 %v2011
        %v3562 = vunpack.c.l.b16 %v2012
        %v3563 = vunpack.c.h.b16 %v2012
        %v3564 = vunpack.c.l.b16 %v2013
        %v3565 = vunpack.c.h.b16 %v2013
        %v3566 = vunpack.c.l.b16 %v2014
        %v3567 = vunpack.c.h.b16 %v2014
        %v3568 = vunpack.c.l.b16 %v2015
        %v3569 = vunpack.c.h.b16 %v2015
        %v3570 = vunpack.c.l.b16 %v2016
        %v3571 = vunpack.c.h.b16 %v2016
        %v3572 = vunpack.c.l.b16 %v2017
        %v3573 = vunpack.c.h.b16 %v2017
        %v3574 = vunpack.c.l.b16 %v2018
        %v3575 = vunpack.c.h.b16 %v2018
        %v3576 = vunpack.c.l.b16 %v2019
        %v3577 = vunpack.c.h.b16 %v2019
        %v3578 = vunpack.c.l.b16 %v2020
        %v3579 = vunpack.c.h.b16 %v2020
        %v3580 = vunpack.c.l.b16 %v2021
        %v3581 = vunpack.c.h.b16 %v2021
        %v3582 = vunpack.c.l.b16 %v2022
        %v3583 = vunpack.c.h.b16 %v2022
        %v3584 = vunpack.c.l.b16 %v2023
        %v3585 = vunpack.c.h.b16 %v2023
        %v3586 = vunpack.c.l.b16 %v2024
        %v3587 = vunpack.c.h.b16 %v2024
        %v3588 = vunpack.c.l.b16 %v2025
        %v3589 = vunpack.c.h.b16 %v2025
        %v3590 = vunpack.c.l.b16 %v2026
        %v3591 = vunpack.c.h.b16 %v2026
        %v3592 = vunpack.c.l.b16 %v2027
        %v3593 = vunpack.c.h.b16 %v2027
        %v3594 = vunpack.c.l.b16 %v2028
        %v3595 = vunpack.c.h.b16 %v2028
        %v3596 = vunpack.c.l.b16 %v2029
        %v3597 = vunpack.c.h.b16 %v2029
        %v3598 = vunpack.c.l.b16 %v2030
        %v3599 = vunpack.c.h.b16 %v2030
        %v3600 = vunpack.c.l.b16 %v2031
        %v3601 = vunpack.c.h.b16 %v2031
        %v3602 = vunpack.c.l.b16 %v2032
        %v3603 = vunpack.c.h.b16 %v2032
        %v3604 = vunpack.c.l.b16 %v2033
        %v3605 = vunpack.c.h.b16 %v2033
        %v3606 = vunpack.c.l.b16 %v2034
        %v3607 = vunpack.c.h.b16 %v2034
        %v3608 = vunpack.c.l.b16 %v2035
        %v3609 = vunpack.c.h.b16 %v2035
        %v3610 = vunpack.c.l.b16 %v2036
        %v3611 = vunpack.c.h.b16 %v2036
        %v3612 = vunpack.c.l.b16 %v2037
        %v3613 = vunpack.c.h.b16 %v2037
        %v3614 = vunpack.c.l.b16 %v2038
        %v3615 = vunpack.c.h.b16 %v2038
        %v3616 = vunpack.c.l.b16 %v2039
        %v3617 = vunpack.c.h.b16 %v2039
        %v3618 = vunpack.c.l.b16 %v2040
        %v3619 = vunpack.c.h.b16 %v2040
        %v3620 = vunpack.c.l.b16 %v2041
        %v3621 = vunpack.c.h.b16 %v2041
        %v3622 = vunpack.c.l.b16 %v2042
        %v3623 = vunpack.c.h.b16 %v2042
        %v3624 = vunpack.c.l.b16 %v2043
        %v3625 = vunpack.c.h.b16 %v2043
        %v3626 = vunpack.c.l.b16 %v2044
        %v3627 = vunpack.c.h.b16 %v2044
        %v3628 = vunpack.c.l.b16 %v2045
        %v3629 = vunpack.c.h.b16 %v2045
        %v3630 = vunpack.c.l.b16 %v2046
        %v3631 = vunpack.c.h.b16 %v2046
        %v3632 = vunpack.c.l.b16 %v2047
        %v3633 = vunpack.c.h.b16 %v2047
        %v3634 = vunpack.c.l.b16 %v2048
        %v3635 = vunpack.c.h.b16 %v2048
        %v3636 = vunpack.c.l.b16 %v2049
        %v3637 = vunpack.c.h.b16 %v2049
        %v3638 = vunpack.c.l.b16 %v2050
        %v3639 = vunpack.c.h.b16 %v2050
        %v3640 = vunpack.c.l.b16 %v2051
        %v3641 = vunpack.c.h.b16 %v2051
        %v3642 = vunpack.c.l.b16 %v2052
        %v3643 = vunpack.c.h.b16 %v2052
        %v3644 = vunpack.c.l.b16 %v2053
        %v3645 = vunpack.c.h.b16 %v2053
        %v3646 = vunpack.c.l.b16 %v2054
        %v3647 = vunpack.c.h.b16 %v2054
        %v3648 = vunpack.c.l.b16 %v2055
        %v3649 = vunpack.c.h.b16 %v2055
        %v3650 = vunpack.c.l.b16 %v2056
        %v3651 = vunpack.c.h.b16 %v2056
        %v3652 = vunpack.c.l.b16 %v2057
        %v3653 = vunpack.c.h.b16 %v2057
        %v3654 = vunpack.c.l.b16 %v2058
        %v3655 = vunpack.c.h.b16 %v2058
        %v3656 = vunpack.c.l.b16 %v2059
        %v3657 = vunpack.c.h.b16 %v2059
        %v3658 = vunpack.c.l.b16 %v2060
        %v3659 = vunpack.c.h.b16 %v2060
        %v3660 = vunpack.c.l.b16 %v2061
        %v3661 = vunpack.c.h.b16 %v2061
        %v3662 = vunpack.c.l.b16 %v2062
        %v3663 = vunpack.c.h.b16 %v2062
        %v3664 = vunpack.c.l.b16 %v2063
        %v3665 = vunpack.c.h.b16 %v2063
        %v3666 = vunpack.c.l.b16 %v2064
        %v3667 = vunpack.c.h.b16 %v2064
        %v3668 = vunpack.c.l.b16 %v2065
        %v3669 = vunpack.c.h.b16 %v2065
        %v3670 = vunpack.c.l.b16 %v2066
        %v3671 = vunpack.c.h.b16 %v2066
        %v3672 = vunpack.c.l.b16 %v2067
        %v3673 = vunpack.c.h.b16 %v2067
        %v3674 = vunpack.c.l.b16 %v2068
        %v3675 = vunpack.c.h.b16 %v2068
        %v3676 = vunpack.c.l.b16 %v2069
        %v3677 = vunpack.c.h.b16 %v2069
        %v3678 = vunpack.c.l.b16 %v2070
        %v3679 = vunpack.c.h.b16 %v2070
        %v3680 = vunpack.c.l.b16 %v2071
        %v3681 = vunpack.c.h.b16 %v2071
        %v3682 = vunpack.c.l.b16 %v2072
        %v3683 = vunpack.c.h.b16 %v2072
        %v3684 = vunpack.c.l.b16 %v2073
        %v3685 = vunpack.c.h.b16 %v2073
        %v3686 = vunpack.c.l.b16 %v2074
        %v3687 = vunpack.c.h.b16 %v2074
        %v3688 = vunpack.c.l.b16 %v2075
        %v3689 = vunpack.c.h.b16 %v2075
        %v3690 = vunpack.c.l.b16 %v2076
        %v3691 = vunpack.c.h.b16 %v2076
        %v3692 = vunpack.c.l.b16 %v2077
        %v3693 = vunpack.c.h.b16 %v2077
        %v3694 = vunpack.c.l.b16 %v2078
        %v3695 = vunpack.c.h.b16 %v2078
        %v3696 = vunpack.c.l.b16 %v2079
        %v3697 = vunpack.c.h.b16 %v2079
        %v3698 = vunpack.c.l.b16 %v2080
        %v3699 = vunpack.c.h.b16 %v2080
        %v3700 = vunpack.c.l.b16 %v2081
        %v3701 = vunpack.c.h.b16 %v2081
        %v3702 = vunpack.c.l.b16 %v2082
        %v3703 = vunpack.c.h.b16 %v2082
        %v3704 = vunpack.c.l.b16 %v2083
        %v3705 = vunpack.c.h.b16 %v2083
        %v3706 = vunpack.c.l.b16 %v2084
        %v3707 = vunpack.c.h.b16 %v2084
        %v3708 = vunpack.c.l.b16 %v2085
        %v3709 = vunpack.c.h.b16 %v2085
        %v3710 = vunpack.c.l.b16 %v2086
        %v3711 = vunpack.c.h.b16 %v2086
        %v3712 = vunpack.c.l.b16 %v2087
        %v3713 = vunpack.c.h.b16 %v2087
        %v3714 = vunpack.c.l.b16 %v2088
        %v3715 = vunpack.c.h.b16 %v2088
        %v3716 = vunpack.c.l.b16 %v2089
        %v3717 = vunpack.c.h.b16 %v2089
        %v3718 = vunpack.c.l.b16 %v2090
        %v3719 = vunpack.c.h.b16 %v2090
        %v3720 = vunpack.c.l.b16 %v2091
        %v3721 = vunpack.c.h.b16 %v2091
        %v3722 = vunpack.c.l.b16 %v2092
        %v3723 = vunpack.c.h.b16 %v2092
        %v3724 = vunpack.c.l.b16 %v2093
        %v3725 = vunpack.c.h.b16 %v2093
        %v3726 = vunpack.c.l.b16 %v2094
        %v3727 = vunpack.c.h.b16 %v2094
        %v3728 = vunpack.c.l.b16 %v2095
        %v3729 = vunpack.c.h.b16 %v2095
        %v3730 = vunpack.c.l.b16 %v2096
        %v3731 = vunpack.c.h.b16 %v2096
        %v3732 = vunpack.c.l.b16 %v2097
        %v3733 = vunpack.c.h.b16 %v2097
        %v3734 = vunpack.c.l.b16 %v2098
        %v3735 = vunpack.c.h.b16 %v2098
        %v3736 = vunpack.c.l.b16 %v2099
        %v3737 = vunpack.c.h.b16 %v2099
        %v3738 = vunpack.c.l.b16 %v2100
        %v3739 = vunpack.c.h.b16 %v2100
        %v3740 = vunpack.c.l.b16 %v2101
        %v3741 = vunpack.c.h.b16 %v2101
        %v3742 = vunpack.c.l.b16 %v2102
        %v3743 = vunpack.c.h.b16 %v2102
        %v3744 = vunpack.c.l.b16 %v2103
        %v3745 = vunpack.c.h.b16 %v2103
        %v3746 = vunpack.c.l.b16 %v2104
        %v3747 = vunpack.c.h.b16 %v2104
        %v3748 = vunpack.c.l.b16 %v2105
        %v3749 = vunpack.c.h.b16 %v2105
        %v3750 = vunpack.c.l.b16 %v2106
        %v3751 = vunpack.c.h.b16 %v2106
        %v3752 = vunpack.c.l.b16 %v2107
        %v3753 = vunpack.c.h.b16 %v2107
        %v3754 = vunpack.c.l.b16 %v2108
        %v3755 = vunpack.c.h.b16 %v2108
        %v3756 = vunpack.c.l.b16 %v2109
        %v3757 = vunpack.c.h.b16 %v2109
        %v3758 = vunpack.c.l.b16 %v2110
        %v3759 = vunpack.c.h.b16 %v2110
        %v3760 = vunpack.c.l.b16 %v2111
        %v3761 = vunpack.c.h.b16 %v2111
        %v3762 = vunpack.c.l.b16 %v2112
        %v3763 = vunpack.c.h.b16 %v2112
        %v3764 = vunpack.c.l.b16 %v2113
        %v3765 = vunpack.c.h.b16 %v2113
        %v3766 = vunpack.c.l.b16 %v2114
        %v3767 = vunpack.c.h.b16 %v2114
        %v3768 = vunpack.c.l.b16 %v2115
        %v3769 = vunpack.c.h.b16 %v2115
        %v3770 = vunpack.c.l.b16 %v2116
        %v3771 = vunpack.c.h.b16 %v2116
        %v3772 = vunpack.c.l.b16 %v2117
        %v3773 = vunpack.c.h.b16 %v2117
        %v3774 = vunpack.c.l.b16 %v2118
        %v3775 = vunpack.c.h.b16 %v2118
        %v3776 = vunpack.c.l.b16 %v2119
        %v3777 = vunpack.c.h.b16 %v2119
        %v3778 = vunpack.c.l.b16 %v2120
        %v3779 = vunpack.c.h.b16 %v2120
        %v3780 = vunpack.c.l.b16 %v2121
        %v3781 = vunpack.c.h.b16 %v2121
        %v3782 = vunpack.c.l.b16 %v2122
        %v3783 = vunpack.c.h.b16 %v2122
        %v3784 = vunpack.c.l.b16 %v2123
        %v3785 = vunpack.c.h.b16 %v2123
        %v3786 = vunpack.c.l.b16 %v2124
        %v3787 = vunpack.c.h.b16 %v2124
        %v3788 = vunpack.c.l.b16 %v2125
        %v3789 = vunpack.c.h.b16 %v2125
        %v3790 = vunpack.c.l.b16 %v2126
        %v3791 = vunpack.c.h.b16 %v2126
        %v3792 = vunpack.c.l.b16 %v2127
        %v3793 = vunpack.c.h.b16 %v2127
        %v3794 = vunpack.c.l.b16 %v2128
        %v3795 = vunpack.c.h.b16 %v2128
        %v3796 = vunpack.c.l.b16 %v2129
        %v3797 = vunpack.c.h.b16 %v2129
        %v3798 = vunpack.c.l.b16 %v2130
        %v3799 = vunpack.c.h.b16 %v2130
        %v3800 = vunpack.c.l.b16 %v2131
        %v3801 = vunpack.c.h.b16 %v2131
        %v3802 = vunpack.c.l.b16 %v2132
        %v3803 = vunpack.c.h.b16 %v2132
        %v3804 = vunpack.c.l.b16 %v2133
        %v3805 = vunpack.c.h.b16 %v2133
        %v3806 = vunpack.c.l.b16 %v2134
        %v3807 = vunpack.c.h.b16 %v2134
        %v3808 = vunpack.c.l.b16 %v2135
        %v3809 = vunpack.c.h.b16 %v2135
        %v3810 = vunpack.c.l.b16 %v2136
        %v3811 = vunpack.c.h.b16 %v2136
        %v3812 = vunpack.c.l.b16 %v2137
        %v3813 = vunpack.c.h.b16 %v2137
        %v3814 = vunpack.c.l.b16 %v2138
        %v3815 = vunpack.c.h.b16 %v2138
        %v3816 = vunpack.c.l.b16 %v2139
        %v3817 = vunpack.c.h.b16 %v2139
        %v3818 = vunpack.c.l.b16 %v2140
        %v3819 = vunpack.c.h.b16 %v2140
        %v3820 = vunpack.c.l.b16 %v2141
        %v3821 = vunpack.c.h.b16 %v2141
        %v3822 = vunpack.c.l.b16 %v2142
        %v3823 = vunpack.c.h.b16 %v2142
        %v3824 = vunpack.c.l.b16 %v2143
        %v3825 = vunpack.c.h.b16 %v2143
        %v3826 = vunpack.c.l.b16 %v2144
        %v3827 = vunpack.c.h.b16 %v2144
        %v3828 = vunpack.c.l.b16 %v2145
        %v3829 = vunpack.c.h.b16 %v2145
        %v3830 = vunpack.c.l.b16 %v2146
        %v3831 = vunpack.c.h.b16 %v2146
        %v3832 = vunpack.c.l.b16 %v2147
        %v3833 = vunpack.c.h.b16 %v2147
        %v3834 = vunpack.c.l.b16 %v2148
        %v3835 = vunpack.c.h.b16 %v2148
        %v3836 = vunpack.c.l.b16 %v2149
        %v3837 = vunpack.c.h.b16 %v2149
        %v3838 = vunpack.c.l.b16 %v2150
        %v3839 = vunpack.c.h.b16 %v2150
        %v3840 = vunpack.c.l.b16 %v2151
        %v3841 = vunpack.c.h.b16 %v2151
        %v3842 = vunpack.c.l.b16 %v2152
        %v3843 = vunpack.c.h.b16 %v2152
        %v3844 = vunpack.c.l.b16 %v2153
        %v3845 = vunpack.c.h.b16 %v2153
        %v3846 = vunpack.c.l.b16 %v2154
        %v3847 = vunpack.c.h.b16 %v2154
        %v3848 = vunpack.c.l.b16 %v2155
        %v3849 = vunpack.c.h.b16 %v2155
        %v3850 = vunpack.c.l.b16 %v2156
        %v3851 = vunpack.c.h.b16 %v2156
        %v3852 = vunpack.c.l.b16 %v2157
        %v3853 = vunpack.c.h.b16 %v2157
        %v3854 = vunpack.c.l.b16 %v2158
        %v3855 = vunpack.c.h.b16 %v2158
        %v3856 = vunpack.c.l.b16 %v2159
        %v3857 = vunpack.c.h.b16 %v2159
        %v3858 = vunpack.c.l.b16 %v2160
        %v3859 = vunpack.c.h.b16 %v2160
        %v3860 = vunpack.c.l.b16 %v2161
        %v3861 = vunpack.c.h.b16 %v2161
        %v3862 = vunpack.c.l.b16 %v2162
        %v3863 = vunpack.c.h.b16 %v2162
        %v3864 = vunpack.c.l.b16 %v2163
        %v3865 = vunpack.c.h.b16 %v2163
        %v3866 = vunpack.c.l.b16 %v2164
        %v3867 = vunpack.c.h.b16 %v2164
        %v3868 = vunpack.c.l.b16 %v2165
        %v3869 = vunpack.c.h.b16 %v2165
        %v3870 = vunpack.c.l.b16 %v2166
        %v3871 = vunpack.c.h.b16 %v2166
        %v3872 = vunpack.c.l.b16 %v2167
        %v3873 = vunpack.c.h.b16 %v2167
        %v3874 = vunpack.c.l.b16 %v2168
        %v3875 = vunpack.c.h.b16 %v2168
        %v3876 = vunpack.c.l.b16 %v2169
        %v3877 = vunpack.c.h.b16 %v2169
        %v3878 = vunpack.c.l.b16 %v2170
        %v3879 = vunpack.c.h.b16 %v2170
        %v3880 = vunpack.c.l.b16 %v2171
        %v3881 = vunpack.c.h.b16 %v2171
        %v3882 = vunpack.c.l.b16 %v2172
        %v3883 = vunpack.c.h.b16 %v2172
        %v3884 = vunpack.c.l.b16 %v2173
        %v3885 = vunpack.c.h.b16 %v2173
        %v3886 = vunpack.c.l.b16 %v2174
        %v3887 = vunpack.c.h.b16 %v2174
        %v3888 = vunpack.c.l.b16 %v2175
        %v3889 = vunpack.c.h.b16 %v2175
        %v3890 = vunpack.c.l.b16 %v2176
        %v3891 = vunpack.c.h.b16 %v2176
        %v3892 = vunpack.c.l.b16 %v2177
        %v3893 = vunpack.c.h.b16 %v2177
        %v3894 = vunpack.c.l.b16 %v2178
        %v3895 = vunpack.c.h.b16 %v2178
        %v3896 = vunpack.c.l.b16 %v2179
        %v3897 = vunpack.c.h.b16 %v2179
        %v3898 = vunpack.c.l.b16 %v2180
        %v3899 = vunpack.c.h.b16 %v2180
        %v3900 = vunpack.c.l.b16 %v2181
        %v3901 = vunpack.c.h.b16 %v2181
        %v3902 = vunpack.c.l.b16 %v2182
        %v3903 = vunpack.c.h.b16 %v2182
        %v3904 = vunpack.c.l.b16 %v2183
        %v3905 = vunpack.c.h.b16 %v2183
        %v3906 = vunpack.c.l.b16 %v2184
        %v3907 = vunpack.c.h.b16 %v2184
        %v3908 = vunpack.c.l.b16 %v2185
        %v3909 = vunpack.c.h.b16 %v2185
        %v3910 = vunpack.c.l.b16 %v2186
        %v3911 = vunpack.c.h.b16 %v2186
        %v3912 = vunpack.c.l.b16 %v2187
        %v3913 = vunpack.c.h.b16 %v2187
        %v3914 = vunpack.c.l.b16 %v2188
        %v3915 = vunpack.c.h.b16 %v2188
        %v3916 = vunpack.c.l.b16 %v2189
        %v3917 = vunpack.c.h.b16 %v2189
        %v3918 = vunpack.c.l.b16 %v2190
        %v3919 = vunpack.c.h.b16 %v2190
        %v3920 = vunpack.c.l.b16 %v2191
        %v3921 = vunpack.c.h.b16 %v2191
        %v3922 = vunpack.c.l.b16 %v2192
        %v3923 = vunpack.c.h.b16 %v2192
        %v3924 = vunpack.c.l.b16 %v2193
        %v3925 = vunpack.c.h.b16 %v2193
        %v3926 = vunpack.c.l.b16 %v2194
        %v3927 = vunpack.c.h.b16 %v2194
        %v3928 = vunpack.c.l.b16 %v2195
        %v3929 = vunpack.c.h.b16 %v2195
        %v3930 = vunpack.c.l.b16 %v2196
        %v3931 = vunpack.c.h.b16 %v2196
        %v3932 = vunpack.c.l.b16 %v2197
        %v3933 = vunpack.c.h.b16 %v2197
        %v3934 = vunpack.c.l.b16 %v2198
        %v3935 = vunpack.c.h.b16 %v2198
        %v3936 = vunpack.c.l.b16 %v2199
        %v3937 = vunpack.c.h.b16 %v2199
        %v3938 = vunpack.c.l.b16 %v2200
        %v3939 = vunpack.c.h.b16 %v2200
        %v3940 = vunpack.c.l.b16 %v2201
        %v3941 = vunpack.c.h.b16 %v2201
        %v3942 = vunpack.c.l.b16 %v2202
        %v3943 = vunpack.c.h.b16 %v2202
        %v3944 = vunpack.c.l.b16 %v2203
        %v3945 = vunpack.c.h.b16 %v2203
        %v3946 = vunpack.c.l.b16 %v2204
        %v3947 = vunpack.c.h.b16 %v2204
        %v3948 = vunpack.c.l.b16 %v2205
        %v3949 = vunpack.c.h.b16 %v2205
        %v3950 = vunpack.c.l.b16 %v2206
        %v3951 = vunpack.c.h.b16 %v2206
        %v3952 = vunpack.c.l.b16 %v2207
        %v3953 = vunpack.c.h.b16 %v2207
        %v3954 = vunpack.c.l.b16 %v2208
        %v3955 = vunpack.c.h.b16 %v2208
        %v3956 = vunpack.c.l.b16 %v2209
        %v3957 = vunpack.c.h.b16 %v2209
        %v3958 = vunpack.c.l.b16 %v2210
        %v3959 = vunpack.c.h.b16 %v2210
        %v3960 = vunpack.c.l.b16 %v2211
        %v3961 = vunpack.c.h.b16 %v2211
        %v3962 = vunpack.c.l.b16 %v2212
        %v3963 = vunpack.c.h.b16 %v2212
        %v3964 = vunpack.c.l.b16 %v2213
        %v3965 = vunpack.c.h.b16 %v2213
        %v3966 = vunpack.c.l.b16 %v2214
        %v3967 = vunpack.c.h.b16 %v2214
        %v3968 = vunpack.c.l.b16 %v2215
        %v3969 = vunpack.c.h.b16 %v2215
        %v3970 = vunpack.c.l.b16 %v2216
        %v3971 = vunpack.c.h.b16 %v2216
        %v3972 = vunpack.c.l.b16 %v2217
        %v3973 = vunpack.c.h.b16 %v2217
        %v3974 = vunpack.c.l.b16 %v2218
        %v3975 = vunpack.c.h.b16 %v2218
        %v3976 = vunpack.c.l.b16 %v2219
        %v3977 = vunpack.c.h.b16 %v2219
        %v3978 = vunpack.c.l.b16 %v2220
        %v3979 = vunpack.c.h.b16 %v2220
        %v3980 = vunpack.c.l.b16 %v2221
        %v3981 = vunpack.c.h.b16 %v2221
        %v3982 = vunpack.c.l.b16 %v2222
        %v3983 = vunpack.c.h.b16 %v2222
        %v3984 = vunpack.c.l.b16 %v2223
        %v3985 = vunpack.c.h.b16 %v2223
        %v3986 = vunpack.c.l.b16 %v2224
        %v3987 = vunpack.c.h.b16 %v2224
        %v3988 = vunpack.c.l.b16 %v2225
        %v3989 = vunpack.c.h.b16 %v2225
        %v3990 = vunpack.c.l.b16 %v2226
        %v3991 = vunpack.c.h.b16 %v2226
        %v3992 = vunpack.c.l.b16 %v2227
        %v3993 = vunpack.c.h.b16 %v2227
        %v3994 = vunpack.c.l.b16 %v2228
        %v3995 = vunpack.c.h.b16 %v2228
        %v3996 = vunpack.c.l.b16 %v2229
        %v3997 = vunpack.c.h.b16 %v2229
        %v3998 = vunpack.c.l.b16 %v2230
        %v3999 = vunpack.c.h.b16 %v2230
        %v4000 = vunpack.c.l.b16 %v2231
        %v4001 = vunpack.c.h.b16 %v2231
        %v4002 = vunpack.c.l.b16 %v2232
        %v4003 = vunpack.c.h.b16 %v2232
        %v4004 = vunpack.c.l.b16 %v2233
        %v4005 = vunpack.c.h.b16 %v2233
        %v4006 = vunpack.c.l.b16 %v2234
        %v4007 = vunpack.c.h.b16 %v2234
        %v4008 = vunpack.c.l.b16 %v2235
        %v4009 = vunpack.c.h.b16 %v2235
        %v4010 = vunpack.c.l.b16 %v2236
        %v4011 = vunpack.c.h.b16 %v2236
        %v4012 = vunpack.c.l.b16 %v2237
        %v4013 = vunpack.c.h.b16 %v2237
        %v4014 = vunpack.c.l.b16 %v2238
        %v4015 = vunpack.c.h.b16 %v2238
        %v4016 = vunpack.c.l.b16 %v2239
        %v4017 = vunpack.c.h.b16 %v2239
        %v4018 = vunpack.c.l.b16 %v2240
        %v4019 = vunpack.c.h.b16 %v2240
        %v4020 = vunpack.c.l.b16 %v2241
        %v4021 = vunpack.c.h.b16 %v2241
        %v4022 = vunpack.c.l.b16 %v2242
        %v4023 = vunpack.c.h.b16 %v2242
        %v4024 = vunpack.c.l.b16 %v2243
        %v4025 = vunpack.c.h.b16 %v2243
        %v4026 = vunpack.c.l.b16 %v2244
        %v4027 = vunpack.c.h.b16 %v2244
        %v4028 = vunpack.c.l.b16 %v2245
        %v4029 = vunpack.c.h.b16 %v2245
        %v4030 = vunpack.c.l.b16 %v2246
        %v4031 = vunpack.c.h.b16 %v2246
        %v4032 = vunpack.c.l.b16 %v2247
        %v4033 = vunpack.c.h.b16 %v2247
        %v4034 = vunpack.c.l.b16 %v2248
        %v4035 = vunpack.c.h.b16 %v2248
        %v4036 = vunpack.c.l.b16 %v2249
        %v4037 = vunpack.c.h.b16 %v2249
        %v4038 = vunpack.c.l.b16 %v2250
        %v4039 = vunpack.c.h.b16 %v2250
        %v4040 = vunpack.c.l.b16 %v2251
        %v4041 = vunpack.c.h.b16 %v2251
        %v4042 = vunpack.c.l.b16 %v2252
        %v4043 = vunpack.c.h.b16 %v2252
        %v4044 = vunpack.c.l.b16 %v2253
        %v4045 = vunpack.c.h.b16 %v2253
        %v4046 = vunpack.c.l.b16 %v2254
        %v4047 = vunpack.c.h.b16 %v2254
        %v4048 = vunpack.c.l.b16 %v2255
        %v4049 = vunpack.c.h.b16 %v2255
        %v4050 = vunpack.c.l.b16 %v2256
        %v4051 = vunpack.c.h.b16 %v2256
        %v4052 = vunpack.c.l.b16 %v2257
        %v4053 = vunpack.c.h.b16 %v2257
        %v4054 = vunpack.c.l.b16 %v2258
        %v4055 = vunpack.c.h.b16 %v2258
        %v4056 = vunpack.c.l.b16 %v2259
        %v4057 = vunpack.c.h.b16 %v2259
        %v4058 = vunpack.c.l.b16 %v2260
        %v4059 = vunpack.c.h.b16 %v2260
        %v4060 = vunpack.c.l.b16 %v2261
        %v4061 = vunpack.c.h.b16 %v2261
        %v4062 = vunpack.c.l.b16 %v2262
        %v4063 = vunpack.c.h.b16 %v2262
        %v4064 = vunpack.c.l.b16 %v2263
        %v4065 = vunpack.c.h.b16 %v2263
        %v4066 = vunpack.c.l.b16 %v2264
        %v4067 = vunpack.c.h.b16 %v2264
        %v4068 = vunpack.c.l.b16 %v2265
        %v4069 = vunpack.c.h.b16 %v2265
        %v4070 = vunpack.c.l.b16 %v2266
        %v4071 = vunpack.c.h.b16 %v2266
        %v4072 = vunpack.c.l.b16 %v2267
        %v4073 = vunpack.c.h.b16 %v2267
        %v4074 = vunpack.c.l.b16 %v2268
        %v4075 = vunpack.c.h.b16 %v2268
        %v4076 = vunpack.c.l.b16 %v2269
        %v4077 = vunpack.c.h.b16 %v2269
        %v4078 = vunpack.c.l.b16 %v2270
        %v4079 = vunpack.c.h.b16 %v2270
        %v4080 = vunpack.c.l.b16 %v2271
        %v4081 = vunpack.c.h.b16 %v2271
        %v4082 = vunpack.c.l.b16 %v2272
        %v4083 = vunpack.c.h.b16 %v2272
        %v4084 = vunpack.c.l.b16 %v2273
        %v4085 = vunpack.c.h.b16 %v2273
        %v4086 = vunpack.c.l.b16 %v2274
        %v4087 = vunpack.c.h.b16 %v2274
        %v4088 = vunpack.c.l.b16 %v2275
        %v4089 = vunpack.c.h.b16 %v2275
        %v4090 = vunpack.c.l.b16 %v2276
        %v4091 = vunpack.c.h.b16 %v2276
        %v4092 = vunpack.c.l.b16 %v2277
        %v4093 = vunpack.c.h.b16 %v2277
        %v4094 = vunpack.c.l.b16 %v2278
        %v4095 = vunpack.c.h.b16 %v2278
        %v4096 = vunpack.c.l.b16 %v2279
        %v4097 = vunpack.c.h.b16 %v2279
        %v4098 = vunpack.c.l.b16 %v2280
        %v4099 = vunpack.c.h.b16 %v2280
        %v4100 = vunpack.c.l.b16 %v2281
        %v4101 = vunpack.c.h.b16 %v2281
        %v4102 = vunpack.c.l.b16 %v2282
        %v4103 = vunpack.c.h.b16 %v2282
        %v4104 = vunpack.c.l.b16 %v2283
        %v4105 = vunpack.c.h.b16 %v2283
        %v4106 = vunpack.c.l.b16 %v2284
        %v4107 = vunpack.c.h.b16 %v2284
        %v4108 = vunpack.c.l.b16 %v2285
        %v4109 = vunpack.c.h.b16 %v2285
        %v4110 = vunpack.c.l.b16 %v2286
        %v4111 = vunpack.c.h.b16 %v2286
        %v4112 = vunpack.c.l.b16 %v2287
        %v4113 = vunpack.c.h.b16 %v2287
        %v4114 = vunpack.c.l.b16 %v2288
        %v4115 = vunpack.c.h.b16 %v2288
        %v4116 = vunpack.c.l.b16 %v2289
        %v4117 = vunpack.c.h.b16 %v2289
        %v4118 = vunpack.c.l.b16 %v2290
        %v4119 = vunpack.c.h.b16 %v2290
        %v4120 = vunpack.c.l.b16 %v2291
        %v4121 = vunpack.c.h.b16 %v2291
        %v4122 = vunpack.c.l.b16 %v2292
        %v4123 = vunpack.c.h.b16 %v2292
        %v4124 = vunpack.c.l.b16 %v2293
        %v4125 = vunpack.c.h.b16 %v2293
        %v4126 = vunpack.c.l.b16 %v2294
        %v4127 = vunpack.c.h.b16 %v2294
        %v4128 = vunpack.c.l.b16 %v2295
        %v4129 = vunpack.c.h.b16 %v2295
        %v4130 = vunpack.c.l.b16 %v2296
        %v4131 = vunpack.c.h.b16 %v2296
        %v4132 = vunpack.c.l.b16 %v2297
        %v4133 = vunpack.c.h.b16 %v2297
        %v4134 = vunpack.c.l.b16 %v2298
        %v4135 = vunpack.c.h.b16 %v2298
        %v4136 = vunpack.c.l.b16 %v2299
        %v4137 = vunpack.c.h.b16 %v2299
        %v4138 = vunpack.c.l.b16 %v2300
        %v4139 = vunpack.c.h.b16 %v2300
        %v4140 = vunpack.c.l.b16 %v2301
        %v4141 = vunpack.c.h.b16 %v2301
        %v4142 = vunpack.c.l.b16 %v2302
        %v4143 = vunpack.c.h.b16 %v2302
        %v4144 = vunpack.c.l.b16 %v2303
        %v4145 = vunpack.c.h.b16 %v2303
        %v4146 = vunpack.c.l.b16 %v2304
        %v4147 = vunpack.c.h.b16 %v2304
        %v4148 = vunpack.c.l.b16 %v2305
        %v4149 = vunpack.c.h.b16 %v2305
        %v4150 = vunpack.c.l.b16 %v2306
        %v4151 = vunpack.c.h.b16 %v2306
        %v4152 = vunpack.c.l.b16 %v2307
        %v4153 = vunpack.c.h.b16 %v2307
        %v4154 = vunpack.c.l.b16 %v2308
        %v4155 = vunpack.c.h.b16 %v2308
        %v4156 = vunpack.c.l.b16 %v2309
        %v4157 = vunpack.c.h.b16 %v2309
        %v4158 = vunpack.c.l.b16 %v2310
        %v4159 = vunpack.c.h.b16 %v2310
        %v4160 = vunpack.c.l.b16 %v2311
        %v4161 = vunpack.c.h.b16 %v2311
        %v4162 = vunpack.c.l.b16 %v2312
        %v4163 = vunpack.c.h.b16 %v2312
        %v4164 = vunpack.c.l.b16 %v2313
        %v4165 = vunpack.c.h.b16 %v2313
        %v4166 = vunpack.c.l.b16 %v2314
        %v4167 = vunpack.c.h.b16 %v2314
        %v4168 = vunpack.c.l.b16 %v2315
        %v4169 = vunpack.c.h.b16 %v2315
        %v4170 = vunpack.c.l.b16 %v2316
        %v4171 = vunpack.c.h.b16 %v2316
        %v4172 = vunpack.c.l.b16 %v2317
        %v4173 = vunpack.c.h.b16 %v2317
        %v4174 = vunpack.c.l.b16 %v2318
        %v4175 = vunpack.c.h.b16 %v2318
        %v4176 = vunpack.c.l.b16 %v2319
        %v4177 = vunpack.c.h.b16 %v2319
        %v4178 = vunpack.c.l.b16 %v2320
        %v4179 = vunpack.c.h.b16 %v2320
        %v4180 = vunpack.c.l.b16 %v2321
        %v4181 = vunpack.c.h.b16 %v2321
        %v4182 = vunpack.c.l.b16 %v2322
        %v4183 = vunpack.c.h.b16 %v2322
        %v4184 = vunpack.c.l.b16 %v2323
        %v4185 = vunpack.c.h.b16 %v2323
        %v4186 = vunpack.c.l.b16 %v2324
        %v4187 = vunpack.c.h.b16 %v2324
        %v4188 = vunpack.c.l.b16 %v2325
        %v4189 = vunpack.c.h.b16 %v2325
        %v4190 = vunpack.c.l.b16 %v2326
        %v4191 = vunpack.c.h.b16 %v2326
        %v4192 = vunpack.c.l.b16 %v2327
        %v4193 = vunpack.c.h.b16 %v2327
        %v4194 = vunpack.c.l.b16 %v2328
        %v4195 = vunpack.c.h.b16 %v2328
        %v4196 = vunpack.c.l.b16 %v2329
        %v4197 = vunpack.c.h.b16 %v2329
        %v4198 = vunpack.c.l.b16 %v2330
        %v4199 = vunpack.c.h.b16 %v2330
        %v4200 = vunpack.c.l.b16 %v2331
        %v4201 = vunpack.c.h.b16 %v2331
        %v4202 = vunpack.c.l.b16 %v2332
        %v4203 = vunpack.c.h.b16 %v2332
        %v4204 = vunpack.c.l.b16 %v2333
        %v4205 = vunpack.c.h.b16 %v2333
        %v4206 = vunpack.c.l.b16 %v2334
        %v4207 = vunpack.c.h.b16 %v2334
        %v4208 = vunpack.c.l.b16 %v2335
        %v4209 = vunpack.c.h.b16 %v2335
        %v4210 = vunpack.c.l.b16 %v2336
        %v4211 = vunpack.c.h.b16 %v2336
        %v4212 = vunpack.c.l.b16 %v2337
        %v4213 = vunpack.c.h.b16 %v2337
        %v4214 = vunpack.c.l.b16 %v2338
        %v4215 = vunpack.c.h.b16 %v2338
        %v4216 = vunpack.c.l.b16 %v2339
        %v4217 = vunpack.c.h.b16 %v2339
        %v4218 = vunpack.c.l.b16 %v2340
        %v4219 = vunpack.c.h.b16 %v2340
        %v4220 = vunpack.c.l.b16 %v2341
        %v4221 = vunpack.c.h.b16 %v2341
        %v4222 = vunpack.c.l.b16 %v2342
        %v4223 = vunpack.c.h.b16 %v2342
        %v4224 = vunpack.c.l.b16 %v2343
        %v4225 = vunpack.c.h.b16 %v2343
        %v4226 = vunpack.c.l.b16 %v2344
        %v4227 = vunpack.c.h.b16 %v2344
        %v4228 = vunpack.c.l.b16 %v2345
        %v4229 = vunpack.c.h.b16 %v2345
        %v4230 = vunpack.c.l.b16 %v2346
        %v4231 = vunpack.c.h.b16 %v2346
        %v4232 = vunpack.c.l.b16 %v2347
        %v4233 = vunpack.c.h.b16 %v2347
        %v4234 = vunpack.c.l.b16 %v2348
        %v4235 = vunpack.c.h.b16 %v2348
        %v4236 = vunpack.c.l.b16 %v2349
        %v4237 = vunpack.c.h.b16 %v2349
        %v4238 = vunpack.c.l.b16 %v2350
        %v4239 = vunpack.c.h.b16 %v2350
        %v4240 = vunpack.c.l.b16 %v2351
        %v4241 = vunpack.c.h.b16 %v2351
        %v4242 = vunpack.c.l.b16 %v2352
        %v4243 = vunpack.c.h.b16 %v2352
        %v4244 = vunpack.c.l.b16 %v2353
        %v4245 = vunpack.c.h.b16 %v2353
        %v4246 = vunpack.c.l.b16 %v2354
        %v4247 = vunpack.c.h.b16 %v2354
        %v4248 = vunpack.c.l.b16 %v2355
        %v4249 = vunpack.c.h.b16 %v2355
        %v4250 = vunpack.c.l.b16 %v2356
        %v4251 = vunpack.c.h.b16 %v2356
        %v4252 = vunpack.c.l.b16 %v2357
        %v4253 = vunpack.c.h.b16 %v2357
        %v4254 = vunpack.c.l.b16 %v2358
        %v4255 = vunpack.c.h.b16 %v2358
        %v4256 = vunpack.c.l.b16 %v2359
        %v4257 = vunpack.c.h.b16 %v2359
        %v4258 = vunpack.c.l.b16 %v2360
        %v4259 = vunpack.c.h.b16 %v2360
        %v4260 = vunpack.c.l.b16 %v2361
        %v4261 = vunpack.c.h.b16 %v2361
        %v4262 = vunpack.c.l.b16 %v2362
        %v4263 = vunpack.c.h.b16 %v2362
        %v4264 = vunpack.c.l.b16 %v2363
        %v4265 = vunpack.c.h.b16 %v2363
        %v4266 = vunpack.c.l.b16 %v2364
        %v4267 = vunpack.c.h.b16 %v2364
        %v4268 = vunpack.c.l.b16 %v2365
        %v4269 = vunpack.c.h.b16 %v2365
        %v4270 = vunpack.c.l.b16 %v2366
        %v4271 = vunpack.c.h.b16 %v2366
        %v4272 = vunpack.c.l.b16 %v2367
        %v4273 = vunpack.c.h.b16 %v2367
        %v4274 = vunpack.c.l.b16 %v2368
        %v4275 = vunpack.c.h.b16 %v2368
        %v4276 = vunpack.c.l.b16 %v2369
        %v4277 = vunpack.c.h.b16 %v2369
        %v4278 = vunpack.c.l.b16 %v2370
        %v4279 = vunpack.c.h.b16 %v2370
        %v4280 = vunpack.c.l.b16 %v2371
        %v4281 = vunpack.c.h.b16 %v2371
        %v4282 = vunpack.c.l.b16 %v2372
        %v4283 = vunpack.c.h.b16 %v2372
        %v4284 = vunpack.c.l.b16 %v2373
        %v4285 = vunpack.c.h.b16 %v2373
        %v4286 = vunpack.c.l.b16 %v2374
        %v4287 = vunpack.c.h.b16 %v2374
        %v4288 = vunpack.c.l.b16 %v2375
        %v4289 = vunpack.c.h.b16 %v2375
        %v4290 = vunpack.c.l.b16 %v2376
        %v4291 = vunpack.c.h.b16 %v2376
        %v4292 = vunpack.c.l.b16 %v2377
        %v4293 = vunpack.c.h.b16 %v2377
        %v4294 = vunpack.c.l.b16 %v2378
        %v4295 = vunpack.c.h.b16 %v2378
        %v4296 = vunpack.c.l.b16 %v2379
        %v4297 = vunpack.c.h.b16 %v2379
        %v4298 = vunpack.c.l.b16 %v2380
        %v4299 = vunpack.c.h.b16 %v2380
        %v4300 = vunpack.c.l.b16 %v2381
        %v4301 = vunpack.c.h.b16 %v2381
        %v4302 = vunpack.c.l.b16 %v2382
        %v4303 = vunpack.c.h.b16 %v2382
        %v4304 = vpack.c.b16 %v3032, %v3024
        %v4305 = vpack.c.b16 %v3033, %v3025
        %v4306 = vpack.c.b16 %v3034, %v3026
        %v4307 = vpack.c.b16 %v3035, %v3027
        %v4308 = vpack.c.b16 %v3036, %v3028
        %v4309 = vpack.c.b16 %v3037, %v3029
        %v4310 = vpack.c.b16 %v3038, %v3030
        %v4311 = vpack.c.b16 %v3039, %v3031
        %v4312 = vpack.c.b16 %v3048, %v3040
        %v4313 = vpack.c.b16 %v3049, %v3041
        %v4314 = vpack.c.b16 %v3050, %v3042
        %v4315 = vpack.c.b16 %v3051, %v3043
        %v4316 = vpack.c.b16 %v3052, %v3044
        %v4317 = vpack.c.b16 %v3053, %v3045
        %v4318 = vpack.c.b16 %v3054, %v3046
        %v4319 = vpack.c.b16 %v3055, %v3047
        %v4320 = vpack.c.b16 %v3064, %v3056
        %v4321 = vpack.c.b16 %v3065, %v3057
        %v4322 = vpack.c.b16 %v3066, %v3058
        %v4323 = vpack.c.b16 %v3067, %v3059
        %v4324 = vpack.c.b16 %v3068, %v3060
        %v4325 = vpack.c.b16 %v3069, %v3061
        %v4326 = vpack.c.b16 %v3070, %v3062
        %v4327 = vpack.c.b16 %v3071, %v3063
        %v4328 = vpack.c.b16 %v3080, %v3072
        %v4329 = vpack.c.b16 %v3081, %v3073
        %v4330 = vpack.c.b16 %v3082, %v3074
        %v4331 = vpack.c.b16 %v3083, %v3075
        %v4332 = vpack.c.b16 %v3084, %v3076
        %v4333 = vpack.c.b16 %v3085, %v3077
        %v4334 = vpack.c.b16 %v3086, %v3078
        %v4335 = vpack.c.b16 %v3087, %v3079
        %v4336 = vpack.c.b16 %v3096, %v3088
        %v4337 = vpack.c.b16 %v3097, %v3089
        %v4338 = vpack.c.b16 %v3098, %v3090
        %v4339 = vpack.c.b16 %v3099, %v3091
        %v4340 = vpack.c.b16 %v3100, %v3092
        %v4341 = vpack.c.b16 %v3101, %v3093
        %v4342 = vpack.c.b16 %v3102, %v3094
        %v4343 = vpack.c.b16 %v3103, %v3095
        %v4344 = vpack.c.b16 %v3112, %v3104
        %v4345 = vpack.c.b16 %v3113, %v3105
        %v4346 = vpack.c.b16 %v3114, %v3106
        %v4347 = vpack.c.b16 %v3115, %v3107
        %v4348 = vpack.c.b16 %v3116, %v3108
        %v4349 = vpack.c.b16 %v3117, %v3109
        %v4350 = vpack.c.b16 %v3118, %v3110
        %v4351 = vpack.c.b16 %v3119, %v3111
        %v4352 = vpack.c.b16 %v3128, %v3120
        %v4353 = vpack.c.b16 %v3129, %v3121
        %v4354 = vpack.c.b16 %v3130, %v3122
        %v4355 = vpack.c.b16 %v3131, %v3123
        %v4356 = vpack.c.b16 %v3132, %v3124
        %v4357 = vpack.c.b16 %v3133, %v3125
        %v4358 = vpack.c.b16 %v3134, %v3126
        %v4359 = vpack.c.b16 %v3135, %v3127
        %v4360 = vpack.c.b16 %v3144, %v3136
        %v4361 = vpack.c.b16 %v3145, %v3137
        %v4362 = vpack.c.b16 %v3146, %v3138
        %v4363 = vpack.c.b16 %v3147, %v3139
        %v4364 = vpack.c.b16 %v3148, %v3140
        %v4365 = vpack.c.b16 %v3149, %v3141
        %v4366 = vpack.c.b16 %v3150, %v3142
        %v4367 = vpack.c.b16 %v3151, %v3143
        %v4368 = vpack.c.b16 %v3160, %v3152
        %v4369 = vpack.c.b16 %v3161, %v3153
        %v4370 = vpack.c.b16 %v3162, %v3154
        %v4371 = vpack.c.b16 %v3163, %v3155
        %v4372 = vpack.c.b16 %v3164, %v3156
        %v4373 = vpack.c.b16 %v3165, %v3157
        %v4374 = vpack.c.b16 %v3166, %v3158
        %v4375 = vpack.c.b16 %v3167, %v3159
        %v4376 = vpack.c.b16 %v3176, %v3168
        %v4377 = vpack.c.b16 %v3177, %v3169
        %v4378 = vpack.c.b16 %v3178, %v3170
        %v4379 = vpack.c.b16 %v3179, %v3171
        %v4380 = vpack.c.b16 %v3180, %v3172
        %v4381 = vpack.c.b16 %v3181, %v3173
        %v4382 = vpack.c.b16 %v3182, %v3174
        %v4383 = vpack.c.b16 %v3183, %v3175
        %v4384 = vpack.c.b16 %v3192, %v3184
        %v4385 = vpack.c.b16 %v3193, %v3185
        %v4386 = vpack.c.b16 %v3194, %v3186
        %v4387 = vpack.c.b16 %v3195, %v3187
        %v4388 = vpack.c.b16 %v3196, %v3188
        %v4389 = vpack.c.b16 %v3197, %v3189
        %v4390 = vpack.c.b16 %v3198, %v3190
        %v4391 = vpack.c.b16 %v3199, %v3191
        %v4392 = vpack.c.b16 %v3208, %v3200
        %v4393 = vpack.c.b16 %v3209, %v3201
        %v4394 = vpack.c.b16 %v3210, %v3202
        %v4395 = vpack.c.b16 %v3211, %v3203
        %v4396 = vpack.c.b16 %v3212, %v3204
        %v4397 = vpack.c.b16 %v3213, %v3205
        %v4398 = vpack.c.b16 %v3214, %v3206
        %v4399 = vpack.c.b16 %v3215, %v3207
        %v4400 = vpack.c.b16 %v3224, %v3216
        %v4401 = vpack.c.b16 %v3225, %v3217
        %v4402 = vpack.c.b16 %v3226, %v3218
        %v4403 = vpack.c.b16 %v3227, %v3219
        %v4404 = vpack.c.b16 %v3228, %v3220
        %v4405 = vpack.c.b16 %v3229, %v3221
        %v4406 = vpack.c.b16 %v3230, %v3222
        %v4407 = vpack.c.b16 %v3231, %v3223
        %v4408 = vpack.c.b16 %v3240, %v3232
        %v4409 = vpack.c.b16 %v3241, %v3233
        %v4410 = vpack.c.b16 %v3242, %v3234
        %v4411 = vpack.c.b16 %v3243, %v3235
        %v4412 = vpack.c.b16 %v3244, %v3236
        %v4413 = vpack.c.b16 %v3245, %v3237
        %v4414 = vpack.c.b16 %v3246, %v3238
        %v4415 = vpack.c.b16 %v3247, %v3239
        %v4416 = vpack.c.b16 %v3256, %v3248
        %v4417 = vpack.c.b16 %v3257, %v3249
        %v4418 = vpack.c.b16 %v3258, %v3250
        %v4419 = vpack.c.b16 %v3259, %v3251
        %v4420 = vpack.c.b16 %v3260, %v3252
        %v4421 = vpack.c.b16 %v3261, %v3253
        %v4422 = vpack.c.b16 %v3262, %v3254
        %v4423 = vpack.c.b16 %v3263, %v3255
        %v4424 = vpack.c.b16 %v3272, %v3264
        %v4425 = vpack.c.b16 %v3273, %v3265
        %v4426 = vpack.c.b16 %v3274, %v3266
        %v4427 = vpack.c.b16 %v3275, %v3267
        %v4428 = vpack.c.b16 %v3276, %v3268
        %v4429 = vpack.c.b16 %v3277, %v3269
        %v4430 = vpack.c.b16 %v3278, %v3270
        %v4431 = vpack.c.b16 %v3279, %v3271
        %v4432 = vpack.c.b16 %v3288, %v3280
        %v4433 = vpack.c.b16 %v3289, %v3281
        %v4434 = vpack.c.b16 %v3290, %v3282
        %v4435 = vpack.c.b16 %v3291, %v3283
        %v4436 = vpack.c.b16 %v3292, %v3284
        %v4437 = vpack.c.b16 %v3293, %v3285
        %v4438 = vpack.c.b16 %v3294, %v3286
        %v4439 = vpack.c.b16 %v3295, %v3287
        %v4440 = vpack.c.b16 %v3304, %v3296
        %v4441 = vpack.c.b16 %v3305, %v3297
        %v4442 = vpack.c.b16 %v3306, %v3298
        %v4443 = vpack.c.b16 %v3307, %v3299
        %v4444 = vpack.c.b16 %v3308, %v3300
        %v4445 = vpack.c.b16 %v3309, %v3301
        %v4446 = vpack.c.b16 %v3310, %v3302
        %v4447 = vpack.c.b16 %v3311, %v3303
        %v4448 = vpack.c.b16 %v3320, %v3312
        %v4449 = vpack.c.b16 %v3321, %v3313
        %v4450 = vpack.c.b16 %v3322, %v3314
        %v4451 = vpack.c.b16 %v3323, %v3315
        %v4452 = vpack.c.b16 %v3324, %v3316
        %v4453 = vpack.c.b16 %v3325, %v3317
        %v4454 = vpack.c.b16 %v3326, %v3318
        %v4455 = vpack.c.b16 %v3327, %v3319
        %v4456 = vpack.c.b16 %v3336, %v3328
        %v4457 = vpack.c.b16 %v3337, %v3329
        %v4458 = vpack.c.b16 %v3338, %v3330
        %v4459 = vpack.c.b16 %v3339, %v3331
        %v4460 = vpack.c.b16 %v3340, %v3332
        %v4461 = vpack.c.b16 %v3341, %v3333
        %v4462 = vpack.c.b16 %v3342, %v3334
        %v4463 = vpack.c.b16 %v3343, %v3335
        %v4464 = vpack.c.b16 %v3352, %v3344
        %v4465 = vpack.c.b16 %v3353, %v3345
        %v4466 = vpack.c.b16 %v3354, %v3346
        %v4467 = vpack.c.b16 %v3355, %v3347
        %v4468 = vpack.c.b16 %v3356, %v3348
        %v4469 = vpack.c.b16 %v3357, %v3349
        %v4470 = vpack.c.b16 %v3358, %v3350
        %v4471 = vpack.c.b16 %v3359, %v3351
        %v4472 = vpack.c.b16 %v3368, %v3360
        %v4473 = vpack.c.b16 %v3369, %v3361
        %v4474 = vpack.c.b16 %v3370, %v3362
        %v4475 = vpack.c.b16 %v3371, %v3363
        %v4476 = vpack.c.b16 %v3372, %v3364
        %v4477 = vpack.c.b16 %v3373, %v3365
        %v4478 = vpack.c.b16 %v3374, %v3366
        %v4479 = vpack.c.b16 %v3375, %v3367
        %v4480 = vpack.c.b16 %v3384, %v3376
        %v4481 = vpack.c.b16 %v3385, %v3377
        %v4482 = vpack.c.b16 %v3386, %v3378
        %v4483 = vpack.c.b16 %v3387, %v3379
        %v4484 = vpack.c.b16 %v3388, %v3380
        %v4485 = vpack.c.b16 %v3389, %v3381
        %v4486 = vpack.c.b16 %v3390, %v3382
        %v4487 = vpack.c.b16 %v3391, %v3383
        %v4488 = vpack.c.b16 %v3400, %v3392
        %v4489 = vpack.c.b16 %v3401, %v3393
        %v4490 = vpack.c.b16 %v3402, %v3394
        %v4491 = vpack.c.b16 %v3403, %v3395
        %v4492 = vpack.c.b16 %v3404, %v3396
        %v4493 = vpack.c.b16 %v3405, %v3397
        %v4494 = vpack.c.b16 %v3406, %v3398
        %v4495 = vpack.c.b16 %v3407, %v3399
        %v4496 = vpack.c.b16 %v3416, %v3408
        %v4497 = vpack.c.b16 %v3417, %v3409
        %v4498 = vpack.c.b16 %v3418, %v3410
        %v4499 = vpack.c.b16 %v3419, %v3411
        %v4500 = vpack.c.b16 %v3420, %v3412
        %v4501 = vpack.c.b16 %v3421, %v3413
        %v4502 = vpack.c.b16 %v3422, %v3414
        %v4503 = vpack.c.b16 %v3423, %v3415
        %v4504 = vpack.c.b16 %v3432, %v3424
        %v4505 = vpack.c.b16 %v3433, %v3425
        %v4506 = vpack.c.b16 %v3434, %v3426
        %v4507 = vpack.c.b16 %v3435, %v3427
        %v4508 = vpack.c.b16 %v3436, %v3428
        %v4509 = vpack.c.b16 %v3437, %v3429
        %v4510 = vpack.c.b16 %v3438, %v3430
        %v4511 = vpack.c.b16 %v3439, %v3431
        %v4512 = vpack.c.b16 %v3448, %v3440
        %v4513 = vpack.c.b16 %v3449, %v3441
        %v4514 = vpack.c.b16 %v3450, %v3442
        %v4515 = vpack.c.b16 %v3451, %v3443
        %v4516 = vpack.c.b16 %v3452, %v3444
        %v4517 = vpack.c.b16 %v3453, %v3445
        %v4518 = vpack.c.b16 %v3454, %v3446
        %v4519 = vpack.c.b16 %v3455, %v3447
        %v4520 = vpack.c.b16 %v3464, %v3456
        %v4521 = vpack.c.b16 %v3465, %v3457
        %v4522 = vpack.c.b16 %v3466, %v3458
        %v4523 = vpack.c.b16 %v3467, %v3459
        %v4524 = vpack.c.b16 %v3468, %v3460
        %v4525 = vpack.c.b16 %v3469, %v3461
        %v4526 = vpack.c.b16 %v3470, %v3462
        %v4527 = vpack.c.b16 %v3471, %v3463
        %v4528 = vpack.c.b16 %v3480, %v3472
        %v4529 = vpack.c.b16 %v3481, %v3473
        %v4530 = vpack.c.b16 %v3482, %v3474
        %v4531 = vpack.c.b16 %v3483, %v3475
        %v4532 = vpack.c.b16 %v3484, %v3476
        %v4533 = vpack.c.b16 %v3485, %v3477
        %v4534 = vpack.c.b16 %v3486, %v3478
        %v4535 = vpack.c.b16 %v3487, %v3479
        %v4536 = vpack.c.b16 %v3496, %v3488
        %v4537 = vpack.c.b16 %v3497, %v3489
        %v4538 = vpack.c.b16 %v3498, %v3490
        %v4539 = vpack.c.b16 %v3499, %v3491
        %v4540 = vpack.c.b16 %v3500, %v3492
        %v4541 = vpack.c.b16 %v3501, %v3493
        %v4542 = vpack.c.b16 %v3502, %v3494
        %v4543 = vpack.c.b16 %v3503, %v3495
        %v4544 = vpack.c.b16 %v3512, %v3504
        %v4545 = vpack.c.b16 %v3513, %v3505
        %v4546 = vpack.c.b16 %v3514, %v3506
        %v4547 = vpack.c.b16 %v3515, %v3507
        %v4548 = vpack.c.b16 %v3516, %v3508
        %v4549 = vpack.c.b16 %v3517, %v3509
        %v4550 = vpack.c.b16 %v3518, %v3510
        %v4551 = vpack.c.b16 %v3519, %v3511
        %v4552 = vpack.c.b16 %v3528, %v3520
        %v4553 = vpack.c.b16 %v3529, %v3521
        %v4554 = vpack.c.b16 %v3530, %v3522
        %v4555 = vpack.c.b16 %v3531, %v3523
        %v4556 = vpack.c.b16 %v3532, %v3524
        %v4557 = vpack.c.b16 %v3533, %v3525
        %v4558 = vpack.c.b16 %v3534, %v3526
        %v4559 = vpack.c.b16 %v3535, %v3527
        %v4560 = vpack.c.b16 %v3544, %v3536
        %v4561 = vpack.c.b16 %v3545, %v3537
        %v4562 = vpack.c.b16 %v3546, %v3538
        %v4563 = vpack.c.b16 %v3547, %v3539
        %v4564 = vpack.c.b16 %v3548, %v3540
        %v4565 = vpack.c.b16 %v3549, %v3541
        %v4566 = vpack.c.b16 %v3550, %v3542
        %v4567 = vpack.c.b16 %v3551, %v3543
        %v4568 = vpack.c.b16 %v3560, %v3552
        %v4569 = vpack.c.b16 %v3561, %v3553
        %v4570 = vpack.c.b16 %v3562, %v3554
        %v4571 = vpack.c.b16 %v3563, %v3555
        %v4572 = vpack.c.b16 %v3564, %v3556
        %v4573 = vpack.c.b16 %v3565, %v3557
        %v4574 = vpack.c.b16 %v3566, %v3558
        %v4575 = vpack.c.b16 %v3567, %v3559
        %v4576 = vpack.c.b16 %v3576, %v3568
        %v4577 = vpack.c.b16 %v3577, %v3569
        %v4578 = vpack.c.b16 %v3578, %v3570
        %v4579 = vpack.c.b16 %v3579, %v3571
        %v4580 = vpack.c.b16 %v3580, %v3572
        %v4581 = vpack.c.b16 %v3581, %v3573
        %v4582 = vpack.c.b16 %v3582, %v3574
        %v4583 = vpack.c.b16 %v3583, %v3575
        %v4584 = vpack.c.b16 %v3592, %v3584
        %v4585 = vpack.c.b16 %v3593, %v3585
        %v4586 = vpack.c.b16 %v3594, %v3586
        %v4587 = vpack.c.b16 %v3595, %v3587
        %v4588 = vpack.c.b16 %v3596, %v3588
        %v4589 = vpack.c.b16 %v3597, %v3589
        %v4590 = vpack.c.b16 %v3598, %v3590
        %v4591 = vpack.c.b16 %v3599, %v3591
        %v4592 = vpack.c.b16 %v3608, %v3600
        %v4593 = vpack.c.b16 %v3609, %v3601
        %v4594 = vpack.c.b16 %v3610, %v3602
        %v4595 = vpack.c.b16 %v3611, %v3603
        %v4596 = vpack.c.b16 %v3612, %v3604
        %v4597 = vpack.c.b16 %v3613, %v3605
        %v4598 = vpack.c.b16 %v3614, %v3606
        %v4599 = vpack.c.b16 %v3615, %v3607
        %v4600 = vpack.c.b16 %v3624, %v3616
        %v4601 = vpack.c.b16 %v3625, %v3617
        %v4602 = vpack.c.b16 %v3626, %v3618
        %v4603 = vpack.c.b16 %v3627, %v3619
        %v4604 = vpack.c.b16 %v3628, %v3620
        %v4605 = vpack.c.b16 %v3629, %v3621
        %v4606 = vpack.c.b16 %v3630, %v3622
        %v4607 = vpack.c.b16 %v3631, %v3623
        %v4608 = vpack.c.b16 %v3640, %v3632
        %v4609 = vpack.c.b16 %v3641, %v3633
        %v4610 = vpack.c.b16 %v3642, %v3634
        %v4611 = vpack.c.b16 %v3643, %v3635
        %v4612 = vpack.c.b16 %v3644, %v3636
        %v4613 = vpack.c.b16 %v3645, %v3637
        %v4614 = vpack.c.b16 %v3646, %v3638
        %v4615 = vpack.c.b16 %v3647, %v3639
        %v4616 = vpack.c.b16 %v3656, %v3648
        %v4617 = vpack.c.b16 %v3657, %v3649
        %v4618 = vpack.c.b16 %v3658, %v3650
        %v4619 = vpack.c.b16 %v3659, %v3651
        %v4620 = vpack.c.b16 %v3660, %v3652
        %v4621 = vpack.c.b16 %v3661, %v3653
        %v4622 = vpack.c.b16 %v3662, %v3654
        %v4623 = vpack.c.b16 %v3663, %v3655
        %v4624 = vpack.c.b16 %v3672, %v3664
        %v4625 = vpack.c.b16 %v3673, %v3665
        %v4626 = vpack.c.b16 %v3674, %v3666
        %v4627 = vpack.c.b16 %v3675, %v3667
        %v4628 = vpack.c.b16 %v3676, %v3668
        %v4629 = vpack.c.b16 %v3677, %v3669
        %v4630 = vpack.c.b16 %v3678, %v3670
        %v4631 = vpack.c.b16 %v3679, %v3671
        %v4632 = vpack.c.b16 %v3688, %v3680
        %v4633 = vpack.c.b16 %v3689, %v3681
        %v4634 = vpack.c.b16 %v3690, %v3682
        %v4635 = vpack.c.b16 %v3691, %v3683
        %v4636 = vpack.c.b16 %v3692, %v3684
        %v4637 = vpack.c.b16 %v3693, %v3685
        %v4638 = vpack.c.b16 %v3694, %v3686
        %v4639 = vpack.c.b16 %v3695, %v3687
        %v4640 = vpack.c.b16 %v3704, %v3696
        %v4641 = vpack.c.b16 %v3705, %v3697
        %v4642 = vpack.c.b16 %v3706, %v3698
        %v4643 = vpack.c.b16 %v3707, %v3699
        %v4644 = vpack.c.b16 %v3708, %v3700
        %v4645 = vpack.c.b16 %v3709, %v3701
        %v4646 = vpack.c.b16 %v3710, %v3702
        %v4647 = vpack.c.b16 %v3711, %v3703
        %v4648 = vpack.c.b16 %v3720, %v3712
        %v4649 = vpack.c.b16 %v3721, %v3713
        %v4650 = vpack.c.b16 %v3722, %v3714
        %v4651 = vpack.c.b16 %v3723, %v3715
        %v4652 = vpack.c.b16 %v3724, %v3716
        %v4653 = vpack.c.b16 %v3725, %v3717
        %v4654 = vpack.c.b16 %v3726, %v3718
        %v4655 = vpack.c.b16 %v3727, %v3719
        %v4656 = vpack.c.b16 %v3736, %v3728
        %v4657 = vpack.c.b16 %v3737, %v3729
        %v4658 = vpack.c.b16 %v3738, %v3730
        %v4659 = vpack.c.b16 %v3739, %v3731
        %v4660 = vpack.c.b16 %v3740, %v3732
        %v4661 = vpack.c.b16 %v3741, %v3733
        %v4662 = vpack.c.b16 %v3742, %v3734
        %v4663 = vpack.c.b16 %v3743, %v3735
        %v4664 = vpack.c.b16 %v3752, %v3744
        %v4665 = vpack.c.b16 %v3753, %v3745
        %v4666 = vpack.c.b16 %v3754, %v3746
        %v4667 = vpack.c.b16 %v3755, %v3747
        %v4668 = vpack.c.b16 %v3756, %v3748
        %v4669 = vpack.c.b16 %v3757, %v3749
        %v4670 = vpack.c.b16 %v3758, %v3750
        %v4671 = vpack.c.b16 %v3759, %v3751
        %v4672 = vpack.c.b16 %v3768, %v3760
        %v4673 = vpack.c.b16 %v3769, %v3761
        %v4674 = vpack.c.b16 %v3770, %v3762
        %v4675 = vpack.c.b16 %v3771, %v3763
        %v4676 = vpack.c.b16 %v3772, %v3764
        %v4677 = vpack.c.b16 %v3773, %v3765
        %v4678 = vpack.c.b16 %v3774, %v3766
        %v4679 = vpack.c.b16 %v3775, %v3767
        %v4680 = vpack.c.b16 %v3784, %v3776
        %v4681 = vpack.c.b16 %v3785, %v3777
        %v4682 = vpack.c.b16 %v3786, %v3778
        %v4683 = vpack.c.b16 %v3787, %v3779
        %v4684 = vpack.c.b16 %v3788, %v3780
        %v4685 = vpack.c.b16 %v3789, %v3781
        %v4686 = vpack.c.b16 %v3790, %v3782
        %v4687 = vpack.c.b16 %v3791, %v3783
        %v4688 = vpack.c.b16 %v3800, %v3792
        %v4689 = vpack.c.b16 %v3801, %v3793
        %v4690 = vpack.c.b16 %v3802, %v3794
        %v4691 = vpack.c.b16 %v3803, %v3795
        %v4692 = vpack.c.b16 %v3804, %v3796
        %v4693 = vpack.c.b16 %v3805, %v3797
        %v4694 = vpack.c.b16 %v3806, %v3798
        %v4695 = vpack.c.b16 %v3807, %v3799
        %v4696 = vpack.c.b16 %v3816, %v3808
        %v4697 = vpack.c.b16 %v3817, %v3809
        %v4698 = vpack.c.b16 %v3818, %v3810
        %v4699 = vpack.c.b16 %v3819, %v3811
        %v4700 = vpack.c.b16 %v3820, %v3812
        %v4701 = vpack.c.b16 %v3821, %v3813
        %v4702 = vpack.c.b16 %v3822, %v3814
        %v4703 = vpack.c.b16 %v3823, %v3815
        %v4704 = vpack.c.b16 %v3832, %v3824
        %v4705 = vpack.c.b16 %v3833, %v3825
        %v4706 = vpack.c.b16 %v3834, %v3826
        %v4707 = vpack.c.b16 %v3835, %v3827
        %v4708 = vpack.c.b16 %v3836, %v3828
        %v4709 = vpack.c.b16 %v3837, %v3829
        %v4710 = vpack.c.b16 %v3838, %v3830
        %v4711 = vpack.c.b16 %v3839, %v3831
        %v4712 = vpack.c.b16 %v3848, %v3840
        %v4713 = vpack.c.b16 %v3849, %v3841
        %v4714 = vpack.c.b16 %v3850, %v3842
        %v4715 = vpack.c.b16 %v3851, %v3843
        %v4716 = vpack.c.b16 %v3852, %v3844
        %v4717 = vpack.c.b16 %v3853, %v3845
        %v4718 = vpack.c.b16 %v3854, %v3846
        %v4719 = vpack.c.b16 %v3855, %v3847
        %v4720 = vpack.c.b16 %v3864, %v3856
        %v4721 = vpack.c.b16 %v3865, %v3857
        %v4722 = vpack.c.b16 %v3866, %v3858
        %v4723 = vpack.c.b16 %v3867, %v3859
        %v4724 = vpack.c.b16 %v3868, %v3860
        %v4725 = vpack.c.b16 %v3869, %v3861
        %v4726 = vpack.c.b16 %v3870, %v3862
        %v4727 = vpack.c.b16 %v3871, %v3863
        %v4728 = vpack.c.b16 %v3880, %v3872
        %v4729 = vpack.c.b16 %v3881, %v3873
        %v4730 = vpack.c.b16 %v3882, %v3874
        %v4731 = vpack.c.b16 %v3883, %v3875
        %v4732 = vpack.c.b16 %v3884, %v3876
        %v4733 = vpack.c.b16 %v3885, %v3877
        %v4734 = vpack.c.b16 %v3886, %v3878
        %v4735 = vpack.c.b16 %v3887, %v3879
        %v4736 = vpack.c.b16 %v3896, %v3888
        %v4737 = vpack.c.b16 %v3897, %v3889
        %v4738 = vpack.c.b16 %v3898, %v3890
        %v4739 = vpack.c.b16 %v3899, %v3891
        %v4740 = vpack.c.b16 %v3900, %v3892
        %v4741 = vpack.c.b16 %v3901, %v3893
        %v4742 = vpack.c.b16 %v3902, %v3894
        %v4743 = vpack.c.b16 %v3903, %v3895
        %v4744 = vpack.c.b16 %v3912, %v3904
        %v4745 = vpack.c.b16 %v3913, %v3905
        %v4746 = vpack.c.b16 %v3914, %v3906
        %v4747 = vpack.c.b16 %v3915, %v3907
        %v4748 = vpack.c.b16 %v3916, %v3908
        %v4749 = vpack.c.b16 %v3917, %v3909
        %v4750 = vpack.c.b16 %v3918, %v3910
        %v4751 = vpack.c.b16 %v3919, %v3911
        %v4752 = vpack.c.b16 %v3928, %v3920
        %v4753 = vpack.c.b16 %v3929, %v3921
        %v4754 = vpack.c.b16 %v3930, %v3922
        %v4755 = vpack.c.b16 %v3931, %v3923
        %v4756 = vpack.c.b16 %v3932, %v3924
        %v4757 = vpack.c.b16 %v3933, %v3925
        %v4758 = vpack.c.b16 %v3934, %v3926
        %v4759 = vpack.c.b16 %v3935, %v3927
        %v4760 = vpack.c.b16 %v3944, %v3936
        %v4761 = vpack.c.b16 %v3945, %v3937
        %v4762 = vpack.c.b16 %v3946, %v3938
        %v4763 = vpack.c.b16 %v3947, %v3939
        %v4764 = vpack.c.b16 %v3948, %v3940
        %v4765 = vpack.c.b16 %v3949, %v3941
        %v4766 = vpack.c.b16 %v3950, %v3942
        %v4767 = vpack.c.b16 %v3951, %v3943
        %v4768 = vpack.c.b16 %v3960, %v3952
        %v4769 = vpack.c.b16 %v3961, %v3953
        %v4770 = vpack.c.b16 %v3962, %v3954
        %v4771 = vpack.c.b16 %v3963, %v3955
        %v4772 = vpack.c.b16 %v3964, %v3956
        %v4773 = vpack.c.b16 %v3965, %v3957
        %v4774 = vpack.c.b16 %v3966, %v3958
        %v4775 = vpack.c.b16 %v3967, %v3959
        %v4776 = vpack.c.b16 %v3976, %v3968
        %v4777 = vpack.c.b16 %v3977, %v3969
        %v4778 = vpack.c.b16 %v3978, %v3970
        %v4779 = vpack.c.b16 %v3979, %v3971
        %v4780 = vpack.c.b16 %v3980, %v3972
        %v4781 = vpack.c.b16 %v3981, %v3973
        %v4782 = vpack.c.b16 %v3982, %v3974
        %v4783 = vpack.c.b16 %v3983, %v3975
        %v4784 = vpack.c.b16 %v3992, %v3984
        %v4785 = vpack.c.b16 %v3993, %v3985
        %v4786 = vpack.c.b16 %v3994, %v3986
        %v4787 = vpack.c.b16 %v3995, %v3987
        %v4788 = vpack.c.b16 %v3996, %v3988
        %v4789 = vpack.c.b16 %v3997, %v3989
        %v4790 = vpack.c.b16 %v3998, %v3990
        %v4791 = vpack.c.b16 %v3999, %v3991
        %v4792 = vpack.c.b16 %v4008, %v4000
        %v4793 = vpack.c.b16 %v4009, %v4001
        %v4794 = vpack.c.b16 %v4010, %v4002
        %v4795 = vpack.c.b16 %v4011, %v4003
        %v4796 = vpack.c.b16 %v4012, %v4004
        %v4797 = vpack.c.b16 %v4013, %v4005
        %v4798 = vpack.c.b16 %v4014, %v4006
        %v4799 = vpack.c.b16 %v4015, %v4007
        %v4800 = vpack.c.b16 %v4024, %v4016
        %v4801 = vpack.c.b16 %v4025, %v4017
        %v4802 = vpack.c.b16 %v4026, %v4018
        %v4803 = vpack.c.b16 %v4027, %v4019
        %v4804 = vpack.c.b16 %v4028, %v4020
        %v4805 = vpack.c.b16 %v4029, %v4021
        %v4806 = vpack.c.b16 %v4030, %v4022
        %v4807 = vpack.c.b16 %v4031, %v4023
        %v4808 = vpack.c.b16 %v4040, %v4032
        %v4809 = vpack.c.b16 %v4041, %v4033
        %v4810 = vpack.c.b16 %v4042, %v4034
        %v4811 = vpack.c.b16 %v4043, %v4035
        %v4812 = vpack.c.b16 %v4044, %v4036
        %v4813 = vpack.c.b16 %v4045, %v4037
        %v4814 = vpack.c.b16 %v4046, %v4038
        %v4815 = vpack.c.b16 %v4047, %v4039
        %v4816 = vpack.c.b16 %v4056, %v4048
        %v4817 = vpack.c.b16 %v4057, %v4049
        %v4818 = vpack.c.b16 %v4058, %v4050
        %v4819 = vpack.c.b16 %v4059, %v4051
        %v4820 = vpack.c.b16 %v4060, %v4052
        %v4821 = vpack.c.b16 %v4061, %v4053
        %v4822 = vpack.c.b16 %v4062, %v4054
        %v4823 = vpack.c.b16 %v4063, %v4055
        %v4824 = vpack.c.b16 %v4072, %v4064
        %v4825 = vpack.c.b16 %v4073, %v4065
        %v4826 = vpack.c.b16 %v4074, %v4066
        %v4827 = vpack.c.b16 %v4075, %v4067
        %v4828 = vpack.c.b16 %v4076, %v4068
        %v4829 = vpack.c.b16 %v4077, %v4069
        %v4830 = vpack.c.b16 %v4078, %v4070
        %v4831 = vpack.c.b16 %v4079, %v4071
        %v4832 = vpack.c.b16 %v4088, %v4080
        %v4833 = vpack.c.b16 %v4089, %v4081
        %v4834 = vpack.c.b16 %v4090, %v4082
        %v4835 = vpack.c.b16 %v4091, %v4083
        %v4836 = vpack.c.b16 %v4092, %v4084
        %v4837 = vpack.c.b16 %v4093, %v4085
        %v4838 = vpack.c.b16 %v4094, %v4086
        %v4839 = vpack.c.b16 %v4095, %v4087
        %v4840 = vpack.c.b16 %v4104, %v4096
        %v4841 = vpack.c.b16 %v4105, %v4097
        %v4842 = vpack.c.b16 %v4106, %v4098
        %v4843 = vpack.c.b16 %v4107, %v4099
        %v4844 = vpack.c.b16 %v4108, %v4100
        %v4845 = vpack.c.b16 %v4109, %v4101
        %v4846 = vpack.c.b16 %v4110, %v4102
        %v4847 = vpack.c.b16 %v4111, %v4103
        %v4848 = vpack.c.b16 %v4120, %v4112
        %v4849 = vpack.c.b16 %v4121, %v4113
        %v4850 = vpack.c.b16 %v4122, %v4114
        %v4851 = vpack.c.b16 %v4123, %v4115
        %v4852 = vpack.c.b16 %v4124, %v4116
        %v4853 = vpack.c.b16 %v4125, %v4117
        %v4854 = vpack.c.b16 %v4126, %v4118
        %v4855 = vpack.c.b16 %v4127, %v4119
        %v4856 = vpack.c.b16 %v4136, %v4128
        %v4857 = vpack.c.b16 %v4137, %v4129
        %v4858 = vpack.c.b16 %v4138, %v4130
        %v4859 = vpack.c.b16 %v4139, %v4131
        %v4860 = vpack.c.b16 %v4140, %v4132
        %v4861 = vpack.c.b16 %v4141, %v4133
        %v4862 = vpack.c.b16 %v4142, %v4134
        %v4863 = vpack.c.b16 %v4143, %v4135
        %v4864 = vpack.c.b16 %v4152, %v4144
        %v4865 = vpack.c.b16 %v4153, %v4145
        %v4866 = vpack.c.b16 %v4154, %v4146
        %v4867 = vpack.c.b16 %v4155, %v4147
        %v4868 = vpack.c.b16 %v4156, %v4148
        %v4869 = vpack.c.b16 %v4157, %v4149
        %v4870 = vpack.c.b16 %v4158, %v4150
        %v4871 = vpack.c.b16 %v4159, %v4151
        %v4872 = vpack.c.b16 %v4168, %v4160
        %v4873 = vpack.c.b16 %v4169, %v4161
        %v4874 = vpack.c.b16 %v4170, %v4162
        %v4875 = vpack.c.b16 %v4171, %v4163
        %v4876 = vpack.c.b16 %v4172, %v4164
        %v4877 = vpack.c.b16 %v4173, %v4165
        %v4878 = vpack.c.b16 %v4174, %v4166
        %v4879 = vpack.c.b16 %v4175, %v4167
        %v4880 = vpack.c.b16 %v4184, %v4176
        %v4881 = vpack.c.b16 %v4185, %v4177
        %v4882 = vpack.c.b16 %v4186, %v4178
        %v4883 = vpack.c.b16 %v4187, %v4179
        %v4884 = vpack.c.b16 %v4188, %v4180
        %v4885 = vpack.c.b16 %v4189, %v4181
        %v4886 = vpack.c.b16 %v4190, %v4182
        %v4887 = vpack.c.b16 %v4191, %v4183
        %v4888 = vpack.c.b16 %v4200, %v4192
        %v4889 = vpack.c.b16 %v4201, %v4193
        %v4890 = vpack.c.b16 %v4202, %v4194
        %v4891 = vpack.c.b16 %v4203, %v4195
        %v4892 = vpack.c.b16 %v4204, %v4196
        %v4893 = vpack.c.b16 %v4205, %v4197
        %v4894 = vpack.c.b16 %v4206, %v4198
        %v4895 = vpack.c.b16 %v4207, %v4199
        %v4896 = vpack.c.b16 %v4216, %v4208
        %v4897 = vpack.c.b16 %v4217, %v4209
        %v4898 = vpack.c.b16 %v4218, %v4210
        %v4899 = vpack.c.b16 %v4219, %v4211
        %v4900 = vpack.c.b16 %v4220, %v4212
        %v4901 = vpack.c.b16 %v4221, %v4213
        %v4902 = vpack.c.b16 %v4222, %v4214
        %v4903 = vpack.c.b16 %v4223, %v4215
        %v4904 = vpack.c.b16 %v4232, %v4224
        %v4905 = vpack.c.b16 %v4233, %v4225
        %v4906 = vpack.c.b16 %v4234, %v4226
        %v4907 = vpack.c.b16 %v4235, %v4227
        %v4908 = vpack.c.b16 %v4236, %v4228
        %v4909 = vpack.c.b16 %v4237, %v4229
        %v4910 = vpack.c.b16 %v4238, %v4230
        %v4911 = vpack.c.b16 %v4239, %v4231
        %v4912 = vpack.c.b16 %v4248, %v4240
        %v4913 = vpack.c.b16 %v4249, %v4241
        %v4914 = vpack.c.b16 %v4250, %v4242
        %v4915 = vpack.c.b16 %v4251, %v4243
        %v4916 = vpack.c.b16 %v4252, %v4244
        %v4917 = vpack.c.b16 %v4253, %v4245
        %v4918 = vpack.c.b16 %v4254, %v4246
        %v4919 = vpack.c.b16 %v4255, %v4247
        %v4920 = vpack.c.b16 %v4264, %v4256
        %v4921 = vpack.c.b16 %v4265, %v4257
        %v4922 = vpack.c.b16 %v4266, %v4258
        %v4923 = vpack.c.b16 %v4267, %v4259
        %v4924 = vpack.c.b16 %v4268, %v4260
        %v4925 = vpack.c.b16 %v4269, %v4261
        %v4926 = vpack.c.b16 %v4270, %v4262
        %v4927 = vpack.c.b16 %v4271, %v4263
        %v4928 = vpack.c.b16 %v4280, %v4272
        %v4929 = vpack.c.b16 %v4281, %v4273
        %v4930 = vpack.c.b16 %v4282, %v4274
        %v4931 = vpack.c.b16 %v4283, %v4275
        %v4932 = vpack.c.b16 %v4284, %v4276
        %v4933 = vpack.c.b16 %v4285, %v4277
        %v4934 = vpack.c.b16 %v4286, %v4278
        %v4935 = vpack.c.b16 %v4287, %v4279
        %v4936 = vpack.c.b16 %v4296, %v4288
        %v4937 = vpack.c.b16 %v4297, %v4289
        %v4938 = vpack.c.b16 %v4298, %v4290
        %v4939 = vpack.c.b16 %v4299, %v4291
        %v4940 = vpack.c.b16 %v4300, %v4292
        %v4941 = vpack.c.b16 %v4301, %v4293
        %v4942 = vpack.c.b16 %v4302, %v4294
        %v4943 = vpack.c.b16 %v4303, %v4295
        %v5585 = vperm.slane %v2383, 0
        %v5586 = vperm.slane %v2383, 1
        %v5587 = vperm.slane %v2383, 2
        %v5588 = vperm.slane %v2383, 3
        %v5589 = vperm.slane %v2383, 4
        %v5590 = vperm.slane %v2383, 5
        %v5591 = vperm.slane %v2383, 6
        %v5592 = vperm.slane %v2383, 7
        %5601 = vmatpush.bf16.msra.mxu0 %v4360
        %5602 = vmatpush.bf16.msra.mxu0 %v4352
        %5603 = vmatpush.bf16.msra.mxu0 %v4344
        %5604 = vmatpush.bf16.msra.mxu0 %v4336
        %5605 = vmatpush.bf16.msra.mxu0 %v4328
        %5606 = vmatpush.bf16.msra.mxu0 %v4320
        %5607 = vmatpush.bf16.msra.mxu0 %v4312
        %5608 = vmatpush.bf16.msra.mxu0 %v4304
        %5609 = vmatmul.bf16.gmra.mxu0 %v1733
        %v5610 = vpop.f32.mrf.mxu0
        %v5611 = vadd.f32 %v5585, %v5610
        %v5612 = vpop.f32.mrf.mxu0
        %5613 = vdwg.mxu0
        %5614 = vmatpush.bf16.msra.mxu0 %v4424
        %5615 = vmatpush.bf16.msra.mxu0 %v4416
        %5616 = vmatpush.bf16.msra.mxu0 %v4408
        %5617 = vmatpush.bf16.msra.mxu0 %v4400
        %5618 = vmatpush.bf16.msra.mxu0 %v4392
        %5619 = vmatpush.bf16.msra.mxu0 %v4384
        %5620 = vmatpush.bf16.msra.mxu0 %v4376
        %5621 = vmatpush.bf16.msra.mxu0 %v4368
        %5622 = vmatmul.bf16.gmra.mxu0 %v1734
        %v5623 = vpop.f32.mrf.mxu0
        %v5624 = vadd.f32 %v5611, %v5623
        %v5625 = vpop.f32.mrf.mxu0
        %5626 = vdwg.mxu0
        %5627 = vmatpush.bf16.msra.mxu0 %v4488
        %5628 = vmatpush.bf16.msra.mxu0 %v4480
        %5629 = vmatpush.bf16.msra.mxu0 %v4472
        %5630 = vmatpush.bf16.msra.mxu0 %v4464
        %5631 = vmatpush.bf16.msra.mxu0 %v4456
        %5632 = vmatpush.bf16.msra.mxu0 %v4448
        %5633 = vmatpush.bf16.msra.mxu0 %v4440
        %5634 = vmatpush.bf16.msra.mxu0 %v4432
        %5635 = vmatmul.bf16.gmra.mxu0 %v1735
        %v5636 = vpop.f32.mrf.mxu0
        %v5637 = vadd.f32 %v5624, %v5636
        %v5638 = vpop.f32.mrf.mxu0
        %5639 = vdwg.mxu0
        %5640 = vmatpush.bf16.msra.mxu0 %v4552
        %5641 = vmatpush.bf16.msra.mxu0 %v4544
        %5642 = vmatpush.bf16.msra.mxu0 %v4536
        %5643 = vmatpush.bf16.msra.mxu0 %v4528
        %5644 = vmatpush.bf16.msra.mxu0 %v4520
        %5645 = vmatpush.bf16.msra.mxu0 %v4512
        %5646 = vmatpush.bf16.msra.mxu0 %v4504
        %5647 = vmatpush.bf16.msra.mxu0 %v4496
        %5648 = vmatmul.bf16.gmra.mxu0 %v1736
        %v5649 = vpop.f32.mrf.mxu0
        %v5650 = vadd.f32 %v5637, %v5649
        %v5651 = vpop.f32.mrf.mxu0
        %5652 = vdwg.mxu0
        %5653 = vmatpush.bf16.msra.mxu0 %v4616
        %5654 = vmatpush.bf16.msra.mxu0 %v4608
        %5655 = vmatpush.bf16.msra.mxu0 %v4600
        %5656 = vmatpush.bf16.msra.mxu0 %v4592
        %5657 = vmatpush.bf16.msra.mxu0 %v4584
        %5658 = vmatpush.bf16.msra.mxu0 %v4576
        %5659 = vmatpush.bf16.msra.mxu0 %v4568
        %5660 = vmatpush.bf16.msra.mxu0 %v4560
        %5661 = vmatmul.bf16.gmra.mxu0 %v1737
        %v5662 = vpop.f32.mrf.mxu0
        %v5663 = vadd.f32 %v5650, %v5662
        %v5664 = vpop.f32.mrf.mxu0
        %5665 = vdwg.mxu0
        %5666 = vmatpush.bf16.msra.mxu0 %v4680
        %5667 = vmatpush.bf16.msra.mxu0 %v4672
        %5668 = vmatpush.bf16.msra.mxu0 %v4664
        %5669 = vmatpush.bf16.msra.mxu0 %v4656
        %5670 = vmatpush.bf16.msra.mxu0 %v4648
        %5671 = vmatpush.bf16.msra.mxu0 %v4640
        %5672 = vmatpush.bf16.msra.mxu0 %v4632
        %5673 = vmatpush.bf16.msra.mxu0 %v4624
        %5674 = vmatmul.bf16.gmra.mxu0 %v1738
        %v5675 = vpop.f32.mrf.mxu0
        %v5676 = vadd.f32 %v5663, %v5675
        %v5677 = vpop.f32.mrf.mxu0
        %5678 = vdwg.mxu0
        %5679 = vmatpush.bf16.msra.mxu0 %v4744
        %5680 = vmatpush.bf16.msra.mxu0 %v4736
        %5681 = vmatpush.bf16.msra.mxu0 %v4728
        %5682 = vmatpush.bf16.msra.mxu0 %v4720
        %5683 = vmatpush.bf16.msra.mxu0 %v4712
        %5684 = vmatpush.bf16.msra.mxu0 %v4704
        %5685 = vmatpush.bf16.msra.mxu0 %v4696
        %5686 = vmatpush.bf16.msra.mxu0 %v4688
        %5687 = vmatmul.bf16.gmra.mxu0 %v1739
        %v5688 = vpop.f32.mrf.mxu0
        %v5689 = vadd.f32 %v5676, %v5688
        %v5690 = vpop.f32.mrf.mxu0
        %5691 = vdwg.mxu0
        %5692 = vmatpush.bf16.msra.mxu0 %v4808
        %5693 = vmatpush.bf16.msra.mxu0 %v4800
        %5694 = vmatpush.bf16.msra.mxu0 %v4792
        %5695 = vmatpush.bf16.msra.mxu0 %v4784
        %5696 = vmatpush.bf16.msra.mxu0 %v4776
        %5697 = vmatpush.bf16.msra.mxu0 %v4768
        %5698 = vmatpush.bf16.msra.mxu0 %v4760
        %5699 = vmatpush.bf16.msra.mxu0 %v4752
        %5700 = vmatmul.bf16.gmra.mxu0 %v1740
        %v5701 = vpop.f32.mrf.mxu0
        %v5702 = vadd.f32 %v5689, %v5701
        %v5703 = vpop.f32.mrf.mxu0
        %5704 = vdwg.mxu0
        %5705 = vmatpush.bf16.msra.mxu0 %v4872
        %5706 = vmatpush.bf16.msra.mxu0 %v4864
        %5707 = vmatpush.bf16.msra.mxu0 %v4856
        %5708 = vmatpush.bf16.msra.mxu0 %v4848
        %5709 = vmatpush.bf16.msra.mxu0 %v4840
        %5710 = vmatpush.bf16.msra.mxu0 %v4832
        %5711 = vmatpush.bf16.msra.mxu0 %v4824
        %5712 = vmatpush.bf16.msra.mxu0 %v4816
        %5713 = vmatmul.bf16.gmra.mxu0 %v1741
        %v5714 = vpop.f32.mrf.mxu0
        %v5715 = vadd.f32 %v5702, %v5714
        %v5716 = vpop.f32.mrf.mxu0
        %5717 = vdwg.mxu0
        %5718 = vmatpush.bf16.msra.mxu0 %v4936
        %5719 = vmatpush.bf16.msra.mxu0 %v4928
        %5720 = vmatpush.bf16.msra.mxu0 %v4920
        %5721 = vmatpush.bf16.msra.mxu0 %v4912
        %5722 = vmatpush.bf16.msra.mxu0 %v4904
        %5723 = vmatpush.bf16.msra.mxu0 %v4896
        %5724 = vmatpush.bf16.msra.mxu0 %v4888
        %5725 = vmatpush.bf16.msra.mxu0 %v4880
        %5726 = vmatmul.bf16.gmra.mxu0 %v1742
        %v5727 = vpop.f32.mrf.mxu0
        %v5728 = vadd.f32 %v5715, %v5727
        %v5729 = vpop.f32.mrf.mxu0
        %5730 = vdwg.mxu0
        %5731 = vmatpush.bf16.msra.mxu0 %v4361
        %5732 = vmatpush.bf16.msra.mxu0 %v4353
        %5733 = vmatpush.bf16.msra.mxu0 %v4345
        %5734 = vmatpush.bf16.msra.mxu0 %v4337
        %5735 = vmatpush.bf16.msra.mxu0 %v4329
        %5736 = vmatpush.bf16.msra.mxu0 %v4321
        %5737 = vmatpush.bf16.msra.mxu0 %v4313
        %5738 = vmatpush.bf16.msra.mxu0 %v4305
        %5739 = vmatmul.bf16.gmra.mxu0 %v1733
        %v5740 = vpop.f32.mrf.mxu0
        %v5741 = vadd.f32 %v5586, %v5740
        %v5742 = vpop.f32.mrf.mxu0
        %5743 = vdwg.mxu0
        %5744 = vmatpush.bf16.msra.mxu0 %v4425
        %5745 = vmatpush.bf16.msra.mxu0 %v4417
        %5746 = vmatpush.bf16.msra.mxu0 %v4409
        %5747 = vmatpush.bf16.msra.mxu0 %v4401
        %5748 = vmatpush.bf16.msra.mxu0 %v4393
        %5749 = vmatpush.bf16.msra.mxu0 %v4385
        %5750 = vmatpush.bf16.msra.mxu0 %v4377
        %5751 = vmatpush.bf16.msra.mxu0 %v4369
        %5752 = vmatmul.bf16.gmra.mxu0 %v1734
        %v5753 = vpop.f32.mrf.mxu0
        %v5754 = vadd.f32 %v5741, %v5753
        %v5755 = vpop.f32.mrf.mxu0
        %5756 = vdwg.mxu0
        %5757 = vmatpush.bf16.msra.mxu0 %v4489
        %5758 = vmatpush.bf16.msra.mxu0 %v4481
        %5759 = vmatpush.bf16.msra.mxu0 %v4473
        %5760 = vmatpush.bf16.msra.mxu0 %v4465
        %5761 = vmatpush.bf16.msra.mxu0 %v4457
        %5762 = vmatpush.bf16.msra.mxu0 %v4449
        %5763 = vmatpush.bf16.msra.mxu0 %v4441
        %5764 = vmatpush.bf16.msra.mxu0 %v4433
        %5765 = vmatmul.bf16.gmra.mxu0 %v1735
        %v5766 = vpop.f32.mrf.mxu0
        %v5767 = vadd.f32 %v5754, %v5766
        %v5768 = vpop.f32.mrf.mxu0
        %5769 = vdwg.mxu0
        %5770 = vmatpush.bf16.msra.mxu0 %v4553
        %5771 = vmatpush.bf16.msra.mxu0 %v4545
        %5772 = vmatpush.bf16.msra.mxu0 %v4537
        %5773 = vmatpush.bf16.msra.mxu0 %v4529
        %5774 = vmatpush.bf16.msra.mxu0 %v4521
        %5775 = vmatpush.bf16.msra.mxu0 %v4513
        %5776 = vmatpush.bf16.msra.mxu0 %v4505
        %5777 = vmatpush.bf16.msra.mxu0 %v4497
        %5778 = vmatmul.bf16.gmra.mxu0 %v1736
        %v5779 = vpop.f32.mrf.mxu0
        %v5780 = vadd.f32 %v5767, %v5779
        %v5781 = vpop.f32.mrf.mxu0
        %5782 = vdwg.mxu0
        %5783 = vmatpush.bf16.msra.mxu0 %v4617
        %5784 = vmatpush.bf16.msra.mxu0 %v4609
        %5785 = vmatpush.bf16.msra.mxu0 %v4601
        %5786 = vmatpush.bf16.msra.mxu0 %v4593
        %5787 = vmatpush.bf16.msra.mxu0 %v4585
        %5788 = vmatpush.bf16.msra.mxu0 %v4577
        %5789 = vmatpush.bf16.msra.mxu0 %v4569
        %5790 = vmatpush.bf16.msra.mxu0 %v4561
        %5791 = vmatmul.bf16.gmra.mxu0 %v1737
        %v5792 = vpop.f32.mrf.mxu0
        %v5793 = vadd.f32 %v5780, %v5792
        %v5794 = vpop.f32.mrf.mxu0
        %5795 = vdwg.mxu0
        %5796 = vmatpush.bf16.msra.mxu0 %v4681
        %5797 = vmatpush.bf16.msra.mxu0 %v4673
        %5798 = vmatpush.bf16.msra.mxu0 %v4665
        %5799 = vmatpush.bf16.msra.mxu0 %v4657
        %5800 = vmatpush.bf16.msra.mxu0 %v4649
        %5801 = vmatpush.bf16.msra.mxu0 %v4641
        %5802 = vmatpush.bf16.msra.mxu0 %v4633
        %5803 = vmatpush.bf16.msra.mxu0 %v4625
        %5804 = vmatmul.bf16.gmra.mxu0 %v1738
        %v5805 = vpop.f32.mrf.mxu0
        %v5806 = vadd.f32 %v5793, %v5805
        %v5807 = vpop.f32.mrf.mxu0
        %5808 = vdwg.mxu0
        %5809 = vmatpush.bf16.msra.mxu0 %v4745
        %5810 = vmatpush.bf16.msra.mxu0 %v4737
        %5811 = vmatpush.bf16.msra.mxu0 %v4729
        %5812 = vmatpush.bf16.msra.mxu0 %v4721
        %5813 = vmatpush.bf16.msra.mxu0 %v4713
        %5814 = vmatpush.bf16.msra.mxu0 %v4705
        %5815 = vmatpush.bf16.msra.mxu0 %v4697
        %5816 = vmatpush.bf16.msra.mxu0 %v4689
        %5817 = vmatmul.bf16.gmra.mxu0 %v1739
        %v5818 = vpop.f32.mrf.mxu0
        %v5819 = vadd.f32 %v5806, %v5818
        %v5820 = vpop.f32.mrf.mxu0
        %5821 = vdwg.mxu0
        %5822 = vmatpush.bf16.msra.mxu0 %v4809
        %5823 = vmatpush.bf16.msra.mxu0 %v4801
        %5824 = vmatpush.bf16.msra.mxu0 %v4793
        %5825 = vmatpush.bf16.msra.mxu0 %v4785
        %5826 = vmatpush.bf16.msra.mxu0 %v4777
        %5827 = vmatpush.bf16.msra.mxu0 %v4769
        %5828 = vmatpush.bf16.msra.mxu0 %v4761
        %5829 = vmatpush.bf16.msra.mxu0 %v4753
        %5830 = vmatmul.bf16.gmra.mxu0 %v1740
        %v5831 = vpop.f32.mrf.mxu0
        %v5832 = vadd.f32 %v5819, %v5831
        %v5833 = vpop.f32.mrf.mxu0
        %5834 = vdwg.mxu0
        %5835 = vmatpush.bf16.msra.mxu0 %v4873
        %5836 = vmatpush.bf16.msra.mxu0 %v4865
        %5837 = vmatpush.bf16.msra.mxu0 %v4857
        %5838 = vmatpush.bf16.msra.mxu0 %v4849
        %5839 = vmatpush.bf16.msra.mxu0 %v4841
        %5840 = vmatpush.bf16.msra.mxu0 %v4833
        %5841 = vmatpush.bf16.msra.mxu0 %v4825
        %5842 = vmatpush.bf16.msra.mxu0 %v4817
        %5843 = vmatmul.bf16.gmra.mxu0 %v1741
        %v5844 = vpop.f32.mrf.mxu0
        %v5845 = vadd.f32 %v5832, %v5844
        %v5846 = vpop.f32.mrf.mxu0
        %5847 = vdwg.mxu0
        %5848 = vmatpush.bf16.msra.mxu0 %v4937
        %5849 = vmatpush.bf16.msra.mxu0 %v4929
        %5850 = vmatpush.bf16.msra.mxu0 %v4921
        %5851 = vmatpush.bf16.msra.mxu0 %v4913
        %5852 = vmatpush.bf16.msra.mxu0 %v4905
        %5853 = vmatpush.bf16.msra.mxu0 %v4897
        %5854 = vmatpush.bf16.msra.mxu0 %v4889
        %5855 = vmatpush.bf16.msra.mxu0 %v4881
        %5856 = vmatmul.bf16.gmra.mxu0 %v1742
        %v5857 = vpop.f32.mrf.mxu0
        %v5858 = vadd.f32 %v5845, %v5857
        %v5859 = vpop.f32.mrf.mxu0
        %5860 = vdwg.mxu0
        %5861 = vmatpush.bf16.msra.mxu0 %v4362
        %5862 = vmatpush.bf16.msra.mxu0 %v4354
        %5863 = vmatpush.bf16.msra.mxu0 %v4346
        %5864 = vmatpush.bf16.msra.mxu0 %v4338
        %5865 = vmatpush.bf16.msra.mxu0 %v4330
        %5866 = vmatpush.bf16.msra.mxu0 %v4322
        %5867 = vmatpush.bf16.msra.mxu0 %v4314
        %5868 = vmatpush.bf16.msra.mxu0 %v4306
        %5869 = vmatmul.bf16.gmra.mxu0 %v1733
        %v5870 = vpop.f32.mrf.mxu0
        %v5871 = vadd.f32 %v5587, %v5870
        %v5872 = vpop.f32.mrf.mxu0
        %5873 = vdwg.mxu0
        %5874 = vmatpush.bf16.msra.mxu0 %v4426
        %5875 = vmatpush.bf16.msra.mxu0 %v4418
        %5876 = vmatpush.bf16.msra.mxu0 %v4410
        %5877 = vmatpush.bf16.msra.mxu0 %v4402
        %5878 = vmatpush.bf16.msra.mxu0 %v4394
        %5879 = vmatpush.bf16.msra.mxu0 %v4386
        %5880 = vmatpush.bf16.msra.mxu0 %v4378
        %5881 = vmatpush.bf16.msra.mxu0 %v4370
        %5882 = vmatmul.bf16.gmra.mxu0 %v1734
        %v5883 = vpop.f32.mrf.mxu0
        %v5884 = vadd.f32 %v5871, %v5883
        %v5885 = vpop.f32.mrf.mxu0
        %5886 = vdwg.mxu0
        %5887 = vmatpush.bf16.msra.mxu0 %v4490
        %5888 = vmatpush.bf16.msra.mxu0 %v4482
        %5889 = vmatpush.bf16.msra.mxu0 %v4474
        %5890 = vmatpush.bf16.msra.mxu0 %v4466
        %5891 = vmatpush.bf16.msra.mxu0 %v4458
        %5892 = vmatpush.bf16.msra.mxu0 %v4450
        %5893 = vmatpush.bf16.msra.mxu0 %v4442
        %5894 = vmatpush.bf16.msra.mxu0 %v4434
        %5895 = vmatmul.bf16.gmra.mxu0 %v1735
        %v5896 = vpop.f32.mrf.mxu0
        %v5897 = vadd.f32 %v5884, %v5896
        %v5898 = vpop.f32.mrf.mxu0
        %5899 = vdwg.mxu0
        %5900 = vmatpush.bf16.msra.mxu0 %v4554
        %5901 = vmatpush.bf16.msra.mxu0 %v4546
        %5902 = vmatpush.bf16.msra.mxu0 %v4538
        %5903 = vmatpush.bf16.msra.mxu0 %v4530
        %5904 = vmatpush.bf16.msra.mxu0 %v4522
        %5905 = vmatpush.bf16.msra.mxu0 %v4514
        %5906 = vmatpush.bf16.msra.mxu0 %v4506
        %5907 = vmatpush.bf16.msra.mxu0 %v4498
        %5908 = vmatmul.bf16.gmra.mxu0 %v1736
        %v5909 = vpop.f32.mrf.mxu0
        %v5910 = vadd.f32 %v5897, %v5909
        %v5911 = vpop.f32.mrf.mxu0
        %5912 = vdwg.mxu0
        %5913 = vmatpush.bf16.msra.mxu0 %v4618
        %5914 = vmatpush.bf16.msra.mxu0 %v4610
        %5915 = vmatpush.bf16.msra.mxu0 %v4602
        %5916 = vmatpush.bf16.msra.mxu0 %v4594
        %5917 = vmatpush.bf16.msra.mxu0 %v4586
        %5918 = vmatpush.bf16.msra.mxu0 %v4578
        %5919 = vmatpush.bf16.msra.mxu0 %v4570
        %5920 = vmatpush.bf16.msra.mxu0 %v4562
        %5921 = vmatmul.bf16.gmra.mxu0 %v1737
        %v5922 = vpop.f32.mrf.mxu0
        %v5923 = vadd.f32 %v5910, %v5922
        %v5924 = vpop.f32.mrf.mxu0
        %5925 = vdwg.mxu0
        %5926 = vmatpush.bf16.msra.mxu0 %v4682
        %5927 = vmatpush.bf16.msra.mxu0 %v4674
        %5928 = vmatpush.bf16.msra.mxu0 %v4666
        %5929 = vmatpush.bf16.msra.mxu0 %v4658
        %5930 = vmatpush.bf16.msra.mxu0 %v4650
        %5931 = vmatpush.bf16.msra.mxu0 %v4642
        %5932 = vmatpush.bf16.msra.mxu0 %v4634
        %5933 = vmatpush.bf16.msra.mxu0 %v4626
        %5934 = vmatmul.bf16.gmra.mxu0 %v1738
        %v5935 = vpop.f32.mrf.mxu0
        %v5936 = vadd.f32 %v5923, %v5935
        %v5937 = vpop.f32.mrf.mxu0
        %5938 = vdwg.mxu0
        %5939 = vmatpush.bf16.msra.mxu0 %v4746
        %5940 = vmatpush.bf16.msra.mxu0 %v4738
        %5941 = vmatpush.bf16.msra.mxu0 %v4730
        %5942 = vmatpush.bf16.msra.mxu0 %v4722
        %5943 = vmatpush.bf16.msra.mxu0 %v4714
        %5944 = vmatpush.bf16.msra.mxu0 %v4706
        %5945 = vmatpush.bf16.msra.mxu0 %v4698
        %5946 = vmatpush.bf16.msra.mxu0 %v4690
        %5947 = vmatmul.bf16.gmra.mxu0 %v1739
        %v5948 = vpop.f32.mrf.mxu0
        %v5949 = vadd.f32 %v5936, %v5948
        %v5950 = vpop.f32.mrf.mxu0
        %5951 = vdwg.mxu0
        %5952 = vmatpush.bf16.msra.mxu0 %v4810
        %5953 = vmatpush.bf16.msra.mxu0 %v4802
        %5954 = vmatpush.bf16.msra.mxu0 %v4794
        %5955 = vmatpush.bf16.msra.mxu0 %v4786
        %5956 = vmatpush.bf16.msra.mxu0 %v4778
        %5957 = vmatpush.bf16.msra.mxu0 %v4770
        %5958 = vmatpush.bf16.msra.mxu0 %v4762
        %5959 = vmatpush.bf16.msra.mxu0 %v4754
        %5960 = vmatmul.bf16.gmra.mxu0 %v1740
        %v5961 = vpop.f32.mrf.mxu0
        %v5962 = vadd.f32 %v5949, %v5961
        %v5963 = vpop.f32.mrf.mxu0
        %5964 = vdwg.mxu0
        %5965 = vmatpush.bf16.msra.mxu0 %v4874
        %5966 = vmatpush.bf16.msra.mxu0 %v4866
        %5967 = vmatpush.bf16.msra.mxu0 %v4858
        %5968 = vmatpush.bf16.msra.mxu0 %v4850
        %5969 = vmatpush.bf16.msra.mxu0 %v4842
        %5970 = vmatpush.bf16.msra.mxu0 %v4834
        %5971 = vmatpush.bf16.msra.mxu0 %v4826
        %5972 = vmatpush.bf16.msra.mxu0 %v4818
        %5973 = vmatmul.bf16.gmra.mxu0 %v1741
        %v5974 = vpop.f32.mrf.mxu0
        %v5975 = vadd.f32 %v5962, %v5974
        %v5976 = vpop.f32.mrf.mxu0
        %5977 = vdwg.mxu0
        %5978 = vmatpush.bf16.msra.mxu0 %v4938
        %5979 = vmatpush.bf16.msra.mxu0 %v4930
        %5980 = vmatpush.bf16.msra.mxu0 %v4922
        %5981 = vmatpush.bf16.msra.mxu0 %v4914
        %5982 = vmatpush.bf16.msra.mxu0 %v4906
        %5983 = vmatpush.bf16.msra.mxu0 %v4898
        %5984 = vmatpush.bf16.msra.mxu0 %v4890
        %5985 = vmatpush.bf16.msra.mxu0 %v4882
        %5986 = vmatmul.bf16.gmra.mxu0 %v1742
        %v5987 = vpop.f32.mrf.mxu0
        %v5988 = vadd.f32 %v5975, %v5987
        %v5989 = vpop.f32.mrf.mxu0
        %5990 = vdwg.mxu0
        %5991 = vmatpush.bf16.msra.mxu0 %v4363
        %5992 = vmatpush.bf16.msra.mxu0 %v4355
        %5993 = vmatpush.bf16.msra.mxu0 %v4347
        %5994 = vmatpush.bf16.msra.mxu0 %v4339
        %5995 = vmatpush.bf16.msra.mxu0 %v4331
        %5996 = vmatpush.bf16.msra.mxu0 %v4323
        %5997 = vmatpush.bf16.msra.mxu0 %v4315
        %5998 = vmatpush.bf16.msra.mxu0 %v4307
        %5999 = vmatmul.bf16.gmra.mxu0 %v1733
        %v6000 = vpop.f32.mrf.mxu0
        %v6001 = vadd.f32 %v5588, %v6000
        %v6002 = vpop.f32.mrf.mxu0
        %6003 = vdwg.mxu0
        %6004 = vmatpush.bf16.msra.mxu0 %v4427
        %6005 = vmatpush.bf16.msra.mxu0 %v4419
        %6006 = vmatpush.bf16.msra.mxu0 %v4411
        %6007 = vmatpush.bf16.msra.mxu0 %v4403
        %6008 = vmatpush.bf16.msra.mxu0 %v4395
        %6009 = vmatpush.bf16.msra.mxu0 %v4387
        %6010 = vmatpush.bf16.msra.mxu0 %v4379
        %6011 = vmatpush.bf16.msra.mxu0 %v4371
        %6012 = vmatmul.bf16.gmra.mxu0 %v1734
        %v6013 = vpop.f32.mrf.mxu0
        %v6014 = vadd.f32 %v6001, %v6013
        %v6015 = vpop.f32.mrf.mxu0
        %6016 = vdwg.mxu0
        %6017 = vmatpush.bf16.msra.mxu0 %v4491
        %6018 = vmatpush.bf16.msra.mxu0 %v4483
        %6019 = vmatpush.bf16.msra.mxu0 %v4475
        %6020 = vmatpush.bf16.msra.mxu0 %v4467
        %6021 = vmatpush.bf16.msra.mxu0 %v4459
        %6022 = vmatpush.bf16.msra.mxu0 %v4451
        %6023 = vmatpush.bf16.msra.mxu0 %v4443
        %6024 = vmatpush.bf16.msra.mxu0 %v4435
        %6025 = vmatmul.bf16.gmra.mxu0 %v1735
        %v6026 = vpop.f32.mrf.mxu0
        %v6027 = vadd.f32 %v6014, %v6026
        %v6028 = vpop.f32.mrf.mxu0
        %6029 = vdwg.mxu0
        %6030 = vmatpush.bf16.msra.mxu0 %v4555
        %6031 = vmatpush.bf16.msra.mxu0 %v4547
        %6032 = vmatpush.bf16.msra.mxu0 %v4539
        %6033 = vmatpush.bf16.msra.mxu0 %v4531
        %6034 = vmatpush.bf16.msra.mxu0 %v4523
        %6035 = vmatpush.bf16.msra.mxu0 %v4515
        %6036 = vmatpush.bf16.msra.mxu0 %v4507
        %6037 = vmatpush.bf16.msra.mxu0 %v4499
        %6038 = vmatmul.bf16.gmra.mxu0 %v1736
        %v6039 = vpop.f32.mrf.mxu0
        %v6040 = vadd.f32 %v6027, %v6039
        %v6041 = vpop.f32.mrf.mxu0
        %6042 = vdwg.mxu0
        %6043 = vmatpush.bf16.msra.mxu0 %v4619
        %6044 = vmatpush.bf16.msra.mxu0 %v4611
        %6045 = vmatpush.bf16.msra.mxu0 %v4603
        %6046 = vmatpush.bf16.msra.mxu0 %v4595
        %6047 = vmatpush.bf16.msra.mxu0 %v4587
        %6048 = vmatpush.bf16.msra.mxu0 %v4579
        %6049 = vmatpush.bf16.msra.mxu0 %v4571
        %6050 = vmatpush.bf16.msra.mxu0 %v4563
        %6051 = vmatmul.bf16.gmra.mxu0 %v1737
        %v6052 = vpop.f32.mrf.mxu0
        %v6053 = vadd.f32 %v6040, %v6052
        %v6054 = vpop.f32.mrf.mxu0
        %6055 = vdwg.mxu0
        %6056 = vmatpush.bf16.msra.mxu0 %v4683
        %6057 = vmatpush.bf16.msra.mxu0 %v4675
        %6058 = vmatpush.bf16.msra.mxu0 %v4667
        %6059 = vmatpush.bf16.msra.mxu0 %v4659
        %6060 = vmatpush.bf16.msra.mxu0 %v4651
        %6061 = vmatpush.bf16.msra.mxu0 %v4643
        %6062 = vmatpush.bf16.msra.mxu0 %v4635
        %6063 = vmatpush.bf16.msra.mxu0 %v4627
        %6064 = vmatmul.bf16.gmra.mxu0 %v1738
        %v6065 = vpop.f32.mrf.mxu0
        %v6066 = vadd.f32 %v6053, %v6065
        %v6067 = vpop.f32.mrf.mxu0
        %6068 = vdwg.mxu0
        %6069 = vmatpush.bf16.msra.mxu0 %v4747
        %6070 = vmatpush.bf16.msra.mxu0 %v4739
        %6071 = vmatpush.bf16.msra.mxu0 %v4731
        %6072 = vmatpush.bf16.msra.mxu0 %v4723
        %6073 = vmatpush.bf16.msra.mxu0 %v4715
        %6074 = vmatpush.bf16.msra.mxu0 %v4707
        %6075 = vmatpush.bf16.msra.mxu0 %v4699
        %6076 = vmatpush.bf16.msra.mxu0 %v4691
        %6077 = vmatmul.bf16.gmra.mxu0 %v1739
        %v6078 = vpop.f32.mrf.mxu0
        %v6079 = vadd.f32 %v6066, %v6078
        %v6080 = vpop.f32.mrf.mxu0
        %6081 = vdwg.mxu0
        %6082 = vmatpush.bf16.msra.mxu0 %v4811
        %6083 = vmatpush.bf16.msra.mxu0 %v4803
        %6084 = vmatpush.bf16.msra.mxu0 %v4795
        %6085 = vmatpush.bf16.msra.mxu0 %v4787
        %6086 = vmatpush.bf16.msra.mxu0 %v4779
        %6087 = vmatpush.bf16.msra.mxu0 %v4771
        %6088 = vmatpush.bf16.msra.mxu0 %v4763
        %6089 = vmatpush.bf16.msra.mxu0 %v4755
        %6090 = vmatmul.bf16.gmra.mxu0 %v1740
        %v6091 = vpop.f32.mrf.mxu0
        %v6092 = vadd.f32 %v6079, %v6091
        %v6093 = vpop.f32.mrf.mxu0
        %6094 = vdwg.mxu0
        %6095 = vmatpush.bf16.msra.mxu0 %v4875
        %6096 = vmatpush.bf16.msra.mxu0 %v4867
        %6097 = vmatpush.bf16.msra.mxu0 %v4859
        %6098 = vmatpush.bf16.msra.mxu0 %v4851
        %6099 = vmatpush.bf16.msra.mxu0 %v4843
        %6100 = vmatpush.bf16.msra.mxu0 %v4835
        %6101 = vmatpush.bf16.msra.mxu0 %v4827
        %6102 = vmatpush.bf16.msra.mxu0 %v4819
        %6103 = vmatmul.bf16.gmra.mxu0 %v1741
        %v6104 = vpop.f32.mrf.mxu0
        %v6105 = vadd.f32 %v6092, %v6104
        %v6106 = vpop.f32.mrf.mxu0
        %6107 = vdwg.mxu0
        %6108 = vmatpush.bf16.msra.mxu0 %v4939
        %6109 = vmatpush.bf16.msra.mxu0 %v4931
        %6110 = vmatpush.bf16.msra.mxu0 %v4923
        %6111 = vmatpush.bf16.msra.mxu0 %v4915
        %6112 = vmatpush.bf16.msra.mxu0 %v4907
        %6113 = vmatpush.bf16.msra.mxu0 %v4899
        %6114 = vmatpush.bf16.msra.mxu0 %v4891
        %6115 = vmatpush.bf16.msra.mxu0 %v4883
        %6116 = vmatmul.bf16.gmra.mxu0 %v1742
        %v6117 = vpop.f32.mrf.mxu0
        %v6118 = vadd.f32 %v6105, %v6117
        %v6119 = vpop.f32.mrf.mxu0
        %6120 = vdwg.mxu0
        %6121 = vmatpush.bf16.msra.mxu0 %v4364
        %6122 = vmatpush.bf16.msra.mxu0 %v4356
        %6123 = vmatpush.bf16.msra.mxu0 %v4348
        %6124 = vmatpush.bf16.msra.mxu0 %v4340
        %6125 = vmatpush.bf16.msra.mxu0 %v4332
        %6126 = vmatpush.bf16.msra.mxu0 %v4324
        %6127 = vmatpush.bf16.msra.mxu0 %v4316
        %6128 = vmatpush.bf16.msra.mxu0 %v4308
        %6129 = vmatmul.bf16.gmra.mxu0 %v1733
        %v6130 = vpop.f32.mrf.mxu0
        %v6131 = vadd.f32 %v5589, %v6130
        %v6132 = vpop.f32.mrf.mxu0
        %6133 = vdwg.mxu0
        %6134 = vmatpush.bf16.msra.mxu0 %v4428
        %6135 = vmatpush.bf16.msra.mxu0 %v4420
        %6136 = vmatpush.bf16.msra.mxu0 %v4412
        %6137 = vmatpush.bf16.msra.mxu0 %v4404
        %6138 = vmatpush.bf16.msra.mxu0 %v4396
        %6139 = vmatpush.bf16.msra.mxu0 %v4388
        %6140 = vmatpush.bf16.msra.mxu0 %v4380
        %6141 = vmatpush.bf16.msra.mxu0 %v4372
        %6142 = vmatmul.bf16.gmra.mxu0 %v1734
        %v6143 = vpop.f32.mrf.mxu0
        %v6144 = vadd.f32 %v6131, %v6143
        %v6145 = vpop.f32.mrf.mxu0
        %6146 = vdwg.mxu0
        %6147 = vmatpush.bf16.msra.mxu0 %v4492
        %6148 = vmatpush.bf16.msra.mxu0 %v4484
        %6149 = vmatpush.bf16.msra.mxu0 %v4476
        %6150 = vmatpush.bf16.msra.mxu0 %v4468
        %6151 = vmatpush.bf16.msra.mxu0 %v4460
        %6152 = vmatpush.bf16.msra.mxu0 %v4452
        %6153 = vmatpush.bf16.msra.mxu0 %v4444
        %6154 = vmatpush.bf16.msra.mxu0 %v4436
        %6155 = vmatmul.bf16.gmra.mxu0 %v1735
        %v6156 = vpop.f32.mrf.mxu0
        %v6157 = vadd.f32 %v6144, %v6156
        %v6158 = vpop.f32.mrf.mxu0
        %6159 = vdwg.mxu0
        %6160 = vmatpush.bf16.msra.mxu0 %v4556
        %6161 = vmatpush.bf16.msra.mxu0 %v4548
        %6162 = vmatpush.bf16.msra.mxu0 %v4540
        %6163 = vmatpush.bf16.msra.mxu0 %v4532
        %6164 = vmatpush.bf16.msra.mxu0 %v4524
        %6165 = vmatpush.bf16.msra.mxu0 %v4516
        %6166 = vmatpush.bf16.msra.mxu0 %v4508
        %6167 = vmatpush.bf16.msra.mxu0 %v4500
        %6168 = vmatmul.bf16.gmra.mxu0 %v1736
        %v6169 = vpop.f32.mrf.mxu0
        %v6170 = vadd.f32 %v6157, %v6169
        %v6171 = vpop.f32.mrf.mxu0
        %6172 = vdwg.mxu0
        %6173 = vmatpush.bf16.msra.mxu0 %v4620
        %6174 = vmatpush.bf16.msra.mxu0 %v4612
        %6175 = vmatpush.bf16.msra.mxu0 %v4604
        %6176 = vmatpush.bf16.msra.mxu0 %v4596
        %6177 = vmatpush.bf16.msra.mxu0 %v4588
        %6178 = vmatpush.bf16.msra.mxu0 %v4580
        %6179 = vmatpush.bf16.msra.mxu0 %v4572
        %6180 = vmatpush.bf16.msra.mxu0 %v4564
        %6181 = vmatmul.bf16.gmra.mxu0 %v1737
        %v6182 = vpop.f32.mrf.mxu0
        %v6183 = vadd.f32 %v6170, %v6182
        %v6184 = vpop.f32.mrf.mxu0
        %6185 = vdwg.mxu0
        %6186 = vmatpush.bf16.msra.mxu0 %v4684
        %6187 = vmatpush.bf16.msra.mxu0 %v4676
        %6188 = vmatpush.bf16.msra.mxu0 %v4668
        %6189 = vmatpush.bf16.msra.mxu0 %v4660
        %6190 = vmatpush.bf16.msra.mxu0 %v4652
        %6191 = vmatpush.bf16.msra.mxu0 %v4644
        %6192 = vmatpush.bf16.msra.mxu0 %v4636
        %6193 = vmatpush.bf16.msra.mxu0 %v4628
        %6194 = vmatmul.bf16.gmra.mxu0 %v1738
        %v6195 = vpop.f32.mrf.mxu0
        %v6196 = vadd.f32 %v6183, %v6195
        %v6197 = vpop.f32.mrf.mxu0
        %6198 = vdwg.mxu0
        %6199 = vmatpush.bf16.msra.mxu0 %v4748
        %6200 = vmatpush.bf16.msra.mxu0 %v4740
        %6201 = vmatpush.bf16.msra.mxu0 %v4732
        %6202 = vmatpush.bf16.msra.mxu0 %v4724
        %6203 = vmatpush.bf16.msra.mxu0 %v4716
        %6204 = vmatpush.bf16.msra.mxu0 %v4708
        %6205 = vmatpush.bf16.msra.mxu0 %v4700
        %6206 = vmatpush.bf16.msra.mxu0 %v4692
        %6207 = vmatmul.bf16.gmra.mxu0 %v1739
        %v6208 = vpop.f32.mrf.mxu0
        %v6209 = vadd.f32 %v6196, %v6208
        %v6210 = vpop.f32.mrf.mxu0
        %6211 = vdwg.mxu0
        %6212 = vmatpush.bf16.msra.mxu0 %v4812
        %6213 = vmatpush.bf16.msra.mxu0 %v4804
        %6214 = vmatpush.bf16.msra.mxu0 %v4796
        %6215 = vmatpush.bf16.msra.mxu0 %v4788
        %6216 = vmatpush.bf16.msra.mxu0 %v4780
        %6217 = vmatpush.bf16.msra.mxu0 %v4772
        %6218 = vmatpush.bf16.msra.mxu0 %v4764
        %6219 = vmatpush.bf16.msra.mxu0 %v4756
        %6220 = vmatmul.bf16.gmra.mxu0 %v1740
        %v6221 = vpop.f32.mrf.mxu0
        %v6222 = vadd.f32 %v6209, %v6221
        %v6223 = vpop.f32.mrf.mxu0
        %6224 = vdwg.mxu0
        %6225 = vmatpush.bf16.msra.mxu0 %v4876
        %6226 = vmatpush.bf16.msra.mxu0 %v4868
        %6227 = vmatpush.bf16.msra.mxu0 %v4860
        %6228 = vmatpush.bf16.msra.mxu0 %v4852
        %6229 = vmatpush.bf16.msra.mxu0 %v4844
        %6230 = vmatpush.bf16.msra.mxu0 %v4836
        %6231 = vmatpush.bf16.msra.mxu0 %v4828
        %6232 = vmatpush.bf16.msra.mxu0 %v4820
        %6233 = vmatmul.bf16.gmra.mxu0 %v1741
        %v6234 = vpop.f32.mrf.mxu0
        %v6235 = vadd.f32 %v6222, %v6234
        %v6236 = vpop.f32.mrf.mxu0
        %6237 = vdwg.mxu0
        %6238 = vmatpush.bf16.msra.mxu0 %v4940
        %6239 = vmatpush.bf16.msra.mxu0 %v4932
        %6240 = vmatpush.bf16.msra.mxu0 %v4924
        %6241 = vmatpush.bf16.msra.mxu0 %v4916
        %6242 = vmatpush.bf16.msra.mxu0 %v4908
        %6243 = vmatpush.bf16.msra.mxu0 %v4900
        %6244 = vmatpush.bf16.msra.mxu0 %v4892
        %6245 = vmatpush.bf16.msra.mxu0 %v4884
        %6246 = vmatmul.bf16.gmra.mxu0 %v1742
        %v6247 = vpop.f32.mrf.mxu0
        %v6248 = vadd.f32 %v6235, %v6247
        %v6249 = vpop.f32.mrf.mxu0
        %6250 = vdwg.mxu0
        %6251 = vmatpush.bf16.msra.mxu0 %v4365
        %6252 = vmatpush.bf16.msra.mxu0 %v4357
        %6253 = vmatpush.bf16.msra.mxu0 %v4349
        %6254 = vmatpush.bf16.msra.mxu0 %v4341
        %6255 = vmatpush.bf16.msra.mxu0 %v4333
        %6256 = vmatpush.bf16.msra.mxu0 %v4325
        %6257 = vmatpush.bf16.msra.mxu0 %v4317
        %6258 = vmatpush.bf16.msra.mxu0 %v4309
        %6259 = vmatmul.bf16.gmra.mxu0 %v1733
        %v6260 = vpop.f32.mrf.mxu0
        %v6261 = vadd.f32 %v5590, %v6260
        %v6262 = vpop.f32.mrf.mxu0
        %6263 = vdwg.mxu0
        %6264 = vmatpush.bf16.msra.mxu0 %v4429
        %6265 = vmatpush.bf16.msra.mxu0 %v4421
        %6266 = vmatpush.bf16.msra.mxu0 %v4413
        %6267 = vmatpush.bf16.msra.mxu0 %v4405
        %6268 = vmatpush.bf16.msra.mxu0 %v4397
        %6269 = vmatpush.bf16.msra.mxu0 %v4389
        %6270 = vmatpush.bf16.msra.mxu0 %v4381
        %6271 = vmatpush.bf16.msra.mxu0 %v4373
        %6272 = vmatmul.bf16.gmra.mxu0 %v1734
        %v6273 = vpop.f32.mrf.mxu0
        %v6274 = vadd.f32 %v6261, %v6273
        %v6275 = vpop.f32.mrf.mxu0
        %6276 = vdwg.mxu0
        %6277 = vmatpush.bf16.msra.mxu0 %v4493
        %6278 = vmatpush.bf16.msra.mxu0 %v4485
        %6279 = vmatpush.bf16.msra.mxu0 %v4477
        %6280 = vmatpush.bf16.msra.mxu0 %v4469
        %6281 = vmatpush.bf16.msra.mxu0 %v4461
        %6282 = vmatpush.bf16.msra.mxu0 %v4453
        %6283 = vmatpush.bf16.msra.mxu0 %v4445
        %6284 = vmatpush.bf16.msra.mxu0 %v4437
        %6285 = vmatmul.bf16.gmra.mxu0 %v1735
        %v6286 = vpop.f32.mrf.mxu0
        %v6287 = vadd.f32 %v6274, %v6286
        %v6288 = vpop.f32.mrf.mxu0
        %6289 = vdwg.mxu0
        %6290 = vmatpush.bf16.msra.mxu0 %v4557
        %6291 = vmatpush.bf16.msra.mxu0 %v4549
        %6292 = vmatpush.bf16.msra.mxu0 %v4541
        %6293 = vmatpush.bf16.msra.mxu0 %v4533
        %6294 = vmatpush.bf16.msra.mxu0 %v4525
        %6295 = vmatpush.bf16.msra.mxu0 %v4517
        %6296 = vmatpush.bf16.msra.mxu0 %v4509
        %6297 = vmatpush.bf16.msra.mxu0 %v4501
        %6298 = vmatmul.bf16.gmra.mxu0 %v1736
        %v6299 = vpop.f32.mrf.mxu0
        %v6300 = vadd.f32 %v6287, %v6299
        %v6301 = vpop.f32.mrf.mxu0
        %6302 = vdwg.mxu0
        %6303 = vmatpush.bf16.msra.mxu0 %v4621
        %6304 = vmatpush.bf16.msra.mxu0 %v4613
        %6305 = vmatpush.bf16.msra.mxu0 %v4605
        %6306 = vmatpush.bf16.msra.mxu0 %v4597
        %6307 = vmatpush.bf16.msra.mxu0 %v4589
        %6308 = vmatpush.bf16.msra.mxu0 %v4581
        %6309 = vmatpush.bf16.msra.mxu0 %v4573
        %6310 = vmatpush.bf16.msra.mxu0 %v4565
        %6311 = vmatmul.bf16.gmra.mxu0 %v1737
        %v6312 = vpop.f32.mrf.mxu0
        %v6313 = vadd.f32 %v6300, %v6312
        %v6314 = vpop.f32.mrf.mxu0
        %6315 = vdwg.mxu0
        %6316 = vmatpush.bf16.msra.mxu0 %v4685
        %6317 = vmatpush.bf16.msra.mxu0 %v4677
        %6318 = vmatpush.bf16.msra.mxu0 %v4669
        %6319 = vmatpush.bf16.msra.mxu0 %v4661
        %6320 = vmatpush.bf16.msra.mxu0 %v4653
        %6321 = vmatpush.bf16.msra.mxu0 %v4645
        %6322 = vmatpush.bf16.msra.mxu0 %v4637
        %6323 = vmatpush.bf16.msra.mxu0 %v4629
        %6324 = vmatmul.bf16.gmra.mxu0 %v1738
        %v6325 = vpop.f32.mrf.mxu0
        %v6326 = vadd.f32 %v6313, %v6325
        %v6327 = vpop.f32.mrf.mxu0
        %6328 = vdwg.mxu0
        %6329 = vmatpush.bf16.msra.mxu0 %v4749
        %6330 = vmatpush.bf16.msra.mxu0 %v4741
        %6331 = vmatpush.bf16.msra.mxu0 %v4733
        %6332 = vmatpush.bf16.msra.mxu0 %v4725
        %6333 = vmatpush.bf16.msra.mxu0 %v4717
        %6334 = vmatpush.bf16.msra.mxu0 %v4709
        %6335 = vmatpush.bf16.msra.mxu0 %v4701
        %6336 = vmatpush.bf16.msra.mxu0 %v4693
        %6337 = vmatmul.bf16.gmra.mxu0 %v1739
        %v6338 = vpop.f32.mrf.mxu0
        %v6339 = vadd.f32 %v6326, %v6338
        %v6340 = vpop.f32.mrf.mxu0
        %6341 = vdwg.mxu0
        %6342 = vmatpush.bf16.msra.mxu0 %v4813
        %6343 = vmatpush.bf16.msra.mxu0 %v4805
        %6344 = vmatpush.bf16.msra.mxu0 %v4797
        %6345 = vmatpush.bf16.msra.mxu0 %v4789
        %6346 = vmatpush.bf16.msra.mxu0 %v4781
        %6347 = vmatpush.bf16.msra.mxu0 %v4773
        %6348 = vmatpush.bf16.msra.mxu0 %v4765
        %6349 = vmatpush.bf16.msra.mxu0 %v4757
        %6350 = vmatmul.bf16.gmra.mxu0 %v1740
        %v6351 = vpop.f32.mrf.mxu0
        %v6352 = vadd.f32 %v6339, %v6351
        %v6353 = vpop.f32.mrf.mxu0
        %6354 = vdwg.mxu0
        %6355 = vmatpush.bf16.msra.mxu0 %v4877
        %6356 = vmatpush.bf16.msra.mxu0 %v4869
        %6357 = vmatpush.bf16.msra.mxu0 %v4861
        %6358 = vmatpush.bf16.msra.mxu0 %v4853
        %6359 = vmatpush.bf16.msra.mxu0 %v4845
        %6360 = vmatpush.bf16.msra.mxu0 %v4837
        %6361 = vmatpush.bf16.msra.mxu0 %v4829
        %6362 = vmatpush.bf16.msra.mxu0 %v4821
        %6363 = vmatmul.bf16.gmra.mxu0 %v1741
        %v6364 = vpop.f32.mrf.mxu0
        %v6365 = vadd.f32 %v6352, %v6364
        %v6366 = vpop.f32.mrf.mxu0
        %6367 = vdwg.mxu0
        %6368 = vmatpush.bf16.msra.mxu0 %v4941
        %6369 = vmatpush.bf16.msra.mxu0 %v4933
        %6370 = vmatpush.bf16.msra.mxu0 %v4925
        %6371 = vmatpush.bf16.msra.mxu0 %v4917
        %6372 = vmatpush.bf16.msra.mxu0 %v4909
        %6373 = vmatpush.bf16.msra.mxu0 %v4901
        %6374 = vmatpush.bf16.msra.mxu0 %v4893
        %6375 = vmatpush.bf16.msra.mxu0 %v4885
        %6376 = vmatmul.bf16.gmra.mxu0 %v1742
        %v6377 = vpop.f32.mrf.mxu0
        %v6378 = vadd.f32 %v6365, %v6377
        %v6379 = vpop.f32.mrf.mxu0
        %6380 = vdwg.mxu0
        %6381 = vmatpush.bf16.msra.mxu0 %v4366
        %6382 = vmatpush.bf16.msra.mxu0 %v4358
        %6383 = vmatpush.bf16.msra.mxu0 %v4350
        %6384 = vmatpush.bf16.msra.mxu0 %v4342
        %6385 = vmatpush.bf16.msra.mxu0 %v4334
        %6386 = vmatpush.bf16.msra.mxu0 %v4326
        %6387 = vmatpush.bf16.msra.mxu0 %v4318
        %6388 = vmatpush.bf16.msra.mxu0 %v4310
        %6389 = vmatmul.bf16.gmra.mxu0 %v1733
        %v6390 = vpop.f32.mrf.mxu0
        %v6391 = vadd.f32 %v5591, %v6390
        %v6392 = vpop.f32.mrf.mxu0
        %6393 = vdwg.mxu0
        %6394 = vmatpush.bf16.msra.mxu0 %v4430
        %6395 = vmatpush.bf16.msra.mxu0 %v4422
        %6396 = vmatpush.bf16.msra.mxu0 %v4414
        %6397 = vmatpush.bf16.msra.mxu0 %v4406
        %6398 = vmatpush.bf16.msra.mxu0 %v4398
        %6399 = vmatpush.bf16.msra.mxu0 %v4390
        %6400 = vmatpush.bf16.msra.mxu0 %v4382
        %6401 = vmatpush.bf16.msra.mxu0 %v4374
        %6402 = vmatmul.bf16.gmra.mxu0 %v1734
        %v6403 = vpop.f32.mrf.mxu0
        %v6404 = vadd.f32 %v6391, %v6403
        %v6405 = vpop.f32.mrf.mxu0
        %6406 = vdwg.mxu0
        %6407 = vmatpush.bf16.msra.mxu0 %v4494
        %6408 = vmatpush.bf16.msra.mxu0 %v4486
        %6409 = vmatpush.bf16.msra.mxu0 %v4478
        %6410 = vmatpush.bf16.msra.mxu0 %v4470
        %6411 = vmatpush.bf16.msra.mxu0 %v4462
        %6412 = vmatpush.bf16.msra.mxu0 %v4454
        %6413 = vmatpush.bf16.msra.mxu0 %v4446
        %6414 = vmatpush.bf16.msra.mxu0 %v4438
        %6415 = vmatmul.bf16.gmra.mxu0 %v1735
        %v6416 = vpop.f32.mrf.mxu0
        %v6417 = vadd.f32 %v6404, %v6416
        %v6418 = vpop.f32.mrf.mxu0
        %6419 = vdwg.mxu0
        %6420 = vmatpush.bf16.msra.mxu0 %v4558
        %6421 = vmatpush.bf16.msra.mxu0 %v4550
        %6422 = vmatpush.bf16.msra.mxu0 %v4542
        %6423 = vmatpush.bf16.msra.mxu0 %v4534
        %6424 = vmatpush.bf16.msra.mxu0 %v4526
        %6425 = vmatpush.bf16.msra.mxu0 %v4518
        %6426 = vmatpush.bf16.msra.mxu0 %v4510
        %6427 = vmatpush.bf16.msra.mxu0 %v4502
        %6428 = vmatmul.bf16.gmra.mxu0 %v1736
        %v6429 = vpop.f32.mrf.mxu0
        %v6430 = vadd.f32 %v6417, %v6429
        %v6431 = vpop.f32.mrf.mxu0
        %6432 = vdwg.mxu0
        %6433 = vmatpush.bf16.msra.mxu0 %v4622
        %6434 = vmatpush.bf16.msra.mxu0 %v4614
        %6435 = vmatpush.bf16.msra.mxu0 %v4606
        %6436 = vmatpush.bf16.msra.mxu0 %v4598
        %6437 = vmatpush.bf16.msra.mxu0 %v4590
        %6438 = vmatpush.bf16.msra.mxu0 %v4582
        %6439 = vmatpush.bf16.msra.mxu0 %v4574
        %6440 = vmatpush.bf16.msra.mxu0 %v4566
        %6441 = vmatmul.bf16.gmra.mxu0 %v1737
        %v6442 = vpop.f32.mrf.mxu0
        %v6443 = vadd.f32 %v6430, %v6442
        %v6444 = vpop.f32.mrf.mxu0
        %6445 = vdwg.mxu0
        %6446 = vmatpush.bf16.msra.mxu0 %v4686
        %6447 = vmatpush.bf16.msra.mxu0 %v4678
        %6448 = vmatpush.bf16.msra.mxu0 %v4670
        %6449 = vmatpush.bf16.msra.mxu0 %v4662
        %6450 = vmatpush.bf16.msra.mxu0 %v4654
        %6451 = vmatpush.bf16.msra.mxu0 %v4646
        %6452 = vmatpush.bf16.msra.mxu0 %v4638
        %6453 = vmatpush.bf16.msra.mxu0 %v4630
        %6454 = vmatmul.bf16.gmra.mxu0 %v1738
        %v6455 = vpop.f32.mrf.mxu0
        %v6456 = vadd.f32 %v6443, %v6455
        %v6457 = vpop.f32.mrf.mxu0
        %6458 = vdwg.mxu0
        %6459 = vmatpush.bf16.msra.mxu0 %v4750
        %6460 = vmatpush.bf16.msra.mxu0 %v4742
        %6461 = vmatpush.bf16.msra.mxu0 %v4734
        %6462 = vmatpush.bf16.msra.mxu0 %v4726
        %6463 = vmatpush.bf16.msra.mxu0 %v4718
        %6464 = vmatpush.bf16.msra.mxu0 %v4710
        %6465 = vmatpush.bf16.msra.mxu0 %v4702
        %6466 = vmatpush.bf16.msra.mxu0 %v4694
        %6467 = vmatmul.bf16.gmra.mxu0 %v1739
        %v6468 = vpop.f32.mrf.mxu0
        %v6469 = vadd.f32 %v6456, %v6468
        %v6470 = vpop.f32.mrf.mxu0
        %6471 = vdwg.mxu0
        %6472 = vmatpush.bf16.msra.mxu0 %v4814
        %6473 = vmatpush.bf16.msra.mxu0 %v4806
        %6474 = vmatpush.bf16.msra.mxu0 %v4798
        %6475 = vmatpush.bf16.msra.mxu0 %v4790
        %6476 = vmatpush.bf16.msra.mxu0 %v4782
        %6477 = vmatpush.bf16.msra.mxu0 %v4774
        %6478 = vmatpush.bf16.msra.mxu0 %v4766
        %6479 = vmatpush.bf16.msra.mxu0 %v4758
        %6480 = vmatmul.bf16.gmra.mxu0 %v1740
        %v6481 = vpop.f32.mrf.mxu0
        %v6482 = vadd.f32 %v6469, %v6481
        %v6483 = vpop.f32.mrf.mxu0
        %6484 = vdwg.mxu0
        %6485 = vmatpush.bf16.msra.mxu0 %v4878
        %6486 = vmatpush.bf16.msra.mxu0 %v4870
        %6487 = vmatpush.bf16.msra.mxu0 %v4862
        %6488 = vmatpush.bf16.msra.mxu0 %v4854
        %6489 = vmatpush.bf16.msra.mxu0 %v4846
        %6490 = vmatpush.bf16.msra.mxu0 %v4838
        %6491 = vmatpush.bf16.msra.mxu0 %v4830
        %6492 = vmatpush.bf16.msra.mxu0 %v4822
        %6493 = vmatmul.bf16.gmra.mxu0 %v1741
        %v6494 = vpop.f32.mrf.mxu0
        %v6495 = vadd.f32 %v6482, %v6494
        %v6496 = vpop.f32.mrf.mxu0
        %6497 = vdwg.mxu0
        %6498 = vmatpush.bf16.msra.mxu0 %v4942
        %6499 = vmatpush.bf16.msra.mxu0 %v4934
        %6500 = vmatpush.bf16.msra.mxu0 %v4926
        %6501 = vmatpush.bf16.msra.mxu0 %v4918
        %6502 = vmatpush.bf16.msra.mxu0 %v4910
        %6503 = vmatpush.bf16.msra.mxu0 %v4902
        %6504 = vmatpush.bf16.msra.mxu0 %v4894
        %6505 = vmatpush.bf16.msra.mxu0 %v4886
        %6506 = vmatmul.bf16.gmra.mxu0 %v1742
        %v6507 = vpop.f32.mrf.mxu0
        %v6508 = vadd.f32 %v6495, %v6507
        %v6509 = vpop.f32.mrf.mxu0
        %6510 = vdwg.mxu0
        %6511 = vmatpush.bf16.msra.mxu0 %v4367
        %6512 = vmatpush.bf16.msra.mxu0 %v4359
        %6513 = vmatpush.bf16.msra.mxu0 %v4351
        %6514 = vmatpush.bf16.msra.mxu0 %v4343
        %6515 = vmatpush.bf16.msra.mxu0 %v4335
        %6516 = vmatpush.bf16.msra.mxu0 %v4327
        %6517 = vmatpush.bf16.msra.mxu0 %v4319
        %6518 = vmatpush.bf16.msra.mxu0 %v4311
        %6519 = vmatmul.bf16.gmra.mxu0 %v1733
        %v6520 = vpop.f32.mrf.mxu0
        %v6521 = vadd.f32 %v5592, %v6520
        %v6522 = vpop.f32.mrf.mxu0
        %6523 = vdwg.mxu0
        %6524 = vmatpush.bf16.msra.mxu0 %v4431
        %6525 = vmatpush.bf16.msra.mxu0 %v4423
        %6526 = vmatpush.bf16.msra.mxu0 %v4415
        %6527 = vmatpush.bf16.msra.mxu0 %v4407
        %6528 = vmatpush.bf16.msra.mxu0 %v4399
        %6529 = vmatpush.bf16.msra.mxu0 %v4391
        %6530 = vmatpush.bf16.msra.mxu0 %v4383
        %6531 = vmatpush.bf16.msra.mxu0 %v4375
        %6532 = vmatmul.bf16.gmra.mxu0 %v1734
        %v6533 = vpop.f32.mrf.mxu0
        %v6534 = vadd.f32 %v6521, %v6533
        %v6535 = vpop.f32.mrf.mxu0
        %6536 = vdwg.mxu0
        %6537 = vmatpush.bf16.msra.mxu0 %v4495
        %6538 = vmatpush.bf16.msra.mxu0 %v4487
        %6539 = vmatpush.bf16.msra.mxu0 %v4479
        %6540 = vmatpush.bf16.msra.mxu0 %v4471
        %6541 = vmatpush.bf16.msra.mxu0 %v4463
        %6542 = vmatpush.bf16.msra.mxu0 %v4455
        %6543 = vmatpush.bf16.msra.mxu0 %v4447
        %6544 = vmatpush.bf16.msra.mxu0 %v4439
        %6545 = vmatmul.bf16.gmra.mxu0 %v1735
        %v6546 = vpop.f32.mrf.mxu0
        %v6547 = vadd.f32 %v6534, %v6546
        %v6548 = vpop.f32.mrf.mxu0
        %6549 = vdwg.mxu0
        %6550 = vmatpush.bf16.msra.mxu0 %v4559
        %6551 = vmatpush.bf16.msra.mxu0 %v4551
        %6552 = vmatpush.bf16.msra.mxu0 %v4543
        %6553 = vmatpush.bf16.msra.mxu0 %v4535
        %6554 = vmatpush.bf16.msra.mxu0 %v4527
        %6555 = vmatpush.bf16.msra.mxu0 %v4519
        %6556 = vmatpush.bf16.msra.mxu0 %v4511
        %6557 = vmatpush.bf16.msra.mxu0 %v4503
        %6558 = vmatmul.bf16.gmra.mxu0 %v1736
        %v6559 = vpop.f32.mrf.mxu0
        %v6560 = vadd.f32 %v6547, %v6559
        %v6561 = vpop.f32.mrf.mxu0
        %6562 = vdwg.mxu0
        %6563 = vmatpush.bf16.msra.mxu0 %v4623
        %6564 = vmatpush.bf16.msra.mxu0 %v4615
        %6565 = vmatpush.bf16.msra.mxu0 %v4607
        %6566 = vmatpush.bf16.msra.mxu0 %v4599
        %6567 = vmatpush.bf16.msra.mxu0 %v4591
        %6568 = vmatpush.bf16.msra.mxu0 %v4583
        %6569 = vmatpush.bf16.msra.mxu0 %v4575
        %6570 = vmatpush.bf16.msra.mxu0 %v4567
        %6571 = vmatmul.bf16.gmra.mxu0 %v1737
        %v6572 = vpop.f32.mrf.mxu0
        %v6573 = vadd.f32 %v6560, %v6572
        %v6574 = vpop.f32.mrf.mxu0
        %6575 = vdwg.mxu0
        %6576 = vmatpush.bf16.msra.mxu0 %v4687
        %6577 = vmatpush.bf16.msra.mxu0 %v4679
        %6578 = vmatpush.bf16.msra.mxu0 %v4671
        %6579 = vmatpush.bf16.msra.mxu0 %v4663
        %6580 = vmatpush.bf16.msra.mxu0 %v4655
        %6581 = vmatpush.bf16.msra.mxu0 %v4647
        %6582 = vmatpush.bf16.msra.mxu0 %v4639
        %6583 = vmatpush.bf16.msra.mxu0 %v4631
        %6584 = vmatmul.bf16.gmra.mxu0 %v1738
        %v6585 = vpop.f32.mrf.mxu0
        %v6586 = vadd.f32 %v6573, %v6585
        %v6587 = vpop.f32.mrf.mxu0
        %6588 = vdwg.mxu0
        %6589 = vmatpush.bf16.msra.mxu0 %v4751
        %6590 = vmatpush.bf16.msra.mxu0 %v4743
        %6591 = vmatpush.bf16.msra.mxu0 %v4735
        %6592 = vmatpush.bf16.msra.mxu0 %v4727
        %6593 = vmatpush.bf16.msra.mxu0 %v4719
        %6594 = vmatpush.bf16.msra.mxu0 %v4711
        %6595 = vmatpush.bf16.msra.mxu0 %v4703
        %6596 = vmatpush.bf16.msra.mxu0 %v4695
        %6597 = vmatmul.bf16.gmra.mxu0 %v1739
        %v6598 = vpop.f32.mrf.mxu0
        %v6599 = vadd.f32 %v6586, %v6598
        %v6600 = vpop.f32.mrf.mxu0
        %6601 = vdwg.mxu0
        %6602 = vmatpush.bf16.msra.mxu0 %v4815
        %6603 = vmatpush.bf16.msra.mxu0 %v4807
        %6604 = vmatpush.bf16.msra.mxu0 %v4799
        %6605 = vmatpush.bf16.msra.mxu0 %v4791
        %6606 = vmatpush.bf16.msra.mxu0 %v4783
        %6607 = vmatpush.bf16.msra.mxu0 %v4775
        %6608 = vmatpush.bf16.msra.mxu0 %v4767
        %6609 = vmatpush.bf16.msra.mxu0 %v4759
        %6610 = vmatmul.bf16.gmra.mxu0 %v1740
        %v6611 = vpop.f32.mrf.mxu0
        %v6612 = vadd.f32 %v6599, %v6611
        %v6613 = vpop.f32.mrf.mxu0
        %6614 = vdwg.mxu0
        %6615 = vmatpush.bf16.msra.mxu0 %v4879
        %6616 = vmatpush.bf16.msra.mxu0 %v4871
        %6617 = vmatpush.bf16.msra.mxu0 %v4863
        %6618 = vmatpush.bf16.msra.mxu0 %v4855
        %6619 = vmatpush.bf16.msra.mxu0 %v4847
        %6620 = vmatpush.bf16.msra.mxu0 %v4839
        %6621 = vmatpush.bf16.msra.mxu0 %v4831
        %6622 = vmatpush.bf16.msra.mxu0 %v4823
        %6623 = vmatmul.bf16.gmra.mxu0 %v1741
        %v6624 = vpop.f32.mrf.mxu0
        %v6625 = vadd.f32 %v6612, %v6624
        %v6626 = vpop.f32.mrf.mxu0
        %6627 = vdwg.mxu0
        %6628 = vmatpush.bf16.msra.mxu0 %v4943
        %6629 = vmatpush.bf16.msra.mxu0 %v4935
        %6630 = vmatpush.bf16.msra.mxu0 %v4927
        %6631 = vmatpush.bf16.msra.mxu0 %v4919
        %6632 = vmatpush.bf16.msra.mxu0 %v4911
        %6633 = vmatpush.bf16.msra.mxu0 %v4903
        %6634 = vmatpush.bf16.msra.mxu0 %v4895
        %6635 = vmatpush.bf16.msra.mxu0 %v4887
        %6636 = vmatmul.bf16.gmra.mxu0 %v1742
        %v6637 = vpop.f32.mrf.mxu0
        %v6638 = vadd.f32 %v6625, %v6637
        %v6639 = vpop.f32.mrf.mxu0
        %6640 = vdwg.mxu0
        %v6641 = vsub.f32 0.0, %v5728
        %v6642 = vsub.f32 0.0, %v5858
        %v6643 = vsub.f32 0.0, %v5988
        %v6644 = vsub.f32 0.0, %v6118
        %v6645 = vsub.f32 0.0, %v6248
        %v6646 = vsub.f32 0.0, %v6378
        %v6647 = vsub.f32 0.0, %v6508
        %v6648 = vsub.f32 0.0, %v6638
        %v6649 = vmul.f32 %v6641, 1.442695
        %v6650 = vpow.pop %v6649
        %v6651 = vmul.f32 %v6642, 1.442695
        %v6652 = vpow.pop %v6651
        %v6653 = vmul.f32 %v6643, 1.442695
        %v6654 = vpow.pop %v6653
        %v6655 = vmul.f32 %v6644, 1.442695
        %v6656 = vpow.pop %v6655
        %v6657 = vmul.f32 %v6645, 1.442695
        %v6658 = vpow.pop %v6657
        %v6659 = vmul.f32 %v6646, 1.442695
        %v6660 = vpow.pop %v6659
        %v6661 = vmul.f32 %v6647, 1.442695
        %v6662 = vpow.pop %v6661
        %v6663 = vmul.f32 %v6648, 1.442695
        %v6664 = vpow.pop %v6663
        %v6665 = vadd.f32 %v6650, 1.0
        %v6666 = vadd.f32 %v6652, 1.0
        %v6667 = vadd.f32 %v6654, 1.0
        %v6668 = vadd.f32 %v6656, 1.0
        %v6669 = vadd.f32 %v6658, 1.0
        %v6670 = vadd.f32 %v6660, 1.0
        %v6671 = vadd.f32 %v6662, 1.0
        %v6672 = vadd.f32 %v6664, 1.0
        %v6673 = vrcp.pop %v6665
        %v6674 = vrcp.pop %v6666
        %v6675 = vrcp.pop %v6667
        %v6676 = vrcp.pop %v6668
        %v6677 = vrcp.pop %v6669
        %v6678 = vrcp.pop %v6670
        %v6679 = vrcp.pop %v6671
        %v6680 = vrcp.pop %v6672
        %v6681 = vmul.f32 %v5728, %v6673
        %v6682 = vmul.f32 %v5858, %v6674
        %v6683 = vmul.f32 %v5988, %v6675
        %v6684 = vmul.f32 %v6118, %v6676
        %v6685 = vmul.f32 %v6248, %v6677
        %v6686 = vmul.f32 %v6378, %v6678
        %v6687 = vmul.f32 %v6508, %v6679
        %v6688 = vmul.f32 %v6638, %v6680
        %v6689 = vpack.c.bf16 %v6681, %v6681
        %v6690 = vpack.c.bf16 %v6682, %v6682
        %v6691 = vpack.c.bf16 %v6683, %v6683
        %v6692 = vpack.c.bf16 %v6684, %v6684
        %v6693 = vld [vmem:[%s7] sm:$0xff]
        %v6694 = vld [vmem:[%s7 + $0x8] sm:$0xff]
        %v6695 = vld [vmem:[%s7 + $0x10] sm:$0xff]
        %v6696 = vld [vmem:[%s7 + $0x18] sm:$0xff]
        %v6697 = vld [vmem:[%s7 + $0x20] sm:$0xff]
        %v6698 = vld [vmem:[%s7 + $0x28] sm:$0xff]
        %v6699 = vld [vmem:[%s7 + $0x30] sm:$0xff]
        %v6700 = vld [vmem:[%s7 + $0x38] sm:$0xff]
        %v6701 = vld [vmem:[%s7 + $0x40] sm:$0xff]
        %v6702 = vld [vmem:[%s7 + $0x48] sm:$0xff]
        %v6703 = vld [vmem:[%s7 + $0x50] sm:$0xff]
        %v6704 = vld [vmem:[%s7 + $0x58] sm:$0xff]
        %v6705 = vld [vmem:[%s7 + $0x60] sm:$0xff]
        %v6706 = vld [vmem:[%s7 + $0x68] sm:$0xff]
        %v6707 = vld [vmem:[%s7 + $0x70] sm:$0xff]
        %v6708 = vld [vmem:[%s7 + $0x78] sm:$0xff]
        %v6709 = vld [vmem:[%s7 + $0x80] sm:$0xff]
        %v6710 = vld [vmem:[%s7 + $0x88] sm:$0xff]
        %v6711 = vld [vmem:[%s7 + $0x90] sm:$0xff]
        %v6712 = vld [vmem:[%s7 + $0x98] sm:$0xff]
        %v6713 = vld [vmem:[%s7 + $0xa0] sm:$0xff]
        %v6714 = vld [vmem:[%s7 + $0xa8] sm:$0xff]
        %v6715 = vld [vmem:[%s7 + $0xb0] sm:$0xff]
        %v6716 = vld [vmem:[%s7 + $0xb8] sm:$0xff]
        %v6717 = vld [vmem:[%s7 + $0xc0] sm:$0xff]
        %v6718 = vld [vmem:[%s7 + $0xc8] sm:$0xff]
        %v6719 = vld [vmem:[%s7 + $0xd0] sm:$0xff]
        %v6720 = vld [vmem:[%s7 + $0xd8] sm:$0xff]
        %v6721 = vld [vmem:[%s7 + $0xe0] sm:$0xff]
        %v6722 = vld [vmem:[%s7 + $0xe8] sm:$0xff]
        %v6723 = vld [vmem:[%s7 + $0xf0] sm:$0xff]
        %v6724 = vld [vmem:[%s7 + $0xf8] sm:$0xff]
        %v6725 = vld [vmem:[%s7 + $0x100] sm:$0xff]
        %v6726 = vld [vmem:[%s7 + $0x108] sm:$0xff]
        %v6727 = vld [vmem:[%s7 + $0x110] sm:$0xff]
        %v6728 = vld [vmem:[%s7 + $0x118] sm:$0xff]
        %v6729 = vld [vmem:[%s7 + $0x120] sm:$0xff]
        %v6730 = vld [vmem:[%s7 + $0x128] sm:$0xff]
        %v6731 = vld [vmem:[%s7 + $0x130] sm:$0xff]
        %v6732 = vld [vmem:[%s7 + $0x138] sm:$0xff]
        %v6733 = vld [vmem:[%s7 + $0x140] sm:$0xff]
        %v6734 = vld [vmem:[%s7 + $0x148] sm:$0xff]
        %v6735 = vld [vmem:[%s7 + $0x150] sm:$0xff]
        %v6736 = vld [vmem:[%s7 + $0x158] sm:$0xff]
        %v6737 = vld [vmem:[%s7 + $0x160] sm:$0xff]
        %v6738 = vld [vmem:[%s7 + $0x168] sm:$0xff]
        %v6739 = vld [vmem:[%s7 + $0x170] sm:$0xff]
        %v6740 = vld [vmem:[%s7 + $0x178] sm:$0xff]
        %v6741 = vld [vmem:[%s7 + $0x180] sm:$0xff]
        %v6742 = vld [vmem:[%s7 + $0x188] sm:$0xff]
        %v6743 = vld [vmem:[%s7 + $0x190] sm:$0xff]
        %v6744 = vld [vmem:[%s7 + $0x198] sm:$0xff]
        %v6745 = vld [vmem:[%s7 + $0x1a0] sm:$0xff]
        %v6746 = vld [vmem:[%s7 + $0x1a8] sm:$0xff]
        %v6747 = vld [vmem:[%s7 + $0x1b0] sm:$0xff]
        %v6748 = vld [vmem:[%s7 + $0x1b8] sm:$0xff]
        %v6749 = vld [vmem:[%s7 + $0x1c0] sm:$0xff]
        %v6750 = vld [vmem:[%s7 + $0x1c8] sm:$0xff]
        %v6751 = vld [vmem:[%s7 + $0x1d0] sm:$0xff]
        %v6752 = vld [vmem:[%s7 + $0x1d8] sm:$0xff]
        %v6753 = vld [vmem:[%s7 + $0x1e0] sm:$0xff]
        %v6754 = vld [vmem:[%s7 + $0x1e8] sm:$0xff]
        %v6755 = vld [vmem:[%s7 + $0x1f0] sm:$0xff]
        %v6756 = vld [vmem:[%s7 + $0x1f8] sm:$0xff]
        %v6757 = vld [vmem:[%s8] sm:$0x3]
        %v6822 = vunpack.c.l.b16 %v6693
        %v6823 = vunpack.c.h.b16 %v6693
        %v6824 = vunpack.c.l.b16 %v6694
        %v6825 = vunpack.c.h.b16 %v6694
        %v6826 = vunpack.c.l.b16 %v6695
        %v6827 = vunpack.c.h.b16 %v6695
        %v6828 = vunpack.c.l.b16 %v6696
        %v6829 = vunpack.c.h.b16 %v6696
        %v6830 = vunpack.c.l.b16 %v6697
        %v6831 = vunpack.c.h.b16 %v6697
        %v6832 = vunpack.c.l.b16 %v6698
        %v6833 = vunpack.c.h.b16 %v6698
        %v6834 = vunpack.c.l.b16 %v6699
        %v6835 = vunpack.c.h.b16 %v6699
        %v6836 = vunpack.c.l.b16 %v6700
        %v6837 = vunpack.c.h.b16 %v6700
        %v6838 = vunpack.c.l.b16 %v6701
        %v6839 = vunpack.c.h.b16 %v6701
        %v6840 = vunpack.c.l.b16 %v6702
        %v6841 = vunpack.c.h.b16 %v6702
        %v6842 = vunpack.c.l.b16 %v6703
        %v6843 = vunpack.c.h.b16 %v6703
        %v6844 = vunpack.c.l.b16 %v6704
        %v6845 = vunpack.c.h.b16 %v6704
        %v6846 = vunpack.c.l.b16 %v6705
        %v6847 = vunpack.c.h.b16 %v6705
        %v6848 = vunpack.c.l.b16 %v6706
        %v6849 = vunpack.c.h.b16 %v6706
        %v6850 = vunpack.c.l.b16 %v6707
        %v6851 = vunpack.c.h.b16 %v6707
        %v6852 = vunpack.c.l.b16 %v6708
        %v6853 = vunpack.c.h.b16 %v6708
        %v6854 = vunpack.c.l.b16 %v6709
        %v6855 = vunpack.c.h.b16 %v6709
        %v6856 = vunpack.c.l.b16 %v6710
        %v6857 = vunpack.c.h.b16 %v6710
        %v6858 = vunpack.c.l.b16 %v6711
        %v6859 = vunpack.c.h.b16 %v6711
        %v6860 = vunpack.c.l.b16 %v6712
        %v6861 = vunpack.c.h.b16 %v6712
        %v6862 = vunpack.c.l.b16 %v6713
        %v6863 = vunpack.c.h.b16 %v6713
        %v6864 = vunpack.c.l.b16 %v6714
        %v6865 = vunpack.c.h.b16 %v6714
        %v6866 = vunpack.c.l.b16 %v6715
        %v6867 = vunpack.c.h.b16 %v6715
        %v6868 = vunpack.c.l.b16 %v6716
        %v6869 = vunpack.c.h.b16 %v6716
        %v6870 = vunpack.c.l.b16 %v6717
        %v6871 = vunpack.c.h.b16 %v6717
        %v6872 = vunpack.c.l.b16 %v6718
        %v6873 = vunpack.c.h.b16 %v6718
        %v6874 = vunpack.c.l.b16 %v6719
        %v6875 = vunpack.c.h.b16 %v6719
        %v6876 = vunpack.c.l.b16 %v6720
        %v6877 = vunpack.c.h.b16 %v6720
        %v6878 = vunpack.c.l.b16 %v6721
        %v6879 = vunpack.c.h.b16 %v6721
        %v6880 = vunpack.c.l.b16 %v6722
        %v6881 = vunpack.c.h.b16 %v6722
        %v6882 = vunpack.c.l.b16 %v6723
        %v6883 = vunpack.c.h.b16 %v6723
        %v6884 = vunpack.c.l.b16 %v6724
        %v6885 = vunpack.c.h.b16 %v6724
        %v6886 = vunpack.c.l.b16 %v6725
        %v6887 = vunpack.c.h.b16 %v6725
        %v6888 = vunpack.c.l.b16 %v6726
        %v6889 = vunpack.c.h.b16 %v6726
        %v6890 = vunpack.c.l.b16 %v6727
        %v6891 = vunpack.c.h.b16 %v6727
        %v6892 = vunpack.c.l.b16 %v6728
        %v6893 = vunpack.c.h.b16 %v6728
        %v6894 = vunpack.c.l.b16 %v6729
        %v6895 = vunpack.c.h.b16 %v6729
        %v6896 = vunpack.c.l.b16 %v6730
        %v6897 = vunpack.c.h.b16 %v6730
        %v6898 = vunpack.c.l.b16 %v6731
        %v6899 = vunpack.c.h.b16 %v6731
        %v6900 = vunpack.c.l.b16 %v6732
        %v6901 = vunpack.c.h.b16 %v6732
        %v6902 = vunpack.c.l.b16 %v6733
        %v6903 = vunpack.c.h.b16 %v6733
        %v6904 = vunpack.c.l.b16 %v6734
        %v6905 = vunpack.c.h.b16 %v6734
        %v6906 = vunpack.c.l.b16 %v6735
        %v6907 = vunpack.c.h.b16 %v6735
        %v6908 = vunpack.c.l.b16 %v6736
        %v6909 = vunpack.c.h.b16 %v6736
        %v6910 = vunpack.c.l.b16 %v6737
        %v6911 = vunpack.c.h.b16 %v6737
        %v6912 = vunpack.c.l.b16 %v6738
        %v6913 = vunpack.c.h.b16 %v6738
        %v6914 = vunpack.c.l.b16 %v6739
        %v6915 = vunpack.c.h.b16 %v6739
        %v6916 = vunpack.c.l.b16 %v6740
        %v6917 = vunpack.c.h.b16 %v6740
        %v6918 = vunpack.c.l.b16 %v6741
        %v6919 = vunpack.c.h.b16 %v6741
        %v6920 = vunpack.c.l.b16 %v6742
        %v6921 = vunpack.c.h.b16 %v6742
        %v6922 = vunpack.c.l.b16 %v6743
        %v6923 = vunpack.c.h.b16 %v6743
        %v6924 = vunpack.c.l.b16 %v6744
        %v6925 = vunpack.c.h.b16 %v6744
        %v6926 = vunpack.c.l.b16 %v6745
        %v6927 = vunpack.c.h.b16 %v6745
        %v6928 = vunpack.c.l.b16 %v6746
        %v6929 = vunpack.c.h.b16 %v6746
        %v6930 = vunpack.c.l.b16 %v6747
        %v6931 = vunpack.c.h.b16 %v6747
        %v6932 = vunpack.c.l.b16 %v6748
        %v6933 = vunpack.c.h.b16 %v6748
        %v6934 = vunpack.c.l.b16 %v6749
        %v6935 = vunpack.c.h.b16 %v6749
        %v6936 = vunpack.c.l.b16 %v6750
        %v6937 = vunpack.c.h.b16 %v6750
        %v6938 = vunpack.c.l.b16 %v6751
        %v6939 = vunpack.c.h.b16 %v6751
        %v6940 = vunpack.c.l.b16 %v6752
        %v6941 = vunpack.c.h.b16 %v6752
        %v6942 = vunpack.c.l.b16 %v6753
        %v6943 = vunpack.c.h.b16 %v6753
        %v6944 = vunpack.c.l.b16 %v6754
        %v6945 = vunpack.c.h.b16 %v6754
        %v6946 = vunpack.c.l.b16 %v6755
        %v6947 = vunpack.c.h.b16 %v6755
        %v6948 = vunpack.c.l.b16 %v6756
        %v6949 = vunpack.c.h.b16 %v6756
        %v6950 = vpack.c.b16 %v6824, %v6822
        %v6951 = vpack.c.b16 %v6825, %v6823
        %v6952 = vpack.c.b16 %v6828, %v6826
        %v6953 = vpack.c.b16 %v6829, %v6827
        %v6954 = vpack.c.b16 %v6832, %v6830
        %v6955 = vpack.c.b16 %v6833, %v6831
        %v6956 = vpack.c.b16 %v6836, %v6834
        %v6957 = vpack.c.b16 %v6837, %v6835
        %v6958 = vpack.c.b16 %v6840, %v6838
        %v6959 = vpack.c.b16 %v6841, %v6839
        %v6960 = vpack.c.b16 %v6844, %v6842
        %v6961 = vpack.c.b16 %v6845, %v6843
        %v6962 = vpack.c.b16 %v6848, %v6846
        %v6963 = vpack.c.b16 %v6849, %v6847
        %v6964 = vpack.c.b16 %v6852, %v6850
        %v6965 = vpack.c.b16 %v6853, %v6851
        %v6966 = vpack.c.b16 %v6856, %v6854
        %v6967 = vpack.c.b16 %v6857, %v6855
        %v6968 = vpack.c.b16 %v6860, %v6858
        %v6969 = vpack.c.b16 %v6861, %v6859
        %v6970 = vpack.c.b16 %v6864, %v6862
        %v6971 = vpack.c.b16 %v6865, %v6863
        %v6972 = vpack.c.b16 %v6868, %v6866
        %v6973 = vpack.c.b16 %v6869, %v6867
        %v6974 = vpack.c.b16 %v6872, %v6870
        %v6975 = vpack.c.b16 %v6873, %v6871
        %v6976 = vpack.c.b16 %v6876, %v6874
        %v6977 = vpack.c.b16 %v6877, %v6875
        %v6978 = vpack.c.b16 %v6880, %v6878
        %v6979 = vpack.c.b16 %v6881, %v6879
        %v6980 = vpack.c.b16 %v6884, %v6882
        %v6981 = vpack.c.b16 %v6885, %v6883
        %v6982 = vpack.c.b16 %v6888, %v6886
        %v6983 = vpack.c.b16 %v6889, %v6887
        %v6984 = vpack.c.b16 %v6892, %v6890
        %v6985 = vpack.c.b16 %v6893, %v6891
        %v6986 = vpack.c.b16 %v6896, %v6894
        %v6987 = vpack.c.b16 %v6897, %v6895
        %v6988 = vpack.c.b16 %v6900, %v6898
        %v6989 = vpack.c.b16 %v6901, %v6899
        %v6990 = vpack.c.b16 %v6904, %v6902
        %v6991 = vpack.c.b16 %v6905, %v6903
        %v6992 = vpack.c.b16 %v6908, %v6906
        %v6993 = vpack.c.b16 %v6909, %v6907
        %v6994 = vpack.c.b16 %v6912, %v6910
        %v6995 = vpack.c.b16 %v6913, %v6911
        %v6996 = vpack.c.b16 %v6916, %v6914
        %v6997 = vpack.c.b16 %v6917, %v6915
        %v6998 = vpack.c.b16 %v6920, %v6918
        %v6999 = vpack.c.b16 %v6921, %v6919
        %v7000 = vpack.c.b16 %v6924, %v6922
        %v7001 = vpack.c.b16 %v6925, %v6923
        %v7002 = vpack.c.b16 %v6928, %v6926
        %v7003 = vpack.c.b16 %v6929, %v6927
        %v7004 = vpack.c.b16 %v6932, %v6930
        %v7005 = vpack.c.b16 %v6933, %v6931
        %v7006 = vpack.c.b16 %v6936, %v6934
        %v7007 = vpack.c.b16 %v6937, %v6935
        %v7008 = vpack.c.b16 %v6940, %v6938
        %v7009 = vpack.c.b16 %v6941, %v6939
        %v7010 = vpack.c.b16 %v6944, %v6942
        %v7011 = vpack.c.b16 %v6945, %v6943
        %v7012 = vpack.c.b16 %v6948, %v6946
        %v7013 = vpack.c.b16 %v6949, %v6947
        %v7079 = vperm.slane %v6757, 0
        %v7080 = vperm.slane %v6757, 1
        %7083 = vmatpush.bf16.msra.mxu0 %v6964
        %7084 = vmatpush.bf16.msra.mxu0 %v6962
        %7085 = vmatpush.bf16.msra.mxu0 %v6960
        %7086 = vmatpush.bf16.msra.mxu0 %v6958
        %7087 = vmatpush.bf16.msra.mxu0 %v6956
        %7088 = vmatpush.bf16.msra.mxu0 %v6954
        %7089 = vmatpush.bf16.msra.mxu0 %v6952
        %7090 = vmatpush.bf16.msra.mxu0 %v6950
        %7091 = vmatmul.bf16.gmra.mxu0 %v6689
        %v7092 = vpop.f32.mrf.mxu0
        %v7093 = vadd.f32 %v7079, %v7092
        %v7094 = vpop.f32.mrf.mxu0
        %7095 = vdwg.mxu0
        %7096 = vmatpush.bf16.msra.mxu0 %v6980
        %7097 = vmatpush.bf16.msra.mxu0 %v6978
        %7098 = vmatpush.bf16.msra.mxu0 %v6976
        %7099 = vmatpush.bf16.msra.mxu0 %v6974
        %7100 = vmatpush.bf16.msra.mxu0 %v6972
        %7101 = vmatpush.bf16.msra.mxu0 %v6970
        %7102 = vmatpush.bf16.msra.mxu0 %v6968
        %7103 = vmatpush.bf16.msra.mxu0 %v6966
        %7104 = vmatmul.bf16.gmra.mxu0 %v6690
        %v7105 = vpop.f32.mrf.mxu0
        %v7106 = vadd.f32 %v7093, %v7105
        %v7107 = vpop.f32.mrf.mxu0
        %7108 = vdwg.mxu0
        %7109 = vmatpush.bf16.msra.mxu0 %v6996
        %7110 = vmatpush.bf16.msra.mxu0 %v6994
        %7111 = vmatpush.bf16.msra.mxu0 %v6992
        %7112 = vmatpush.bf16.msra.mxu0 %v6990
        %7113 = vmatpush.bf16.msra.mxu0 %v6988
        %7114 = vmatpush.bf16.msra.mxu0 %v6986
        %7115 = vmatpush.bf16.msra.mxu0 %v6984
        %7116 = vmatpush.bf16.msra.mxu0 %v6982
        %7117 = vmatmul.bf16.gmra.mxu0 %v6691
        %v7118 = vpop.f32.mrf.mxu0
        %v7119 = vadd.f32 %v7106, %v7118
        %v7120 = vpop.f32.mrf.mxu0
        %7121 = vdwg.mxu0
        %7122 = vmatpush.bf16.msra.mxu0 %v7012
        %7123 = vmatpush.bf16.msra.mxu0 %v7010
        %7124 = vmatpush.bf16.msra.mxu0 %v7008
        %7125 = vmatpush.bf16.msra.mxu0 %v7006
        %7126 = vmatpush.bf16.msra.mxu0 %v7004
        %7127 = vmatpush.bf16.msra.mxu0 %v7002
        %7128 = vmatpush.bf16.msra.mxu0 %v7000
        %7129 = vmatpush.bf16.msra.mxu0 %v6998
        %7130 = vmatmul.bf16.gmra.mxu0 %v6692
        %v7131 = vpop.f32.mrf.mxu0
        %v7132 = vadd.f32 %v7119, %v7131
        %v7133 = vpop.f32.mrf.mxu0
        %7134 = vdwg.mxu0
        %7135 = vmatpush.bf16.msra.mxu0 %v6965
        %7136 = vmatpush.bf16.msra.mxu0 %v6963
        %7137 = vmatpush.bf16.msra.mxu0 %v6961
        %7138 = vmatpush.bf16.msra.mxu0 %v6959
        %7139 = vmatpush.bf16.msra.mxu0 %v6957
        %7140 = vmatpush.bf16.msra.mxu0 %v6955
        %7141 = vmatpush.bf16.msra.mxu0 %v6953
        %7142 = vmatpush.bf16.msra.mxu0 %v6951
        %7143 = vmatmul.bf16.gmra.mxu0 %v6689
        %v7144 = vpop.f32.mrf.mxu0
        %v7145 = vadd.f32 %v7080, %v7144
        %v7146 = vpop.f32.mrf.mxu0
        %7147 = vdwg.mxu0
        %7148 = vmatpush.bf16.msra.mxu0 %v6981
        %7149 = vmatpush.bf16.msra.mxu0 %v6979
        %7150 = vmatpush.bf16.msra.mxu0 %v6977
        %7151 = vmatpush.bf16.msra.mxu0 %v6975
        %7152 = vmatpush.bf16.msra.mxu0 %v6973
        %7153 = vmatpush.bf16.msra.mxu0 %v6971
        %7154 = vmatpush.bf16.msra.mxu0 %v6969
        %7155 = vmatpush.bf16.msra.mxu0 %v6967
        %7156 = vmatmul.bf16.gmra.mxu0 %v6690
        %v7157 = vpop.f32.mrf.mxu0
        %v7158 = vadd.f32 %v7145, %v7157
        %v7159 = vpop.f32.mrf.mxu0
        %7160 = vdwg.mxu0
        %7161 = vmatpush.bf16.msra.mxu0 %v6997
        %7162 = vmatpush.bf16.msra.mxu0 %v6995
        %7163 = vmatpush.bf16.msra.mxu0 %v6993
        %7164 = vmatpush.bf16.msra.mxu0 %v6991
        %7165 = vmatpush.bf16.msra.mxu0 %v6989
        %7166 = vmatpush.bf16.msra.mxu0 %v6987
        %7167 = vmatpush.bf16.msra.mxu0 %v6985
        %7168 = vmatpush.bf16.msra.mxu0 %v6983
        %7169 = vmatmul.bf16.gmra.mxu0 %v6691
        %v7170 = vpop.f32.mrf.mxu0
        %v7171 = vadd.f32 %v7158, %v7170
        %v7172 = vpop.f32.mrf.mxu0
        %7173 = vdwg.mxu0
        %7174 = vmatpush.bf16.msra.mxu0 %v7013
        %7175 = vmatpush.bf16.msra.mxu0 %v7011
        %7176 = vmatpush.bf16.msra.mxu0 %v7009
        %7177 = vmatpush.bf16.msra.mxu0 %v7007
        %7178 = vmatpush.bf16.msra.mxu0 %v7005
        %7179 = vmatpush.bf16.msra.mxu0 %v7003
        %7180 = vmatpush.bf16.msra.mxu0 %v7001
        %7181 = vmatpush.bf16.msra.mxu0 %v6999
        %7182 = vmatmul.bf16.gmra.mxu0 %v6692
        %v7183 = vpop.f32.mrf.mxu0
        %v7184 = vadd.f32 %v7171, %v7183
        %v7185 = vpop.f32.mrf.mxu0
        %7186 = vdwg.mxu0
        %v7187 = vsub.f32 0.0, %v7132
        %v7188 = vsub.f32 0.0, %v7184
        %v7189 = vmul.f32 %v7187, 1.442695
        %v7190 = vpow.pop %v7189
        %v7191 = vmul.f32 %v7188, 1.442695
        %v7192 = vpow.pop %v7191
        %v7193 = vadd.f32 %v7190, 1.0
        %v7194 = vadd.f32 %v7192, 1.0
        %v7195 = vrcp.pop %v7193
        %v7196 = vrcp.pop %v7194
        %v7197 = vmul.f32 %v7132, %v7195
        %v7198 = vmul.f32 %v7184, %v7196
        %v7199 = vld [vmem:[%s9] sm:$0x3]
        %v7201 = vperm.slane %v7199, 0
        %v7202 = vperm.slane %v7199, 1
        %v7205 = vmul.f32 %v7197, %v7201
        %v7206 = vmul.f32 %v7198, %v7202
        %vm7207 = vcmask 1040384
        %v7208 = vsel %vm7207, %v7205, 0.0
        %v7209 = vsel %vm7207, %v7206, 0.0
        %v7210 = vadd.f32 %v7208, %v7209
        %7211 = vadd.xlane.f32.xlu0 %v7210
        %v7212 = vpop.xlane.xlu0 %7211
        %v7213 = vld [vmem:[#allocation3] sm:$0x1]
        %v7214 = vadd.f32 %v7212, %v7213
        %v7215 = vxor.u32 %v7214, 2147483648
        %v7216 = vmul.f32 %v7215, 1.442695
        %v7217 = vpow.pop %v7216
        %v7218 = vadd.f32 %v7217, 1.0
        %v7219 = vrcp.pop %v7218
        %v7220 = vmul.f32 %v7218, %v7219
        %v7221 = vsub.f32 1.0, %v7220
        %v7222 = vmul.f32 %v7219, %v7221
        %v7223 = vadd.f32 %v7219, %v7222
        %vm7224 = vweird.f32 %v7218
        %vm7225 = vweird.f32 %v7219
        %vm7226 = vmor %vm7224, %vm7225
        %v7227 = vsel %vm7226, %v7219, %v7223
        %v7228 = vand.u32 2147483647, %v7218
        %vm7229 = vcmp.eq.f32.partialorder %v7228, 8.507059e+37
        %v7230 = vand.u32 %v7218, 2147483648
        %v7231 = vor.u32 1.1754944e-38, %v7230
        %v7232 = vsel %vm7229, %v7231, %v7227
        %v7233 = vmul.f32 1.0, %v7232
        %v7234 = vpack.c.bf16 %v6685, %v6685
        %v7235 = vpack.c.bf16 %v6686, %v6686
        %v7236 = vpack.c.bf16 %v6687, %v6687
        %v7237 = vpack.c.bf16 %v6688, %v6688
        %v7238 = vld [vmem:[%s11] sm:$0xf]
        %v7239 = vld [vmem:[%s11 + $0x4] sm:$0xf]
        %v7240 = vld [vmem:[%s11 + $0x8] sm:$0xf]
        %v7241 = vld [vmem:[%s11 + $0xc] sm:$0xf]
        %v7242 = vld [vmem:[%s11 + $0x10] sm:$0xf]
        %v7243 = vld [vmem:[%s11 + $0x14] sm:$0xf]
        %v7244 = vld [vmem:[%s11 + $0x18] sm:$0xf]
        %v7245 = vld [vmem:[%s11 + $0x1c] sm:$0xf]
        %v7246 = vld [vmem:[%s11 + $0x20] sm:$0xf]
        %v7247 = vld [vmem:[%s11 + $0x24] sm:$0xf]
        %v7248 = vld [vmem:[%s11 + $0x28] sm:$0xf]
        %v7249 = vld [vmem:[%s11 + $0x2c] sm:$0xf]
        %v7250 = vld [vmem:[%s11 + $0x30] sm:$0xf]
        %v7251 = vld [vmem:[%s11 + $0x34] sm:$0xf]
        %v7252 = vld [vmem:[%s11 + $0x38] sm:$0xf]
        %v7253 = vld [vmem:[%s11 + $0x3c] sm:$0xf]
        %v7254 = vld [vmem:[%s11 + $0x40] sm:$0xf]
        %v7255 = vld [vmem:[%s11 + $0x44] sm:$0xf]
        %v7256 = vld [vmem:[%s11 + $0x48] sm:$0xf]
        %v7257 = vld [vmem:[%s11 + $0x4c] sm:$0xf]
        %v7258 = vld [vmem:[%s11 + $0x50] sm:$0xf]
        %v7259 = vld [vmem:[%s11 + $0x54] sm:$0xf]
        %v7260 = vld [vmem:[%s11 + $0x58] sm:$0xf]
        %v7261 = vld [vmem:[%s11 + $0x5c] sm:$0xf]
        %v7262 = vld [vmem:[%s11 + $0x60] sm:$0xf]
        %v7263 = vld [vmem:[%s11 + $0x64] sm:$0xf]
        %v7264 = vld [vmem:[%s11 + $0x68] sm:$0xf]
        %v7265 = vld [vmem:[%s11 + $0x6c] sm:$0xf]
        %v7266 = vld [vmem:[%s11 + $0x70] sm:$0xf]
        %v7267 = vld [vmem:[%s11 + $0x74] sm:$0xf]
        %v7268 = vld [vmem:[%s11 + $0x78] sm:$0xf]
        %v7269 = vld [vmem:[%s11 + $0x7c] sm:$0xf]
        %v7270 = vld [vmem:[%s11 + $0x80] sm:$0xf]
        %v7271 = vld [vmem:[%s11 + $0x84] sm:$0xf]
        %v7272 = vld [vmem:[%s11 + $0x88] sm:$0xf]
        %v7273 = vld [vmem:[%s11 + $0x8c] sm:$0xf]
        %v7274 = vld [vmem:[%s11 + $0x90] sm:$0xf]
        %v7275 = vld [vmem:[%s11 + $0x94] sm:$0xf]
        %v7276 = vld [vmem:[%s11 + $0x98] sm:$0xf]
        %v7277 = vld [vmem:[%s11 + $0x9c] sm:$0xf]
        %v7278 = vld [vmem:[%s11 + $0xa0] sm:$0xf]
        %v7279 = vld [vmem:[%s11 + $0xa4] sm:$0xf]
        %v7280 = vld [vmem:[%s11 + $0xa8] sm:$0xf]
        %v7281 = vld [vmem:[%s11 + $0xac] sm:$0xf]
        %v7282 = vld [vmem:[%s11 + $0xb0] sm:$0xf]
        %v7283 = vld [vmem:[%s11 + $0xb4] sm:$0xf]
        %v7284 = vld [vmem:[%s11 + $0xb8] sm:$0xf]
        %v7285 = vld [vmem:[%s11 + $0xbc] sm:$0xf]
        %v7286 = vld [vmem:[%s11 + $0xc0] sm:$0xf]
        %v7287 = vld [vmem:[%s11 + $0xc4] sm:$0xf]
        %v7288 = vld [vmem:[%s11 + $0xc8] sm:$0xf]
        %v7289 = vld [vmem:[%s11 + $0xcc] sm:$0xf]
        %v7290 = vld [vmem:[%s11 + $0xd0] sm:$0xf]
        %v7291 = vld [vmem:[%s11 + $0xd4] sm:$0xf]
        %v7292 = vld [vmem:[%s11 + $0xd8] sm:$0xf]
        %v7293 = vld [vmem:[%s11 + $0xdc] sm:$0xf]
        %v7294 = vld [vmem:[%s11 + $0xe0] sm:$0xf]
        %v7295 = vld [vmem:[%s11 + $0xe4] sm:$0xf]
        %v7296 = vld [vmem:[%s11 + $0xe8] sm:$0xf]
        %v7297 = vld [vmem:[%s11 + $0xec] sm:$0xf]
        %v7298 = vld [vmem:[%s11 + $0xf0] sm:$0xf]
        %v7299 = vld [vmem:[%s11 + $0xf4] sm:$0xf]
        %v7300 = vld [vmem:[%s11 + $0xf8] sm:$0xf]
        %v7301 = vld [vmem:[%s11 + $0xfc] sm:$0xf]
        %v7302 = vld [vmem:[%s12] sm:$0x1]
        %v7367 = vunpack.c.l.b16 %v7238
        %v7368 = vunpack.c.l.b16 %v7239
        %v7369 = vunpack.c.l.b16 %v7240
        %v7370 = vunpack.c.l.b16 %v7241
        %v7371 = vunpack.c.l.b16 %v7242
        %v7372 = vunpack.c.l.b16 %v7243
        %v7373 = vunpack.c.l.b16 %v7244
        %v7374 = vunpack.c.l.b16 %v7245
        %v7375 = vunpack.c.l.b16 %v7246
        %v7376 = vunpack.c.l.b16 %v7247
        %v7377 = vunpack.c.l.b16 %v7248
        %v7378 = vunpack.c.l.b16 %v7249
        %v7379 = vunpack.c.l.b16 %v7250
        %v7380 = vunpack.c.l.b16 %v7251
        %v7381 = vunpack.c.l.b16 %v7252
        %v7382 = vunpack.c.l.b16 %v7253
        %v7383 = vunpack.c.l.b16 %v7254
        %v7384 = vunpack.c.l.b16 %v7255
        %v7385 = vunpack.c.l.b16 %v7256
        %v7386 = vunpack.c.l.b16 %v7257
        %v7387 = vunpack.c.l.b16 %v7258
        %v7388 = vunpack.c.l.b16 %v7259
        %v7389 = vunpack.c.l.b16 %v7260
        %v7390 = vunpack.c.l.b16 %v7261
        %v7391 = vunpack.c.l.b16 %v7262
        %v7392 = vunpack.c.l.b16 %v7263
        %v7393 = vunpack.c.l.b16 %v7264
        %v7394 = vunpack.c.l.b16 %v7265
        %v7395 = vunpack.c.l.b16 %v7266
        %v7396 = vunpack.c.l.b16 %v7267
        %v7397 = vunpack.c.l.b16 %v7268
        %v7398 = vunpack.c.l.b16 %v7269
        %v7399 = vunpack.c.l.b16 %v7270
        %v7400 = vunpack.c.l.b16 %v7271
        %v7401 = vunpack.c.l.b16 %v7272
        %v7402 = vunpack.c.l.b16 %v7273
        %v7403 = vunpack.c.l.b16 %v7274
        %v7404 = vunpack.c.l.b16 %v7275
        %v7405 = vunpack.c.l.b16 %v7276
        %v7406 = vunpack.c.l.b16 %v7277
        %v7407 = vunpack.c.l.b16 %v7278
        %v7408 = vunpack.c.l.b16 %v7279
        %v7409 = vunpack.c.l.b16 %v7280
        %v7410 = vunpack.c.l.b16 %v7281
        %v7411 = vunpack.c.l.b16 %v7282
        %v7412 = vunpack.c.l.b16 %v7283
        %v7413 = vunpack.c.l.b16 %v7284
        %v7414 = vunpack.c.l.b16 %v7285
        %v7415 = vunpack.c.l.b16 %v7286
        %v7416 = vunpack.c.l.b16 %v7287
        %v7417 = vunpack.c.l.b16 %v7288
        %v7418 = vunpack.c.l.b16 %v7289
        %v7419 = vunpack.c.l.b16 %v7290
        %v7420 = vunpack.c.l.b16 %v7291
        %v7421 = vunpack.c.l.b16 %v7292
        %v7422 = vunpack.c.l.b16 %v7293
        %v7423 = vunpack.c.l.b16 %v7294
        %v7424 = vunpack.c.l.b16 %v7295
        %v7425 = vunpack.c.l.b16 %v7296
        %v7426 = vunpack.c.l.b16 %v7297
        %v7427 = vunpack.c.l.b16 %v7298
        %v7428 = vunpack.c.l.b16 %v7299
        %v7429 = vunpack.c.l.b16 %v7300
        %v7430 = vunpack.c.l.b16 %v7301
        %v7431 = vpack.c.b16 %v7368, %v7367
        %v7432 = vpack.c.b16 %v7370, %v7369
        %v7433 = vpack.c.b16 %v7372, %v7371
        %v7434 = vpack.c.b16 %v7374, %v7373
        %v7435 = vpack.c.b16 %v7376, %v7375
        %v7436 = vpack.c.b16 %v7378, %v7377
        %v7437 = vpack.c.b16 %v7380, %v7379
        %v7438 = vpack.c.b16 %v7382, %v7381
        %v7439 = vpack.c.b16 %v7384, %v7383
        %v7440 = vpack.c.b16 %v7386, %v7385
        %v7441 = vpack.c.b16 %v7388, %v7387
        %v7442 = vpack.c.b16 %v7390, %v7389
        %v7443 = vpack.c.b16 %v7392, %v7391
        %v7444 = vpack.c.b16 %v7394, %v7393
        %v7445 = vpack.c.b16 %v7396, %v7395
        %v7446 = vpack.c.b16 %v7398, %v7397
        %v7447 = vpack.c.b16 %v7400, %v7399
        %v7448 = vpack.c.b16 %v7402, %v7401
        %v7449 = vpack.c.b16 %v7404, %v7403
        %v7450 = vpack.c.b16 %v7406, %v7405
        %v7451 = vpack.c.b16 %v7408, %v7407
        %v7452 = vpack.c.b16 %v7410, %v7409
        %v7453 = vpack.c.b16 %v7412, %v7411
        %v7454 = vpack.c.b16 %v7414, %v7413
        %v7455 = vpack.c.b16 %v7416, %v7415
        %v7456 = vpack.c.b16 %v7418, %v7417
        %v7457 = vpack.c.b16 %v7420, %v7419
        %v7458 = vpack.c.b16 %v7422, %v7421
        %v7459 = vpack.c.b16 %v7424, %v7423
        %v7460 = vpack.c.b16 %v7426, %v7425
        %v7461 = vpack.c.b16 %v7428, %v7427
        %v7462 = vpack.c.b16 %v7430, %v7429
        %7495 = vmatpush.bf16.msra.mxu0 %v7438
        %7496 = vmatpush.bf16.msra.mxu0 %v7437
        %7497 = vmatpush.bf16.msra.mxu0 %v7436
        %7498 = vmatpush.bf16.msra.mxu0 %v7435
        %7499 = vmatpush.bf16.msra.mxu0 %v7434
        %7500 = vmatpush.bf16.msra.mxu0 %v7433
        %7501 = vmatpush.bf16.msra.mxu0 %v7432
        %7502 = vmatpush.bf16.msra.mxu0 %v7431
        %7503 = vmatmul.bf16.gmra.mxu0 %v7234
        %v7504 = vpop.f32.mrf.mxu0
        %v7505 = vadd.f32 %v7302, %v7504
        %v7506 = vpop.f32.mrf.mxu0
        %7507 = vdwg.mxu0
        %7508 = vmatpush.bf16.msra.mxu0 %v7446
        %7509 = vmatpush.bf16.msra.mxu0 %v7445
        %7510 = vmatpush.bf16.msra.mxu0 %v7444
        %7511 = vmatpush.bf16.msra.mxu0 %v7443
        %7512 = vmatpush.bf16.msra.mxu0 %v7442
        %7513 = vmatpush.bf16.msra.mxu0 %v7441
        %7514 = vmatpush.bf16.msra.mxu0 %v7440
        %7515 = vmatpush.bf16.msra.mxu0 %v7439
        %7516 = vmatmul.bf16.gmra.mxu0 %v7235
        %v7517 = vpop.f32.mrf.mxu0
        %v7518 = vadd.f32 %v7505, %v7517
        %v7519 = vpop.f32.mrf.mxu0
        %7520 = vdwg.mxu0
        %7521 = vmatpush.bf16.msra.mxu0 %v7454
        %7522 = vmatpush.bf16.msra.mxu0 %v7453
        %7523 = vmatpush.bf16.msra.mxu0 %v7452
        %7524 = vmatpush.bf16.msra.mxu0 %v7451
        %7525 = vmatpush.bf16.msra.mxu0 %v7450
        %7526 = vmatpush.bf16.msra.mxu0 %v7449
        %7527 = vmatpush.bf16.msra.mxu0 %v7448
        %7528 = vmatpush.bf16.msra.mxu0 %v7447
        %7529 = vmatmul.bf16.gmra.mxu0 %v7236
        %v7530 = vpop.f32.mrf.mxu0
        %v7531 = vadd.f32 %v7518, %v7530
        %v7532 = vpop.f32.mrf.mxu0
        %7533 = vdwg.mxu0
        %7534 = vmatpush.bf16.msra.mxu0 %v7462
        %7535 = vmatpush.bf16.msra.mxu0 %v7461
        %7536 = vmatpush.bf16.msra.mxu0 %v7460
        %7537 = vmatpush.bf16.msra.mxu0 %v7459
        %7538 = vmatpush.bf16.msra.mxu0 %v7458
        %7539 = vmatpush.bf16.msra.mxu0 %v7457
        %7540 = vmatpush.bf16.msra.mxu0 %v7456
        %7541 = vmatpush.bf16.msra.mxu0 %v7455
        %7542 = vmatmul.bf16.gmra.mxu0 %v7237
        %v7543 = vpop.f32.mrf.mxu0
        %v7544 = vadd.f32 %v7531, %v7543
        %v7545 = vpop.f32.mrf.mxu0
        %7546 = vdwg.mxu0
        %7548 = vset.pattern.permute.xlu0 0
        %7549 = vperm.xlu0 %7548, %v7233
        %v7550 = vpop.permute.xlu0 %7549
        %v7552 = vmul.f32 %v7544, %v7550
        %7553 = vst [vmem:[%s466] sm:$0x1] %v7552
      $region80: #{efficientnetv2_pad_forward.1} parent=71 // pred_fallthru
        _
      %p7554 = scmp.lt.s32.totalorder %s30, 1
      %s7555 = scalar_select %p7554, %s30, 1
      %s7556 = scalar_lea.vmem %s13, %s7555
      // Predicated region
      $region81: #{efficientnetv2_pad_forward.1} parent=71 // pred_check
        %p7557 = pneg %p336
      $region82: #{efficientnetv2_pad_forward.1} parent=71 // pred_check_branch
        %7559 = sbr.rel (%p7557) target = $region84
      $region83: #{efficientnetv2_pad_forward.1} parent=71 // pred_region
        _
      $region84: #{efficientnetv2_pad_forward.1} parent=71 // pred_fallthru
        _
    $region72: #{efficientnetv2_pad_forward.1} parent=5 // pred_fallthru
      _
    %p7560 = scmp.le.s32.totalorder 2, %s21
    // Predicated region
    $region85: #{efficientnetv2_pad_forward.1} parent=5 // pred_check
      %p7561 = pneg %p7560
    $region86: #{efficientnetv2_pad_forward.1} parent=5 // pred_check_branch
      %7563 = sbr.rel (%p7561) target = $region88
    $region87: #{efficientnetv2_pad_forward.1} parent=5 // pred_region
      %s7564 = ssub.s32 %s21, 2
      // Predicated region
      $region89: #{efficientnetv2_pad_forward.1} parent=87 // pred_check
        %p7565 = pneg %p342
      $region90: #{efficientnetv2_pad_forward.1} parent=87 // pred_check_branch
        %7567 = sbr.rel (%p7565) target = $region92
      $region91: #{efficientnetv2_pad_forward.1} parent=87 // pred_region
        %p7568 = scmp.lt.s32.totalorder %s32, 1
        %s7569 = scalar_select %p7568, %s32, 1
        %s7570 = scalar_lea.vmem %s13, %s7569
      $region92: #{efficientnetv2_pad_forward.1} parent=87 // pred_fallthru
        _
    $region88: #{efficientnetv2_pad_forward.1} parent=5 // pred_fallthru
      _
  $region6: #{efficientnetv2_pad_forward.1} parent=0 // loop_footer
    %s25 = sadd.s32 1, %s21
  $region7: #{efficientnetv2_pad_forward.1} parent=0 // loop_footer_branch
    %20 = sbr.rel target = $region3
  $region8: #{efficientnetv2_pad_forward.1} parent=0 // loop_exit
    _

</llo_original>
